<compile_context>
chip_gen: v7x
topology: tpu7x:2x2x1
jax: 0.10.0
libtpu: 0.0.40
codegen_flags: <defaults>
</compile_context>

<pallas_src>
import functools
import math

import jax
import jax.numpy as jnp
import numpy as np
from jax.experimental import pallas as pl
from jax.experimental.pallas import tpu as pltpu


# ----------------------------------------------------------------------------
# fused kernel: one program per batch element, everything resident in VMEM
# ----------------------------------------------------------------------------
def _fused_kernel(y_ref, src_ref,
                  a1_ref, a2_ref, adp_ref, wgcn_ref, bmlp_ref,
                  gn1l_g_ref, gn1l_b_ref,
                  wqT_ref, wk_ref, wvT_ref, pk_ref, pvT_ref, woT_ref, bo_ref,
                  mask_ref, gn1a_g_ref, gn1a_b_ref,
                  wff1_ref, bff1_ref, wff2_ref, bff2_ref,
                  gn2_g_ref, gn2_b_ref, pmat_ref,
                  o_ref, *, heads, order, eps):
    f32 = jnp.float32

    def mm(a, b):
        return jnp.dot(a, b, preferred_element_type=f32)

    y = y_ref[0].astype(f32)        # (C, N),  N = K*L, column n = k*L + l
    src = src_ref[0].astype(f32)    # (C, N)   q/k source (itp_y if cross else y)
    C, N = y.shape

    # scaled same-group indicator (C, C): pmat[i, j] = 1/((C/groups)*N) if same group
    pmat = pmat_ref[...]

    def group_norm(s, gamma, beta):
        mu_c = jnp.sum(mm(pmat, s), axis=1, keepdims=True)          # (C, 1)
        ex2_c = jnp.sum(mm(pmat, s * s), axis=1, keepdims=True)     # (C, 1)
        rstd_c = jax.lax.rsqrt(ex2_c - mu_c * mu_c + eps)
        return (s - mu_c) * rstd_c * gamma + beta

    # ---------------- AdaptiveGCN branch (weight-split accumulation) --------
    gcn = mm(wgcn_ref[0], y) + bmlp_ref[...]            # include_self chunk
    chunk = 1
    for a_r in (a1_ref, a2_ref, adp_ref):
        a_big_t = a_r[...]                              # (N, N) = kron(A.T, I_L)
        x1 = mm(y, a_big_t)
        gcn = gcn + mm(wgcn_ref[chunk], x1)
        chunk += 1
        for _ in range(2, order + 1):
            x1 = mm(x1, a_big_t)
            gcn = gcn + mm(wgcn_ref[chunk], x1)
            chunk += 1
    y_local = group_norm(y + gcn, gn1l_g_ref[...], gn1l_b_ref[...])

    # ---------------- Linformer cross-attention (Attn_spa) ------------------
    dh = C // heads
    scale = dh ** (-0.5)
    mask = mask_ref[...]                 # (N, Nk): 0 on same-l blocks, -1e30 off
    src_t = src.T                        # (N, C)
    y_t = y.T                            # (N, C)
    src_pk = mm(src, pk_ref[...])        # (C, Nk)  keys projected along seq per l
    y_pv_t = mm(pvT_ref[...], y_t)       # (Nk, C)  values projected along seq per l

    acc_t = jnp.zeros((N, C), f32)       # attention output in (seq, channel) layout
    for h in range(heads):
        q_h = mm(src_t, wqT_ref[h])      # (N, dh)
        k_h = mm(wk_ref[h], src_pk)      # (dh, Nk)
        v_h = mm(y_pv_t, wvT_ref[h])     # (Nk, dh)
        dots = mm(q_h, k_h) * scale + mask                     # (N, Nk)
        dots = dots - jnp.max(dots, axis=-1, keepdims=True)
        e = jnp.exp(dots)
        attn = e / jnp.sum(e, axis=-1, keepdims=True)          # dropout p=0 -> id
        o_h = mm(attn, v_h)                                    # (N, dh)
        acc_t = acc_t + mm(o_h, woT_ref[h])                    # head concat folded
    attn_out = acc_t.T + bo_ref[...]                           # (C, N)
    y_attn = group_norm(y + attn_out, gn1a_g_ref[...], gn1a_b_ref[...])

    # ---------------- position-wise feed-forward + norm2 --------------------
    y_in2 = y_local + y_attn
    h_mid = jnp.maximum(mm(wff1_ref[...], y_in2) + bff1_ref[...], 0.0)   # (2C, N)
    ff = mm(wff2_ref[...], h_mid) + bff2_ref[...]                        # (C, N)
    out = group_norm(ff + y_in2, gn2_g_ref[...], gn2_b_ref[...])
    o_ref[0] = out.astype(o_ref.dtype)


# ----------------------------------------------------------------------------
# wrapper: trace-time weight re-packing + one pallas_call
# ----------------------------------------------------------------------------
def spatial_learning_forward(y, itp_y, base_shape, p, *, order=2, heads=4,
                             groups=4, is_cross=True, eps=1e-5):
    B, C, K, L = base_shape
    if K == 1:
        return y
    N = K * L
    kp = p["proj_k"].shape[1]
    Nk = kp * L
    S = order * 3 + 1                       # 2 static supports + adaptive, +self
    dh = C // heads
    f32 = jnp.float32
    eye_l = jnp.eye(L, dtype=f32)

    # adaptive adjacency in plain JAX (tiny (K,d)@(d,K) + softmax)
    adp = jax.nn.softmax(jnp.maximum(p["nodevec1"] @ p["nodevec2"], 0.0), axis=1)

    # fold the per-l reshape/permute structure into kron-expanded operators so
    # the kernel works on the native (C, K*L) layout (n = k*L + l) directly
    a1_big_t = jnp.kron(p["A1"].T, eye_l)            # (N, N)
    a2_big_t = jnp.kron(p["A2"].T, eye_l)
    adp_big_t = jnp.kron(adp.T, eye_l)
    pk_big = jnp.kron(p["proj_k"], eye_l)            # (N, Nk)
    pv_big_t = jnp.kron(p["proj_v"], eye_l).T        # (Nk, N)

    # split weights at trace time (no in-kernel concat or sub-tile slicing)
    w_gcn = p["w_mlp"].reshape(C, S, C).transpose(1, 0, 2)       # (S, C, C)
    wq_t = p["wq"].reshape(heads, dh, C).transpose(0, 2, 1)      # (H, C, dh)
    wk_s = p["wk"].reshape(heads, dh, C)                         # (H, dh, C)
    wv_t = p["wv"].reshape(heads, dh, C).transpose(0, 2, 1)      # (H, C, dh)
    wo_t = p["wo"].reshape(C, heads, dh).transpose(1, 2, 0)      # (H, dh, C)
    bo = p["bo"].reshape(C, 1)

    # additive mask restricting attention to same-l blocks of the flat layout
    row_l = jnp.arange(N, dtype=jnp.int32) % L
    col_l = jnp.arange(Nk, dtype=jnp.int32) % L
    mask = jnp.where(row_l[:, None] == col_l[None, :], 0.0, -1e30).astype(f32)

    # scaled same-group indicator for GroupNorm statistics
    cg = C // groups
    grp = jnp.arange(C, dtype=jnp.int32) // cg
    pmat = (grp[:, None] == grp[None, :]).astype(f32) / float(cg * N)

    src = itp_y if is_cross else y

    operands = (y, src, a1_big_t, a2_big_t, adp_big_t, w_gcn, p["b_mlp"],
                p["gn1l_g"], p["gn1l_b"],
                wq_t, wk_s, wv_t, pk_big, pv_big_t, wo_t, bo, mask,
                p["gn1a_g"], p["gn1a_b"],
                p["w_ff1"], p["b_ff1"], p["w_ff2"], p["b_ff2"],
                p["gn2_g"], p["gn2_b"], pmat)

    in_specs = [pl.BlockSpec((1, C, N), lambda b: (b, 0, 0)),
                pl.BlockSpec((1, C, N), lambda b: (b, 0, 0))]
    for x in operands[2:]:
        if x.ndim == 2:
            in_specs.append(pl.BlockSpec(x.shape, lambda b: (0, 0)))
        else:
            in_specs.append(pl.BlockSpec(x.shape, lambda b: (0, 0, 0)))

    kernel = functools.partial(_fused_kernel, heads=heads, order=order, eps=eps)
    return pl.pallas_call(
        kernel,
        grid=(B,),
        in_specs=in_specs,
        out_specs=pl.BlockSpec((1, C, N), lambda b: (b, 0, 0)),
        out_shape=jax.ShapeDtypeStruct((B, C, N), jnp.float32),
        compiler_params=pltpu.CompilerParams(dimension_semantics=("parallel",)),
    )(*operands)


# ----------------------------------------------------------------------------
# pure-JAX reference (mirrors the PyTorch forward) for correctness check
# ----------------------------------------------------------------------------
def reference_forward(y, itp_y, base_shape, p, *, order=2, heads=4, groups=4,
                      is_cross=True, eps=1e-5):
    B, C, K, L = base_shape
    N = K * L

    def group_norm(v, g, b):
        vg = v.reshape(B, groups, C // groups, N)
        mu = vg.mean(axis=(2, 3), keepdims=True)
        var = ((vg - mu) ** 2).mean(axis=(2, 3), keepdims=True)
        vn = ((vg - mu) / jnp.sqrt(var + eps)).reshape(B, C, N)
        return vn * g.reshape(1, C, 1) + b.reshape(1, C, 1)

    # AdaptiveGCN
    x = y.reshape(B, C, K, L).transpose(0, 3, 1, 2).reshape(B * L, C, K)[..., None]
    adp = jax.nn.softmax(jnp.maximum(p["nodevec1"] @ p["nodevec2"], 0.0), axis=1)
    out = [x]
    for a in (p["A1"], p["A2"], adp):
        x1 = jnp.einsum('ncvl,wv->ncwl', x, a)
        out.append(x1)
        for _ in range(2, order + 1):
            x1 = jnp.einsum('ncvl,wv->ncwl', x1, a)
            out.append(x1)
    cat = jnp.concatenate(out, axis=1)
    mlp = jnp.einsum('oc,bckl->bokl', p["w_mlp"], cat) + p["b_mlp"].reshape(1, C, 1, 1)
    gcn = mlp[..., 0].reshape(B, L, C, K).transpose(0, 2, 3, 1).reshape(B, C, N)
    y_local = group_norm(y + gcn, p["gn1l_g"], p["gn1l_b"])

    # Attn_spa (Linformer)
    x_t = y.reshape(B, C, K, L).transpose(0, 3, 1, 2).reshape(B * L, C, K).transpose(0, 2, 1)
    if is_cross:
        itp_t = itp_y.reshape(B, C, K, L).transpose(0, 3, 1, 2).reshape(B * L, C, K).transpose(0, 2, 1)
        q_in, k_in, v_in = itp_t, itp_t, x_t
    else:
        q_in, k_in, v_in = x_t, x_t, x_t
    dh = C // heads
    q = q_in @ p["wq"].T
    kk = k_in @ p["wk"].T
    vv = v_in @ p["wv"].T
    kp = jnp.einsum('bnd,nk->bkd', kk, p["proj_k"])
    vp = jnp.einsum('bnd,nk->bkd', vv, p["proj_v"])
    bsz = q.shape[0]
    qh = q.reshape(bsz, K, heads, dh).transpose(0, 2, 1, 3)
    kh = kp.reshape(bsz, -1, heads, dh).transpose(0, 2, 1, 3)
    vh = vp.reshape(bsz, -1, heads, dh).transpose(0, 2, 1, 3)
    dots = jnp.einsum('bhnd,bhkd->bhnk', qh, kh) * dh ** (-0.5)
    attn = jax.nn.softmax(dots, axis=-1)
    o = jnp.einsum('bhnk,bhkd->bhnd', attn, vh)
    o = o.transpose(0, 2, 1, 3).reshape(bsz, K, heads * dh)
    o = o @ p["wo"].T + p["bo"].reshape(1, 1, C)
    attn_out = o.transpose(0, 2, 1).reshape(B, L, C, K).transpose(0, 2, 3, 1).reshape(B, C, N)
    y_attn = group_norm(y + attn_out, p["gn1a_g"], p["gn1a_b"])

    # FF + norm2
    y_in2 = y_local + y_attn
    h = jnp.maximum(jnp.einsum('fc,bcn->bfn', p["w_ff1"], y_in2) + p["b_ff1"].reshape(1, -1, 1), 0.0)
    ff = jnp.einsum('cf,bfn->bcn', p["w_ff2"], h) + p["b_ff2"].reshape(1, -1, 1)
    return group_norm(ff + y_in2, p["gn2_g"], p["gn2_b"])


# ----------------------------------------------------------------------------
# deterministic parameter construction
# ----------------------------------------------------------------------------
def make_params(key, C, K, proj_t, d_nv, order=2):
    c_in_mlp = (order * 3 + 1) * C       # 3 supports (2 static + adaptive), include_self
    ks = jax.random.split(key, 24)
    n = lambda k, s, sc: (sc * jax.random.normal(k, s)).astype(jnp.float32)
    u = lambda k, s, lim: jax.random.uniform(k, s, jnp.float32, -lim, lim)
    return {
        "A1": jax.nn.softmax(jax.random.normal(ks[0], (K, K)), axis=1).astype(jnp.float32),
        "A2": jax.nn.softmax(jax.random.normal(ks[1], (K, K)), axis=1).astype(jnp.float32),
        "nodevec1": n(ks[2], (K, d_nv), 0.5),
        "nodevec2": n(ks[3], (d_nv, K), 0.5),
        "w_mlp": n(ks[4], (C, c_in_mlp), 1.0 / math.sqrt(c_in_mlp)),
        "b_mlp": n(ks[5], (C, 1), 0.02),
        "wq": n(ks[6], (C, C), 1.0 / math.sqrt(C)),
        "wk": n(ks[7], (C, C), 1.0 / math.sqrt(C)),
        "wv": n(ks[8], (C, C), 1.0 / math.sqrt(C)),
        "proj_k": u(ks[9], (K, proj_t), 1.0 / math.sqrt(proj_t)),
        "proj_v": u(ks[10], (K, proj_t), 1.0 / math.sqrt(proj_t)),
        "wo": n(ks[11], (C, C), 1.0 / math.sqrt(C)),
        "bo": n(ks[12], (1, C), 0.02),
        "gn1l_g": (1.0 + 0.1 * jax.random.normal(ks[13], (C, 1))).astype(jnp.float32),
        "gn1l_b": n(ks[14], (C, 1), 0.1),
        "gn1a_g": (1.0 + 0.1 * jax.random.normal(ks[15], (C, 1))).astype(jnp.float32),
        "gn1a_b": n(ks[16], (C, 1), 0.1),
        "gn2_g": (1.0 + 0.1 * jax.random.normal(ks[17], (C, 1))).astype(jnp.float32),
        "gn2_b": n(ks[18], (C, 1), 0.1),
        "w_ff1": n(ks[19], (2 * C, C), 1.0 / math.sqrt(C)),
        "b_ff1": n(ks[20], (2 * C, 1), 0.02),
        "w_ff2": n(ks[21], (C, 2 * C), 1.0 / math.sqrt(2 * C)),
        "b_ff2": n(ks[22], (C, 1), 0.02),
        # TODO(synk): cond_proj (Conv1d 2C->C) exists in __init__ but is unused in forward; omitted.
    }


if __name__ == "__main__":
    B, C, K, L = 2, 16, 8, 8          # base_shape
    heads, proj_t, order, groups, d_nv = 4, 8, 2, 4, 8
    is_cross = True

    key = jax.random.PRNGKey(0)
    k_y, k_itp, k_p = jax.random.split(key, 3)
    y = jax.random.normal(k_y, (B, C, K * L), jnp.float32)
    itp_y = jax.random.normal(k_itp, (B, C, K * L), jnp.float32)
    params = make_params(k_p, C, K, proj_t, d_nv, order)

    fwd = jax.jit(lambda y_, itp_, p_: spatial_learning_forward(
        y_, itp_, (B, C, K, L), p_, order=order, heads=heads,
        groups=groups, is_cross=is_cross))
    out = jax.block_until_ready(fwd(y, itp_y, params))

    with jax.default_matmul_precision("highest"):
        ref = reference_forward(y, itp_y, (B, C, K, L), params,
                                order=order, heads=heads, groups=groups,
                                is_cross=is_cross)
    ref = jax.block_until_ready(ref)

    assert out.shape == (B, C, K * L)
    assert np.all(np.isfinite(np.asarray(out)))
    assert np.allclose(np.asarray(out), np.asarray(ref), rtol=2e-2, atol=2e-2), \
        f"max abs err = {np.max(np.abs(np.asarray(out) - np.asarray(ref)))}"
    print("KERNEL_OK")
</pallas_src>

<mosaic_0001>
module attributes {stable_mosaic.version = 11 : i64} {
  func.func @_fused_kernel(%arg0: i32, %arg1: memref<1x16x64xf32, #tpu.memory_space<vmem>>, %arg2: memref<1x16x64xf32, #tpu.memory_space<vmem>>, %arg3: memref<64x64xf32, #tpu.memory_space<vmem>>, %arg4: memref<64x64xf32, #tpu.memory_space<vmem>>, %arg5: memref<64x64xf32, #tpu.memory_space<vmem>>, %arg6: memref<7x16x16xf32, #tpu.memory_space<vmem>>, %arg7: memref<16x1xf32, #tpu.memory_space<vmem>>, %arg8: memref<16x1xf32, #tpu.memory_space<vmem>>, %arg9: memref<16x1xf32, #tpu.memory_space<vmem>>, %arg10: memref<4x16x4xf32, #tpu.memory_space<vmem>>, %arg11: memref<4x4x16xf32, #tpu.memory_space<vmem>>, %arg12: memref<4x16x4xf32, #tpu.memory_space<vmem>>, %arg13: memref<64x64xf32, #tpu.memory_space<vmem>>, %arg14: memref<64x64xf32, #tpu.memory_space<vmem>>, %arg15: memref<4x4x16xf32, #tpu.memory_space<vmem>>, %arg16: memref<16x1xf32, #tpu.memory_space<vmem>>, %arg17: memref<64x64xf32, #tpu.memory_space<vmem>>, %arg18: memref<16x1xf32, #tpu.memory_space<vmem>>, %arg19: memref<16x1xf32, #tpu.memory_space<vmem>>, %arg20: memref<32x16xf32, #tpu.memory_space<vmem>>, %arg21: memref<32x1xf32, #tpu.memory_space<vmem>>, %arg22: memref<16x32xf32, #tpu.memory_space<vmem>>, %arg23: memref<16x1xf32, #tpu.memory_space<vmem>>, %arg24: memref<16x1xf32, #tpu.memory_space<vmem>>, %arg25: memref<16x1xf32, #tpu.memory_space<vmem>>, %arg26: memref<16x16xf32, #tpu.memory_space<vmem>>, %arg27: memref<1x16x64xf32, #tpu.memory_space<vmem>>) attributes {dimension_semantics = [#tpu.dimension_semantics<parallel>], iteration_bounds = array<i64: 2>, scalar_prefetch = 0 : i64, scratch_operands = 0 : i64, tpu.core_type = #tpu.core_type<tc>, window_params = [{transform_indices = @transform_0, window_bounds = array<i64: 1, 16, 64>}, {transform_indices = @transform_1, window_bounds = array<i64: 1, 16, 64>}, {pipeline_mode = #tpu.pipeline_mode<synchronous>, transform_indices = @transform_2, window_bounds = array<i64: 64, 64>}, {pipeline_mode = #tpu.pipeline_mode<synchronous>, transform_indices = @transform_3, window_bounds = array<i64: 64, 64>}, {pipeline_mode = #tpu.pipeline_mode<synchronous>, transform_indices = @transform_4, window_bounds = array<i64: 64, 64>}, {pipeline_mode = #tpu.pipeline_mode<synchronous>, transform_indices = @transform_5, window_bounds = array<i64: 7, 16, 16>}, {pipeline_mode = #tpu.pipeline_mode<synchronous>, transform_indices = @transform_6, window_bounds = array<i64: 16, 1>}, {pipeline_mode = #tpu.pipeline_mode<synchronous>, transform_indices = @transform_7, window_bounds = array<i64: 16, 1>}, {pipeline_mode = #tpu.pipeline_mode<synchronous>, transform_indices = @transform_8, window_bounds = array<i64: 16, 1>}, {pipeline_mode = #tpu.pipeline_mode<synchronous>, transform_indices = @transform_9, window_bounds = array<i64: 4, 16, 4>}, {pipeline_mode = #tpu.pipeline_mode<synchronous>, transform_indices = @transform_10, window_bounds = array<i64: 4, 4, 16>}, {pipeline_mode = #tpu.pipeline_mode<synchronous>, transform_indices = @transform_11, window_bounds = array<i64: 4, 16, 4>}, {pipeline_mode = #tpu.pipeline_mode<synchronous>, transform_indices = @transform_12, window_bounds = array<i64: 64, 64>}, {pipeline_mode = #tpu.pipeline_mode<synchronous>, transform_indices = @transform_13, window_bounds = array<i64: 64, 64>}, {pipeline_mode = #tpu.pipeline_mode<synchronous>, transform_indices = @transform_14, window_bounds = array<i64: 4, 4, 16>}, {pipeline_mode = #tpu.pipeline_mode<synchronous>, transform_indices = @transform_15, window_bounds = array<i64: 16, 1>}, {pipeline_mode = #tpu.pipeline_mode<synchronous>, transform_indices = @transform_16, window_bounds = array<i64: 64, 64>}, {pipeline_mode = #tpu.pipeline_mode<synchronous>, transform_indices = @transform_17, window_bounds = array<i64: 16, 1>}, {pipeline_mode = #tpu.pipeline_mode<synchronous>, transform_indices = @transform_18, window_bounds = array<i64: 16, 1>}, {pipeline_mode = #tpu.pipeline_mode<synchronous>, transform_indices = @transform_19, window_bounds = array<i64: 32, 16>}, {pipeline_mode = #tpu.pipeline_mode<synchronous>, transform_indices = @transform_20, window_bounds = array<i64: 32, 1>}, {pipeline_mode = #tpu.pipeline_mode<synchronous>, transform_indices = @transform_21, window_bounds = array<i64: 16, 32>}, {pipeline_mode = #tpu.pipeline_mode<synchronous>, transform_indices = @transform_22, window_bounds = array<i64: 16, 1>}, {pipeline_mode = #tpu.pipeline_mode<synchronous>, transform_indices = @transform_23, window_bounds = array<i64: 16, 1>}, {pipeline_mode = #tpu.pipeline_mode<synchronous>, transform_indices = @transform_24, window_bounds = array<i64: 16, 1>}, {pipeline_mode = #tpu.pipeline_mode<synchronous>, transform_indices = @transform_25, window_bounds = array<i64: 16, 16>}, {transform_indices = @transform_26, window_bounds = array<i64: 1, 16, 64>}]} {
    %c0 = arith.constant 0 : index
    %c0_0 = arith.constant 0 : index
    %c0_1 = arith.constant 0 : index
    %0 = vector.load %arg1[%c0, %c0_0, %c0_1] : memref<1x16x64xf32, #tpu.memory_space<vmem>>, vector<1x16x64xf32>
    %1 = vector.shape_cast %0 : vector<1x16x64xf32> to vector<16x64xf32>
    %c0_2 = arith.constant 0 : index
    %c0_3 = arith.constant 0 : index
    %c0_4 = arith.constant 0 : index
    %2 = vector.load %arg2[%c0_2, %c0_3, %c0_4] : memref<1x16x64xf32, #tpu.memory_space<vmem>>, vector<1x16x64xf32>
    %3 = vector.shape_cast %2 : vector<1x16x64xf32> to vector<16x64xf32>
    %c0_5 = arith.constant 0 : index
    %c0_6 = arith.constant 0 : index
    %4 = vector.load %arg26[%c0_5, %c0_6] : memref<16x16xf32, #tpu.memory_space<vmem>>, vector<16x16xf32>
    %c0_7 = arith.constant 0 : index
    %c0_8 = arith.constant 0 : index
    %c0_9 = arith.constant 0 : index
    %5 = vector.load %arg6[%c0_7, %c0_8, %c0_9] : memref<7x16x16xf32, #tpu.memory_space<vmem>>, vector<1x16x16xf32>
    %6 = vector.shape_cast %5 : vector<1x16x16xf32> to vector<16x16xf32>
    %cst = arith.constant dense<0.000000e+00> : vector<16x64xf32>
    %7 = tpu.matmul %6, %1, %cst {dimension_numbers = #tpu.dot_dimension_numbers<[1], [0], [0], [1], [0, 0, 1, 1], [], []>} : vector<16x16xf32>, vector<16x64xf32>, vector<16x64xf32> -> vector<16x64xf32>
    %c0_10 = arith.constant 0 : index
    %c0_11 = arith.constant 0 : index
    %8 = vector.load %arg7[%c0_10, %c0_11] : memref<16x1xf32, #tpu.memory_space<vmem>>, vector<16x1xf32>
    %9 = vector.broadcast %8 : vector<16x1xf32> to vector<16x64xf32>
    %10 = arith.addf %7, %9 : vector<16x64xf32>
    %c0_12 = arith.constant 0 : index
    %c0_13 = arith.constant 0 : index
    %11 = vector.load %arg3[%c0_12, %c0_13] : memref<64x64xf32, #tpu.memory_space<vmem>>, vector<64x64xf32>
    %cst_14 = arith.constant dense<0.000000e+00> : vector<16x64xf32>
    %12 = tpu.matmul %1, %11, %cst_14 {dimension_numbers = #tpu.dot_dimension_numbers<[1], [0], [0], [1], [0, 0, 1, 1], [], []>} : vector<16x64xf32>, vector<64x64xf32>, vector<16x64xf32> -> vector<16x64xf32>
    %c1 = arith.constant 1 : index
    %c0_15 = arith.constant 0 : index
    %c0_16 = arith.constant 0 : index
    %13 = vector.load %arg6[%c1, %c0_15, %c0_16] : memref<7x16x16xf32, #tpu.memory_space<vmem>>, vector<1x16x16xf32>
    %14 = vector.shape_cast %13 : vector<1x16x16xf32> to vector<16x16xf32>
    %cst_17 = arith.constant dense<0.000000e+00> : vector<16x64xf32>
    %15 = tpu.matmul %14, %12, %cst_17 {dimension_numbers = #tpu.dot_dimension_numbers<[1], [0], [0], [1], [0, 0, 1, 1], [], []>} : vector<16x16xf32>, vector<16x64xf32>, vector<16x64xf32> -> vector<16x64xf32>
    %16 = arith.addf %10, %15 : vector<16x64xf32>
    %cst_18 = arith.constant dense<0.000000e+00> : vector<16x64xf32>
    %17 = tpu.matmul %12, %11, %cst_18 {dimension_numbers = #tpu.dot_dimension_numbers<[1], [0], [0], [1], [0, 0, 1, 1], [], []>} : vector<16x64xf32>, vector<64x64xf32>, vector<16x64xf32> -> vector<16x64xf32>
    %c2 = arith.constant 2 : index
    %c0_19 = arith.constant 0 : index
    %c0_20 = arith.constant 0 : index
    %18 = vector.load %arg6[%c2, %c0_19, %c0_20] : memref<7x16x16xf32, #tpu.memory_space<vmem>>, vector<1x16x16xf32>
    %19 = vector.shape_cast %18 : vector<1x16x16xf32> to vector<16x16xf32>
    %cst_21 = arith.constant dense<0.000000e+00> : vector<16x64xf32>
    %20 = tpu.matmul %19, %17, %cst_21 {dimension_numbers = #tpu.dot_dimension_numbers<[1], [0], [0], [1], [0, 0, 1, 1], [], []>} : vector<16x16xf32>, vector<16x64xf32>, vector<16x64xf32> -> vector<16x64xf32>
    %21 = arith.addf %16, %20 : vector<16x64xf32>
    %c0_22 = arith.constant 0 : index
    %c0_23 = arith.constant 0 : index
    %22 = vector.load %arg4[%c0_22, %c0_23] : memref<64x64xf32, #tpu.memory_space<vmem>>, vector<64x64xf32>
    %cst_24 = arith.constant dense<0.000000e+00> : vector<16x64xf32>
    %23 = tpu.matmul %1, %22, %cst_24 {dimension_numbers = #tpu.dot_dimension_numbers<[1], [0], [0], [1], [0, 0, 1, 1], [], []>} : vector<16x64xf32>, vector<64x64xf32>, vector<16x64xf32> -> vector<16x64xf32>
    %c3 = arith.constant 3 : index
    %c0_25 = arith.constant 0 : index
    %c0_26 = arith.constant 0 : index
    %24 = vector.load %arg6[%c3, %c0_25, %c0_26] : memref<7x16x16xf32, #tpu.memory_space<vmem>>, vector<1x16x16xf32>
    %25 = vector.shape_cast %24 : vector<1x16x16xf32> to vector<16x16xf32>
    %cst_27 = arith.constant dense<0.000000e+00> : vector<16x64xf32>
    %26 = tpu.matmul %25, %23, %cst_27 {dimension_numbers = #tpu.dot_dimension_numbers<[1], [0], [0], [1], [0, 0, 1, 1], [], []>} : vector<16x16xf32>, vector<16x64xf32>, vector<16x64xf32> -> vector<16x64xf32>
    %27 = arith.addf %21, %26 : vector<16x64xf32>
    %cst_28 = arith.constant dense<0.000000e+00> : vector<16x64xf32>
    %28 = tpu.matmul %23, %22, %cst_28 {dimension_numbers = #tpu.dot_dimension_numbers<[1], [0], [0], [1], [0, 0, 1, 1], [], []>} : vector<16x64xf32>, vector<64x64xf32>, vector<16x64xf32> -> vector<16x64xf32>
    %c4 = arith.constant 4 : index
    %c0_29 = arith.constant 0 : index
    %c0_30 = arith.constant 0 : index
    %29 = vector.load %arg6[%c4, %c0_29, %c0_30] : memref<7x16x16xf32, #tpu.memory_space<vmem>>, vector<1x16x16xf32>
    %30 = vector.shape_cast %29 : vector<1x16x16xf32> to vector<16x16xf32>
    %cst_31 = arith.constant dense<0.000000e+00> : vector<16x64xf32>
    %31 = tpu.matmul %30, %28, %cst_31 {dimension_numbers = #tpu.dot_dimension_numbers<[1], [0], [0], [1], [0, 0, 1, 1], [], []>} : vector<16x16xf32>, vector<16x64xf32>, vector<16x64xf32> -> vector<16x64xf32>
    %32 = arith.addf %27, %31 : vector<16x64xf32>
    %c0_32 = arith.constant 0 : index
    %c0_33 = arith.constant 0 : index
    %33 = vector.load %arg5[%c0_32, %c0_33] : memref<64x64xf32, #tpu.memory_space<vmem>>, vector<64x64xf32>
    %cst_34 = arith.constant dense<0.000000e+00> : vector<16x64xf32>
    %34 = tpu.matmul %1, %33, %cst_34 {dimension_numbers = #tpu.dot_dimension_numbers<[1], [0], [0], [1], [0, 0, 1, 1], [], []>} : vector<16x64xf32>, vector<64x64xf32>, vector<16x64xf32> -> vector<16x64xf32>
    %c5 = arith.constant 5 : index
    %c0_35 = arith.constant 0 : index
    %c0_36 = arith.constant 0 : index
    %35 = vector.load %arg6[%c5, %c0_35, %c0_36] : memref<7x16x16xf32, #tpu.memory_space<vmem>>, vector<1x16x16xf32>
    %36 = vector.shape_cast %35 : vector<1x16x16xf32> to vector<16x16xf32>
    %cst_37 = arith.constant dense<0.000000e+00> : vector<16x64xf32>
    %37 = tpu.matmul %36, %34, %cst_37 {dimension_numbers = #tpu.dot_dimension_numbers<[1], [0], [0], [1], [0, 0, 1, 1], [], []>} : vector<16x16xf32>, vector<16x64xf32>, vector<16x64xf32> -> vector<16x64xf32>
    %38 = arith.addf %32, %37 : vector<16x64xf32>
    %cst_38 = arith.constant dense<0.000000e+00> : vector<16x64xf32>
    %39 = tpu.matmul %34, %33, %cst_38 {dimension_numbers = #tpu.dot_dimension_numbers<[1], [0], [0], [1], [0, 0, 1, 1], [], []>} : vector<16x64xf32>, vector<64x64xf32>, vector<16x64xf32> -> vector<16x64xf32>
    %c6 = arith.constant 6 : index
    %c0_39 = arith.constant 0 : index
    %c0_40 = arith.constant 0 : index
    %40 = vector.load %arg6[%c6, %c0_39, %c0_40] : memref<7x16x16xf32, #tpu.memory_space<vmem>>, vector<1x16x16xf32>
    %41 = vector.shape_cast %40 : vector<1x16x16xf32> to vector<16x16xf32>
    %cst_41 = arith.constant dense<0.000000e+00> : vector<16x64xf32>
    %42 = tpu.matmul %41, %39, %cst_41 {dimension_numbers = #tpu.dot_dimension_numbers<[1], [0], [0], [1], [0, 0, 1, 1], [], []>} : vector<16x16xf32>, vector<16x64xf32>, vector<16x64xf32> -> vector<16x64xf32>
    %43 = arith.addf %38, %42 : vector<16x64xf32>
    %44 = arith.addf %1, %43 : vector<16x64xf32>
    %c0_42 = arith.constant 0 : index
    %c0_43 = arith.constant 0 : index
    %45 = vector.load %arg8[%c0_42, %c0_43] : memref<16x1xf32, #tpu.memory_space<vmem>>, vector<16x1xf32>
    %c0_44 = arith.constant 0 : index
    %c0_45 = arith.constant 0 : index
    %46 = vector.load %arg9[%c0_44, %c0_45] : memref<16x1xf32, #tpu.memory_space<vmem>>, vector<16x1xf32>
    %cst_46 = arith.constant dense<0.000000e+00> : vector<16x64xf32>
    %47 = tpu.matmul %4, %44, %cst_46 {dimension_numbers = #tpu.dot_dimension_numbers<[1], [0], [0], [1], [0, 0, 1, 1], [], []>} : vector<16x16xf32>, vector<16x64xf32>, vector<16x64xf32> -> vector<16x64xf32>
    %cst_47 = arith.constant dense<0.000000e+00> : vector<16xf32>
    %48 = vector.multi_reduction <add>, %47, %cst_47 [1] : vector<16x64xf32> to vector<16xf32>
    %49 = vector.shape_cast %48 : vector<16xf32> to vector<16x1xf32>
    %50 = arith.mulf %44, %44 : vector<16x64xf32>
    %cst_48 = arith.constant dense<0.000000e+00> : vector<16x64xf32>
    %51 = tpu.matmul %4, %50, %cst_48 {dimension_numbers = #tpu.dot_dimension_numbers<[1], [0], [0], [1], [0, 0, 1, 1], [], []>} : vector<16x16xf32>, vector<16x64xf32>, vector<16x64xf32> -> vector<16x64xf32>
    %cst_49 = arith.constant dense<0.000000e+00> : vector<16xf32>
    %52 = vector.multi_reduction <add>, %51, %cst_49 [1] : vector<16x64xf32> to vector<16xf32>
    %53 = vector.shape_cast %52 : vector<16xf32> to vector<16x1xf32>
    %54 = arith.mulf %49, %49 : vector<16x1xf32>
    %55 = arith.subf %53, %54 : vector<16x1xf32>
    %cst_50 = arith.constant 9.99999974E-6 : f32
    %56 = vector.broadcast %cst_50 : f32 to vector<16x1xf32>
    %57 = arith.addf %55, %56 : vector<16x1xf32>
    %58 = math.rsqrt %57 : vector<16x1xf32>
    %59 = vector.broadcast %49 : vector<16x1xf32> to vector<16x64xf32>
    %60 = arith.subf %44, %59 : vector<16x64xf32>
    %61 = vector.broadcast %58 : vector<16x1xf32> to vector<16x64xf32>
    %62 = arith.mulf %60, %61 : vector<16x64xf32>
    %63 = vector.broadcast %45 : vector<16x1xf32> to vector<16x64xf32>
    %64 = arith.mulf %62, %63 : vector<16x64xf32>
    %65 = vector.broadcast %46 : vector<16x1xf32> to vector<16x64xf32>
    %66 = arith.addf %64, %65 : vector<16x64xf32>
    %c0_51 = arith.constant 0 : index
    %c0_52 = arith.constant 0 : index
    %67 = vector.load %arg17[%c0_51, %c0_52] : memref<64x64xf32, #tpu.memory_space<vmem>>, vector<64x64xf32>
    %68 = tpu.transpose %3, [1, 0] : vector<16x64xf32> -> vector<64x16xf32>
    %69 = tpu.transpose %1, [1, 0] : vector<16x64xf32> -> vector<64x16xf32>
    %c0_53 = arith.constant 0 : index
    %c0_54 = arith.constant 0 : index
    %70 = vector.load %arg13[%c0_53, %c0_54] : memref<64x64xf32, #tpu.memory_space<vmem>>, vector<64x64xf32>
    %cst_55 = arith.constant dense<0.000000e+00> : vector<16x64xf32>
    %71 = tpu.matmul %3, %70, %cst_55 {dimension_numbers = #tpu.dot_dimension_numbers<[1], [0], [0], [1], [0, 0, 1, 1], [], []>} : vector<16x64xf32>, vector<64x64xf32>, vector<16x64xf32> -> vector<16x64xf32>
    %c0_56 = arith.constant 0 : index
    %c0_57 = arith.constant 0 : index
    %72 = vector.load %arg14[%c0_56, %c0_57] : memref<64x64xf32, #tpu.memory_space<vmem>>, vector<64x64xf32>
    %cst_58 = arith.constant dense<0.000000e+00> : vector<64x16xf32>
    %73 = tpu.matmul %72, %69, %cst_58 {dimension_numbers = #tpu.dot_dimension_numbers<[1], [0], [0], [1], [0, 0, 1, 1], [], []>} : vector<64x64xf32>, vector<64x16xf32>, vector<64x16xf32> -> vector<64x16xf32>
    %cst_59 = arith.constant 0.000000e+00 : f32
    %74 = vector.broadcast %cst_59 : f32 to vector<64x16xf32>
    %c0_60 = arith.constant 0 : index
    %c0_61 = arith.constant 0 : index
    %c0_62 = arith.constant 0 : index
    %75 = vector.load %arg10[%c0_60, %c0_61, %c0_62] : memref<4x16x4xf32, #tpu.memory_space<vmem>>, vector<1x16x4xf32>
    %76 = vector.shape_cast %75 : vector<1x16x4xf32> to vector<16x4xf32>
    %cst_63 = arith.constant dense<0.000000e+00> : vector<64x4xf32>
    %77 = tpu.matmul %68, %76, %cst_63 {dimension_numbers = #tpu.dot_dimension_numbers<[1], [0], [0], [1], [0, 0, 1, 1], [], []>} : vector<64x16xf32>, vector<16x4xf32>, vector<64x4xf32> -> vector<64x4xf32>
    %c0_64 = arith.constant 0 : index
    %c0_65 = arith.constant 0 : index
    %c0_66 = arith.constant 0 : index
    %78 = vector.load %arg11[%c0_64, %c0_65, %c0_66] : memref<4x4x16xf32, #tpu.memory_space<vmem>>, vector<1x4x16xf32>
    %79 = vector.shape_cast %78 : vector<1x4x16xf32> to vector<4x16xf32>
    %cst_67 = arith.constant dense<0.000000e+00> : vector<4x64xf32>
    %80 = tpu.matmul %79, %71, %cst_67 {dimension_numbers = #tpu.dot_dimension_numbers<[1], [0], [0], [1], [0, 0, 1, 1], [], []>} : vector<4x16xf32>, vector<16x64xf32>, vector<4x64xf32> -> vector<4x64xf32>
    %c0_68 = arith.constant 0 : index
    %c0_69 = arith.constant 0 : index
    %c0_70 = arith.constant 0 : index
    %81 = vector.load %arg12[%c0_68, %c0_69, %c0_70] : memref<4x16x4xf32, #tpu.memory_space<vmem>>, vector<1x16x4xf32>
    %82 = vector.shape_cast %81 : vector<1x16x4xf32> to vector<16x4xf32>
    %cst_71 = arith.constant dense<0.000000e+00> : vector<64x4xf32>
    %83 = tpu.matmul %73, %82, %cst_71 {dimension_numbers = #tpu.dot_dimension_numbers<[1], [0], [0], [1], [0, 0, 1, 1], [], []>} : vector<64x16xf32>, vector<16x4xf32>, vector<64x4xf32> -> vector<64x4xf32>
    %cst_72 = arith.constant dense<0.000000e+00> : vector<64x64xf32>
    %84 = tpu.matmul %77, %80, %cst_72 {dimension_numbers = #tpu.dot_dimension_numbers<[1], [0], [0], [1], [0, 0, 1, 1], [], []>} : vector<64x4xf32>, vector<4x64xf32>, vector<64x64xf32> -> vector<64x64xf32>
    %cst_73 = arith.constant 5.000000e-01 : f32
    %85 = vector.broadcast %cst_73 : f32 to vector<64x64xf32>
    %86 = arith.mulf %84, %85 : vector<64x64xf32>
    %87 = arith.addf %86, %67 : vector<64x64xf32>
    %cst_74 = arith.constant dense<0xFF800000> : vector<64xf32>
    %88 = vector.multi_reduction <maximumf>, %87, %cst_74 [1] : vector<64x64xf32> to vector<64xf32>
    %89 = vector.shape_cast %88 : vector<64xf32> to vector<64x1xf32>
    %90 = vector.broadcast %89 : vector<64x1xf32> to vector<64x64xf32>
    %91 = arith.subf %87, %90 : vector<64x64xf32>
    %92 = math.exp %91 : vector<64x64xf32>
    %cst_75 = arith.constant dense<0.000000e+00> : vector<64xf32>
    %93 = vector.multi_reduction <add>, %92, %cst_75 [1] : vector<64x64xf32> to vector<64xf32>
    %94 = vector.shape_cast %93 : vector<64xf32> to vector<64x1xf32>
    %95 = vector.broadcast %94 : vector<64x1xf32> to vector<64x64xf32>
    %96 = arith.divf %92, %95 : vector<64x64xf32>
    %cst_76 = arith.constant dense<0.000000e+00> : vector<64x4xf32>
    %97 = tpu.matmul %96, %83, %cst_76 {dimension_numbers = #tpu.dot_dimension_numbers<[1], [0], [0], [1], [0, 0, 1, 1], [], []>} : vector<64x64xf32>, vector<64x4xf32>, vector<64x4xf32> -> vector<64x4xf32>
    %c0_77 = arith.constant 0 : index
    %c0_78 = arith.constant 0 : index
    %c0_79 = arith.constant 0 : index
    %98 = vector.load %arg15[%c0_77, %c0_78, %c0_79] : memref<4x4x16xf32, #tpu.memory_space<vmem>>, vector<1x4x16xf32>
    %99 = vector.shape_cast %98 : vector<1x4x16xf32> to vector<4x16xf32>
    %cst_80 = arith.constant dense<0.000000e+00> : vector<64x16xf32>
    %100 = tpu.matmul %97, %99, %cst_80 {dimension_numbers = #tpu.dot_dimension_numbers<[1], [0], [0], [1], [0, 0, 1, 1], [], []>} : vector<64x4xf32>, vector<4x16xf32>, vector<64x16xf32> -> vector<64x16xf32>
    %101 = arith.addf %74, %100 : vector<64x16xf32>
    %c1_81 = arith.constant 1 : index
    %c0_82 = arith.constant 0 : index
    %c0_83 = arith.constant 0 : index
    %102 = vector.load %arg10[%c1_81, %c0_82, %c0_83] : memref<4x16x4xf32, #tpu.memory_space<vmem>>, vector<1x16x4xf32>
    %103 = vector.shape_cast %102 : vector<1x16x4xf32> to vector<16x4xf32>
    %cst_84 = arith.constant dense<0.000000e+00> : vector<64x4xf32>
    %104 = tpu.matmul %68, %103, %cst_84 {dimension_numbers = #tpu.dot_dimension_numbers<[1], [0], [0], [1], [0, 0, 1, 1], [], []>} : vector<64x16xf32>, vector<16x4xf32>, vector<64x4xf32> -> vector<64x4xf32>
    %c1_85 = arith.constant 1 : index
    %c0_86 = arith.constant 0 : index
    %c0_87 = arith.constant 0 : index
    %105 = vector.load %arg11[%c1_85, %c0_86, %c0_87] : memref<4x4x16xf32, #tpu.memory_space<vmem>>, vector<1x4x16xf32>
    %106 = vector.shape_cast %105 : vector<1x4x16xf32> to vector<4x16xf32>
    %cst_88 = arith.constant dense<0.000000e+00> : vector<4x64xf32>
    %107 = tpu.matmul %106, %71, %cst_88 {dimension_numbers = #tpu.dot_dimension_numbers<[1], [0], [0], [1], [0, 0, 1, 1], [], []>} : vector<4x16xf32>, vector<16x64xf32>, vector<4x64xf32> -> vector<4x64xf32>
    %c1_89 = arith.constant 1 : index
    %c0_90 = arith.constant 0 : index
    %c0_91 = arith.constant 0 : index
    %108 = vector.load %arg12[%c1_89, %c0_90, %c0_91] : memref<4x16x4xf32, #tpu.memory_space<vmem>>, vector<1x16x4xf32>
    %109 = vector.shape_cast %108 : vector<1x16x4xf32> to vector<16x4xf32>
    %cst_92 = arith.constant dense<0.000000e+00> : vector<64x4xf32>
    %110 = tpu.matmul %73, %109, %cst_92 {dimension_numbers = #tpu.dot_dimension_numbers<[1], [0], [0], [1], [0, 0, 1, 1], [], []>} : vector<64x16xf32>, vector<16x4xf32>, vector<64x4xf32> -> vector<64x4xf32>
    %cst_93 = arith.constant dense<0.000000e+00> : vector<64x64xf32>
    %111 = tpu.matmul %104, %107, %cst_93 {dimension_numbers = #tpu.dot_dimension_numbers<[1], [0], [0], [1], [0, 0, 1, 1], [], []>} : vector<64x4xf32>, vector<4x64xf32>, vector<64x64xf32> -> vector<64x64xf32>
    %cst_94 = arith.constant 5.000000e-01 : f32
    %112 = vector.broadcast %cst_94 : f32 to vector<64x64xf32>
    %113 = arith.mulf %111, %112 : vector<64x64xf32>
    %114 = arith.addf %113, %67 : vector<64x64xf32>
    %cst_95 = arith.constant dense<0xFF800000> : vector<64xf32>
    %115 = vector.multi_reduction <maximumf>, %114, %cst_95 [1] : vector<64x64xf32> to vector<64xf32>
    %116 = vector.shape_cast %115 : vector<64xf32> to vector<64x1xf32>
    %117 = vector.broadcast %116 : vector<64x1xf32> to vector<64x64xf32>
    %118 = arith.subf %114, %117 : vector<64x64xf32>
    %119 = math.exp %118 : vector<64x64xf32>
    %cst_96 = arith.constant dense<0.000000e+00> : vector<64xf32>
    %120 = vector.multi_reduction <add>, %119, %cst_96 [1] : vector<64x64xf32> to vector<64xf32>
    %121 = vector.shape_cast %120 : vector<64xf32> to vector<64x1xf32>
    %122 = vector.broadcast %121 : vector<64x1xf32> to vector<64x64xf32>
    %123 = arith.divf %119, %122 : vector<64x64xf32>
    %cst_97 = arith.constant dense<0.000000e+00> : vector<64x4xf32>
    %124 = tpu.matmul %123, %110, %cst_97 {dimension_numbers = #tpu.dot_dimension_numbers<[1], [0], [0], [1], [0, 0, 1, 1], [], []>} : vector<64x64xf32>, vector<64x4xf32>, vector<64x4xf32> -> vector<64x4xf32>
    %c1_98 = arith.constant 1 : index
    %c0_99 = arith.constant 0 : index
    %c0_100 = arith.constant 0 : index
    %125 = vector.load %arg15[%c1_98, %c0_99, %c0_100] : memref<4x4x16xf32, #tpu.memory_space<vmem>>, vector<1x4x16xf32>
    %126 = vector.shape_cast %125 : vector<1x4x16xf32> to vector<4x16xf32>
    %cst_101 = arith.constant dense<0.000000e+00> : vector<64x16xf32>
    %127 = tpu.matmul %124, %126, %cst_101 {dimension_numbers = #tpu.dot_dimension_numbers<[1], [0], [0], [1], [0, 0, 1, 1], [], []>} : vector<64x4xf32>, vector<4x16xf32>, vector<64x16xf32> -> vector<64x16xf32>
    %128 = arith.addf %101, %127 : vector<64x16xf32>
    %c2_102 = arith.constant 2 : index
    %c0_103 = arith.constant 0 : index
    %c0_104 = arith.constant 0 : index
    %129 = vector.load %arg10[%c2_102, %c0_103, %c0_104] : memref<4x16x4xf32, #tpu.memory_space<vmem>>, vector<1x16x4xf32>
    %130 = vector.shape_cast %129 : vector<1x16x4xf32> to vector<16x4xf32>
    %cst_105 = arith.constant dense<0.000000e+00> : vector<64x4xf32>
    %131 = tpu.matmul %68, %130, %cst_105 {dimension_numbers = #tpu.dot_dimension_numbers<[1], [0], [0], [1], [0, 0, 1, 1], [], []>} : vector<64x16xf32>, vector<16x4xf32>, vector<64x4xf32> -> vector<64x4xf32>
    %c2_106 = arith.constant 2 : index
    %c0_107 = arith.constant 0 : index
    %c0_108 = arith.constant 0 : index
    %132 = vector.load %arg11[%c2_106, %c0_107, %c0_108] : memref<4x4x16xf32, #tpu.memory_space<vmem>>, vector<1x4x16xf32>
    %133 = vector.shape_cast %132 : vector<1x4x16xf32> to vector<4x16xf32>
    %cst_109 = arith.constant dense<0.000000e+00> : vector<4x64xf32>
    %134 = tpu.matmul %133, %71, %cst_109 {dimension_numbers = #tpu.dot_dimension_numbers<[1], [0], [0], [1], [0, 0, 1, 1], [], []>} : vector<4x16xf32>, vector<16x64xf32>, vector<4x64xf32> -> vector<4x64xf32>
    %c2_110 = arith.constant 2 : index
    %c0_111 = arith.constant 0 : index
    %c0_112 = arith.constant 0 : index
    %135 = vector.load %arg12[%c2_110, %c0_111, %c0_112] : memref<4x16x4xf32, #tpu.memory_space<vmem>>, vector<1x16x4xf32>
    %136 = vector.shape_cast %135 : vector<1x16x4xf32> to vector<16x4xf32>
    %cst_113 = arith.constant dense<0.000000e+00> : vector<64x4xf32>
    %137 = tpu.matmul %73, %136, %cst_113 {dimension_numbers = #tpu.dot_dimension_numbers<[1], [0], [0], [1], [0, 0, 1, 1], [], []>} : vector<64x16xf32>, vector<16x4xf32>, vector<64x4xf32> -> vector<64x4xf32>
    %cst_114 = arith.constant dense<0.000000e+00> : vector<64x64xf32>
    %138 = tpu.matmul %131, %134, %cst_114 {dimension_numbers = #tpu.dot_dimension_numbers<[1], [0], [0], [1], [0, 0, 1, 1], [], []>} : vector<64x4xf32>, vector<4x64xf32>, vector<64x64xf32> -> vector<64x64xf32>
    %cst_115 = arith.constant 5.000000e-01 : f32
    %139 = vector.broadcast %cst_115 : f32 to vector<64x64xf32>
    %140 = arith.mulf %138, %139 : vector<64x64xf32>
    %141 = arith.addf %140, %67 : vector<64x64xf32>
    %cst_116 = arith.constant dense<0xFF800000> : vector<64xf32>
    %142 = vector.multi_reduction <maximumf>, %141, %cst_116 [1] : vector<64x64xf32> to vector<64xf32>
    %143 = vector.shape_cast %142 : vector<64xf32> to vector<64x1xf32>
    %144 = vector.broadcast %143 : vector<64x1xf32> to vector<64x64xf32>
    %145 = arith.subf %141, %144 : vector<64x64xf32>
    %146 = math.exp %145 : vector<64x64xf32>
    %cst_117 = arith.constant dense<0.000000e+00> : vector<64xf32>
    %147 = vector.multi_reduction <add>, %146, %cst_117 [1] : vector<64x64xf32> to vector<64xf32>
    %148 = vector.shape_cast %147 : vector<64xf32> to vector<64x1xf32>
    %149 = vector.broadcast %148 : vector<64x1xf32> to vector<64x64xf32>
    %150 = arith.divf %146, %149 : vector<64x64xf32>
    %cst_118 = arith.constant dense<0.000000e+00> : vector<64x4xf32>
    %151 = tpu.matmul %150, %137, %cst_118 {dimension_numbers = #tpu.dot_dimension_numbers<[1], [0], [0], [1], [0, 0, 1, 1], [], []>} : vector<64x64xf32>, vector<64x4xf32>, vector<64x4xf32> -> vector<64x4xf32>
    %c2_119 = arith.constant 2 : index
    %c0_120 = arith.constant 0 : index
    %c0_121 = arith.constant 0 : index
    %152 = vector.load %arg15[%c2_119, %c0_120, %c0_121] : memref<4x4x16xf32, #tpu.memory_space<vmem>>, vector<1x4x16xf32>
    %153 = vector.shape_cast %152 : vector<1x4x16xf32> to vector<4x16xf32>
    %cst_122 = arith.constant dense<0.000000e+00> : vector<64x16xf32>
    %154 = tpu.matmul %151, %153, %cst_122 {dimension_numbers = #tpu.dot_dimension_numbers<[1], [0], [0], [1], [0, 0, 1, 1], [], []>} : vector<64x4xf32>, vector<4x16xf32>, vector<64x16xf32> -> vector<64x16xf32>
    %155 = arith.addf %128, %154 : vector<64x16xf32>
    %c3_123 = arith.constant 3 : index
    %c0_124 = arith.constant 0 : index
    %c0_125 = arith.constant 0 : index
    %156 = vector.load %arg10[%c3_123, %c0_124, %c0_125] : memref<4x16x4xf32, #tpu.memory_space<vmem>>, vector<1x16x4xf32>
    %157 = vector.shape_cast %156 : vector<1x16x4xf32> to vector<16x4xf32>
    %cst_126 = arith.constant dense<0.000000e+00> : vector<64x4xf32>
    %158 = tpu.matmul %68, %157, %cst_126 {dimension_numbers = #tpu.dot_dimension_numbers<[1], [0], [0], [1], [0, 0, 1, 1], [], []>} : vector<64x16xf32>, vector<16x4xf32>, vector<64x4xf32> -> vector<64x4xf32>
    %c3_127 = arith.constant 3 : index
    %c0_128 = arith.constant 0 : index
    %c0_129 = arith.constant 0 : index
    %159 = vector.load %arg11[%c3_127, %c0_128, %c0_129] : memref<4x4x16xf32, #tpu.memory_space<vmem>>, vector<1x4x16xf32>
    %160 = vector.shape_cast %159 : vector<1x4x16xf32> to vector<4x16xf32>
    %cst_130 = arith.constant dense<0.000000e+00> : vector<4x64xf32>
    %161 = tpu.matmul %160, %71, %cst_130 {dimension_numbers = #tpu.dot_dimension_numbers<[1], [0], [0], [1], [0, 0, 1, 1], [], []>} : vector<4x16xf32>, vector<16x64xf32>, vector<4x64xf32> -> vector<4x64xf32>
    %c3_131 = arith.constant 3 : index
    %c0_132 = arith.constant 0 : index
    %c0_133 = arith.constant 0 : index
    %162 = vector.load %arg12[%c3_131, %c0_132, %c0_133] : memref<4x16x4xf32, #tpu.memory_space<vmem>>, vector<1x16x4xf32>
    %163 = vector.shape_cast %162 : vector<1x16x4xf32> to vector<16x4xf32>
    %cst_134 = arith.constant dense<0.000000e+00> : vector<64x4xf32>
    %164 = tpu.matmul %73, %163, %cst_134 {dimension_numbers = #tpu.dot_dimension_numbers<[1], [0], [0], [1], [0, 0, 1, 1], [], []>} : vector<64x16xf32>, vector<16x4xf32>, vector<64x4xf32> -> vector<64x4xf32>
    %cst_135 = arith.constant dense<0.000000e+00> : vector<64x64xf32>
    %165 = tpu.matmul %158, %161, %cst_135 {dimension_numbers = #tpu.dot_dimension_numbers<[1], [0], [0], [1], [0, 0, 1, 1], [], []>} : vector<64x4xf32>, vector<4x64xf32>, vector<64x64xf32> -> vector<64x64xf32>
    %cst_136 = arith.constant 5.000000e-01 : f32
    %166 = vector.broadcast %cst_136 : f32 to vector<64x64xf32>
    %167 = arith.mulf %165, %166 : vector<64x64xf32>
    %168 = arith.addf %167, %67 : vector<64x64xf32>
    %cst_137 = arith.constant dense<0xFF800000> : vector<64xf32>
    %169 = vector.multi_reduction <maximumf>, %168, %cst_137 [1] : vector<64x64xf32> to vector<64xf32>
    %170 = vector.shape_cast %169 : vector<64xf32> to vector<64x1xf32>
    %171 = vector.broadcast %170 : vector<64x1xf32> to vector<64x64xf32>
    %172 = arith.subf %168, %171 : vector<64x64xf32>
    %173 = math.exp %172 : vector<64x64xf32>
    %cst_138 = arith.constant dense<0.000000e+00> : vector<64xf32>
    %174 = vector.multi_reduction <add>, %173, %cst_138 [1] : vector<64x64xf32> to vector<64xf32>
    %175 = vector.shape_cast %174 : vector<64xf32> to vector<64x1xf32>
    %176 = vector.broadcast %175 : vector<64x1xf32> to vector<64x64xf32>
    %177 = arith.divf %173, %176 : vector<64x64xf32>
    %cst_139 = arith.constant dense<0.000000e+00> : vector<64x4xf32>
    %178 = tpu.matmul %177, %164, %cst_139 {dimension_numbers = #tpu.dot_dimension_numbers<[1], [0], [0], [1], [0, 0, 1, 1], [], []>} : vector<64x64xf32>, vector<64x4xf32>, vector<64x4xf32> -> vector<64x4xf32>
    %c3_140 = arith.constant 3 : index
    %c0_141 = arith.constant 0 : index
    %c0_142 = arith.constant 0 : index
    %179 = vector.load %arg15[%c3_140, %c0_141, %c0_142] : memref<4x4x16xf32, #tpu.memory_space<vmem>>, vector<1x4x16xf32>
    %180 = vector.shape_cast %179 : vector<1x4x16xf32> to vector<4x16xf32>
    %cst_143 = arith.constant dense<0.000000e+00> : vector<64x16xf32>
    %181 = tpu.matmul %178, %180, %cst_143 {dimension_numbers = #tpu.dot_dimension_numbers<[1], [0], [0], [1], [0, 0, 1, 1], [], []>} : vector<64x4xf32>, vector<4x16xf32>, vector<64x16xf32> -> vector<64x16xf32>
    %182 = arith.addf %155, %181 : vector<64x16xf32>
    %183 = tpu.transpose %182, [1, 0] : vector<64x16xf32> -> vector<16x64xf32>
    %c0_144 = arith.constant 0 : index
    %c0_145 = arith.constant 0 : index
    %184 = vector.load %arg16[%c0_144, %c0_145] : memref<16x1xf32, #tpu.memory_space<vmem>>, vector<16x1xf32>
    %185 = vector.broadcast %184 : vector<16x1xf32> to vector<16x64xf32>
    %186 = arith.addf %183, %185 : vector<16x64xf32>
    %187 = arith.addf %1, %186 : vector<16x64xf32>
    %c0_146 = arith.constant 0 : index
    %c0_147 = arith.constant 0 : index
    %188 = vector.load %arg18[%c0_146, %c0_147] : memref<16x1xf32, #tpu.memory_space<vmem>>, vector<16x1xf32>
    %c0_148 = arith.constant 0 : index
    %c0_149 = arith.constant 0 : index
    %189 = vector.load %arg19[%c0_148, %c0_149] : memref<16x1xf32, #tpu.memory_space<vmem>>, vector<16x1xf32>
    %cst_150 = arith.constant dense<0.000000e+00> : vector<16x64xf32>
    %190 = tpu.matmul %4, %187, %cst_150 {dimension_numbers = #tpu.dot_dimension_numbers<[1], [0], [0], [1], [0, 0, 1, 1], [], []>} : vector<16x16xf32>, vector<16x64xf32>, vector<16x64xf32> -> vector<16x64xf32>
    %cst_151 = arith.constant dense<0.000000e+00> : vector<16xf32>
    %191 = vector.multi_reduction <add>, %190, %cst_151 [1] : vector<16x64xf32> to vector<16xf32>
    %192 = vector.shape_cast %191 : vector<16xf32> to vector<16x1xf32>
    %193 = arith.mulf %187, %187 : vector<16x64xf32>
    %cst_152 = arith.constant dense<0.000000e+00> : vector<16x64xf32>
    %194 = tpu.matmul %4, %193, %cst_152 {dimension_numbers = #tpu.dot_dimension_numbers<[1], [0], [0], [1], [0, 0, 1, 1], [], []>} : vector<16x16xf32>, vector<16x64xf32>, vector<16x64xf32> -> vector<16x64xf32>
    %cst_153 = arith.constant dense<0.000000e+00> : vector<16xf32>
    %195 = vector.multi_reduction <add>, %194, %cst_153 [1] : vector<16x64xf32> to vector<16xf32>
    %196 = vector.shape_cast %195 : vector<16xf32> to vector<16x1xf32>
    %197 = arith.mulf %192, %192 : vector<16x1xf32>
    %198 = arith.subf %196, %197 : vector<16x1xf32>
    %cst_154 = arith.constant 9.99999974E-6 : f32
    %199 = vector.broadcast %cst_154 : f32 to vector<16x1xf32>
    %200 = arith.addf %198, %199 : vector<16x1xf32>
    %201 = math.rsqrt %200 : vector<16x1xf32>
    %202 = vector.broadcast %192 : vector<16x1xf32> to vector<16x64xf32>
    %203 = arith.subf %187, %202 : vector<16x64xf32>
    %204 = vector.broadcast %201 : vector<16x1xf32> to vector<16x64xf32>
    %205 = arith.mulf %203, %204 : vector<16x64xf32>
    %206 = vector.broadcast %188 : vector<16x1xf32> to vector<16x64xf32>
    %207 = arith.mulf %205, %206 : vector<16x64xf32>
    %208 = vector.broadcast %189 : vector<16x1xf32> to vector<16x64xf32>
    %209 = arith.addf %207, %208 : vector<16x64xf32>
    %210 = arith.addf %66, %209 : vector<16x64xf32>
    %c0_155 = arith.constant 0 : index
    %c0_156 = arith.constant 0 : index
    %211 = vector.load %arg20[%c0_155, %c0_156] : memref<32x16xf32, #tpu.memory_space<vmem>>, vector<32x16xf32>
    %cst_157 = arith.constant dense<0.000000e+00> : vector<32x64xf32>
    %212 = tpu.matmul %211, %210, %cst_157 {dimension_numbers = #tpu.dot_dimension_numbers<[1], [0], [0], [1], [0, 0, 1, 1], [], []>} : vector<32x16xf32>, vector<16x64xf32>, vector<32x64xf32> -> vector<32x64xf32>
    %c0_158 = arith.constant 0 : index
    %c0_159 = arith.constant 0 : index
    %213 = vector.load %arg21[%c0_158, %c0_159] : memref<32x1xf32, #tpu.memory_space<vmem>>, vector<32x1xf32>
    %214 = vector.broadcast %213 : vector<32x1xf32> to vector<32x64xf32>
    %215 = arith.addf %212, %214 : vector<32x64xf32>
    %cst_160 = arith.constant 0.000000e+00 : f32
    %216 = vector.broadcast %cst_160 : f32 to vector<32x64xf32>
    %217 = arith.maximumf %215, %216 : vector<32x64xf32>
    %c0_161 = arith.constant 0 : index
    %c0_162 = arith.constant 0 : index
    %218 = vector.load %arg22[%c0_161, %c0_162] : memref<16x32xf32, #tpu.memory_space<vmem>>, vector<16x32xf32>
    %cst_163 = arith.constant dense<0.000000e+00> : vector<16x64xf32>
    %219 = tpu.matmul %218, %217, %cst_163 {dimension_numbers = #tpu.dot_dimension_numbers<[1], [0], [0], [1], [0, 0, 1, 1], [], []>} : vector<16x32xf32>, vector<32x64xf32>, vector<16x64xf32> -> vector<16x64xf32>
    %c0_164 = arith.constant 0 : index
    %c0_165 = arith.constant 0 : index
    %220 = vector.load %arg23[%c0_164, %c0_165] : memref<16x1xf32, #tpu.memory_space<vmem>>, vector<16x1xf32>
    %221 = vector.broadcast %220 : vector<16x1xf32> to vector<16x64xf32>
    %222 = arith.addf %219, %221 : vector<16x64xf32>
    %223 = arith.addf %222, %210 : vector<16x64xf32>
    %c0_166 = arith.constant 0 : index
    %c0_167 = arith.constant 0 : index
    %224 = vector.load %arg24[%c0_166, %c0_167] : memref<16x1xf32, #tpu.memory_space<vmem>>, vector<16x1xf32>
    %c0_168 = arith.constant 0 : index
    %c0_169 = arith.constant 0 : index
    %225 = vector.load %arg25[%c0_168, %c0_169] : memref<16x1xf32, #tpu.memory_space<vmem>>, vector<16x1xf32>
    %cst_170 = arith.constant dense<0.000000e+00> : vector<16x64xf32>
    %226 = tpu.matmul %4, %223, %cst_170 {dimension_numbers = #tpu.dot_dimension_numbers<[1], [0], [0], [1], [0, 0, 1, 1], [], []>} : vector<16x16xf32>, vector<16x64xf32>, vector<16x64xf32> -> vector<16x64xf32>
    %cst_171 = arith.constant dense<0.000000e+00> : vector<16xf32>
    %227 = vector.multi_reduction <add>, %226, %cst_171 [1] : vector<16x64xf32> to vector<16xf32>
    %228 = vector.shape_cast %227 : vector<16xf32> to vector<16x1xf32>
    %229 = arith.mulf %223, %223 : vector<16x64xf32>
    %cst_172 = arith.constant dense<0.000000e+00> : vector<16x64xf32>
    %230 = tpu.matmul %4, %229, %cst_172 {dimension_numbers = #tpu.dot_dimension_numbers<[1], [0], [0], [1], [0, 0, 1, 1], [], []>} : vector<16x16xf32>, vector<16x64xf32>, vector<16x64xf32> -> vector<16x64xf32>
    %cst_173 = arith.constant dense<0.000000e+00> : vector<16xf32>
    %231 = vector.multi_reduction <add>, %230, %cst_173 [1] : vector<16x64xf32> to vector<16xf32>
    %232 = vector.shape_cast %231 : vector<16xf32> to vector<16x1xf32>
    %233 = arith.mulf %228, %228 : vector<16x1xf32>
    %234 = arith.subf %232, %233 : vector<16x1xf32>
    %cst_174 = arith.constant 9.99999974E-6 : f32
    %235 = vector.broadcast %cst_174 : f32 to vector<16x1xf32>
    %236 = arith.addf %234, %235 : vector<16x1xf32>
    %237 = math.rsqrt %236 : vector<16x1xf32>
    %238 = vector.broadcast %228 : vector<16x1xf32> to vector<16x64xf32>
    %239 = arith.subf %223, %238 : vector<16x64xf32>
    %240 = vector.broadcast %237 : vector<16x1xf32> to vector<16x64xf32>
    %241 = arith.mulf %239, %240 : vector<16x64xf32>
    %242 = vector.broadcast %224 : vector<16x1xf32> to vector<16x64xf32>
    %243 = arith.mulf %241, %242 : vector<16x64xf32>
    %244 = vector.broadcast %225 : vector<16x1xf32> to vector<16x64xf32>
    %245 = arith.addf %243, %244 : vector<16x64xf32>
    %c0_175 = arith.constant 0 : index
    %c0_176 = arith.constant 0 : index
    %c0_177 = arith.constant 0 : index
    %246 = vector.load %arg27[%c0_175, %c0_176, %c0_177] : memref<1x16x64xf32, #tpu.memory_space<vmem>>, vector<1x16x64xf32>
    %247 = vector.shape_cast %246 : vector<1x16x64xf32> to vector<16x64xf32>
    %248 = vector.shape_cast %245 : vector<16x64xf32> to vector<1x16x64xf32>
    tpu.vector_store %arg27[%c0_175, %c0_176, %c0_177], %248 {strides = array<i32>} : memref<1x16x64xf32, #tpu.memory_space<vmem>>, vector<1x16x64xf32>,
    return
  }
  func.func @transform_0(%arg0: i32) -> (i32, i32, i32) {
    %c0_i32 = arith.constant 0 : i32
    %c0_i32_0 = arith.constant 0 : i32
    %c0_i32_1 = arith.constant 0 : i32
    return %arg0, %c0_i32, %c0_i32_0 : i32, i32, i32
  }
  func.func @transform_1(%arg0: i32) -> (i32, i32, i32) {
    %c0_i32 = arith.constant 0 : i32
    %c0_i32_0 = arith.constant 0 : i32
    %c0_i32_1 = arith.constant 0 : i32
    return %arg0, %c0_i32, %c0_i32_0 : i32, i32, i32
  }
  func.func @transform_2(%arg0: i32) -> (i32, i32) {
    %c0_i32 = arith.constant 0 : i32
    %c0_i32_0 = arith.constant 0 : i32
    %c0_i32_1 = arith.constant 0 : i32
    return %c0_i32, %c0_i32_0 : i32, i32
  }
  func.func @transform_3(%arg0: i32) -> (i32, i32) {
    %c0_i32 = arith.constant 0 : i32
    %c0_i32_0 = arith.constant 0 : i32
    %c0_i32_1 = arith.constant 0 : i32
    return %c0_i32, %c0_i32_0 : i32, i32
  }
  func.func @transform_4(%arg0: i32) -> (i32, i32) {
    %c0_i32 = arith.constant 0 : i32
    %c0_i32_0 = arith.constant 0 : i32
    %c0_i32_1 = arith.constant 0 : i32
    return %c0_i32, %c0_i32_0 : i32, i32
  }
  func.func @transform_5(%arg0: i32) -> (i32, i32, i32) {
    %c0_i32 = arith.constant 0 : i32
    %c0_i32_0 = arith.constant 0 : i32
    %c0_i32_1 = arith.constant 0 : i32
    %c0_i32_2 = arith.constant 0 : i32
    return %c0_i32, %c0_i32_0, %c0_i32_1 : i32, i32, i32
  }
  func.func @transform_6(%arg0: i32) -> (i32, i32) {
    %c0_i32 = arith.constant 0 : i32
    %c0_i32_0 = arith.constant 0 : i32
    %c0_i32_1 = arith.constant 0 : i32
    return %c0_i32, %c0_i32_0 : i32, i32
  }
  func.func @transform_7(%arg0: i32) -> (i32, i32) {
    %c0_i32 = arith.constant 0 : i32
    %c0_i32_0 = arith.constant 0 : i32
    %c0_i32_1 = arith.constant 0 : i32
    return %c0_i32, %c0_i32_0 : i32, i32
  }
  func.func @transform_8(%arg0: i32) -> (i32, i32) {
    %c0_i32 = arith.constant 0 : i32
    %c0_i32_0 = arith.constant 0 : i32
    %c0_i32_1 = arith.constant 0 : i32
    return %c0_i32, %c0_i32_0 : i32, i32
  }
  func.func @transform_9(%arg0: i32) -> (i32, i32, i32) {
    %c0_i32 = arith.constant 0 : i32
    %c0_i32_0 = arith.constant 0 : i32
    %c0_i32_1 = arith.constant 0 : i32
    %c0_i32_2 = arith.constant 0 : i32
    return %c0_i32, %c0_i32_0, %c0_i32_1 : i32, i32, i32
  }
  func.func @transform_10(%arg0: i32) -> (i32, i32, i32) {
    %c0_i32 = arith.constant 0 : i32
    %c0_i32_0 = arith.constant 0 : i32
    %c0_i32_1 = arith.constant 0 : i32
    %c0_i32_2 = arith.constant 0 : i32
    return %c0_i32, %c0_i32_0, %c0_i32_1 : i32, i32, i32
  }
  func.func @transform_11(%arg0: i32) -> (i32, i32, i32) {
    %c0_i32 = arith.constant 0 : i32
    %c0_i32_0 = arith.constant 0 : i32
    %c0_i32_1 = arith.constant 0 : i32
    %c0_i32_2 = arith.constant 0 : i32
    return %c0_i32, %c0_i32_0, %c0_i32_1 : i32, i32, i32
  }
  func.func @transform_12(%arg0: i32) -> (i32, i32) {
    %c0_i32 = arith.constant 0 : i32
    %c0_i32_0 = arith.constant 0 : i32
    %c0_i32_1 = arith.constant 0 : i32
    return %c0_i32, %c0_i32_0 : i32, i32
  }
  func.func @transform_13(%arg0: i32) -> (i32, i32) {
    %c0_i32 = arith.constant 0 : i32
    %c0_i32_0 = arith.constant 0 : i32
    %c0_i32_1 = arith.constant 0 : i32
    return %c0_i32, %c0_i32_0 : i32, i32
  }
  func.func @transform_14(%arg0: i32) -> (i32, i32, i32) {
    %c0_i32 = arith.constant 0 : i32
    %c0_i32_0 = arith.constant 0 : i32
    %c0_i32_1 = arith.constant 0 : i32
    %c0_i32_2 = arith.constant 0 : i32
    return %c0_i32, %c0_i32_0, %c0_i32_1 : i32, i32, i32
  }
  func.func @transform_15(%arg0: i32) -> (i32, i32) {
    %c0_i32 = arith.constant 0 : i32
    %c0_i32_0 = arith.constant 0 : i32
    %c0_i32_1 = arith.constant 0 : i32
    return %c0_i32, %c0_i32_0 : i32, i32
  }
  func.func @transform_16(%arg0: i32) -> (i32, i32) {
    %c0_i32 = arith.constant 0 : i32
    %c0_i32_0 = arith.constant 0 : i32
    %c0_i32_1 = arith.constant 0 : i32
    return %c0_i32, %c0_i32_0 : i32, i32
  }
  func.func @transform_17(%arg0: i32) -> (i32, i32) {
    %c0_i32 = arith.constant 0 : i32
    %c0_i32_0 = arith.constant 0 : i32
    %c0_i32_1 = arith.constant 0 : i32
    return %c0_i32, %c0_i32_0 : i32, i32
  }
  func.func @transform_18(%arg0: i32) -> (i32, i32) {
    %c0_i32 = arith.constant 0 : i32
    %c0_i32_0 = arith.constant 0 : i32
    %c0_i32_1 = arith.constant 0 : i32
    return %c0_i32, %c0_i32_0 : i32, i32
  }
  func.func @transform_19(%arg0: i32) -> (i32, i32) {
    %c0_i32 = arith.constant 0 : i32
    %c0_i32_0 = arith.constant 0 : i32
    %c0_i32_1 = arith.constant 0 : i32
    return %c0_i32, %c0_i32_0 : i32, i32
  }
  func.func @transform_20(%arg0: i32) -> (i32, i32) {
    %c0_i32 = arith.constant 0 : i32
    %c0_i32_0 = arith.constant 0 : i32
    %c0_i32_1 = arith.constant 0 : i32
    return %c0_i32, %c0_i32_0 : i32, i32
  }
  func.func @transform_21(%arg0: i32) -> (i32, i32) {
    %c0_i32 = arith.constant 0 : i32
    %c0_i32_0 = arith.constant 0 : i32
    %c0_i32_1 = arith.constant 0 : i32
    return %c0_i32, %c0_i32_0 : i32, i32
  }
  func.func @transform_22(%arg0: i32) -> (i32, i32) {
    %c0_i32 = arith.constant 0 : i32
    %c0_i32_0 = arith.constant 0 : i32
    %c0_i32_1 = arith.constant 0 : i32
    return %c0_i32, %c0_i32_0 : i32, i32
  }
  func.func @transform_23(%arg0: i32) -> (i32, i32) {
    %c0_i32 = arith.constant 0 : i32
    %c0_i32_0 = arith.constant 0 : i32
    %c0_i32_1 = arith.constant 0 : i32
    return %c0_i32, %c0_i32_0 : i32, i32
  }
  func.func @transform_24(%arg0: i32) -> (i32, i32) {
    %c0_i32 = arith.constant 0 : i32
    %c0_i32_0 = arith.constant 0 : i32
    %c0_i32_1 = arith.constant 0 : i32
    return %c0_i32, %c0_i32_0 : i32, i32
  }
  func.func @transform_25(%arg0: i32) -> (i32, i32) {
    %c0_i32 = arith.constant 0 : i32
    %c0_i32_0 = arith.constant 0 : i32
    %c0_i32_1 = arith.constant 0 : i32
    return %c0_i32, %c0_i32_0 : i32, i32
  }
  func.func @transform_26(%arg0: i32) -> (i32, i32, i32) {
    %c0_i32 = arith.constant 0 : i32
    %c0_i32_0 = arith.constant 0 : i32
    %c0_i32_1 = arith.constant 0 : i32
    return %arg0, %c0_i32, %c0_i32_0 : i32, i32, i32
  }
}

</mosaic_0001>

<llo_original>
// kernel: _lambda_.1
$region0: #{_lambda_.1}
  #allocation0 [shape = 'u32[]', space=smem, size = 0x4, offset = 0x4, fixed_abs, tag = 'smem constant byte address 0x4 - core index']
  #allocation1 [shape = 'u32[144,128]{1,0:T(1,128)}', space=vmem, size = 0x12000, scoped, tag = 'internal scratch']
  %s0 = inlined_call_operand.vmem [shape: f32[2,16,64], index: 0, kind: input, shape index: {}]
  %s1 = inlined_call_operand.vmem [shape: f32[2,16,64], index: 1, kind: input, shape index: {}]
  %s2 = inlined_call_operand.vmem [shape: f32[64,64], index: 2, kind: input, shape index: {}]
  %s3 = inlined_call_operand.vmem [shape: f32[64,64], index: 3, kind: input, shape index: {}]
  %s4 = inlined_call_operand.vmem [shape: f32[64,64], index: 4, kind: input, shape index: {}]
  %s5 = inlined_call_operand.vmem [shape: f32[7,16,16], index: 5, kind: input, shape index: {}]
  %s6 = inlined_call_operand.vmem [shape: f32[16,1], index: 6, kind: input, shape index: {}]
  %s7 = inlined_call_operand.vmem [shape: f32[16,1], index: 7, kind: input, shape index: {}]
  %s8 = inlined_call_operand.vmem [shape: f32[16,1], index: 8, kind: input, shape index: {}]
  %s9 = inlined_call_operand.vmem [shape: f32[4,16,4], index: 9, kind: input, shape index: {}]
  %s10 = inlined_call_operand.vmem [shape: f32[4,4,16], index: 10, kind: input, shape index: {}]
  %s11 = inlined_call_operand.vmem [shape: f32[4,16,4], index: 11, kind: input, shape index: {}]
  %s12 = inlined_call_operand.vmem [shape: f32[64,64], index: 12, kind: input, shape index: {}]
  %s13 = inlined_call_operand.vmem [shape: f32[64,64], index: 13, kind: input, shape index: {}]
  %s14 = inlined_call_operand.vmem [shape: f32[4,4,16], index: 14, kind: input, shape index: {}]
  %s15 = inlined_call_operand.vmem [shape: f32[16,1], index: 15, kind: input, shape index: {}]
  %s16 = inlined_call_operand.vmem [shape: f32[64,64], index: 16, kind: input, shape index: {}]
  %s17 = inlined_call_operand.vmem [shape: f32[16,1], index: 17, kind: input, shape index: {}]
  %s18 = inlined_call_operand.vmem [shape: f32[16,1], index: 18, kind: input, shape index: {}]
  %s19 = inlined_call_operand.vmem [shape: f32[32,16], index: 19, kind: input, shape index: {}]
  %s20 = inlined_call_operand.vmem [shape: f32[32,1], index: 20, kind: input, shape index: {}]
  %s21 = inlined_call_operand.vmem [shape: f32[16,32], index: 21, kind: input, shape index: {}]
  %s22 = inlined_call_operand.vmem [shape: f32[16,1], index: 22, kind: input, shape index: {}]
  %s23 = inlined_call_operand.vmem [shape: f32[16,1], index: 23, kind: input, shape index: {}]
  %s24 = inlined_call_operand.vmem [shape: f32[16,1], index: 24, kind: input, shape index: {}]
  %s25 = inlined_call_operand.vmem [shape: f32[16,16], index: 25, kind: input, shape index: {}]
  %s26 = inlined_call_operand.hbm [shape: f32[2,16,64], index: 26, kind: output, shape index: {}]
  %s27 = sld [smem:[#allocation0]]
  $region137: #{_lambda_.1} parent=0
    _
  %s29 = ssub.s32 1, %s27
  %s30 = scalar_select 0, %s29, %s27
  $region1: #{_lambda_.1} parent=0
    #allocation2 [shape = 'u8[16384]{0}', space=vmem, size = 0x4000, scoped, tag = 'output window, operand 0']
    #allocation3 [shape = 's32[2]{0}', space=sflag, size = 0x8, scoped, tag = 'scoped memory for _lambda_.1']
    %31 = vsyncpa [#allocation3], 0
    %s32 = scalar_lea.sflag [#allocation3], 1
    %33 = vsyncpa %s32, 0
    loop: start=0, step=1, limit=4
    $region2: #{_lambda_.1} parent=1 // loop_pre_header
      _
    $region3: #{_lambda_.1} parent=1 // loop_header
      %s35 = sphi 0, %s39
      %p36 = scmp.ge.s32.totalorder %s35, 4
      %s45 = sphi 0, %s47
      %s48 = sphi 0, %s45
      %s49 = sphi 0, %s48
      %s65 = sphi 0, %s49
      %s71 = sphi 0, %s73
      %s74 = sphi 0, %s71
      %s75 = sphi 0, %s74
      %s91 = sphi 0, %s75
      %s95 = sphi 0, %s95
      %s97 = sphi 0, %s95
      %s98 = sphi 0, %s97
      %s112 = sphi 0, %s98
      %s116 = sphi 0, %s116
      %s118 = sphi 0, %s116
      %s119 = sphi 0, %s118
      %s133 = sphi 0, %s119
      %s137 = sphi 0, %s137
      %s139 = sphi 0, %s137
      %s140 = sphi 0, %s139
      %s154 = sphi 0, %s140
      %s158 = sphi 0, %s158
      %s160 = sphi 0, %s158
      %s161 = sphi 0, %s160
      %s175 = sphi 0, %s161
      %s179 = sphi 0, %s179
      %s181 = sphi 0, %s179
      %s182 = sphi 0, %s181
      %s196 = sphi 0, %s182
      %s200 = sphi 0, %s200
      %s202 = sphi 0, %s200
      %s203 = sphi 0, %s202
      %s217 = sphi 0, %s203
      %s221 = sphi 0, %s221
      %s223 = sphi 0, %s221
      %s224 = sphi 0, %s223
      %s238 = sphi 0, %s224
      %s242 = sphi 0, %s242
      %s244 = sphi 0, %s242
      %s245 = sphi 0, %s244
      %s259 = sphi 0, %s245
      %s263 = sphi 0, %s263
      %s265 = sphi 0, %s263
      %s266 = sphi 0, %s265
      %s280 = sphi 0, %s266
      %s284 = sphi 0, %s284
      %s286 = sphi 0, %s284
      %s287 = sphi 0, %s286
      %s301 = sphi 0, %s287
      %s305 = sphi 0, %s305
      %s307 = sphi 0, %s305
      %s308 = sphi 0, %s307
      %s322 = sphi 0, %s308
      %s326 = sphi 0, %s326
      %s328 = sphi 0, %s326
      %s329 = sphi 0, %s328
      %s343 = sphi 0, %s329
      %s347 = sphi 0, %s347
      %s349 = sphi 0, %s347
      %s350 = sphi 0, %s349
      %s364 = sphi 0, %s350
      %s368 = sphi 0, %s368
      %s370 = sphi 0, %s368
      %s371 = sphi 0, %s370
      %s385 = sphi 0, %s371
      %s389 = sphi 0, %s389
      %s391 = sphi 0, %s389
      %s392 = sphi 0, %s391
      %s406 = sphi 0, %s392
      %s410 = sphi 0, %s410
      %s412 = sphi 0, %s410
      %s413 = sphi 0, %s412
      %s427 = sphi 0, %s413
      %s431 = sphi 0, %s431
      %s433 = sphi 0, %s431
      %s434 = sphi 0, %s433
      %s448 = sphi 0, %s434
      %s452 = sphi 0, %s452
      %s454 = sphi 0, %s452
      %s455 = sphi 0, %s454
      %s469 = sphi 0, %s455
      %s473 = sphi 0, %s473
      %s475 = sphi 0, %s473
      %s476 = sphi 0, %s475
      %s490 = sphi 0, %s476
      %s494 = sphi 0, %s494
      %s496 = sphi 0, %s494
      %s497 = sphi 0, %s496
      %s511 = sphi 0, %s497
      %s515 = sphi 0, %s515
      %s517 = sphi 0, %s515
      %s518 = sphi 0, %s517
      %s532 = sphi 0, %s518
      %s536 = sphi 0, %s536
      %s538 = sphi 0, %s536
      %s539 = sphi 0, %s538
      %s553 = sphi 0, %s539
      %s557 = sphi 0, %s557
      %s559 = sphi 0, %s557
      %s560 = sphi 0, %s559
      %s574 = sphi 0, %s560
      %s578 = sphi 0, %s578
      %s580 = sphi 0, %s578
      %s581 = sphi 0, %s580
      %s595 = sphi 0, %s581
      %s601 = sphi 0, %s603
      %s604 = sphi 0, %s601
      %s605 = sphi 0, %s604
      %s621 = sphi 0, %s605
    $region4: #{_lambda_.1} parent=1 // loop_header_branch
      %38 = sbr.rel (%p36) target = $region8
    $region5: #{_lambda_.1} parent=1 // loop_body
      %s40 = ssub.s32 %s35, 1
      %s41 = ssub.s32 %s35, 2
      %s42 = sadd.s32 %s35, 1
      %s43 = ssub.s32 %s35, %s42
      %p44 = scmp.eq.s32.totalorder %s43, 0
      %s46 = sadd.s32 %s45, 1
      %s47 = scalar_select %p44, %s45, %s46
      %p50 = pneg %p44
      %p51 = scmp.eq.s32.totalorder %s35, 1
      %p52 = por %p50, %p51
      %p53 = scmp.ne.s32.totalorder %s45, %s48
      %p54 = scmp.eq.s32.totalorder %s35, 0
      %p55 = por %p53, %p54
      %p56 = scmp.ne.s32.totalorder %s45, %s48
      %p57 = scmp.eq.s32.totalorder %s40, 1
      %p58 = por %p56, %p57
      %p59 = scmp.ne.s32.totalorder %s48, %s49
      %p60 = scmp.eq.s32.totalorder %s40, 0
      %p61 = por %p59, %p60
      %p62 = scmp.ne.s32.totalorder %s48, %s49
      %p63 = scmp.eq.s32.totalorder %s41, 1
      %p64 = por %p62, %p63
      %p66 = scmp.ne.s32.totalorder %s49, %s65
      %p67 = scmp.eq.s32.totalorder %s41, 0
      %p68 = por %p66, %p67
      %s69 = ssub.s32 %s35, %s42
      %p70 = scmp.eq.s32.totalorder %s69, 0
      %s72 = sadd.s32 %s71, 1
      %s73 = scalar_select %p70, %s71, %s72
      %p76 = pneg %p70
      %p77 = scmp.eq.s32.totalorder %s35, 1
      %p78 = por %p76, %p77
      %p79 = scmp.ne.s32.totalorder %s71, %s74
      %p80 = scmp.eq.s32.totalorder %s35, 0
      %p81 = por %p79, %p80
      %p82 = scmp.ne.s32.totalorder %s71, %s74
      %p83 = scmp.eq.s32.totalorder %s40, 1
      %p84 = por %p82, %p83
      %p85 = scmp.ne.s32.totalorder %s74, %s75
      %p86 = scmp.eq.s32.totalorder %s40, 0
      %p87 = por %p85, %p86
      %p88 = scmp.ne.s32.totalorder %s74, %s75
      %p89 = scmp.eq.s32.totalorder %s41, 1
      %p90 = por %p88, %p89
      %p92 = scmp.ne.s32.totalorder %s75, %s91
      %p93 = scmp.eq.s32.totalorder %s41, 0
      %p94 = por %p92, %p93
      %s96 = sadd.s32 %s95, 1
      %p99 = scmp.eq.s32.totalorder %s35, 1
      %p100 = scmp.ne.s32.totalorder %s95, %s97
      %p101 = scmp.eq.s32.totalorder %s35, 0
      %p102 = por %p100, %p101
      %p103 = scmp.ne.s32.totalorder %s95, %s97
      %p104 = scmp.eq.s32.totalorder %s40, 1
      %p105 = por %p103, %p104
      %p106 = scmp.ne.s32.totalorder %s97, %s98
      %p107 = scmp.eq.s32.totalorder %s40, 0
      %p108 = por %p106, %p107
      %p109 = scmp.ne.s32.totalorder %s97, %s98
      %p110 = scmp.eq.s32.totalorder %s41, 1
      %p111 = por %p109, %p110
      %p113 = scmp.ne.s32.totalorder %s98, %s112
      %p114 = scmp.eq.s32.totalorder %s41, 0
      %p115 = por %p113, %p114
      %s117 = sadd.s32 %s116, 1
      %p120 = scmp.eq.s32.totalorder %s35, 1
      %p121 = scmp.ne.s32.totalorder %s116, %s118
      %p122 = scmp.eq.s32.totalorder %s35, 0
      %p123 = por %p121, %p122
      %p124 = scmp.ne.s32.totalorder %s116, %s118
      %p125 = scmp.eq.s32.totalorder %s40, 1
      %p126 = por %p124, %p125
      %p127 = scmp.ne.s32.totalorder %s118, %s119
      %p128 = scmp.eq.s32.totalorder %s40, 0
      %p129 = por %p127, %p128
      %p130 = scmp.ne.s32.totalorder %s118, %s119
      %p131 = scmp.eq.s32.totalorder %s41, 1
      %p132 = por %p130, %p131
      %p134 = scmp.ne.s32.totalorder %s119, %s133
      %p135 = scmp.eq.s32.totalorder %s41, 0
      %p136 = por %p134, %p135
      %s138 = sadd.s32 %s137, 1
      %p141 = scmp.eq.s32.totalorder %s35, 1
      %p142 = scmp.ne.s32.totalorder %s137, %s139
      %p143 = scmp.eq.s32.totalorder %s35, 0
      %p144 = por %p142, %p143
      %p145 = scmp.ne.s32.totalorder %s137, %s139
      %p146 = scmp.eq.s32.totalorder %s40, 1
      %p147 = por %p145, %p146
      %p148 = scmp.ne.s32.totalorder %s139, %s140
      %p149 = scmp.eq.s32.totalorder %s40, 0
      %p150 = por %p148, %p149
      %p151 = scmp.ne.s32.totalorder %s139, %s140
      %p152 = scmp.eq.s32.totalorder %s41, 1
      %p153 = por %p151, %p152
      %p155 = scmp.ne.s32.totalorder %s140, %s154
      %p156 = scmp.eq.s32.totalorder %s41, 0
      %p157 = por %p155, %p156
      %s159 = sadd.s32 %s158, 1
      %p162 = scmp.eq.s32.totalorder %s35, 1
      %p163 = scmp.ne.s32.totalorder %s158, %s160
      %p164 = scmp.eq.s32.totalorder %s35, 0
      %p165 = por %p163, %p164
      %p166 = scmp.ne.s32.totalorder %s158, %s160
      %p167 = scmp.eq.s32.totalorder %s40, 1
      %p168 = por %p166, %p167
      %p169 = scmp.ne.s32.totalorder %s160, %s161
      %p170 = scmp.eq.s32.totalorder %s40, 0
      %p171 = por %p169, %p170
      %p172 = scmp.ne.s32.totalorder %s160, %s161
      %p173 = scmp.eq.s32.totalorder %s41, 1
      %p174 = por %p172, %p173
      %p176 = scmp.ne.s32.totalorder %s161, %s175
      %p177 = scmp.eq.s32.totalorder %s41, 0
      %p178 = por %p176, %p177
      %s180 = sadd.s32 %s179, 1
      %p183 = scmp.eq.s32.totalorder %s35, 1
      %p184 = scmp.ne.s32.totalorder %s179, %s181
      %p185 = scmp.eq.s32.totalorder %s35, 0
      %p186 = por %p184, %p185
      %p187 = scmp.ne.s32.totalorder %s179, %s181
      %p188 = scmp.eq.s32.totalorder %s40, 1
      %p189 = por %p187, %p188
      %p190 = scmp.ne.s32.totalorder %s181, %s182
      %p191 = scmp.eq.s32.totalorder %s40, 0
      %p192 = por %p190, %p191
      %p193 = scmp.ne.s32.totalorder %s181, %s182
      %p194 = scmp.eq.s32.totalorder %s41, 1
      %p195 = por %p193, %p194
      %p197 = scmp.ne.s32.totalorder %s182, %s196
      %p198 = scmp.eq.s32.totalorder %s41, 0
      %p199 = por %p197, %p198
      %s201 = sadd.s32 %s200, 1
      %p204 = scmp.eq.s32.totalorder %s35, 1
      %p205 = scmp.ne.s32.totalorder %s200, %s202
      %p206 = scmp.eq.s32.totalorder %s35, 0
      %p207 = por %p205, %p206
      %p208 = scmp.ne.s32.totalorder %s200, %s202
      %p209 = scmp.eq.s32.totalorder %s40, 1
      %p210 = por %p208, %p209
      %p211 = scmp.ne.s32.totalorder %s202, %s203
      %p212 = scmp.eq.s32.totalorder %s40, 0
      %p213 = por %p211, %p212
      %p214 = scmp.ne.s32.totalorder %s202, %s203
      %p215 = scmp.eq.s32.totalorder %s41, 1
      %p216 = por %p214, %p215
      %p218 = scmp.ne.s32.totalorder %s203, %s217
      %p219 = scmp.eq.s32.totalorder %s41, 0
      %p220 = por %p218, %p219
      %s222 = sadd.s32 %s221, 1
      %p225 = scmp.eq.s32.totalorder %s35, 1
      %p226 = scmp.ne.s32.totalorder %s221, %s223
      %p227 = scmp.eq.s32.totalorder %s35, 0
      %p228 = por %p226, %p227
      %p229 = scmp.ne.s32.totalorder %s221, %s223
      %p230 = scmp.eq.s32.totalorder %s40, 1
      %p231 = por %p229, %p230
      %p232 = scmp.ne.s32.totalorder %s223, %s224
      %p233 = scmp.eq.s32.totalorder %s40, 0
      %p234 = por %p232, %p233
      %p235 = scmp.ne.s32.totalorder %s223, %s224
      %p236 = scmp.eq.s32.totalorder %s41, 1
      %p237 = por %p235, %p236
      %p239 = scmp.ne.s32.totalorder %s224, %s238
      %p240 = scmp.eq.s32.totalorder %s41, 0
      %p241 = por %p239, %p240
      %s243 = sadd.s32 %s242, 1
      %p246 = scmp.eq.s32.totalorder %s35, 1
      %p247 = scmp.ne.s32.totalorder %s242, %s244
      %p248 = scmp.eq.s32.totalorder %s35, 0
      %p249 = por %p247, %p248
      %p250 = scmp.ne.s32.totalorder %s242, %s244
      %p251 = scmp.eq.s32.totalorder %s40, 1
      %p252 = por %p250, %p251
      %p253 = scmp.ne.s32.totalorder %s244, %s245
      %p254 = scmp.eq.s32.totalorder %s40, 0
      %p255 = por %p253, %p254
      %p256 = scmp.ne.s32.totalorder %s244, %s245
      %p257 = scmp.eq.s32.totalorder %s41, 1
      %p258 = por %p256, %p257
      %p260 = scmp.ne.s32.totalorder %s245, %s259
      %p261 = scmp.eq.s32.totalorder %s41, 0
      %p262 = por %p260, %p261
      %s264 = sadd.s32 %s263, 1
      %p267 = scmp.eq.s32.totalorder %s35, 1
      %p268 = scmp.ne.s32.totalorder %s263, %s265
      %p269 = scmp.eq.s32.totalorder %s35, 0
      %p270 = por %p268, %p269
      %p271 = scmp.ne.s32.totalorder %s263, %s265
      %p272 = scmp.eq.s32.totalorder %s40, 1
      %p273 = por %p271, %p272
      %p274 = scmp.ne.s32.totalorder %s265, %s266
      %p275 = scmp.eq.s32.totalorder %s40, 0
      %p276 = por %p274, %p275
      %p277 = scmp.ne.s32.totalorder %s265, %s266
      %p278 = scmp.eq.s32.totalorder %s41, 1
      %p279 = por %p277, %p278
      %p281 = scmp.ne.s32.totalorder %s266, %s280
      %p282 = scmp.eq.s32.totalorder %s41, 0
      %p283 = por %p281, %p282
      %s285 = sadd.s32 %s284, 1
      %p288 = scmp.eq.s32.totalorder %s35, 1
      %p289 = scmp.ne.s32.totalorder %s284, %s286
      %p290 = scmp.eq.s32.totalorder %s35, 0
      %p291 = por %p289, %p290
      %p292 = scmp.ne.s32.totalorder %s284, %s286
      %p293 = scmp.eq.s32.totalorder %s40, 1
      %p294 = por %p292, %p293
      %p295 = scmp.ne.s32.totalorder %s286, %s287
      %p296 = scmp.eq.s32.totalorder %s40, 0
      %p297 = por %p295, %p296
      %p298 = scmp.ne.s32.totalorder %s286, %s287
      %p299 = scmp.eq.s32.totalorder %s41, 1
      %p300 = por %p298, %p299
      %p302 = scmp.ne.s32.totalorder %s287, %s301
      %p303 = scmp.eq.s32.totalorder %s41, 0
      %p304 = por %p302, %p303
      %s306 = sadd.s32 %s305, 1
      %p309 = scmp.eq.s32.totalorder %s35, 1
      %p310 = scmp.ne.s32.totalorder %s305, %s307
      %p311 = scmp.eq.s32.totalorder %s35, 0
      %p312 = por %p310, %p311
      %p313 = scmp.ne.s32.totalorder %s305, %s307
      %p314 = scmp.eq.s32.totalorder %s40, 1
      %p315 = por %p313, %p314
      %p316 = scmp.ne.s32.totalorder %s307, %s308
      %p317 = scmp.eq.s32.totalorder %s40, 0
      %p318 = por %p316, %p317
      %p319 = scmp.ne.s32.totalorder %s307, %s308
      %p320 = scmp.eq.s32.totalorder %s41, 1
      %p321 = por %p319, %p320
      %p323 = scmp.ne.s32.totalorder %s308, %s322
      %p324 = scmp.eq.s32.totalorder %s41, 0
      %p325 = por %p323, %p324
      %s327 = sadd.s32 %s326, 1
      %p330 = scmp.eq.s32.totalorder %s35, 1
      %p331 = scmp.ne.s32.totalorder %s326, %s328
      %p332 = scmp.eq.s32.totalorder %s35, 0
      %p333 = por %p331, %p332
      %p334 = scmp.ne.s32.totalorder %s326, %s328
      %p335 = scmp.eq.s32.totalorder %s40, 1
      %p336 = por %p334, %p335
      %p337 = scmp.ne.s32.totalorder %s328, %s329
      %p338 = scmp.eq.s32.totalorder %s40, 0
      %p339 = por %p337, %p338
      %p340 = scmp.ne.s32.totalorder %s328, %s329
      %p341 = scmp.eq.s32.totalorder %s41, 1
      %p342 = por %p340, %p341
      %p344 = scmp.ne.s32.totalorder %s329, %s343
      %p345 = scmp.eq.s32.totalorder %s41, 0
      %p346 = por %p344, %p345
      %s348 = sadd.s32 %s347, 1
      %p351 = scmp.eq.s32.totalorder %s35, 1
      %p352 = scmp.ne.s32.totalorder %s347, %s349
      %p353 = scmp.eq.s32.totalorder %s35, 0
      %p354 = por %p352, %p353
      %p355 = scmp.ne.s32.totalorder %s347, %s349
      %p356 = scmp.eq.s32.totalorder %s40, 1
      %p357 = por %p355, %p356
      %p358 = scmp.ne.s32.totalorder %s349, %s350
      %p359 = scmp.eq.s32.totalorder %s40, 0
      %p360 = por %p358, %p359
      %p361 = scmp.ne.s32.totalorder %s349, %s350
      %p362 = scmp.eq.s32.totalorder %s41, 1
      %p363 = por %p361, %p362
      %p365 = scmp.ne.s32.totalorder %s350, %s364
      %p366 = scmp.eq.s32.totalorder %s41, 0
      %p367 = por %p365, %p366
      %s369 = sadd.s32 %s368, 1
      %p372 = scmp.eq.s32.totalorder %s35, 1
      %p373 = scmp.ne.s32.totalorder %s368, %s370
      %p374 = scmp.eq.s32.totalorder %s35, 0
      %p375 = por %p373, %p374
      %p376 = scmp.ne.s32.totalorder %s368, %s370
      %p377 = scmp.eq.s32.totalorder %s40, 1
      %p378 = por %p376, %p377
      %p379 = scmp.ne.s32.totalorder %s370, %s371
      %p380 = scmp.eq.s32.totalorder %s40, 0
      %p381 = por %p379, %p380
      %p382 = scmp.ne.s32.totalorder %s370, %s371
      %p383 = scmp.eq.s32.totalorder %s41, 1
      %p384 = por %p382, %p383
      %p386 = scmp.ne.s32.totalorder %s371, %s385
      %p387 = scmp.eq.s32.totalorder %s41, 0
      %p388 = por %p386, %p387
      %s390 = sadd.s32 %s389, 1
      %p393 = scmp.eq.s32.totalorder %s35, 1
      %p394 = scmp.ne.s32.totalorder %s389, %s391
      %p395 = scmp.eq.s32.totalorder %s35, 0
      %p396 = por %p394, %p395
      %p397 = scmp.ne.s32.totalorder %s389, %s391
      %p398 = scmp.eq.s32.totalorder %s40, 1
      %p399 = por %p397, %p398
      %p400 = scmp.ne.s32.totalorder %s391, %s392
      %p401 = scmp.eq.s32.totalorder %s40, 0
      %p402 = por %p400, %p401
      %p403 = scmp.ne.s32.totalorder %s391, %s392
      %p404 = scmp.eq.s32.totalorder %s41, 1
      %p405 = por %p403, %p404
      %p407 = scmp.ne.s32.totalorder %s392, %s406
      %p408 = scmp.eq.s32.totalorder %s41, 0
      %p409 = por %p407, %p408
      %s411 = sadd.s32 %s410, 1
      %p414 = scmp.eq.s32.totalorder %s35, 1
      %p415 = scmp.ne.s32.totalorder %s410, %s412
      %p416 = scmp.eq.s32.totalorder %s35, 0
      %p417 = por %p415, %p416
      %p418 = scmp.ne.s32.totalorder %s410, %s412
      %p419 = scmp.eq.s32.totalorder %s40, 1
      %p420 = por %p418, %p419
      %p421 = scmp.ne.s32.totalorder %s412, %s413
      %p422 = scmp.eq.s32.totalorder %s40, 0
      %p423 = por %p421, %p422
      %p424 = scmp.ne.s32.totalorder %s412, %s413
      %p425 = scmp.eq.s32.totalorder %s41, 1
      %p426 = por %p424, %p425
      %p428 = scmp.ne.s32.totalorder %s413, %s427
      %p429 = scmp.eq.s32.totalorder %s41, 0
      %p430 = por %p428, %p429
      %s432 = sadd.s32 %s431, 1
      %p435 = scmp.eq.s32.totalorder %s35, 1
      %p436 = scmp.ne.s32.totalorder %s431, %s433
      %p437 = scmp.eq.s32.totalorder %s35, 0
      %p438 = por %p436, %p437
      %p439 = scmp.ne.s32.totalorder %s431, %s433
      %p440 = scmp.eq.s32.totalorder %s40, 1
      %p441 = por %p439, %p440
      %p442 = scmp.ne.s32.totalorder %s433, %s434
      %p443 = scmp.eq.s32.totalorder %s40, 0
      %p444 = por %p442, %p443
      %p445 = scmp.ne.s32.totalorder %s433, %s434
      %p446 = scmp.eq.s32.totalorder %s41, 1
      %p447 = por %p445, %p446
      %p449 = scmp.ne.s32.totalorder %s434, %s448
      %p450 = scmp.eq.s32.totalorder %s41, 0
      %p451 = por %p449, %p450
      %s453 = sadd.s32 %s452, 1
      %p456 = scmp.eq.s32.totalorder %s35, 1
      %p457 = scmp.ne.s32.totalorder %s452, %s454
      %p458 = scmp.eq.s32.totalorder %s35, 0
      %p459 = por %p457, %p458
      %p460 = scmp.ne.s32.totalorder %s452, %s454
      %p461 = scmp.eq.s32.totalorder %s40, 1
      %p462 = por %p460, %p461
      %p463 = scmp.ne.s32.totalorder %s454, %s455
      %p464 = scmp.eq.s32.totalorder %s40, 0
      %p465 = por %p463, %p464
      %p466 = scmp.ne.s32.totalorder %s454, %s455
      %p467 = scmp.eq.s32.totalorder %s41, 1
      %p468 = por %p466, %p467
      %p470 = scmp.ne.s32.totalorder %s455, %s469
      %p471 = scmp.eq.s32.totalorder %s41, 0
      %p472 = por %p470, %p471
      %s474 = sadd.s32 %s473, 1
      %p477 = scmp.eq.s32.totalorder %s35, 1
      %p478 = scmp.ne.s32.totalorder %s473, %s475
      %p479 = scmp.eq.s32.totalorder %s35, 0
      %p480 = por %p478, %p479
      %p481 = scmp.ne.s32.totalorder %s473, %s475
      %p482 = scmp.eq.s32.totalorder %s40, 1
      %p483 = por %p481, %p482
      %p484 = scmp.ne.s32.totalorder %s475, %s476
      %p485 = scmp.eq.s32.totalorder %s40, 0
      %p486 = por %p484, %p485
      %p487 = scmp.ne.s32.totalorder %s475, %s476
      %p488 = scmp.eq.s32.totalorder %s41, 1
      %p489 = por %p487, %p488
      %p491 = scmp.ne.s32.totalorder %s476, %s490
      %p492 = scmp.eq.s32.totalorder %s41, 0
      %p493 = por %p491, %p492
      %s495 = sadd.s32 %s494, 1
      %p498 = scmp.eq.s32.totalorder %s35, 1
      %p499 = scmp.ne.s32.totalorder %s494, %s496
      %p500 = scmp.eq.s32.totalorder %s35, 0
      %p501 = por %p499, %p500
      %p502 = scmp.ne.s32.totalorder %s494, %s496
      %p503 = scmp.eq.s32.totalorder %s40, 1
      %p504 = por %p502, %p503
      %p505 = scmp.ne.s32.totalorder %s496, %s497
      %p506 = scmp.eq.s32.totalorder %s40, 0
      %p507 = por %p505, %p506
      %p508 = scmp.ne.s32.totalorder %s496, %s497
      %p509 = scmp.eq.s32.totalorder %s41, 1
      %p510 = por %p508, %p509
      %p512 = scmp.ne.s32.totalorder %s497, %s511
      %p513 = scmp.eq.s32.totalorder %s41, 0
      %p514 = por %p512, %p513
      %s516 = sadd.s32 %s515, 1
      %p519 = scmp.eq.s32.totalorder %s35, 1
      %p520 = scmp.ne.s32.totalorder %s515, %s517
      %p521 = scmp.eq.s32.totalorder %s35, 0
      %p522 = por %p520, %p521
      %p523 = scmp.ne.s32.totalorder %s515, %s517
      %p524 = scmp.eq.s32.totalorder %s40, 1
      %p525 = por %p523, %p524
      %p526 = scmp.ne.s32.totalorder %s517, %s518
      %p527 = scmp.eq.s32.totalorder %s40, 0
      %p528 = por %p526, %p527
      %p529 = scmp.ne.s32.totalorder %s517, %s518
      %p530 = scmp.eq.s32.totalorder %s41, 1
      %p531 = por %p529, %p530
      %p533 = scmp.ne.s32.totalorder %s518, %s532
      %p534 = scmp.eq.s32.totalorder %s41, 0
      %p535 = por %p533, %p534
      %s537 = sadd.s32 %s536, 1
      %p540 = scmp.eq.s32.totalorder %s35, 1
      %p541 = scmp.ne.s32.totalorder %s536, %s538
      %p542 = scmp.eq.s32.totalorder %s35, 0
      %p543 = por %p541, %p542
      %p544 = scmp.ne.s32.totalorder %s536, %s538
      %p545 = scmp.eq.s32.totalorder %s40, 1
      %p546 = por %p544, %p545
      %p547 = scmp.ne.s32.totalorder %s538, %s539
      %p548 = scmp.eq.s32.totalorder %s40, 0
      %p549 = por %p547, %p548
      %p550 = scmp.ne.s32.totalorder %s538, %s539
      %p551 = scmp.eq.s32.totalorder %s41, 1
      %p552 = por %p550, %p551
      %p554 = scmp.ne.s32.totalorder %s539, %s553
      %p555 = scmp.eq.s32.totalorder %s41, 0
      %p556 = por %p554, %p555
      %s558 = sadd.s32 %s557, 1
      %p561 = scmp.eq.s32.totalorder %s35, 1
      %p562 = scmp.ne.s32.totalorder %s557, %s559
      %p563 = scmp.eq.s32.totalorder %s35, 0
      %p564 = por %p562, %p563
      %p565 = scmp.ne.s32.totalorder %s557, %s559
      %p566 = scmp.eq.s32.totalorder %s40, 1
      %p567 = por %p565, %p566
      %p568 = scmp.ne.s32.totalorder %s559, %s560
      %p569 = scmp.eq.s32.totalorder %s40, 0
      %p570 = por %p568, %p569
      %p571 = scmp.ne.s32.totalorder %s559, %s560
      %p572 = scmp.eq.s32.totalorder %s41, 1
      %p573 = por %p571, %p572
      %p575 = scmp.ne.s32.totalorder %s560, %s574
      %p576 = scmp.eq.s32.totalorder %s41, 0
      %p577 = por %p575, %p576
      %s579 = sadd.s32 %s578, 1
      %p582 = scmp.eq.s32.totalorder %s35, 1
      %p583 = scmp.ne.s32.totalorder %s578, %s580
      %p584 = scmp.eq.s32.totalorder %s35, 0
      %p585 = por %p583, %p584
      %p586 = scmp.ne.s32.totalorder %s578, %s580
      %p587 = scmp.eq.s32.totalorder %s40, 1
      %p588 = por %p586, %p587
      %p589 = scmp.ne.s32.totalorder %s580, %s581
      %p590 = scmp.eq.s32.totalorder %s40, 0
      %p591 = por %p589, %p590
      %p592 = scmp.ne.s32.totalorder %s580, %s581
      %p593 = scmp.eq.s32.totalorder %s41, 1
      %p594 = por %p592, %p593
      %p596 = scmp.ne.s32.totalorder %s581, %s595
      %p597 = scmp.eq.s32.totalorder %s41, 0
      %p598 = por %p596, %p597
      %s599 = ssub.s32 %s35, %s42
      %p600 = scmp.eq.s32.totalorder %s599, 0
      %s602 = sadd.s32 %s601, 1
      %s603 = scalar_select %p600, %s601, %s602
      %p606 = pneg %p600
      %p607 = scmp.eq.s32.totalorder %s35, 1
      %p608 = por %p606, %p607
      %p609 = scmp.ne.s32.totalorder %s601, %s604
      %p610 = scmp.eq.s32.totalorder %s35, 0
      %p611 = por %p609, %p610
      %p612 = scmp.ne.s32.totalorder %s601, %s604
      %p613 = scmp.eq.s32.totalorder %s40, 1
      %p614 = por %p612, %p613
      %p615 = scmp.ne.s32.totalorder %s604, %s605
      %p616 = scmp.eq.s32.totalorder %s40, 0
      %p617 = por %p615, %p616
      %p618 = scmp.ne.s32.totalorder %s604, %s605
      %p619 = scmp.eq.s32.totalorder %s41, 1
      %p620 = por %p618, %p619
      %p622 = scmp.ne.s32.totalorder %s605, %s621
      %p623 = scmp.eq.s32.totalorder %s41, 0
      %p624 = por %p622, %p623
      %p625 = scmp.le.s32.totalorder 1, %s35
      %p626 = scmp.lt.s32.totalorder %s35, 3
      %p627 = pnand %p625, %p626
      %p628 = pneg %p627
      // Predicated region
      $region9: #{_lambda_.1} parent=5 // pred_check
        _
      $region10: #{_lambda_.1} parent=5 // pred_check_branch
        %630 = sbr.rel (%p627) target = $region12
      $region11: #{_lambda_.1} parent=5 // pred_region
        %s631 = ssub.s32 %s35, 1
        // Predicated region
        $region13: #{_lambda_.1} parent=11 // pred_check
          %p632 = pneg %p108
        $region14: #{_lambda_.1} parent=11 // pred_check_branch
          %634 = sbr.rel (%p632) target = $region16
        $region15: #{_lambda_.1} parent=11 // pred_region
          _
        $region16: #{_lambda_.1} parent=11 // pred_fallthru
          _
        // Predicated region
        $region17: #{_lambda_.1} parent=11 // pred_check
          %p635 = pneg %p129
        $region18: #{_lambda_.1} parent=11 // pred_check_branch
          %637 = sbr.rel (%p635) target = $region20
        $region19: #{_lambda_.1} parent=11 // pred_region
          _
        $region20: #{_lambda_.1} parent=11 // pred_fallthru
          _
        // Predicated region
        $region21: #{_lambda_.1} parent=11 // pred_check
          %p638 = pneg %p150
        $region22: #{_lambda_.1} parent=11 // pred_check_branch
          %640 = sbr.rel (%p638) target = $region24
        $region23: #{_lambda_.1} parent=11 // pred_region
          _
        $region24: #{_lambda_.1} parent=11 // pred_fallthru
          _
        // Predicated region
        $region25: #{_lambda_.1} parent=11 // pred_check
          %p641 = pneg %p171
        $region26: #{_lambda_.1} parent=11 // pred_check_branch
          %643 = sbr.rel (%p641) target = $region28
        $region27: #{_lambda_.1} parent=11 // pred_region
          _
        $region28: #{_lambda_.1} parent=11 // pred_fallthru
          _
        // Predicated region
        $region29: #{_lambda_.1} parent=11 // pred_check
          %p644 = pneg %p192
        $region30: #{_lambda_.1} parent=11 // pred_check_branch
          %646 = sbr.rel (%p644) target = $region32
        $region31: #{_lambda_.1} parent=11 // pred_region
          _
        $region32: #{_lambda_.1} parent=11 // pred_fallthru
          _
        // Predicated region
        $region33: #{_lambda_.1} parent=11 // pred_check
          %p647 = pneg %p213
        $region34: #{_lambda_.1} parent=11 // pred_check_branch
          %649 = sbr.rel (%p647) target = $region36
        $region35: #{_lambda_.1} parent=11 // pred_region
          _
        $region36: #{_lambda_.1} parent=11 // pred_fallthru
          _
        // Predicated region
        $region37: #{_lambda_.1} parent=11 // pred_check
          %p650 = pneg %p234
        $region38: #{_lambda_.1} parent=11 // pred_check_branch
          %652 = sbr.rel (%p650) target = $region40
        $region39: #{_lambda_.1} parent=11 // pred_region
          _
        $region40: #{_lambda_.1} parent=11 // pred_fallthru
          _
        // Predicated region
        $region41: #{_lambda_.1} parent=11 // pred_check
          %p653 = pneg %p255
        $region42: #{_lambda_.1} parent=11 // pred_check_branch
          %655 = sbr.rel (%p653) target = $region44
        $region43: #{_lambda_.1} parent=11 // pred_region
          _
        $region44: #{_lambda_.1} parent=11 // pred_fallthru
          _
        // Predicated region
        $region45: #{_lambda_.1} parent=11 // pred_check
          %p656 = pneg %p276
        $region46: #{_lambda_.1} parent=11 // pred_check_branch
          %658 = sbr.rel (%p656) target = $region48
        $region47: #{_lambda_.1} parent=11 // pred_region
          _
        $region48: #{_lambda_.1} parent=11 // pred_fallthru
          _
        // Predicated region
        $region49: #{_lambda_.1} parent=11 // pred_check
          %p659 = pneg %p297
        $region50: #{_lambda_.1} parent=11 // pred_check_branch
          %661 = sbr.rel (%p659) target = $region52
        $region51: #{_lambda_.1} parent=11 // pred_region
          _
        $region52: #{_lambda_.1} parent=11 // pred_fallthru
          _
        // Predicated region
        $region53: #{_lambda_.1} parent=11 // pred_check
          %p662 = pneg %p318
        $region54: #{_lambda_.1} parent=11 // pred_check_branch
          %664 = sbr.rel (%p662) target = $region56
        $region55: #{_lambda_.1} parent=11 // pred_region
          _
        $region56: #{_lambda_.1} parent=11 // pred_fallthru
          _
        // Predicated region
        $region57: #{_lambda_.1} parent=11 // pred_check
          %p665 = pneg %p339
        $region58: #{_lambda_.1} parent=11 // pred_check_branch
          %667 = sbr.rel (%p665) target = $region60
        $region59: #{_lambda_.1} parent=11 // pred_region
          _
        $region60: #{_lambda_.1} parent=11 // pred_fallthru
          _
        // Predicated region
        $region61: #{_lambda_.1} parent=11 // pred_check
          %p668 = pneg %p360
        $region62: #{_lambda_.1} parent=11 // pred_check_branch
          %670 = sbr.rel (%p668) target = $region64
        $region63: #{_lambda_.1} parent=11 // pred_region
          _
        $region64: #{_lambda_.1} parent=11 // pred_fallthru
          _
        // Predicated region
        $region65: #{_lambda_.1} parent=11 // pred_check
          %p671 = pneg %p381
        $region66: #{_lambda_.1} parent=11 // pred_check_branch
          %673 = sbr.rel (%p671) target = $region68
        $region67: #{_lambda_.1} parent=11 // pred_region
          _
        $region68: #{_lambda_.1} parent=11 // pred_fallthru
          _
        // Predicated region
        $region69: #{_lambda_.1} parent=11 // pred_check
          %p674 = pneg %p402
        $region70: #{_lambda_.1} parent=11 // pred_check_branch
          %676 = sbr.rel (%p674) target = $region72
        $region71: #{_lambda_.1} parent=11 // pred_region
          _
        $region72: #{_lambda_.1} parent=11 // pred_fallthru
          _
        // Predicated region
        $region73: #{_lambda_.1} parent=11 // pred_check
          %p677 = pneg %p423
        $region74: #{_lambda_.1} parent=11 // pred_check_branch
          %679 = sbr.rel (%p677) target = $region76
        $region75: #{_lambda_.1} parent=11 // pred_region
          _
        $region76: #{_lambda_.1} parent=11 // pred_fallthru
          _
        // Predicated region
        $region77: #{_lambda_.1} parent=11 // pred_check
          %p680 = pneg %p444
        $region78: #{_lambda_.1} parent=11 // pred_check_branch
          %682 = sbr.rel (%p680) target = $region80
        $region79: #{_lambda_.1} parent=11 // pred_region
          _
        $region80: #{_lambda_.1} parent=11 // pred_fallthru
          _
        // Predicated region
        $region81: #{_lambda_.1} parent=11 // pred_check
          %p683 = pneg %p465
        $region82: #{_lambda_.1} parent=11 // pred_check_branch
          %685 = sbr.rel (%p683) target = $region84
        $region83: #{_lambda_.1} parent=11 // pred_region
          _
        $region84: #{_lambda_.1} parent=11 // pred_fallthru
          _
        // Predicated region
        $region85: #{_lambda_.1} parent=11 // pred_check
          %p686 = pneg %p486
        $region86: #{_lambda_.1} parent=11 // pred_check_branch
          %688 = sbr.rel (%p686) target = $region88
        $region87: #{_lambda_.1} parent=11 // pred_region
          _
        $region88: #{_lambda_.1} parent=11 // pred_fallthru
          _
        // Predicated region
        $region89: #{_lambda_.1} parent=11 // pred_check
          %p689 = pneg %p507
        $region90: #{_lambda_.1} parent=11 // pred_check_branch
          %691 = sbr.rel (%p689) target = $region92
        $region91: #{_lambda_.1} parent=11 // pred_region
          _
        $region92: #{_lambda_.1} parent=11 // pred_fallthru
          _
        // Predicated region
        $region93: #{_lambda_.1} parent=11 // pred_check
          %p692 = pneg %p528
        $region94: #{_lambda_.1} parent=11 // pred_check_branch
          %694 = sbr.rel (%p692) target = $region96
        $region95: #{_lambda_.1} parent=11 // pred_region
          _
        $region96: #{_lambda_.1} parent=11 // pred_fallthru
          _
        // Predicated region
        $region97: #{_lambda_.1} parent=11 // pred_check
          %p695 = pneg %p549
        $region98: #{_lambda_.1} parent=11 // pred_check_branch
          %697 = sbr.rel (%p695) target = $region100
        $region99: #{_lambda_.1} parent=11 // pred_region
          _
        $region100: #{_lambda_.1} parent=11 // pred_fallthru
          _
        // Predicated region
        $region101: #{_lambda_.1} parent=11 // pred_check
          %p698 = pneg %p570
        $region102: #{_lambda_.1} parent=11 // pred_check_branch
          %700 = sbr.rel (%p698) target = $region104
        $region103: #{_lambda_.1} parent=11 // pred_region
          _
        $region104: #{_lambda_.1} parent=11 // pred_fallthru
          _
        // Predicated region
        $region105: #{_lambda_.1} parent=11 // pred_check
          %p701 = pneg %p591
        $region106: #{_lambda_.1} parent=11 // pred_check_branch
          %703 = sbr.rel (%p701) target = $region108
        $region107: #{_lambda_.1} parent=11 // pred_region
          _
        $region108: #{_lambda_.1} parent=11 // pred_fallthru
          _
      $region12: #{_lambda_.1} parent=5 // pred_fallthru
        _
      %p704 = scmp.lt.s32.totalorder %s35, 2
      // Predicated region
      $region109: #{_lambda_.1} parent=5 // pred_check
        %p705 = pneg %p704
      $region110: #{_lambda_.1} parent=5 // pred_check_branch
        %707 = sbr.rel (%p705) target = $region112
      $region111: #{_lambda_.1} parent=5 // pred_region
        // Predicated region
        $region113: #{_lambda_.1} parent=111 // pred_check
          %p708 = pneg %p55
        $region114: #{_lambda_.1} parent=111 // pred_check_branch
          %710 = sbr.rel (%p708) target = $region116
        $region115: #{_lambda_.1} parent=111 // pred_region
          %p711 = scmp.lt.s32.totalorder %s35, 1
          %s712 = scalar_select %p711, %s35, 1
          %s713 = smul.addr %s712, 2
          %s714 = smul.addr %s713, 8
          %s715 = scalar_lea.vmem %s0, %s714
        $region116: #{_lambda_.1} parent=111 // pred_fallthru
          _
        // Predicated region
        $region117: #{_lambda_.1} parent=111 // pred_check
          %p716 = pneg %p81
        $region118: #{_lambda_.1} parent=111 // pred_check_branch
          %718 = sbr.rel (%p716) target = $region120
        $region119: #{_lambda_.1} parent=111 // pred_region
          %p719 = scmp.lt.s32.totalorder %s35, 1
          %s720 = scalar_select %p719, %s35, 1
          %s721 = smul.addr %s720, 2
          %s722 = smul.addr %s721, 8
          %s723 = scalar_lea.vmem %s1, %s722
        $region120: #{_lambda_.1} parent=111 // pred_fallthru
          _
      $region112: #{_lambda_.1} parent=5 // pred_fallthru
        _
      %p724 = scmp.le.s32.totalorder 1, %s35
      %p725 = scmp.lt.s32.totalorder %s35, 3
      %p726 = pnand %p724, %p725
      %p727 = pneg %p726
      // Predicated region
      $region121: #{_lambda_.1} parent=5 // pred_check
        _
      $region122: #{_lambda_.1} parent=5 // pred_check_branch
        %729 = sbr.rel (%p726) target = $region124
      $region123: #{_lambda_.1} parent=5 // pred_region
        %s730 = ssub.s32 %s35, 1
        %p731 = scmp.lt.s32.totalorder %s40, 1
        %s732 = scalar_select %p731, %s40, 1
        %s733 = smul.addr %s732, 2
        %s734 = smul.addr %s733, 8
        %s735 = scalar_lea.vmem %s0, %s734
        %p736 = pneg %p61
        %p737 = pneg %p58
        %p738 = scmp.lt.s32.totalorder %s40, 1
        %s739 = scalar_select %p738, %s40, 1
        %s740 = smul.addr %s739, 2
        %s741 = smul.addr %s740, 8
        %s742 = scalar_lea.vmem %s1, %s741
        %p743 = pneg %p87
        %p744 = pneg %p84
        %p745 = pneg %p108
        %p746 = pneg %p105
        %p747 = pneg %p129
        %p748 = pneg %p126
        %p749 = pneg %p150
        %p750 = pneg %p147
        %p751 = pneg %p171
        %p752 = pneg %p168
        %p753 = pneg %p192
        %p754 = pneg %p189
        %p755 = pneg %p213
        %p756 = pneg %p210
        %p757 = pneg %p234
        %p758 = pneg %p231
        %p759 = pneg %p255
        %p760 = pneg %p252
        %p761 = pneg %p276
        %p762 = pneg %p273
        %p763 = pneg %p297
        %p764 = pneg %p294
        %p765 = pneg %p318
        %p766 = pneg %p315
        %p767 = pneg %p339
        %p768 = pneg %p336
        %p769 = pneg %p360
        %p770 = pneg %p357
        %p771 = pneg %p381
        %p772 = pneg %p378
        %p773 = pneg %p402
        %p774 = pneg %p399
        %p775 = pneg %p423
        %p776 = pneg %p420
        %p777 = pneg %p444
        %p778 = pneg %p441
        %p779 = pneg %p465
        %p780 = pneg %p462
        %p781 = pneg %p486
        %p782 = pneg %p483
        %p783 = pneg %p507
        %p784 = pneg %p504
        %p785 = pneg %p528
        %p786 = pneg %p525
        %p787 = pneg %p549
        %p788 = pneg %p546
        %p789 = pneg %p570
        %p790 = pneg %p567
        %p791 = pneg %p591
        %p792 = pneg %p588
        %p793 = pneg %p617
        %p794 = pneg %p614
        %s795 = sand.u32 %s604, 1
        %s796 = scalar_lea.sflag [#allocation3], %s795
        %s797 = sand.u32 %s604, 1
        %s798 = smul.addr %s797, 16
        %s799 = scalar_lea.vmem [#allocation2], %s798
        %p800 = scmp.lt.s32.totalorder %s40, 1
        %s801 = scalar_select %p800, %s40, 1
        %s802 = smul.addr %s801, 2
        %s803 = smul.addr %s802, 8
        %s804 = scalar_lea.vmem %s0, %s803
        %p805 = scmp.lt.s32.totalorder %s40, 1
        %s806 = scalar_select %p805, %s40, 1
        %s807 = smul.addr %s806, 2
        %s808 = smul.addr %s807, 8
        %s809 = scalar_lea.vmem %s1, %s808
        %v810 = vld [vmem:[%s804] sm:$0xff]
        %v811 = vld [vmem:[%s804 + $0x8] sm:$0xff]
        %v812 = vld [vmem:[%s809] sm:$0xff]
        %v813 = vld [vmem:[%s809 + $0x8] sm:$0xff]
        %v814 = vld [vmem:[%s25] sm:$0xff]
        %v815 = vld [vmem:[%s25 + $0x8] sm:$0xff]
        %v816 = vld [vmem:[%s5] sm:$0xff]
        %v817 = vld [vmem:[%s5 + $0x8] sm:$0xff]
        %v818 = vld [vmem:[%s6] sm:$0xff]
        %v819 = vld [vmem:[%s6 + $0x8] sm:$0xff]
        %821 = vset.pattern.permute.xlu0 0
        %822 = vperm.xlu0 %821, %v818
        %v823 = vpop.permute.xlu0 %822
        %826 = vset.pattern.permute.xlu0 0
        %827 = vperm.xlu0 %826, %v819
        %v828 = vpop.permute.xlu0 %827
        %vm830 = vcmask 130048
        %v832 = vsel %vm830, %v816, 0
        %v835 = vsel %vm830, %v817, 0
        %837 = vmatprep.subr.mxu0 0.0
        %838 = vmatpush1.msra.mxu0 %v810
        %839 = vmatprep.subr.mxu0 0.0
        %840 = vmatpush1.msra.mxu0 %v811
        %841 = vmatprep.subr.mxu0 0.0
        %842 = vmatpush1.msra.mxu0 0.0
        %843 = vmatprep.subr.mxu0 0.0
        %844 = vmatpush1.msra.mxu0 0.0
        %845 = vmatprep.subr.mxu0 0.0
        %846 = vmatpush1.msra.mxu0 0.0
        %847 = vmatprep.subr.mxu0 0.0
        %848 = vmatpush1.msra.mxu0 0.0
        %849 = vmatprep.subr.mxu0 0.0
        %850 = vmatpush1.msra.mxu0 0.0
        %851 = vmatprep.subr.mxu0 0.0
        %852 = vmatpush1.msra.mxu0 0.0
        %853 = vmatprep.subr.mxu0 0.0
        %854 = vmatpush1.msra.mxu0 0.0
        %855 = vmatprep.subr.mxu0 0.0
        %856 = vmatpush1.msra.mxu0 0.0
        %857 = vmatprep.subr.mxu0 0.0
        %858 = vmatpush1.msra.mxu0 0.0
        %859 = vmatprep.subr.mxu0 0.0
        %860 = vmatpush1.msra.mxu0 0.0
        %861 = vmatprep.subr.mxu0 0.0
        %862 = vmatpush1.msra.mxu0 0.0
        %863 = vmatprep.subr.mxu0 0.0
        %864 = vmatpush1.msra.mxu0 0.0
        %865 = vmatprep.subr.mxu0 0.0
        %866 = vmatpush1.msra.mxu0 0.0
        %867 = vmatprep.subr.mxu0 0.0
        %868 = vmatpush1.msra.mxu0 0.0
        %869 = vmatprep.subr.mxu0 0.0
        %870 = vmatpush1.msra.mxu0 0.0
        %871 = vmatprep.subr.mxu0 0.0
        %872 = vmatpush1.msra.mxu0 0.0
        %873 = vmatprep.subr.mxu0 0.0
        %874 = vmatpush1.msra.mxu0 0.0
        %875 = vmatprep.subr.mxu0 0.0
        %876 = vmatpush1.msra.mxu0 0.0
        %877 = vmatprep.subr.mxu0 0.0
        %878 = vmatpush1.msra.mxu0 0.0
        %879 = vmatprep.subr.mxu0 0.0
        %880 = vmatpush1.msra.mxu0 0.0
        %881 = vmatprep.subr.mxu0 0.0
        %882 = vmatpush1.msra.mxu0 0.0
        %883 = vmatprep.subr.mxu0 0.0
        %884 = vmatpush1.msra.mxu0 0.0
        %885 = vmatprep.subr.mxu0 0.0
        %886 = vmatpush1.msra.mxu0 0.0
        %887 = vmatprep.subr.mxu0 0.0
        %888 = vmatpush1.msra.mxu0 0.0
        %889 = vmatprep.subr.mxu0 0.0
        %890 = vmatpush1.msra.mxu0 0.0
        %891 = vmatprep.subr.mxu0 0.0
        %892 = vmatpush1.msra.mxu0 0.0
        %893 = vmatprep.subr.mxu0 0.0
        %894 = vmatpush1.msra.mxu0 0.0
        %895 = vmatprep.subr.mxu0 0.0
        %896 = vmatpush1.msra.mxu0 0.0
        %897 = vmatprep.subr.mxu0 0.0
        %898 = vmatpush1.msra.mxu0 0.0
        %899 = vmatprep.subr.mxu0 0.0
        %900 = vmatpush1.msra.mxu0 0.0
        %901 = vmatprep.mubr.f32.mxu0 0.0
        %902 = vmatmul.mubr.f32.gmra.mrb[0].mxu0 %v832
        %v903 = vpop.f32.mrb[0].mxu0
        %v904 = vadd.f32 %v823, %v903
        %v905 = vpop.f32.mrb[0].mxu0
        %906 = vmatprep.mubr.f32.mxu0 0.0
        %907 = vmatmul.mubr.f32.gmra.mrb[0].mxu0 %v835
        %v908 = vpop.f32.mrb[0].mxu0
        %v909 = vadd.f32 %v828, %v908
        %v910 = vpop.f32.mrb[0].mxu0
        %911 = vdwg.mxu0
        %v912 = vld [vmem:[%s2] sm:$0xff]
        %v913 = vld [vmem:[%s2 + $0x8] sm:$0xff]
        %v914 = vld [vmem:[%s2 + $0x10] sm:$0xff]
        %v915 = vld [vmem:[%s2 + $0x18] sm:$0xff]
        %v916 = vld [vmem:[%s2 + $0x20] sm:$0xff]
        %v917 = vld [vmem:[%s2 + $0x28] sm:$0xff]
        %v918 = vld [vmem:[%s2 + $0x30] sm:$0xff]
        %v919 = vld [vmem:[%s2 + $0x38] sm:$0xff]
        %vm920 = vcmask 523264
        %v922 = vsel %vm920, %v810, 0
        %v925 = vsel %vm920, %v811, 0
        %927 = vmatprep.subr.mxu0 0.0
        %928 = vmatpush1.msra.mxu0 %v912
        %929 = vmatprep.subr.mxu0 0.0
        %930 = vmatpush1.msra.mxu0 %v913
        %931 = vmatprep.subr.mxu0 0.0
        %932 = vmatpush1.msra.mxu0 %v914
        %933 = vmatprep.subr.mxu0 0.0
        %934 = vmatpush1.msra.mxu0 %v915
        %935 = vmatprep.subr.mxu0 0.0
        %936 = vmatpush1.msra.mxu0 %v916
        %937 = vmatprep.subr.mxu0 0.0
        %938 = vmatpush1.msra.mxu0 %v917
        %939 = vmatprep.subr.mxu0 0.0
        %940 = vmatpush1.msra.mxu0 %v918
        %941 = vmatprep.subr.mxu0 0.0
        %942 = vmatpush1.msra.mxu0 %v919
        %943 = vmatprep.subr.mxu0 0.0
        %944 = vmatpush1.msra.mxu0 0.0
        %945 = vmatprep.subr.mxu0 0.0
        %946 = vmatpush1.msra.mxu0 0.0
        %947 = vmatprep.subr.mxu0 0.0
        %948 = vmatpush1.msra.mxu0 0.0
        %949 = vmatprep.subr.mxu0 0.0
        %950 = vmatpush1.msra.mxu0 0.0
        %951 = vmatprep.subr.mxu0 0.0
        %952 = vmatpush1.msra.mxu0 0.0
        %953 = vmatprep.subr.mxu0 0.0
        %954 = vmatpush1.msra.mxu0 0.0
        %955 = vmatprep.subr.mxu0 0.0
        %956 = vmatpush1.msra.mxu0 0.0
        %957 = vmatprep.subr.mxu0 0.0
        %958 = vmatpush1.msra.mxu0 0.0
        %959 = vmatprep.subr.mxu0 0.0
        %960 = vmatpush1.msra.mxu0 0.0
        %961 = vmatprep.subr.mxu0 0.0
        %962 = vmatpush1.msra.mxu0 0.0
        %963 = vmatprep.subr.mxu0 0.0
        %964 = vmatpush1.msra.mxu0 0.0
        %965 = vmatprep.subr.mxu0 0.0
        %966 = vmatpush1.msra.mxu0 0.0
        %967 = vmatprep.subr.mxu0 0.0
        %968 = vmatpush1.msra.mxu0 0.0
        %969 = vmatprep.subr.mxu0 0.0
        %970 = vmatpush1.msra.mxu0 0.0
        %971 = vmatprep.subr.mxu0 0.0
        %972 = vmatpush1.msra.mxu0 0.0
        %973 = vmatprep.subr.mxu0 0.0
        %974 = vmatpush1.msra.mxu0 0.0
        %975 = vmatprep.subr.mxu0 0.0
        %976 = vmatpush1.msra.mxu0 0.0
        %977 = vmatprep.subr.mxu0 0.0
        %978 = vmatpush1.msra.mxu0 0.0
        %979 = vmatprep.subr.mxu0 0.0
        %980 = vmatpush1.msra.mxu0 0.0
        %981 = vmatprep.subr.mxu0 0.0
        %982 = vmatpush1.msra.mxu0 0.0
        %983 = vmatprep.subr.mxu0 0.0
        %984 = vmatpush1.msra.mxu0 0.0
        %985 = vmatprep.subr.mxu0 0.0
        %986 = vmatpush1.msra.mxu0 0.0
        %987 = vmatprep.subr.mxu0 0.0
        %988 = vmatpush1.msra.mxu0 0.0
        %989 = vmatprep.subr.mxu0 0.0
        %990 = vmatpush1.msra.mxu0 0.0
        %991 = vmatprep.mubr.f32.mxu0 0.0
        %992 = vmatmul.mubr.f32.gmra.mrb[0].mxu0 %v922
        %v993 = vpop.f32.mrb[0].mxu0
        %v994 = vadd.f32 0.0, %v993
        %v995 = vpop.f32.mrb[0].mxu0
        %996 = vmatprep.mubr.f32.mxu0 0.0
        %997 = vmatmul.mubr.f32.gmra.mrb[0].mxu0 %v925
        %v998 = vpop.f32.mrb[0].mxu0
        %v999 = vadd.f32 0.0, %v998
        %v1000 = vpop.f32.mrb[0].mxu0
        %1001 = vdwg.mxu0
        %s1002 = scalar_lea.vmem %s5, 16
        %v1003 = vld [vmem:[%s1002] sm:$0xff]
        %v1004 = vld [vmem:[%s1002 + $0x8] sm:$0xff]
        %v1006 = vsel %vm830, %v1003, 0
        %v1009 = vsel %vm830, %v1004, 0
        %1011 = vmatprep.subr.mxu0 0.0
        %1012 = vmatpush1.msra.mxu0 %v994
        %1013 = vmatprep.subr.mxu0 0.0
        %1014 = vmatpush1.msra.mxu0 %v999
        %1015 = vmatprep.subr.mxu0 0.0
        %1016 = vmatpush1.msra.mxu0 0.0
        %1017 = vmatprep.subr.mxu0 0.0
        %1018 = vmatpush1.msra.mxu0 0.0
        %1019 = vmatprep.subr.mxu0 0.0
        %1020 = vmatpush1.msra.mxu0 0.0
        %1021 = vmatprep.subr.mxu0 0.0
        %1022 = vmatpush1.msra.mxu0 0.0
        %1023 = vmatprep.subr.mxu0 0.0
        %1024 = vmatpush1.msra.mxu0 0.0
        %1025 = vmatprep.subr.mxu0 0.0
        %1026 = vmatpush1.msra.mxu0 0.0
        %1027 = vmatprep.subr.mxu0 0.0
        %1028 = vmatpush1.msra.mxu0 0.0
        %1029 = vmatprep.subr.mxu0 0.0
        %1030 = vmatpush1.msra.mxu0 0.0
        %1031 = vmatprep.subr.mxu0 0.0
        %1032 = vmatpush1.msra.mxu0 0.0
        %1033 = vmatprep.subr.mxu0 0.0
        %1034 = vmatpush1.msra.mxu0 0.0
        %1035 = vmatprep.subr.mxu0 0.0
        %1036 = vmatpush1.msra.mxu0 0.0
        %1037 = vmatprep.subr.mxu0 0.0
        %1038 = vmatpush1.msra.mxu0 0.0
        %1039 = vmatprep.subr.mxu0 0.0
        %1040 = vmatpush1.msra.mxu0 0.0
        %1041 = vmatprep.subr.mxu0 0.0
        %1042 = vmatpush1.msra.mxu0 0.0
        %1043 = vmatprep.subr.mxu0 0.0
        %1044 = vmatpush1.msra.mxu0 0.0
        %1045 = vmatprep.subr.mxu0 0.0
        %1046 = vmatpush1.msra.mxu0 0.0
        %1047 = vmatprep.subr.mxu0 0.0
        %1048 = vmatpush1.msra.mxu0 0.0
        %1049 = vmatprep.subr.mxu0 0.0
        %1050 = vmatpush1.msra.mxu0 0.0
        %1051 = vmatprep.subr.mxu0 0.0
        %1052 = vmatpush1.msra.mxu0 0.0
        %1053 = vmatprep.subr.mxu0 0.0
        %1054 = vmatpush1.msra.mxu0 0.0
        %1055 = vmatprep.subr.mxu0 0.0
        %1056 = vmatpush1.msra.mxu0 0.0
        %1057 = vmatprep.subr.mxu0 0.0
        %1058 = vmatpush1.msra.mxu0 0.0
        %1059 = vmatprep.subr.mxu0 0.0
        %1060 = vmatpush1.msra.mxu0 0.0
        %1061 = vmatprep.subr.mxu0 0.0
        %1062 = vmatpush1.msra.mxu0 0.0
        %1063 = vmatprep.subr.mxu0 0.0
        %1064 = vmatpush1.msra.mxu0 0.0
        %1065 = vmatprep.subr.mxu0 0.0
        %1066 = vmatpush1.msra.mxu0 0.0
        %1067 = vmatprep.subr.mxu0 0.0
        %1068 = vmatpush1.msra.mxu0 0.0
        %1069 = vmatprep.subr.mxu0 0.0
        %1070 = vmatpush1.msra.mxu0 0.0
        %1071 = vmatprep.subr.mxu0 0.0
        %1072 = vmatpush1.msra.mxu0 0.0
        %1073 = vmatprep.subr.mxu0 0.0
        %1074 = vmatpush1.msra.mxu0 0.0
        %1075 = vmatprep.mubr.f32.mxu0 0.0
        %1076 = vmatmul.mubr.f32.gmra.mrb[0].mxu0 %v1006
        %v1077 = vpop.f32.mrb[0].mxu0
        %v1078 = vadd.f32 0.0, %v1077
        %v1079 = vpop.f32.mrb[0].mxu0
        %1080 = vmatprep.mubr.f32.mxu0 0.0
        %1081 = vmatmul.mubr.f32.gmra.mrb[0].mxu0 %v1009
        %v1082 = vpop.f32.mrb[0].mxu0
        %v1083 = vadd.f32 0.0, %v1082
        %v1084 = vpop.f32.mrb[0].mxu0
        %1085 = vdwg.mxu0
        %v1086 = vadd.f32 %v904, %v1078
        %v1087 = vadd.f32 %v909, %v1083
        %v1089 = vsel %vm920, %v994, 0
        %v1092 = vsel %vm920, %v999, 0
        %1094 = vmatprep.subr.mxu0 0.0
        %1095 = vmatpush1.msra.mxu0 %v912
        %1096 = vmatprep.subr.mxu0 0.0
        %1097 = vmatpush1.msra.mxu0 %v913
        %1098 = vmatprep.subr.mxu0 0.0
        %1099 = vmatpush1.msra.mxu0 %v914
        %1100 = vmatprep.subr.mxu0 0.0
        %1101 = vmatpush1.msra.mxu0 %v915
        %1102 = vmatprep.subr.mxu0 0.0
        %1103 = vmatpush1.msra.mxu0 %v916
        %1104 = vmatprep.subr.mxu0 0.0
        %1105 = vmatpush1.msra.mxu0 %v917
        %1106 = vmatprep.subr.mxu0 0.0
        %1107 = vmatpush1.msra.mxu0 %v918
        %1108 = vmatprep.subr.mxu0 0.0
        %1109 = vmatpush1.msra.mxu0 %v919
        %1110 = vmatprep.subr.mxu0 0.0
        %1111 = vmatpush1.msra.mxu0 0.0
        %1112 = vmatprep.subr.mxu0 0.0
        %1113 = vmatpush1.msra.mxu0 0.0
        %1114 = vmatprep.subr.mxu0 0.0
        %1115 = vmatpush1.msra.mxu0 0.0
        %1116 = vmatprep.subr.mxu0 0.0
        %1117 = vmatpush1.msra.mxu0 0.0
        %1118 = vmatprep.subr.mxu0 0.0
        %1119 = vmatpush1.msra.mxu0 0.0
        %1120 = vmatprep.subr.mxu0 0.0
        %1121 = vmatpush1.msra.mxu0 0.0
        %1122 = vmatprep.subr.mxu0 0.0
        %1123 = vmatpush1.msra.mxu0 0.0
        %1124 = vmatprep.subr.mxu0 0.0
        %1125 = vmatpush1.msra.mxu0 0.0
        %1126 = vmatprep.subr.mxu0 0.0
        %1127 = vmatpush1.msra.mxu0 0.0
        %1128 = vmatprep.subr.mxu0 0.0
        %1129 = vmatpush1.msra.mxu0 0.0
        %1130 = vmatprep.subr.mxu0 0.0
        %1131 = vmatpush1.msra.mxu0 0.0
        %1132 = vmatprep.subr.mxu0 0.0
        %1133 = vmatpush1.msra.mxu0 0.0
        %1134 = vmatprep.subr.mxu0 0.0
        %1135 = vmatpush1.msra.mxu0 0.0
        %1136 = vmatprep.subr.mxu0 0.0
        %1137 = vmatpush1.msra.mxu0 0.0
        %1138 = vmatprep.subr.mxu0 0.0
        %1139 = vmatpush1.msra.mxu0 0.0
        %1140 = vmatprep.subr.mxu0 0.0
        %1141 = vmatpush1.msra.mxu0 0.0
        %1142 = vmatprep.subr.mxu0 0.0
        %1143 = vmatpush1.msra.mxu0 0.0
        %1144 = vmatprep.subr.mxu0 0.0
        %1145 = vmatpush1.msra.mxu0 0.0
        %1146 = vmatprep.subr.mxu0 0.0
        %1147 = vmatpush1.msra.mxu0 0.0
        %1148 = vmatprep.subr.mxu0 0.0
        %1149 = vmatpush1.msra.mxu0 0.0
        %1150 = vmatprep.subr.mxu0 0.0
        %1151 = vmatpush1.msra.mxu0 0.0
        %1152 = vmatprep.subr.mxu0 0.0
        %1153 = vmatpush1.msra.mxu0 0.0
        %1154 = vmatprep.subr.mxu0 0.0
        %1155 = vmatpush1.msra.mxu0 0.0
        %1156 = vmatprep.subr.mxu0 0.0
        %1157 = vmatpush1.msra.mxu0 0.0
        %1158 = vmatprep.mubr.f32.mxu0 0.0
        %1159 = vmatmul.mubr.f32.gmra.mrb[0].mxu0 %v1089
        %v1160 = vpop.f32.mrb[0].mxu0
        %v1161 = vadd.f32 0.0, %v1160
        %v1162 = vpop.f32.mrb[0].mxu0
        %1163 = vmatprep.mubr.f32.mxu0 0.0
        %1164 = vmatmul.mubr.f32.gmra.mrb[0].mxu0 %v1092
        %v1165 = vpop.f32.mrb[0].mxu0
        %v1166 = vadd.f32 0.0, %v1165
        %v1167 = vpop.f32.mrb[0].mxu0
        %1168 = vdwg.mxu0
        %s1169 = scalar_lea.vmem %s5, 32
        %v1170 = vld [vmem:[%s1169] sm:$0xff]
        %v1171 = vld [vmem:[%s1169 + $0x8] sm:$0xff]
        %v1173 = vsel %vm830, %v1170, 0
        %v1176 = vsel %vm830, %v1171, 0
        %1178 = vmatprep.subr.mxu0 0.0
        %1179 = vmatpush1.msra.mxu0 %v1161
        %1180 = vmatprep.subr.mxu0 0.0
        %1181 = vmatpush1.msra.mxu0 %v1166
        %1182 = vmatprep.subr.mxu0 0.0
        %1183 = vmatpush1.msra.mxu0 0.0
        %1184 = vmatprep.subr.mxu0 0.0
        %1185 = vmatpush1.msra.mxu0 0.0
        %1186 = vmatprep.subr.mxu0 0.0
        %1187 = vmatpush1.msra.mxu0 0.0
        %1188 = vmatprep.subr.mxu0 0.0
        %1189 = vmatpush1.msra.mxu0 0.0
        %1190 = vmatprep.subr.mxu0 0.0
        %1191 = vmatpush1.msra.mxu0 0.0
        %1192 = vmatprep.subr.mxu0 0.0
        %1193 = vmatpush1.msra.mxu0 0.0
        %1194 = vmatprep.subr.mxu0 0.0
        %1195 = vmatpush1.msra.mxu0 0.0
        %1196 = vmatprep.subr.mxu0 0.0
        %1197 = vmatpush1.msra.mxu0 0.0
        %1198 = vmatprep.subr.mxu0 0.0
        %1199 = vmatpush1.msra.mxu0 0.0
        %1200 = vmatprep.subr.mxu0 0.0
        %1201 = vmatpush1.msra.mxu0 0.0
        %1202 = vmatprep.subr.mxu0 0.0
        %1203 = vmatpush1.msra.mxu0 0.0
        %1204 = vmatprep.subr.mxu0 0.0
        %1205 = vmatpush1.msra.mxu0 0.0
        %1206 = vmatprep.subr.mxu0 0.0
        %1207 = vmatpush1.msra.mxu0 0.0
        %1208 = vmatprep.subr.mxu0 0.0
        %1209 = vmatpush1.msra.mxu0 0.0
        %1210 = vmatprep.subr.mxu0 0.0
        %1211 = vmatpush1.msra.mxu0 0.0
        %1212 = vmatprep.subr.mxu0 0.0
        %1213 = vmatpush1.msra.mxu0 0.0
        %1214 = vmatprep.subr.mxu0 0.0
        %1215 = vmatpush1.msra.mxu0 0.0
        %1216 = vmatprep.subr.mxu0 0.0
        %1217 = vmatpush1.msra.mxu0 0.0
        %1218 = vmatprep.subr.mxu0 0.0
        %1219 = vmatpush1.msra.mxu0 0.0
        %1220 = vmatprep.subr.mxu0 0.0
        %1221 = vmatpush1.msra.mxu0 0.0
        %1222 = vmatprep.subr.mxu0 0.0
        %1223 = vmatpush1.msra.mxu0 0.0
        %1224 = vmatprep.subr.mxu0 0.0
        %1225 = vmatpush1.msra.mxu0 0.0
        %1226 = vmatprep.subr.mxu0 0.0
        %1227 = vmatpush1.msra.mxu0 0.0
        %1228 = vmatprep.subr.mxu0 0.0
        %1229 = vmatpush1.msra.mxu0 0.0
        %1230 = vmatprep.subr.mxu0 0.0
        %1231 = vmatpush1.msra.mxu0 0.0
        %1232 = vmatprep.subr.mxu0 0.0
        %1233 = vmatpush1.msra.mxu0 0.0
        %1234 = vmatprep.subr.mxu0 0.0
        %1235 = vmatpush1.msra.mxu0 0.0
        %1236 = vmatprep.subr.mxu0 0.0
        %1237 = vmatpush1.msra.mxu0 0.0
        %1238 = vmatprep.subr.mxu0 0.0
        %1239 = vmatpush1.msra.mxu0 0.0
        %1240 = vmatprep.subr.mxu0 0.0
        %1241 = vmatpush1.msra.mxu0 0.0
        %1242 = vmatprep.mubr.f32.mxu0 0.0
        %1243 = vmatmul.mubr.f32.gmra.mrb[0].mxu0 %v1173
        %v1244 = vpop.f32.mrb[0].mxu0
        %v1245 = vadd.f32 0.0, %v1244
        %v1246 = vpop.f32.mrb[0].mxu0
        %1247 = vmatprep.mubr.f32.mxu0 0.0
        %1248 = vmatmul.mubr.f32.gmra.mrb[0].mxu0 %v1176
        %v1249 = vpop.f32.mrb[0].mxu0
        %v1250 = vadd.f32 0.0, %v1249
        %v1251 = vpop.f32.mrb[0].mxu0
        %1252 = vdwg.mxu0
        %v1253 = vadd.f32 %v1086, %v1245
        %v1254 = vadd.f32 %v1087, %v1250
        %v1255 = vld [vmem:[%s3] sm:$0xff]
        %v1256 = vld [vmem:[%s3 + $0x8] sm:$0xff]
        %v1257 = vld [vmem:[%s3 + $0x10] sm:$0xff]
        %v1258 = vld [vmem:[%s3 + $0x18] sm:$0xff]
        %v1259 = vld [vmem:[%s3 + $0x20] sm:$0xff]
        %v1260 = vld [vmem:[%s3 + $0x28] sm:$0xff]
        %v1261 = vld [vmem:[%s3 + $0x30] sm:$0xff]
        %v1262 = vld [vmem:[%s3 + $0x38] sm:$0xff]
        %1263 = vmatprep.subr.mxu0 0.0
        %1264 = vmatpush1.msra.mxu0 %v1255
        %1265 = vmatprep.subr.mxu0 0.0
        %1266 = vmatpush1.msra.mxu0 %v1256
        %1267 = vmatprep.subr.mxu0 0.0
        %1268 = vmatpush1.msra.mxu0 %v1257
        %1269 = vmatprep.subr.mxu0 0.0
        %1270 = vmatpush1.msra.mxu0 %v1258
        %1271 = vmatprep.subr.mxu0 0.0
        %1272 = vmatpush1.msra.mxu0 %v1259
        %1273 = vmatprep.subr.mxu0 0.0
        %1274 = vmatpush1.msra.mxu0 %v1260
        %1275 = vmatprep.subr.mxu0 0.0
        %1276 = vmatpush1.msra.mxu0 %v1261
        %1277 = vmatprep.subr.mxu0 0.0
        %1278 = vmatpush1.msra.mxu0 %v1262
        %1279 = vmatprep.subr.mxu0 0.0
        %1280 = vmatpush1.msra.mxu0 0.0
        %1281 = vmatprep.subr.mxu0 0.0
        %1282 = vmatpush1.msra.mxu0 0.0
        %1283 = vmatprep.subr.mxu0 0.0
        %1284 = vmatpush1.msra.mxu0 0.0
        %1285 = vmatprep.subr.mxu0 0.0
        %1286 = vmatpush1.msra.mxu0 0.0
        %1287 = vmatprep.subr.mxu0 0.0
        %1288 = vmatpush1.msra.mxu0 0.0
        %1289 = vmatprep.subr.mxu0 0.0
        %1290 = vmatpush1.msra.mxu0 0.0
        %1291 = vmatprep.subr.mxu0 0.0
        %1292 = vmatpush1.msra.mxu0 0.0
        %1293 = vmatprep.subr.mxu0 0.0
        %1294 = vmatpush1.msra.mxu0 0.0
        %1295 = vmatprep.subr.mxu0 0.0
        %1296 = vmatpush1.msra.mxu0 0.0
        %1297 = vmatprep.subr.mxu0 0.0
        %1298 = vmatpush1.msra.mxu0 0.0
        %1299 = vmatprep.subr.mxu0 0.0
        %1300 = vmatpush1.msra.mxu0 0.0
        %1301 = vmatprep.subr.mxu0 0.0
        %1302 = vmatpush1.msra.mxu0 0.0
        %1303 = vmatprep.subr.mxu0 0.0
        %1304 = vmatpush1.msra.mxu0 0.0
        %1305 = vmatprep.subr.mxu0 0.0
        %1306 = vmatpush1.msra.mxu0 0.0
        %1307 = vmatprep.subr.mxu0 0.0
        %1308 = vmatpush1.msra.mxu0 0.0
        %1309 = vmatprep.subr.mxu0 0.0
        %1310 = vmatpush1.msra.mxu0 0.0
        %1311 = vmatprep.subr.mxu0 0.0
        %1312 = vmatpush1.msra.mxu0 0.0
        %1313 = vmatprep.subr.mxu0 0.0
        %1314 = vmatpush1.msra.mxu0 0.0
        %1315 = vmatprep.subr.mxu0 0.0
        %1316 = vmatpush1.msra.mxu0 0.0
        %1317 = vmatprep.subr.mxu0 0.0
        %1318 = vmatpush1.msra.mxu0 0.0
        %1319 = vmatprep.subr.mxu0 0.0
        %1320 = vmatpush1.msra.mxu0 0.0
        %1321 = vmatprep.subr.mxu0 0.0
        %1322 = vmatpush1.msra.mxu0 0.0
        %1323 = vmatprep.subr.mxu0 0.0
        %1324 = vmatpush1.msra.mxu0 0.0
        %1325 = vmatprep.subr.mxu0 0.0
        %1326 = vmatpush1.msra.mxu0 0.0
        %1327 = vmatprep.mubr.f32.mxu0 0.0
        %1328 = vmatmul.mubr.f32.gmra.mrb[0].mxu0 %v922
        %v1329 = vpop.f32.mrb[0].mxu0
        %v1330 = vadd.f32 0.0, %v1329
        %v1331 = vpop.f32.mrb[0].mxu0
        %1332 = vmatprep.mubr.f32.mxu0 0.0
        %1333 = vmatmul.mubr.f32.gmra.mrb[0].mxu0 %v925
        %v1334 = vpop.f32.mrb[0].mxu0
        %v1335 = vadd.f32 0.0, %v1334
        %v1336 = vpop.f32.mrb[0].mxu0
        %1337 = vdwg.mxu0
        %s1338 = scalar_lea.vmem %s5, 48
        %v1339 = vld [vmem:[%s1338] sm:$0xff]
        %v1340 = vld [vmem:[%s1338 + $0x8] sm:$0xff]
        %v1342 = vsel %vm830, %v1339, 0
        %v1345 = vsel %vm830, %v1340, 0
        %1347 = vmatprep.subr.mxu0 0.0
        %1348 = vmatpush1.msra.mxu0 %v1330
        %1349 = vmatprep.subr.mxu0 0.0
        %1350 = vmatpush1.msra.mxu0 %v1335
        %1351 = vmatprep.subr.mxu0 0.0
        %1352 = vmatpush1.msra.mxu0 0.0
        %1353 = vmatprep.subr.mxu0 0.0
        %1354 = vmatpush1.msra.mxu0 0.0
        %1355 = vmatprep.subr.mxu0 0.0
        %1356 = vmatpush1.msra.mxu0 0.0
        %1357 = vmatprep.subr.mxu0 0.0
        %1358 = vmatpush1.msra.mxu0 0.0
        %1359 = vmatprep.subr.mxu0 0.0
        %1360 = vmatpush1.msra.mxu0 0.0
        %1361 = vmatprep.subr.mxu0 0.0
        %1362 = vmatpush1.msra.mxu0 0.0
        %1363 = vmatprep.subr.mxu0 0.0
        %1364 = vmatpush1.msra.mxu0 0.0
        %1365 = vmatprep.subr.mxu0 0.0
        %1366 = vmatpush1.msra.mxu0 0.0
        %1367 = vmatprep.subr.mxu0 0.0
        %1368 = vmatpush1.msra.mxu0 0.0
        %1369 = vmatprep.subr.mxu0 0.0
        %1370 = vmatpush1.msra.mxu0 0.0
        %1371 = vmatprep.subr.mxu0 0.0
        %1372 = vmatpush1.msra.mxu0 0.0
        %1373 = vmatprep.subr.mxu0 0.0
        %1374 = vmatpush1.msra.mxu0 0.0
        %1375 = vmatprep.subr.mxu0 0.0
        %1376 = vmatpush1.msra.mxu0 0.0
        %1377 = vmatprep.subr.mxu0 0.0
        %1378 = vmatpush1.msra.mxu0 0.0
        %1379 = vmatprep.subr.mxu0 0.0
        %1380 = vmatpush1.msra.mxu0 0.0
        %1381 = vmatprep.subr.mxu0 0.0
        %1382 = vmatpush1.msra.mxu0 0.0
        %1383 = vmatprep.subr.mxu0 0.0
        %1384 = vmatpush1.msra.mxu0 0.0
        %1385 = vmatprep.subr.mxu0 0.0
        %1386 = vmatpush1.msra.mxu0 0.0
        %1387 = vmatprep.subr.mxu0 0.0
        %1388 = vmatpush1.msra.mxu0 0.0
        %1389 = vmatprep.subr.mxu0 0.0
        %1390 = vmatpush1.msra.mxu0 0.0
        %1391 = vmatprep.subr.mxu0 0.0
        %1392 = vmatpush1.msra.mxu0 0.0
        %1393 = vmatprep.subr.mxu0 0.0
        %1394 = vmatpush1.msra.mxu0 0.0
        %1395 = vmatprep.subr.mxu0 0.0
        %1396 = vmatpush1.msra.mxu0 0.0
        %1397 = vmatprep.subr.mxu0 0.0
        %1398 = vmatpush1.msra.mxu0 0.0
        %1399 = vmatprep.subr.mxu0 0.0
        %1400 = vmatpush1.msra.mxu0 0.0
        %1401 = vmatprep.subr.mxu0 0.0
        %1402 = vmatpush1.msra.mxu0 0.0
        %1403 = vmatprep.subr.mxu0 0.0
        %1404 = vmatpush1.msra.mxu0 0.0
        %1405 = vmatprep.subr.mxu0 0.0
        %1406 = vmatpush1.msra.mxu0 0.0
        %1407 = vmatprep.subr.mxu0 0.0
        %1408 = vmatpush1.msra.mxu0 0.0
        %1409 = vmatprep.subr.mxu0 0.0
        %1410 = vmatpush1.msra.mxu0 0.0
        %1411 = vmatprep.mubr.f32.mxu0 0.0
        %1412 = vmatmul.mubr.f32.gmra.mrb[0].mxu0 %v1342
        %v1413 = vpop.f32.mrb[0].mxu0
        %v1414 = vadd.f32 0.0, %v1413
        %v1415 = vpop.f32.mrb[0].mxu0
        %1416 = vmatprep.mubr.f32.mxu0 0.0
        %1417 = vmatmul.mubr.f32.gmra.mrb[0].mxu0 %v1345
        %v1418 = vpop.f32.mrb[0].mxu0
        %v1419 = vadd.f32 0.0, %v1418
        %v1420 = vpop.f32.mrb[0].mxu0
        %1421 = vdwg.mxu0
        %v1422 = vadd.f32 %v1253, %v1414
        %v1423 = vadd.f32 %v1254, %v1419
        %v1425 = vsel %vm920, %v1330, 0
        %v1428 = vsel %vm920, %v1335, 0
        %1430 = vmatprep.subr.mxu0 0.0
        %1431 = vmatpush1.msra.mxu0 %v1255
        %1432 = vmatprep.subr.mxu0 0.0
        %1433 = vmatpush1.msra.mxu0 %v1256
        %1434 = vmatprep.subr.mxu0 0.0
        %1435 = vmatpush1.msra.mxu0 %v1257
        %1436 = vmatprep.subr.mxu0 0.0
        %1437 = vmatpush1.msra.mxu0 %v1258
        %1438 = vmatprep.subr.mxu0 0.0
        %1439 = vmatpush1.msra.mxu0 %v1259
        %1440 = vmatprep.subr.mxu0 0.0
        %1441 = vmatpush1.msra.mxu0 %v1260
        %1442 = vmatprep.subr.mxu0 0.0
        %1443 = vmatpush1.msra.mxu0 %v1261
        %1444 = vmatprep.subr.mxu0 0.0
        %1445 = vmatpush1.msra.mxu0 %v1262
        %1446 = vmatprep.subr.mxu0 0.0
        %1447 = vmatpush1.msra.mxu0 0.0
        %1448 = vmatprep.subr.mxu0 0.0
        %1449 = vmatpush1.msra.mxu0 0.0
        %1450 = vmatprep.subr.mxu0 0.0
        %1451 = vmatpush1.msra.mxu0 0.0
        %1452 = vmatprep.subr.mxu0 0.0
        %1453 = vmatpush1.msra.mxu0 0.0
        %1454 = vmatprep.subr.mxu0 0.0
        %1455 = vmatpush1.msra.mxu0 0.0
        %1456 = vmatprep.subr.mxu0 0.0
        %1457 = vmatpush1.msra.mxu0 0.0
        %1458 = vmatprep.subr.mxu0 0.0
        %1459 = vmatpush1.msra.mxu0 0.0
        %1460 = vmatprep.subr.mxu0 0.0
        %1461 = vmatpush1.msra.mxu0 0.0
        %1462 = vmatprep.subr.mxu0 0.0
        %1463 = vmatpush1.msra.mxu0 0.0
        %1464 = vmatprep.subr.mxu0 0.0
        %1465 = vmatpush1.msra.mxu0 0.0
        %1466 = vmatprep.subr.mxu0 0.0
        %1467 = vmatpush1.msra.mxu0 0.0
        %1468 = vmatprep.subr.mxu0 0.0
        %1469 = vmatpush1.msra.mxu0 0.0
        %1470 = vmatprep.subr.mxu0 0.0
        %1471 = vmatpush1.msra.mxu0 0.0
        %1472 = vmatprep.subr.mxu0 0.0
        %1473 = vmatpush1.msra.mxu0 0.0
        %1474 = vmatprep.subr.mxu0 0.0
        %1475 = vmatpush1.msra.mxu0 0.0
        %1476 = vmatprep.subr.mxu0 0.0
        %1477 = vmatpush1.msra.mxu0 0.0
        %1478 = vmatprep.subr.mxu0 0.0
        %1479 = vmatpush1.msra.mxu0 0.0
        %1480 = vmatprep.subr.mxu0 0.0
        %1481 = vmatpush1.msra.mxu0 0.0
        %1482 = vmatprep.subr.mxu0 0.0
        %1483 = vmatpush1.msra.mxu0 0.0
        %1484 = vmatprep.subr.mxu0 0.0
        %1485 = vmatpush1.msra.mxu0 0.0
        %1486 = vmatprep.subr.mxu0 0.0
        %1487 = vmatpush1.msra.mxu0 0.0
        %1488 = vmatprep.subr.mxu0 0.0
        %1489 = vmatpush1.msra.mxu0 0.0
        %1490 = vmatprep.subr.mxu0 0.0
        %1491 = vmatpush1.msra.mxu0 0.0
        %1492 = vmatprep.subr.mxu0 0.0
        %1493 = vmatpush1.msra.mxu0 0.0
        %1494 = vmatprep.mubr.f32.mxu0 0.0
        %1495 = vmatmul.mubr.f32.gmra.mrb[0].mxu0 %v1425
        %v1496 = vpop.f32.mrb[0].mxu0
        %v1497 = vadd.f32 0.0, %v1496
        %v1498 = vpop.f32.mrb[0].mxu0
        %1499 = vmatprep.mubr.f32.mxu0 0.0
        %1500 = vmatmul.mubr.f32.gmra.mrb[0].mxu0 %v1428
        %v1501 = vpop.f32.mrb[0].mxu0
        %v1502 = vadd.f32 0.0, %v1501
        %v1503 = vpop.f32.mrb[0].mxu0
        %1504 = vdwg.mxu0
        %s1505 = scalar_lea.vmem %s5, 64
        %v1506 = vld [vmem:[%s1505] sm:$0xff]
        %v1507 = vld [vmem:[%s1505 + $0x8] sm:$0xff]
        %v1509 = vsel %vm830, %v1506, 0
        %v1512 = vsel %vm830, %v1507, 0
        %1514 = vmatprep.subr.mxu0 0.0
        %1515 = vmatpush1.msra.mxu0 %v1497
        %1516 = vmatprep.subr.mxu0 0.0
        %1517 = vmatpush1.msra.mxu0 %v1502
        %1518 = vmatprep.subr.mxu0 0.0
        %1519 = vmatpush1.msra.mxu0 0.0
        %1520 = vmatprep.subr.mxu0 0.0
        %1521 = vmatpush1.msra.mxu0 0.0
        %1522 = vmatprep.subr.mxu0 0.0
        %1523 = vmatpush1.msra.mxu0 0.0
        %1524 = vmatprep.subr.mxu0 0.0
        %1525 = vmatpush1.msra.mxu0 0.0
        %1526 = vmatprep.subr.mxu0 0.0
        %1527 = vmatpush1.msra.mxu0 0.0
        %1528 = vmatprep.subr.mxu0 0.0
        %1529 = vmatpush1.msra.mxu0 0.0
        %1530 = vmatprep.subr.mxu0 0.0
        %1531 = vmatpush1.msra.mxu0 0.0
        %1532 = vmatprep.subr.mxu0 0.0
        %1533 = vmatpush1.msra.mxu0 0.0
        %1534 = vmatprep.subr.mxu0 0.0
        %1535 = vmatpush1.msra.mxu0 0.0
        %1536 = vmatprep.subr.mxu0 0.0
        %1537 = vmatpush1.msra.mxu0 0.0
        %1538 = vmatprep.subr.mxu0 0.0
        %1539 = vmatpush1.msra.mxu0 0.0
        %1540 = vmatprep.subr.mxu0 0.0
        %1541 = vmatpush1.msra.mxu0 0.0
        %1542 = vmatprep.subr.mxu0 0.0
        %1543 = vmatpush1.msra.mxu0 0.0
        %1544 = vmatprep.subr.mxu0 0.0
        %1545 = vmatpush1.msra.mxu0 0.0
        %1546 = vmatprep.subr.mxu0 0.0
        %1547 = vmatpush1.msra.mxu0 0.0
        %1548 = vmatprep.subr.mxu0 0.0
        %1549 = vmatpush1.msra.mxu0 0.0
        %1550 = vmatprep.subr.mxu0 0.0
        %1551 = vmatpush1.msra.mxu0 0.0
        %1552 = vmatprep.subr.mxu0 0.0
        %1553 = vmatpush1.msra.mxu0 0.0
        %1554 = vmatprep.subr.mxu0 0.0
        %1555 = vmatpush1.msra.mxu0 0.0
        %1556 = vmatprep.subr.mxu0 0.0
        %1557 = vmatpush1.msra.mxu0 0.0
        %1558 = vmatprep.subr.mxu0 0.0
        %1559 = vmatpush1.msra.mxu0 0.0
        %1560 = vmatprep.subr.mxu0 0.0
        %1561 = vmatpush1.msra.mxu0 0.0
        %1562 = vmatprep.subr.mxu0 0.0
        %1563 = vmatpush1.msra.mxu0 0.0
        %1564 = vmatprep.subr.mxu0 0.0
        %1565 = vmatpush1.msra.mxu0 0.0
        %1566 = vmatprep.subr.mxu0 0.0
        %1567 = vmatpush1.msra.mxu0 0.0
        %1568 = vmatprep.subr.mxu0 0.0
        %1569 = vmatpush1.msra.mxu0 0.0
        %1570 = vmatprep.subr.mxu0 0.0
        %1571 = vmatpush1.msra.mxu0 0.0
        %1572 = vmatprep.subr.mxu0 0.0
        %1573 = vmatpush1.msra.mxu0 0.0
        %1574 = vmatprep.subr.mxu0 0.0
        %1575 = vmatpush1.msra.mxu0 0.0
        %1576 = vmatprep.subr.mxu0 0.0
        %1577 = vmatpush1.msra.mxu0 0.0
        %1578 = vmatprep.mubr.f32.mxu0 0.0
        %1579 = vmatmul.mubr.f32.gmra.mrb[0].mxu0 %v1509
        %v1580 = vpop.f32.mrb[0].mxu0
        %v1581 = vadd.f32 0.0, %v1580
        %v1582 = vpop.f32.mrb[0].mxu0
        %1583 = vmatprep.mubr.f32.mxu0 0.0
        %1584 = vmatmul.mubr.f32.gmra.mrb[0].mxu0 %v1512
        %v1585 = vpop.f32.mrb[0].mxu0
        %v1586 = vadd.f32 0.0, %v1585
        %v1587 = vpop.f32.mrb[0].mxu0
        %1588 = vdwg.mxu0
        %v1589 = vadd.f32 %v1422, %v1581
        %v1590 = vadd.f32 %v1423, %v1586
        %v1591 = vld [vmem:[%s4] sm:$0xff]
        %v1592 = vld [vmem:[%s4 + $0x8] sm:$0xff]
        %v1593 = vld [vmem:[%s4 + $0x10] sm:$0xff]
        %v1594 = vld [vmem:[%s4 + $0x18] sm:$0xff]
        %v1595 = vld [vmem:[%s4 + $0x20] sm:$0xff]
        %v1596 = vld [vmem:[%s4 + $0x28] sm:$0xff]
        %v1597 = vld [vmem:[%s4 + $0x30] sm:$0xff]
        %v1598 = vld [vmem:[%s4 + $0x38] sm:$0xff]
        %1599 = vmatprep.subr.mxu0 0.0
        %1600 = vmatpush1.msra.mxu0 %v1591
        %1601 = vmatprep.subr.mxu0 0.0
        %1602 = vmatpush1.msra.mxu0 %v1592
        %1603 = vmatprep.subr.mxu0 0.0
        %1604 = vmatpush1.msra.mxu0 %v1593
        %1605 = vmatprep.subr.mxu0 0.0
        %1606 = vmatpush1.msra.mxu0 %v1594
        %1607 = vmatprep.subr.mxu0 0.0
        %1608 = vmatpush1.msra.mxu0 %v1595
        %1609 = vmatprep.subr.mxu0 0.0
        %1610 = vmatpush1.msra.mxu0 %v1596
        %1611 = vmatprep.subr.mxu0 0.0
        %1612 = vmatpush1.msra.mxu0 %v1597
        %1613 = vmatprep.subr.mxu0 0.0
        %1614 = vmatpush1.msra.mxu0 %v1598
        %1615 = vmatprep.subr.mxu0 0.0
        %1616 = vmatpush1.msra.mxu0 0.0
        %1617 = vmatprep.subr.mxu0 0.0
        %1618 = vmatpush1.msra.mxu0 0.0
        %1619 = vmatprep.subr.mxu0 0.0
        %1620 = vmatpush1.msra.mxu0 0.0
        %1621 = vmatprep.subr.mxu0 0.0
        %1622 = vmatpush1.msra.mxu0 0.0
        %1623 = vmatprep.subr.mxu0 0.0
        %1624 = vmatpush1.msra.mxu0 0.0
        %1625 = vmatprep.subr.mxu0 0.0
        %1626 = vmatpush1.msra.mxu0 0.0
        %1627 = vmatprep.subr.mxu0 0.0
        %1628 = vmatpush1.msra.mxu0 0.0
        %1629 = vmatprep.subr.mxu0 0.0
        %1630 = vmatpush1.msra.mxu0 0.0
        %1631 = vmatprep.subr.mxu0 0.0
        %1632 = vmatpush1.msra.mxu0 0.0
        %1633 = vmatprep.subr.mxu0 0.0
        %1634 = vmatpush1.msra.mxu0 0.0
        %1635 = vmatprep.subr.mxu0 0.0
        %1636 = vmatpush1.msra.mxu0 0.0
        %1637 = vmatprep.subr.mxu0 0.0
        %1638 = vmatpush1.msra.mxu0 0.0
        %1639 = vmatprep.subr.mxu0 0.0
        %1640 = vmatpush1.msra.mxu0 0.0
        %1641 = vmatprep.subr.mxu0 0.0
        %1642 = vmatpush1.msra.mxu0 0.0
        %1643 = vmatprep.subr.mxu0 0.0
        %1644 = vmatpush1.msra.mxu0 0.0
        %1645 = vmatprep.subr.mxu0 0.0
        %1646 = vmatpush1.msra.mxu0 0.0
        %1647 = vmatprep.subr.mxu0 0.0
        %1648 = vmatpush1.msra.mxu0 0.0
        %1649 = vmatprep.subr.mxu0 0.0
        %1650 = vmatpush1.msra.mxu0 0.0
        %1651 = vmatprep.subr.mxu0 0.0
        %1652 = vmatpush1.msra.mxu0 0.0
        %1653 = vmatprep.subr.mxu0 0.0
        %1654 = vmatpush1.msra.mxu0 0.0
        %1655 = vmatprep.subr.mxu0 0.0
        %1656 = vmatpush1.msra.mxu0 0.0
        %1657 = vmatprep.subr.mxu0 0.0
        %1658 = vmatpush1.msra.mxu0 0.0
        %1659 = vmatprep.subr.mxu0 0.0
        %1660 = vmatpush1.msra.mxu0 0.0
        %1661 = vmatprep.subr.mxu0 0.0
        %1662 = vmatpush1.msra.mxu0 0.0
        %1663 = vmatprep.mubr.f32.mxu0 0.0
        %1664 = vmatmul.mubr.f32.gmra.mrb[0].mxu0 %v922
        %v1665 = vpop.f32.mrb[0].mxu0
        %v1666 = vadd.f32 0.0, %v1665
        %v1667 = vpop.f32.mrb[0].mxu0
        %1668 = vmatprep.mubr.f32.mxu0 0.0
        %1669 = vmatmul.mubr.f32.gmra.mrb[0].mxu0 %v925
        %v1670 = vpop.f32.mrb[0].mxu0
        %v1671 = vadd.f32 0.0, %v1670
        %v1672 = vpop.f32.mrb[0].mxu0
        %1673 = vdwg.mxu0
        %s1674 = scalar_lea.vmem %s5, 80
        %v1675 = vld [vmem:[%s1674] sm:$0xff]
        %v1676 = vld [vmem:[%s1674 + $0x8] sm:$0xff]
        %v1678 = vsel %vm830, %v1675, 0
        %v1681 = vsel %vm830, %v1676, 0
        %1683 = vmatprep.subr.mxu0 0.0
        %1684 = vmatpush1.msra.mxu0 %v1666
        %1685 = vmatprep.subr.mxu0 0.0
        %1686 = vmatpush1.msra.mxu0 %v1671
        %1687 = vmatprep.subr.mxu0 0.0
        %1688 = vmatpush1.msra.mxu0 0.0
        %1689 = vmatprep.subr.mxu0 0.0
        %1690 = vmatpush1.msra.mxu0 0.0
        %1691 = vmatprep.subr.mxu0 0.0
        %1692 = vmatpush1.msra.mxu0 0.0
        %1693 = vmatprep.subr.mxu0 0.0
        %1694 = vmatpush1.msra.mxu0 0.0
        %1695 = vmatprep.subr.mxu0 0.0
        %1696 = vmatpush1.msra.mxu0 0.0
        %1697 = vmatprep.subr.mxu0 0.0
        %1698 = vmatpush1.msra.mxu0 0.0
        %1699 = vmatprep.subr.mxu0 0.0
        %1700 = vmatpush1.msra.mxu0 0.0
        %1701 = vmatprep.subr.mxu0 0.0
        %1702 = vmatpush1.msra.mxu0 0.0
        %1703 = vmatprep.subr.mxu0 0.0
        %1704 = vmatpush1.msra.mxu0 0.0
        %1705 = vmatprep.subr.mxu0 0.0
        %1706 = vmatpush1.msra.mxu0 0.0
        %1707 = vmatprep.subr.mxu0 0.0
        %1708 = vmatpush1.msra.mxu0 0.0
        %1709 = vmatprep.subr.mxu0 0.0
        %1710 = vmatpush1.msra.mxu0 0.0
        %1711 = vmatprep.subr.mxu0 0.0
        %1712 = vmatpush1.msra.mxu0 0.0
        %1713 = vmatprep.subr.mxu0 0.0
        %1714 = vmatpush1.msra.mxu0 0.0
        %1715 = vmatprep.subr.mxu0 0.0
        %1716 = vmatpush1.msra.mxu0 0.0
        %1717 = vmatprep.subr.mxu0 0.0
        %1718 = vmatpush1.msra.mxu0 0.0
        %1719 = vmatprep.subr.mxu0 0.0
        %1720 = vmatpush1.msra.mxu0 0.0
        %1721 = vmatprep.subr.mxu0 0.0
        %1722 = vmatpush1.msra.mxu0 0.0
        %1723 = vmatprep.subr.mxu0 0.0
        %1724 = vmatpush1.msra.mxu0 0.0
        %1725 = vmatprep.subr.mxu0 0.0
        %1726 = vmatpush1.msra.mxu0 0.0
        %1727 = vmatprep.subr.mxu0 0.0
        %1728 = vmatpush1.msra.mxu0 0.0
        %1729 = vmatprep.subr.mxu0 0.0
        %1730 = vmatpush1.msra.mxu0 0.0
        %1731 = vmatprep.subr.mxu0 0.0
        %1732 = vmatpush1.msra.mxu0 0.0
        %1733 = vmatprep.subr.mxu0 0.0
        %1734 = vmatpush1.msra.mxu0 0.0
        %1735 = vmatprep.subr.mxu0 0.0
        %1736 = vmatpush1.msra.mxu0 0.0
        %1737 = vmatprep.subr.mxu0 0.0
        %1738 = vmatpush1.msra.mxu0 0.0
        %1739 = vmatprep.subr.mxu0 0.0
        %1740 = vmatpush1.msra.mxu0 0.0
        %1741 = vmatprep.subr.mxu0 0.0
        %1742 = vmatpush1.msra.mxu0 0.0
        %1743 = vmatprep.subr.mxu0 0.0
        %1744 = vmatpush1.msra.mxu0 0.0
        %1745 = vmatprep.subr.mxu0 0.0
        %1746 = vmatpush1.msra.mxu0 0.0
        %1747 = vmatprep.mubr.f32.mxu0 0.0
        %1748 = vmatmul.mubr.f32.gmra.mrb[0].mxu0 %v1678
        %v1749 = vpop.f32.mrb[0].mxu0
        %v1750 = vadd.f32 0.0, %v1749
        %v1751 = vpop.f32.mrb[0].mxu0
        %1752 = vmatprep.mubr.f32.mxu0 0.0
        %1753 = vmatmul.mubr.f32.gmra.mrb[0].mxu0 %v1681
        %v1754 = vpop.f32.mrb[0].mxu0
        %v1755 = vadd.f32 0.0, %v1754
        %v1756 = vpop.f32.mrb[0].mxu0
        %1757 = vdwg.mxu0
        %v1758 = vadd.f32 %v1589, %v1750
        %v1759 = vadd.f32 %v1590, %v1755
        %v1761 = vsel %vm920, %v1666, 0
        %v1764 = vsel %vm920, %v1671, 0
        %1766 = vmatprep.subr.mxu0 0.0
        %1767 = vmatpush1.msra.mxu0 %v1591
        %1768 = vmatprep.subr.mxu0 0.0
        %1769 = vmatpush1.msra.mxu0 %v1592
        %1770 = vmatprep.subr.mxu0 0.0
        %1771 = vmatpush1.msra.mxu0 %v1593
        %1772 = vmatprep.subr.mxu0 0.0
        %1773 = vmatpush1.msra.mxu0 %v1594
        %1774 = vmatprep.subr.mxu0 0.0
        %1775 = vmatpush1.msra.mxu0 %v1595
        %1776 = vmatprep.subr.mxu0 0.0
        %1777 = vmatpush1.msra.mxu0 %v1596
        %1778 = vmatprep.subr.mxu0 0.0
        %1779 = vmatpush1.msra.mxu0 %v1597
        %1780 = vmatprep.subr.mxu0 0.0
        %1781 = vmatpush1.msra.mxu0 %v1598
        %1782 = vmatprep.subr.mxu0 0.0
        %1783 = vmatpush1.msra.mxu0 0.0
        %1784 = vmatprep.subr.mxu0 0.0
        %1785 = vmatpush1.msra.mxu0 0.0
        %1786 = vmatprep.subr.mxu0 0.0
        %1787 = vmatpush1.msra.mxu0 0.0
        %1788 = vmatprep.subr.mxu0 0.0
        %1789 = vmatpush1.msra.mxu0 0.0
        %1790 = vmatprep.subr.mxu0 0.0
        %1791 = vmatpush1.msra.mxu0 0.0
        %1792 = vmatprep.subr.mxu0 0.0
        %1793 = vmatpush1.msra.mxu0 0.0
        %1794 = vmatprep.subr.mxu0 0.0
        %1795 = vmatpush1.msra.mxu0 0.0
        %1796 = vmatprep.subr.mxu0 0.0
        %1797 = vmatpush1.msra.mxu0 0.0
        %1798 = vmatprep.subr.mxu0 0.0
        %1799 = vmatpush1.msra.mxu0 0.0
        %1800 = vmatprep.subr.mxu0 0.0
        %1801 = vmatpush1.msra.mxu0 0.0
        %1802 = vmatprep.subr.mxu0 0.0
        %1803 = vmatpush1.msra.mxu0 0.0
        %1804 = vmatprep.subr.mxu0 0.0
        %1805 = vmatpush1.msra.mxu0 0.0
        %1806 = vmatprep.subr.mxu0 0.0
        %1807 = vmatpush1.msra.mxu0 0.0
        %1808 = vmatprep.subr.mxu0 0.0
        %1809 = vmatpush1.msra.mxu0 0.0
        %1810 = vmatprep.subr.mxu0 0.0
        %1811 = vmatpush1.msra.mxu0 0.0
        %1812 = vmatprep.subr.mxu0 0.0
        %1813 = vmatpush1.msra.mxu0 0.0
        %1814 = vmatprep.subr.mxu0 0.0
        %1815 = vmatpush1.msra.mxu0 0.0
        %1816 = vmatprep.subr.mxu0 0.0
        %1817 = vmatpush1.msra.mxu0 0.0
        %1818 = vmatprep.subr.mxu0 0.0
        %1819 = vmatpush1.msra.mxu0 0.0
        %1820 = vmatprep.subr.mxu0 0.0
        %1821 = vmatpush1.msra.mxu0 0.0
        %1822 = vmatprep.subr.mxu0 0.0
        %1823 = vmatpush1.msra.mxu0 0.0
        %1824 = vmatprep.subr.mxu0 0.0
        %1825 = vmatpush1.msra.mxu0 0.0
        %1826 = vmatprep.subr.mxu0 0.0
        %1827 = vmatpush1.msra.mxu0 0.0
        %1828 = vmatprep.subr.mxu0 0.0
        %1829 = vmatpush1.msra.mxu0 0.0
        %1830 = vmatprep.mubr.f32.mxu0 0.0
        %1831 = vmatmul.mubr.f32.gmra.mrb[0].mxu0 %v1761
        %v1832 = vpop.f32.mrb[0].mxu0
        %v1833 = vadd.f32 0.0, %v1832
        %v1834 = vpop.f32.mrb[0].mxu0
        %1835 = vmatprep.mubr.f32.mxu0 0.0
        %1836 = vmatmul.mubr.f32.gmra.mrb[0].mxu0 %v1764
        %v1837 = vpop.f32.mrb[0].mxu0
        %v1838 = vadd.f32 0.0, %v1837
        %v1839 = vpop.f32.mrb[0].mxu0
        %1840 = vdwg.mxu0
        %s1841 = scalar_lea.vmem %s5, 96
        %v1842 = vld [vmem:[%s1841] sm:$0xff]
        %v1843 = vld [vmem:[%s1841 + $0x8] sm:$0xff]
        %v1845 = vsel %vm830, %v1842, 0
        %v1848 = vsel %vm830, %v1843, 0
        %1850 = vmatprep.subr.mxu0 0.0
        %1851 = vmatpush1.msra.mxu0 %v1833
        %1852 = vmatprep.subr.mxu0 0.0
        %1853 = vmatpush1.msra.mxu0 %v1838
        %1854 = vmatprep.subr.mxu0 0.0
        %1855 = vmatpush1.msra.mxu0 0.0
        %1856 = vmatprep.subr.mxu0 0.0
        %1857 = vmatpush1.msra.mxu0 0.0
        %1858 = vmatprep.subr.mxu0 0.0
        %1859 = vmatpush1.msra.mxu0 0.0
        %1860 = vmatprep.subr.mxu0 0.0
        %1861 = vmatpush1.msra.mxu0 0.0
        %1862 = vmatprep.subr.mxu0 0.0
        %1863 = vmatpush1.msra.mxu0 0.0
        %1864 = vmatprep.subr.mxu0 0.0
        %1865 = vmatpush1.msra.mxu0 0.0
        %1866 = vmatprep.subr.mxu0 0.0
        %1867 = vmatpush1.msra.mxu0 0.0
        %1868 = vmatprep.subr.mxu0 0.0
        %1869 = vmatpush1.msra.mxu0 0.0
        %1870 = vmatprep.subr.mxu0 0.0
        %1871 = vmatpush1.msra.mxu0 0.0
        %1872 = vmatprep.subr.mxu0 0.0
        %1873 = vmatpush1.msra.mxu0 0.0
        %1874 = vmatprep.subr.mxu0 0.0
        %1875 = vmatpush1.msra.mxu0 0.0
        %1876 = vmatprep.subr.mxu0 0.0
        %1877 = vmatpush1.msra.mxu0 0.0
        %1878 = vmatprep.subr.mxu0 0.0
        %1879 = vmatpush1.msra.mxu0 0.0
        %1880 = vmatprep.subr.mxu0 0.0
        %1881 = vmatpush1.msra.mxu0 0.0
        %1882 = vmatprep.subr.mxu0 0.0
        %1883 = vmatpush1.msra.mxu0 0.0
        %1884 = vmatprep.subr.mxu0 0.0
        %1885 = vmatpush1.msra.mxu0 0.0
        %1886 = vmatprep.subr.mxu0 0.0
        %1887 = vmatpush1.msra.mxu0 0.0
        %1888 = vmatprep.subr.mxu0 0.0
        %1889 = vmatpush1.msra.mxu0 0.0
        %1890 = vmatprep.subr.mxu0 0.0
        %1891 = vmatpush1.msra.mxu0 0.0
        %1892 = vmatprep.subr.mxu0 0.0
        %1893 = vmatpush1.msra.mxu0 0.0
        %1894 = vmatprep.subr.mxu0 0.0
        %1895 = vmatpush1.msra.mxu0 0.0
        %1896 = vmatprep.subr.mxu0 0.0
        %1897 = vmatpush1.msra.mxu0 0.0
        %1898 = vmatprep.subr.mxu0 0.0
        %1899 = vmatpush1.msra.mxu0 0.0
        %1900 = vmatprep.subr.mxu0 0.0
        %1901 = vmatpush1.msra.mxu0 0.0
        %1902 = vmatprep.subr.mxu0 0.0
        %1903 = vmatpush1.msra.mxu0 0.0
        %1904 = vmatprep.subr.mxu0 0.0
        %1905 = vmatpush1.msra.mxu0 0.0
        %1906 = vmatprep.subr.mxu0 0.0
        %1907 = vmatpush1.msra.mxu0 0.0
        %1908 = vmatprep.subr.mxu0 0.0
        %1909 = vmatpush1.msra.mxu0 0.0
        %1910 = vmatprep.subr.mxu0 0.0
        %1911 = vmatpush1.msra.mxu0 0.0
        %1912 = vmatprep.subr.mxu0 0.0
        %1913 = vmatpush1.msra.mxu0 0.0
        %1914 = vmatprep.mubr.f32.mxu0 0.0
        %1915 = vmatmul.mubr.f32.gmra.mrb[0].mxu0 %v1845
        %v1916 = vpop.f32.mrb[0].mxu0
        %v1917 = vadd.f32 0.0, %v1916
        %v1918 = vpop.f32.mrb[0].mxu0
        %1919 = vmatprep.mubr.f32.mxu0 0.0
        %1920 = vmatmul.mubr.f32.gmra.mrb[0].mxu0 %v1848
        %v1921 = vpop.f32.mrb[0].mxu0
        %v1922 = vadd.f32 0.0, %v1921
        %v1923 = vpop.f32.mrb[0].mxu0
        %1924 = vdwg.mxu0
        %v1925 = vadd.f32 %v1758, %v1917
        %v1926 = vadd.f32 %v1759, %v1922
        %v1927 = vadd.f32 %v810, %v1925
        %v1928 = vadd.f32 %v811, %v1926
        %v1929 = vld [vmem:[%s7] sm:$0xff]
        %v1930 = vld [vmem:[%s7 + $0x8] sm:$0xff]
        %v1931 = vld [vmem:[%s8] sm:$0xff]
        %v1932 = vld [vmem:[%s8 + $0x8] sm:$0xff]
        %v1934 = vsel %vm830, %v814, 0
        %v1937 = vsel %vm830, %v815, 0
        %1939 = vmatprep.subr.mxu0 0.0
        %1940 = vmatpush1.msra.mxu0 %v1927
        %1941 = vmatprep.subr.mxu0 0.0
        %1942 = vmatpush1.msra.mxu0 %v1928
        %1943 = vmatprep.subr.mxu0 0.0
        %1944 = vmatpush1.msra.mxu0 0.0
        %1945 = vmatprep.subr.mxu0 0.0
        %1946 = vmatpush1.msra.mxu0 0.0
        %1947 = vmatprep.subr.mxu0 0.0
        %1948 = vmatpush1.msra.mxu0 0.0
        %1949 = vmatprep.subr.mxu0 0.0
        %1950 = vmatpush1.msra.mxu0 0.0
        %1951 = vmatprep.subr.mxu0 0.0
        %1952 = vmatpush1.msra.mxu0 0.0
        %1953 = vmatprep.subr.mxu0 0.0
        %1954 = vmatpush1.msra.mxu0 0.0
        %1955 = vmatprep.subr.mxu0 0.0
        %1956 = vmatpush1.msra.mxu0 0.0
        %1957 = vmatprep.subr.mxu0 0.0
        %1958 = vmatpush1.msra.mxu0 0.0
        %1959 = vmatprep.subr.mxu0 0.0
        %1960 = vmatpush1.msra.mxu0 0.0
        %1961 = vmatprep.subr.mxu0 0.0
        %1962 = vmatpush1.msra.mxu0 0.0
        %1963 = vmatprep.subr.mxu0 0.0
        %1964 = vmatpush1.msra.mxu0 0.0
        %1965 = vmatprep.subr.mxu0 0.0
        %1966 = vmatpush1.msra.mxu0 0.0
        %1967 = vmatprep.subr.mxu0 0.0
        %1968 = vmatpush1.msra.mxu0 0.0
        %1969 = vmatprep.subr.mxu0 0.0
        %1970 = vmatpush1.msra.mxu0 0.0
        %1971 = vmatprep.subr.mxu0 0.0
        %1972 = vmatpush1.msra.mxu0 0.0
        %1973 = vmatprep.subr.mxu0 0.0
        %1974 = vmatpush1.msra.mxu0 0.0
        %1975 = vmatprep.subr.mxu0 0.0
        %1976 = vmatpush1.msra.mxu0 0.0
        %1977 = vmatprep.subr.mxu0 0.0
        %1978 = vmatpush1.msra.mxu0 0.0
        %1979 = vmatprep.subr.mxu0 0.0
        %1980 = vmatpush1.msra.mxu0 0.0
        %1981 = vmatprep.subr.mxu0 0.0
        %1982 = vmatpush1.msra.mxu0 0.0
        %1983 = vmatprep.subr.mxu0 0.0
        %1984 = vmatpush1.msra.mxu0 0.0
        %1985 = vmatprep.subr.mxu0 0.0
        %1986 = vmatpush1.msra.mxu0 0.0
        %1987 = vmatprep.subr.mxu0 0.0
        %1988 = vmatpush1.msra.mxu0 0.0
        %1989 = vmatprep.subr.mxu0 0.0
        %1990 = vmatpush1.msra.mxu0 0.0
        %1991 = vmatprep.subr.mxu0 0.0
        %1992 = vmatpush1.msra.mxu0 0.0
        %1993 = vmatprep.subr.mxu0 0.0
        %1994 = vmatpush1.msra.mxu0 0.0
        %1995 = vmatprep.subr.mxu0 0.0
        %1996 = vmatpush1.msra.mxu0 0.0
        %1997 = vmatprep.subr.mxu0 0.0
        %1998 = vmatpush1.msra.mxu0 0.0
        %1999 = vmatprep.subr.mxu0 0.0
        %2000 = vmatpush1.msra.mxu0 0.0
        %2001 = vmatprep.subr.mxu0 0.0
        %2002 = vmatpush1.msra.mxu0 0.0
        %2003 = vmatprep.mubr.f32.mxu0 0.0
        %2004 = vmatmul.mubr.f32.gmra.mrb[0].mxu0 %v1934
        %v2005 = vpop.f32.mrb[0].mxu0
        %v2006 = vadd.f32 0.0, %v2005
        %v2007 = vpop.f32.mrb[0].mxu0
        %2008 = vmatprep.mubr.f32.mxu0 0.0
        %2009 = vmatmul.mubr.f32.gmra.mrb[0].mxu0 %v1937
        %v2010 = vpop.f32.mrb[0].mxu0
        %v2011 = vadd.f32 0.0, %v2010
        %v2012 = vpop.f32.mrb[0].mxu0
        %2013 = vdwg.mxu0
        %v2014 = vsel %vm920, %v2006, 0.0
        %2015 = vadd.xlane.f32.xlu0 %v2014
        %v2016 = vpop.xlane.xlu0 %2015
        %v2017 = vsel %vm920, %v2011, 0.0
        %2018 = vadd.xlane.f32.xlu0 %v2017
        %v2019 = vpop.xlane.xlu0 %2018
        %v2020 = vmul.f32 %v1927, %v1927
        %v2021 = vmul.f32 %v1928, %v1928
        %2022 = vmatprep.subr.mxu0 0.0
        %2023 = vmatpush1.msra.mxu0 %v2020
        %2024 = vmatprep.subr.mxu0 0.0
        %2025 = vmatpush1.msra.mxu0 %v2021
        %2026 = vmatprep.subr.mxu0 0.0
        %2027 = vmatpush1.msra.mxu0 0.0
        %2028 = vmatprep.subr.mxu0 0.0
        %2029 = vmatpush1.msra.mxu0 0.0
        %2030 = vmatprep.subr.mxu0 0.0
        %2031 = vmatpush1.msra.mxu0 0.0
        %2032 = vmatprep.subr.mxu0 0.0
        %2033 = vmatpush1.msra.mxu0 0.0
        %2034 = vmatprep.subr.mxu0 0.0
        %2035 = vmatpush1.msra.mxu0 0.0
        %2036 = vmatprep.subr.mxu0 0.0
        %2037 = vmatpush1.msra.mxu0 0.0
        %2038 = vmatprep.subr.mxu0 0.0
        %2039 = vmatpush1.msra.mxu0 0.0
        %2040 = vmatprep.subr.mxu0 0.0
        %2041 = vmatpush1.msra.mxu0 0.0
        %2042 = vmatprep.subr.mxu0 0.0
        %2043 = vmatpush1.msra.mxu0 0.0
        %2044 = vmatprep.subr.mxu0 0.0
        %2045 = vmatpush1.msra.mxu0 0.0
        %2046 = vmatprep.subr.mxu0 0.0
        %2047 = vmatpush1.msra.mxu0 0.0
        %2048 = vmatprep.subr.mxu0 0.0
        %2049 = vmatpush1.msra.mxu0 0.0
        %2050 = vmatprep.subr.mxu0 0.0
        %2051 = vmatpush1.msra.mxu0 0.0
        %2052 = vmatprep.subr.mxu0 0.0
        %2053 = vmatpush1.msra.mxu0 0.0
        %2054 = vmatprep.subr.mxu0 0.0
        %2055 = vmatpush1.msra.mxu0 0.0
        %2056 = vmatprep.subr.mxu0 0.0
        %2057 = vmatpush1.msra.mxu0 0.0
        %2058 = vmatprep.subr.mxu0 0.0
        %2059 = vmatpush1.msra.mxu0 0.0
        %2060 = vmatprep.subr.mxu0 0.0
        %2061 = vmatpush1.msra.mxu0 0.0
        %2062 = vmatprep.subr.mxu0 0.0
        %2063 = vmatpush1.msra.mxu0 0.0
        %2064 = vmatprep.subr.mxu0 0.0
        %2065 = vmatpush1.msra.mxu0 0.0
        %2066 = vmatprep.subr.mxu0 0.0
        %2067 = vmatpush1.msra.mxu0 0.0
        %2068 = vmatprep.subr.mxu0 0.0
        %2069 = vmatpush1.msra.mxu0 0.0
        %2070 = vmatprep.subr.mxu0 0.0
        %2071 = vmatpush1.msra.mxu0 0.0
        %2072 = vmatprep.subr.mxu0 0.0
        %2073 = vmatpush1.msra.mxu0 0.0
        %2074 = vmatprep.subr.mxu0 0.0
        %2075 = vmatpush1.msra.mxu0 0.0
        %2076 = vmatprep.subr.mxu0 0.0
        %2077 = vmatpush1.msra.mxu0 0.0
        %2078 = vmatprep.subr.mxu0 0.0
        %2079 = vmatpush1.msra.mxu0 0.0
        %2080 = vmatprep.subr.mxu0 0.0
        %2081 = vmatpush1.msra.mxu0 0.0
        %2082 = vmatprep.subr.mxu0 0.0
        %2083 = vmatpush1.msra.mxu0 0.0
        %2084 = vmatprep.subr.mxu0 0.0
        %2085 = vmatpush1.msra.mxu0 0.0
        %2086 = vmatprep.mubr.f32.mxu0 0.0
        %2087 = vmatmul.mubr.f32.gmra.mrb[0].mxu0 %v1934
        %v2088 = vpop.f32.mrb[0].mxu0
        %v2089 = vadd.f32 0.0, %v2088
        %v2090 = vpop.f32.mrb[0].mxu0
        %2091 = vmatprep.mubr.f32.mxu0 0.0
        %2092 = vmatmul.mubr.f32.gmra.mrb[0].mxu0 %v1937
        %v2093 = vpop.f32.mrb[0].mxu0
        %v2094 = vadd.f32 0.0, %v2093
        %v2095 = vpop.f32.mrb[0].mxu0
        %2096 = vdwg.mxu0
        %v2097 = vsel %vm920, %v2089, 0.0
        %2098 = vadd.xlane.f32.xlu0 %v2097
        %v2099 = vpop.xlane.xlu0 %2098
        %v2100 = vsel %vm920, %v2094, 0.0
        %2101 = vadd.xlane.f32.xlu0 %v2100
        %v2102 = vpop.xlane.xlu0 %2101
        %v2103 = vmul.f32 %v2016, %v2016
        %v2104 = vmul.f32 %v2019, %v2019
        %v2105 = vsub.f32 %v2099, %v2103
        %v2106 = vsub.f32 %v2102, %v2104
        %v2107 = vadd.f32 %v2105, 1e-05
        %v2108 = vadd.f32 %v2106, 1e-05
        %v2109 = vrsqrt.pop %v2107
        %v2110 = vrsqrt.pop %v2108
        %v2111 = vsub.f32 %v1927, %v2016
        %v2112 = vsub.f32 %v1928, %v2019
        %v2113 = vmul.f32 %v2111, %v2109
        %v2114 = vmul.f32 %v2112, %v2110
        %2116 = vset.pattern.permute.xlu0 0
        %2117 = vperm.xlu0 %2116, %v1929
        %v2118 = vpop.permute.xlu0 %2117
        %2121 = vset.pattern.permute.xlu0 0
        %2122 = vperm.xlu0 %2121, %v1930
        %v2123 = vpop.permute.xlu0 %2122
        %v2125 = vmul.f32 %v2113, %v2118
        %v2126 = vmul.f32 %v2114, %v2123
        %2128 = vset.pattern.permute.xlu0 0
        %2129 = vperm.xlu0 %2128, %v1931
        %v2130 = vpop.permute.xlu0 %2129
        %2133 = vset.pattern.permute.xlu0 0
        %2134 = vperm.xlu0 %2133, %v1932
        %v2135 = vpop.permute.xlu0 %2134
        %v2137 = vadd.f32 %v2125, %v2130
        %v2138 = vadd.f32 %v2126, %v2135
        %v2139 = vld [vmem:[%s16] sm:$0xff]
        %v2140 = vld [vmem:[%s16 + $0x8] sm:$0xff]
        %v2141 = vld [vmem:[%s16 + $0x10] sm:$0xff]
        %v2142 = vld [vmem:[%s16 + $0x18] sm:$0xff]
        %v2143 = vld [vmem:[%s16 + $0x20] sm:$0xff]
        %v2144 = vld [vmem:[%s16 + $0x28] sm:$0xff]
        %v2145 = vld [vmem:[%s16 + $0x30] sm:$0xff]
        %v2146 = vld [vmem:[%s16 + $0x38] sm:$0xff]
        %2147 = vxpose.xlu0.b32.start [1/16] %v812, 128
        %2148 = vxpose.xlu0.b32.cont [2/16] %v813, 128
        %2149 = vxpose.xlu0.b32.cont [3/16] 0.0, 128
        %2150 = vxpose.xlu0.b32.cont [4/16] 0.0, 128
        %2151 = vxpose.xlu0.b32.cont [5/16] 0.0, 128
        %2152 = vxpose.xlu0.b32.cont [6/16] 0.0, 128
        %2153 = vxpose.xlu0.b32.cont [7/16] 0.0, 128
        %2154 = vxpose.xlu0.b32.cont [8/16] 0.0, 128
        %2155 = vxpose.xlu0.b32.cont [9/16] 0.0, 128
        %2156 = vxpose.xlu0.b32.cont [10/16] 0.0, 128
        %2157 = vxpose.xlu0.b32.cont [11/16] 0.0, 128
        %2158 = vxpose.xlu0.b32.cont [12/16] 0.0, 128
        %2159 = vxpose.xlu0.b32.cont [13/16] 0.0, 128
        %2160 = vxpose.xlu0.b32.cont [14/16] 0.0, 128
        %2161 = vxpose.xlu0.b32.cont [15/16] 0.0, 128
        %2162 = vxpose.xlu0.b32.end [16/16] 0.0, 128
        %v2163 = vpop.trf.xlu0
        %v2164 = vpop.trf.xlu0
        %v2165 = vpop.trf.xlu0
        %v2166 = vpop.trf.xlu0
        %v2167 = vpop.trf.xlu0
        %v2168 = vpop.trf.xlu0
        %v2169 = vpop.trf.xlu0
        %v2170 = vpop.trf.xlu0
        %v2171 = vpop.trf.xlu0
        %v2172 = vpop.trf.xlu0
        %v2173 = vpop.trf.xlu0
        %v2174 = vpop.trf.xlu0
        %v2175 = vpop.trf.xlu0
        %v2176 = vpop.trf.xlu0
        %v2177 = vpop.trf.xlu0
        %v2178 = vpop.trf.xlu0
        %v2179 = vld [vmem:[%s12] sm:$0xff]
        %v2180 = vld [vmem:[%s12 + $0x8] sm:$0xff]
        %v2181 = vld [vmem:[%s12 + $0x10] sm:$0xff]
        %v2182 = vld [vmem:[%s12 + $0x18] sm:$0xff]
        %v2183 = vld [vmem:[%s12 + $0x20] sm:$0xff]
        %v2184 = vld [vmem:[%s12 + $0x28] sm:$0xff]
        %v2185 = vld [vmem:[%s12 + $0x30] sm:$0xff]
        %v2186 = vld [vmem:[%s12 + $0x38] sm:$0xff]
        %v2188 = vsel %vm920, %v812, 0
        %v2191 = vsel %vm920, %v813, 0
        %2193 = vmatprep.subr.mxu0 0.0
        %2194 = vmatpush1.msra.mxu0 %v2179
        %2195 = vmatprep.subr.mxu0 0.0
        %2196 = vmatpush1.msra.mxu0 %v2180
        %2197 = vmatprep.subr.mxu0 0.0
        %2198 = vmatpush1.msra.mxu0 %v2181
        %2199 = vmatprep.subr.mxu0 0.0
        %2200 = vmatpush1.msra.mxu0 %v2182
        %2201 = vmatprep.subr.mxu0 0.0
        %2202 = vmatpush1.msra.mxu0 %v2183
        %2203 = vmatprep.subr.mxu0 0.0
        %2204 = vmatpush1.msra.mxu0 %v2184
        %2205 = vmatprep.subr.mxu0 0.0
        %2206 = vmatpush1.msra.mxu0 %v2185
        %2207 = vmatprep.subr.mxu0 0.0
        %2208 = vmatpush1.msra.mxu0 %v2186
        %2209 = vmatprep.subr.mxu0 0.0
        %2210 = vmatpush1.msra.mxu0 0.0
        %2211 = vmatprep.subr.mxu0 0.0
        %2212 = vmatpush1.msra.mxu0 0.0
        %2213 = vmatprep.subr.mxu0 0.0
        %2214 = vmatpush1.msra.mxu0 0.0
        %2215 = vmatprep.subr.mxu0 0.0
        %2216 = vmatpush1.msra.mxu0 0.0
        %2217 = vmatprep.subr.mxu0 0.0
        %2218 = vmatpush1.msra.mxu0 0.0
        %2219 = vmatprep.subr.mxu0 0.0
        %2220 = vmatpush1.msra.mxu0 0.0
        %2221 = vmatprep.subr.mxu0 0.0
        %2222 = vmatpush1.msra.mxu0 0.0
        %2223 = vmatprep.subr.mxu0 0.0
        %2224 = vmatpush1.msra.mxu0 0.0
        %2225 = vmatprep.subr.mxu0 0.0
        %2226 = vmatpush1.msra.mxu0 0.0
        %2227 = vmatprep.subr.mxu0 0.0
        %2228 = vmatpush1.msra.mxu0 0.0
        %2229 = vmatprep.subr.mxu0 0.0
        %2230 = vmatpush1.msra.mxu0 0.0
        %2231 = vmatprep.subr.mxu0 0.0
        %2232 = vmatpush1.msra.mxu0 0.0
        %2233 = vmatprep.subr.mxu0 0.0
        %2234 = vmatpush1.msra.mxu0 0.0
        %2235 = vmatprep.subr.mxu0 0.0
        %2236 = vmatpush1.msra.mxu0 0.0
        %2237 = vmatprep.subr.mxu0 0.0
        %2238 = vmatpush1.msra.mxu0 0.0
        %2239 = vmatprep.subr.mxu0 0.0
        %2240 = vmatpush1.msra.mxu0 0.0
        %2241 = vmatprep.subr.mxu0 0.0
        %2242 = vmatpush1.msra.mxu0 0.0
        %2243 = vmatprep.subr.mxu0 0.0
        %2244 = vmatpush1.msra.mxu0 0.0
        %2245 = vmatprep.subr.mxu0 0.0
        %2246 = vmatpush1.msra.mxu0 0.0
        %2247 = vmatprep.subr.mxu0 0.0
        %2248 = vmatpush1.msra.mxu0 0.0
        %2249 = vmatprep.subr.mxu0 0.0
        %2250 = vmatpush1.msra.mxu0 0.0
        %2251 = vmatprep.subr.mxu0 0.0
        %2252 = vmatpush1.msra.mxu0 0.0
        %2253 = vmatprep.subr.mxu0 0.0
        %2254 = vmatpush1.msra.mxu0 0.0
        %2255 = vmatprep.subr.mxu0 0.0
        %2256 = vmatpush1.msra.mxu0 0.0
        %2257 = vmatprep.mubr.f32.mxu0 0.0
        %2258 = vmatmul.mubr.f32.gmra.mrb[0].mxu0 %v2188
        %v2259 = vpop.f32.mrb[0].mxu0
        %v2260 = vadd.f32 0.0, %v2259
        %v2261 = vpop.f32.mrb[0].mxu0
        %2262 = vmatprep.mubr.f32.mxu0 0.0
        %2263 = vmatmul.mubr.f32.gmra.mrb[0].mxu0 %v2191
        %v2264 = vpop.f32.mrb[0].mxu0
        %v2265 = vadd.f32 0.0, %v2264
        %v2266 = vpop.f32.mrb[0].mxu0
        %2267 = vdwg.mxu0
        %v2268 = vld [vmem:[%s13] sm:$0xff]
        %v2269 = vld [vmem:[%s13 + $0x8] sm:$0xff]
        %v2270 = vld [vmem:[%s13 + $0x10] sm:$0xff]
        %v2271 = vld [vmem:[%s13 + $0x18] sm:$0xff]
        %v2272 = vld [vmem:[%s13 + $0x20] sm:$0xff]
        %v2273 = vld [vmem:[%s13 + $0x28] sm:$0xff]
        %v2274 = vld [vmem:[%s13 + $0x30] sm:$0xff]
        %v2275 = vld [vmem:[%s13 + $0x38] sm:$0xff]
        %v2277 = vsel %vm920, %v2268, 0
        %v2280 = vsel %vm920, %v2269, 0
        %v2283 = vsel %vm920, %v2270, 0
        %v2286 = vsel %vm920, %v2271, 0
        %v2289 = vsel %vm920, %v2272, 0
        %v2292 = vsel %vm920, %v2273, 0
        %v2295 = vsel %vm920, %v2274, 0
        %v2298 = vsel %vm920, %v2275, 0
        %2300 = vmatprep.subr.mxu0 0.0
        %2301 = vmatpush1.xpose.msra.mxu0 %v922
        %2302 = vmatprep.subr.mxu0 0.0
        %2303 = vmatpush1.xpose.msra.mxu0 %v925
        %2304 = vmatprep.subr.mxu0 0.0
        %2305 = vmatpush1.xpose.msra.mxu0 0.0
        %2306 = vmatprep.subr.mxu0 0.0
        %2307 = vmatpush1.xpose.msra.mxu0 0.0
        %2308 = vmatprep.subr.mxu0 0.0
        %2309 = vmatpush1.xpose.msra.mxu0 0.0
        %2310 = vmatprep.subr.mxu0 0.0
        %2311 = vmatpush1.xpose.msra.mxu0 0.0
        %2312 = vmatprep.subr.mxu0 0.0
        %2313 = vmatpush1.xpose.msra.mxu0 0.0
        %2314 = vmatprep.subr.mxu0 0.0
        %2315 = vmatpush1.xpose.msra.mxu0 0.0
        %2316 = vmatprep.subr.mxu0 0.0
        %2317 = vmatpush1.xpose.msra.mxu0 0.0
        %2318 = vmatprep.subr.mxu0 0.0
        %2319 = vmatpush1.xpose.msra.mxu0 0.0
        %2320 = vmatprep.subr.mxu0 0.0
        %2321 = vmatpush1.xpose.msra.mxu0 0.0
        %2322 = vmatprep.subr.mxu0 0.0
        %2323 = vmatpush1.xpose.msra.mxu0 0.0
        %2324 = vmatprep.subr.mxu0 0.0
        %2325 = vmatpush1.xpose.msra.mxu0 0.0
        %2326 = vmatprep.subr.mxu0 0.0
        %2327 = vmatpush1.xpose.msra.mxu0 0.0
        %2328 = vmatprep.subr.mxu0 0.0
        %2329 = vmatpush1.xpose.msra.mxu0 0.0
        %2330 = vmatprep.subr.mxu0 0.0
        %2331 = vmatpush1.xpose.msra.mxu0 0.0
        %2332 = vmatprep.subr.mxu0 0.0
        %2333 = vmatpush1.xpose.msra.mxu0 0.0
        %2334 = vmatprep.subr.mxu0 0.0
        %2335 = vmatpush1.xpose.msra.mxu0 0.0
        %2336 = vmatprep.subr.mxu0 0.0
        %2337 = vmatpush1.xpose.msra.mxu0 0.0
        %2338 = vmatprep.subr.mxu0 0.0
        %2339 = vmatpush1.xpose.msra.mxu0 0.0
        %2340 = vmatprep.subr.mxu0 0.0
        %2341 = vmatpush1.xpose.msra.mxu0 0.0
        %2342 = vmatprep.subr.mxu0 0.0
        %2343 = vmatpush1.xpose.msra.mxu0 0.0
        %2344 = vmatprep.subr.mxu0 0.0
        %2345 = vmatpush1.xpose.msra.mxu0 0.0
        %2346 = vmatprep.subr.mxu0 0.0
        %2347 = vmatpush1.xpose.msra.mxu0 0.0
        %2348 = vmatprep.subr.mxu0 0.0
        %2349 = vmatpush1.xpose.msra.mxu0 0.0
        %2350 = vmatprep.subr.mxu0 0.0
        %2351 = vmatpush1.xpose.msra.mxu0 0.0
        %2352 = vmatprep.subr.mxu0 0.0
        %2353 = vmatpush1.xpose.msra.mxu0 0.0
        %2354 = vmatprep.subr.mxu0 0.0
        %2355 = vmatpush1.xpose.msra.mxu0 0.0
        %2356 = vmatprep.subr.mxu0 0.0
        %2357 = vmatpush1.xpose.msra.mxu0 0.0
        %2358 = vmatprep.subr.mxu0 0.0
        %2359 = vmatpush1.xpose.msra.mxu0 0.0
        %2360 = vmatprep.subr.mxu0 0.0
        %2361 = vmatpush1.xpose.msra.mxu0 0.0
        %2362 = vmatprep.subr.mxu0 0.0
        %2363 = vmatpush1.xpose.msra.mxu0 0.0
        %2364 = vmatprep.mubr.f32.mxu0 0.0
        %2365 = vmatmul.mubr.f32.gmra.mrb[0].mxu0 %v2277
        %v2366 = vpop.f32.mrb[0].mxu0
        %v2367 = vadd.f32 0.0, %v2366
        %v2368 = vpop.f32.mrb[0].mxu0
        %2369 = vmatprep.mubr.f32.mxu0 0.0
        %2370 = vmatmul.mubr.f32.gmra.mrb[0].mxu0 %v2280
        %v2371 = vpop.f32.mrb[0].mxu0
        %v2372 = vadd.f32 0.0, %v2371
        %v2373 = vpop.f32.mrb[0].mxu0
        %2374 = vmatprep.mubr.f32.mxu0 0.0
        %2375 = vmatmul.mubr.f32.gmra.mrb[0].mxu0 %v2283
        %v2376 = vpop.f32.mrb[0].mxu0
        %v2377 = vadd.f32 0.0, %v2376
        %v2378 = vpop.f32.mrb[0].mxu0
        %2379 = vmatprep.mubr.f32.mxu0 0.0
        %2380 = vmatmul.mubr.f32.gmra.mrb[0].mxu0 %v2286
        %v2381 = vpop.f32.mrb[0].mxu0
        %v2382 = vadd.f32 0.0, %v2381
        %v2383 = vpop.f32.mrb[0].mxu0
        %2384 = vmatprep.mubr.f32.mxu0 0.0
        %2385 = vmatmul.mubr.f32.gmra.mrb[0].mxu0 %v2289
        %v2386 = vpop.f32.mrb[0].mxu0
        %v2387 = vadd.f32 0.0, %v2386
        %v2388 = vpop.f32.mrb[0].mxu0
        %2389 = vmatprep.mubr.f32.mxu0 0.0
        %2390 = vmatmul.mubr.f32.gmra.mrb[0].mxu0 %v2292
        %v2391 = vpop.f32.mrb[0].mxu0
        %v2392 = vadd.f32 0.0, %v2391
        %v2393 = vpop.f32.mrb[0].mxu0
        %2394 = vmatprep.mubr.f32.mxu0 0.0
        %2395 = vmatmul.mubr.f32.gmra.mrb[0].mxu0 %v2295
        %v2396 = vpop.f32.mrb[0].mxu0
        %v2397 = vadd.f32 0.0, %v2396
        %v2398 = vpop.f32.mrb[0].mxu0
        %2399 = vmatprep.mubr.f32.mxu0 0.0
        %2400 = vmatmul.mubr.f32.gmra.mrb[0].mxu0 %v2298
        %v2401 = vpop.f32.mrb[0].mxu0
        %v2402 = vadd.f32 0.0, %v2401
        %v2403 = vpop.f32.mrb[0].mxu0
        %2404 = vdwg.mxu0
        %v2405 = vld [vmem:[%s9] sm:$0xff]
        %v2406 = vld [vmem:[%s9 + $0x8] sm:$0xff]
        %v2408 = vsel %vm830, %v2163, 0
        %v2411 = vsel %vm830, %v2164, 0
        %v2414 = vsel %vm830, %v2165, 0
        %v2417 = vsel %vm830, %v2166, 0
        %v2420 = vsel %vm830, %v2167, 0
        %v2423 = vsel %vm830, %v2168, 0
        %v2426 = vsel %vm830, %v2169, 0
        %v2429 = vsel %vm830, %v2170, 0
        %2431 = vmatprep.subr.mxu0 0.0
        %2432 = vmatpush1.msra.mxu0 %v2405
        %2433 = vmatprep.subr.mxu0 0.0
        %2434 = vmatpush1.msra.mxu0 %v2406
        %2435 = vmatprep.subr.mxu0 0.0
        %2436 = vmatpush1.msra.mxu0 0.0
        %2437 = vmatprep.subr.mxu0 0.0
        %2438 = vmatpush1.msra.mxu0 0.0
        %2439 = vmatprep.subr.mxu0 0.0
        %2440 = vmatpush1.msra.mxu0 0.0
        %2441 = vmatprep.subr.mxu0 0.0
        %2442 = vmatpush1.msra.mxu0 0.0
        %2443 = vmatprep.subr.mxu0 0.0
        %2444 = vmatpush1.msra.mxu0 0.0
        %2445 = vmatprep.subr.mxu0 0.0
        %2446 = vmatpush1.msra.mxu0 0.0
        %2447 = vmatprep.subr.mxu0 0.0
        %2448 = vmatpush1.msra.mxu0 0.0
        %2449 = vmatprep.subr.mxu0 0.0
        %2450 = vmatpush1.msra.mxu0 0.0
        %2451 = vmatprep.subr.mxu0 0.0
        %2452 = vmatpush1.msra.mxu0 0.0
        %2453 = vmatprep.subr.mxu0 0.0
        %2454 = vmatpush1.msra.mxu0 0.0
        %2455 = vmatprep.subr.mxu0 0.0
        %2456 = vmatpush1.msra.mxu0 0.0
        %2457 = vmatprep.subr.mxu0 0.0
        %2458 = vmatpush1.msra.mxu0 0.0
        %2459 = vmatprep.subr.mxu0 0.0
        %2460 = vmatpush1.msra.mxu0 0.0
        %2461 = vmatprep.subr.mxu0 0.0
        %2462 = vmatpush1.msra.mxu0 0.0
        %2463 = vmatprep.subr.mxu0 0.0
        %2464 = vmatpush1.msra.mxu0 0.0
        %2465 = vmatprep.subr.mxu0 0.0
        %2466 = vmatpush1.msra.mxu0 0.0
        %2467 = vmatprep.subr.mxu0 0.0
        %2468 = vmatpush1.msra.mxu0 0.0
        %2469 = vmatprep.subr.mxu0 0.0
        %2470 = vmatpush1.msra.mxu0 0.0
        %2471 = vmatprep.subr.mxu0 0.0
        %2472 = vmatpush1.msra.mxu0 0.0
        %2473 = vmatprep.subr.mxu0 0.0
        %2474 = vmatpush1.msra.mxu0 0.0
        %2475 = vmatprep.subr.mxu0 0.0
        %2476 = vmatpush1.msra.mxu0 0.0
        %2477 = vmatprep.subr.mxu0 0.0
        %2478 = vmatpush1.msra.mxu0 0.0
        %2479 = vmatprep.subr.mxu0 0.0
        %2480 = vmatpush1.msra.mxu0 0.0
        %2481 = vmatprep.subr.mxu0 0.0
        %2482 = vmatpush1.msra.mxu0 0.0
        %2483 = vmatprep.subr.mxu0 0.0
        %2484 = vmatpush1.msra.mxu0 0.0
        %2485 = vmatprep.subr.mxu0 0.0
        %2486 = vmatpush1.msra.mxu0 0.0
        %2487 = vmatprep.subr.mxu0 0.0
        %2488 = vmatpush1.msra.mxu0 0.0
        %2489 = vmatprep.subr.mxu0 0.0
        %2490 = vmatpush1.msra.mxu0 0.0
        %2491 = vmatprep.subr.mxu0 0.0
        %2492 = vmatpush1.msra.mxu0 0.0
        %2493 = vmatprep.subr.mxu0 0.0
        %2494 = vmatpush1.msra.mxu0 0.0
        %2495 = vmatprep.mubr.f32.mxu0 0.0
        %2496 = vmatmul.mubr.f32.gmra.mrb[0].mxu0 %v2408
        %v2497 = vpop.f32.mrb[0].mxu0
        %v2498 = vadd.f32 0.0, %v2497
        %v2499 = vpop.f32.mrb[0].mxu0
        %2500 = vmatprep.mubr.f32.mxu0 0.0
        %2501 = vmatmul.mubr.f32.gmra.mrb[0].mxu0 %v2411
        %v2502 = vpop.f32.mrb[0].mxu0
        %v2503 = vadd.f32 0.0, %v2502
        %v2504 = vpop.f32.mrb[0].mxu0
        %2505 = vmatprep.mubr.f32.mxu0 0.0
        %2506 = vmatmul.mubr.f32.gmra.mrb[0].mxu0 %v2414
        %v2507 = vpop.f32.mrb[0].mxu0
        %v2508 = vadd.f32 0.0, %v2507
        %v2509 = vpop.f32.mrb[0].mxu0
        %2510 = vmatprep.mubr.f32.mxu0 0.0
        %2511 = vmatmul.mubr.f32.gmra.mrb[0].mxu0 %v2417
        %v2512 = vpop.f32.mrb[0].mxu0
        %v2513 = vadd.f32 0.0, %v2512
        %v2514 = vpop.f32.mrb[0].mxu0
        %2515 = vmatprep.mubr.f32.mxu0 0.0
        %2516 = vmatmul.mubr.f32.gmra.mrb[0].mxu0 %v2420
        %v2517 = vpop.f32.mrb[0].mxu0
        %v2518 = vadd.f32 0.0, %v2517
        %v2519 = vpop.f32.mrb[0].mxu0
        %2520 = vmatprep.mubr.f32.mxu0 0.0
        %2521 = vmatmul.mubr.f32.gmra.mrb[0].mxu0 %v2423
        %v2522 = vpop.f32.mrb[0].mxu0
        %v2523 = vadd.f32 0.0, %v2522
        %v2524 = vpop.f32.mrb[0].mxu0
        %2525 = vmatprep.mubr.f32.mxu0 0.0
        %2526 = vmatmul.mubr.f32.gmra.mrb[0].mxu0 %v2426
        %v2527 = vpop.f32.mrb[0].mxu0
        %v2528 = vadd.f32 0.0, %v2527
        %v2529 = vpop.f32.mrb[0].mxu0
        %2530 = vmatprep.mubr.f32.mxu0 0.0
        %2531 = vmatmul.mubr.f32.gmra.mrb[0].mxu0 %v2429
        %v2532 = vpop.f32.mrb[0].mxu0
        %v2533 = vadd.f32 0.0, %v2532
        %v2534 = vpop.f32.mrb[0].mxu0
        %2535 = vdwg.mxu0
        %v2536 = vld [vmem:[%s10] sm:$0xf]
        %v2538 = vsel %vm830, %v2536, 0
        %2540 = vmatprep.subr.mxu0 0.0
        %2541 = vmatpush1.msra.mxu0 %v2260
        %2542 = vmatprep.subr.mxu0 0.0
        %2543 = vmatpush1.msra.mxu0 %v2265
        %2544 = vmatprep.subr.mxu0 0.0
        %2545 = vmatpush1.msra.mxu0 0.0
        %2546 = vmatprep.subr.mxu0 0.0
        %2547 = vmatpush1.msra.mxu0 0.0
        %2548 = vmatprep.subr.mxu0 0.0
        %2549 = vmatpush1.msra.mxu0 0.0
        %2550 = vmatprep.subr.mxu0 0.0
        %2551 = vmatpush1.msra.mxu0 0.0
        %2552 = vmatprep.subr.mxu0 0.0
        %2553 = vmatpush1.msra.mxu0 0.0
        %2554 = vmatprep.subr.mxu0 0.0
        %2555 = vmatpush1.msra.mxu0 0.0
        %2556 = vmatprep.subr.mxu0 0.0
        %2557 = vmatpush1.msra.mxu0 0.0
        %2558 = vmatprep.subr.mxu0 0.0
        %2559 = vmatpush1.msra.mxu0 0.0
        %2560 = vmatprep.subr.mxu0 0.0
        %2561 = vmatpush1.msra.mxu0 0.0
        %2562 = vmatprep.subr.mxu0 0.0
        %2563 = vmatpush1.msra.mxu0 0.0
        %2564 = vmatprep.subr.mxu0 0.0
        %2565 = vmatpush1.msra.mxu0 0.0
        %2566 = vmatprep.subr.mxu0 0.0
        %2567 = vmatpush1.msra.mxu0 0.0
        %2568 = vmatprep.subr.mxu0 0.0
        %2569 = vmatpush1.msra.mxu0 0.0
        %2570 = vmatprep.subr.mxu0 0.0
        %2571 = vmatpush1.msra.mxu0 0.0
        %2572 = vmatprep.subr.mxu0 0.0
        %2573 = vmatpush1.msra.mxu0 0.0
        %2574 = vmatprep.subr.mxu0 0.0
        %2575 = vmatpush1.msra.mxu0 0.0
        %2576 = vmatprep.subr.mxu0 0.0
        %2577 = vmatpush1.msra.mxu0 0.0
        %2578 = vmatprep.subr.mxu0 0.0
        %2579 = vmatpush1.msra.mxu0 0.0
        %2580 = vmatprep.subr.mxu0 0.0
        %2581 = vmatpush1.msra.mxu0 0.0
        %2582 = vmatprep.subr.mxu0 0.0
        %2583 = vmatpush1.msra.mxu0 0.0
        %2584 = vmatprep.subr.mxu0 0.0
        %2585 = vmatpush1.msra.mxu0 0.0
        %2586 = vmatprep.subr.mxu0 0.0
        %2587 = vmatpush1.msra.mxu0 0.0
        %2588 = vmatprep.subr.mxu0 0.0
        %2589 = vmatpush1.msra.mxu0 0.0
        %2590 = vmatprep.subr.mxu0 0.0
        %2591 = vmatpush1.msra.mxu0 0.0
        %2592 = vmatprep.subr.mxu0 0.0
        %2593 = vmatpush1.msra.mxu0 0.0
        %2594 = vmatprep.subr.mxu0 0.0
        %2595 = vmatpush1.msra.mxu0 0.0
        %2596 = vmatprep.subr.mxu0 0.0
        %2597 = vmatpush1.msra.mxu0 0.0
        %2598 = vmatprep.subr.mxu0 0.0
        %2599 = vmatpush1.msra.mxu0 0.0
        %2600 = vmatprep.subr.mxu0 0.0
        %2601 = vmatpush1.msra.mxu0 0.0
        %2602 = vmatprep.subr.mxu0 0.0
        %2603 = vmatpush1.msra.mxu0 0.0
        %2604 = vmatprep.mubr.f32.mxu0 0.0
        %2605 = vmatmul.mubr.f32.gmra.mrb[0].mxu0 %v2538
        %v2606 = vpop.f32.mrb[0].mxu0
        %v2607 = vadd.f32 0.0, %v2606
        %v2608 = vpop.f32.mrb[0].mxu0
        %2609 = vdwg.mxu0
        %v2610 = vld [vmem:[%s11] sm:$0xff]
        %v2611 = vld [vmem:[%s11 + $0x8] sm:$0xff]
        %v2613 = vsel %vm830, %v2367, 0
        %v2616 = vsel %vm830, %v2372, 0
        %v2619 = vsel %vm830, %v2377, 0
        %v2622 = vsel %vm830, %v2382, 0
        %v2625 = vsel %vm830, %v2387, 0
        %v2628 = vsel %vm830, %v2392, 0
        %v2631 = vsel %vm830, %v2397, 0
        %v2634 = vsel %vm830, %v2402, 0
        %2636 = vmatprep.subr.mxu0 0.0
        %2637 = vmatpush1.msra.mxu0 %v2610
        %2638 = vmatprep.subr.mxu0 0.0
        %2639 = vmatpush1.msra.mxu0 %v2611
        %2640 = vmatprep.subr.mxu0 0.0
        %2641 = vmatpush1.msra.mxu0 0.0
        %2642 = vmatprep.subr.mxu0 0.0
        %2643 = vmatpush1.msra.mxu0 0.0
        %2644 = vmatprep.subr.mxu0 0.0
        %2645 = vmatpush1.msra.mxu0 0.0
        %2646 = vmatprep.subr.mxu0 0.0
        %2647 = vmatpush1.msra.mxu0 0.0
        %2648 = vmatprep.subr.mxu0 0.0
        %2649 = vmatpush1.msra.mxu0 0.0
        %2650 = vmatprep.subr.mxu0 0.0
        %2651 = vmatpush1.msra.mxu0 0.0
        %2652 = vmatprep.subr.mxu0 0.0
        %2653 = vmatpush1.msra.mxu0 0.0
        %2654 = vmatprep.subr.mxu0 0.0
        %2655 = vmatpush1.msra.mxu0 0.0
        %2656 = vmatprep.subr.mxu0 0.0
        %2657 = vmatpush1.msra.mxu0 0.0
        %2658 = vmatprep.subr.mxu0 0.0
        %2659 = vmatpush1.msra.mxu0 0.0
        %2660 = vmatprep.subr.mxu0 0.0
        %2661 = vmatpush1.msra.mxu0 0.0
        %2662 = vmatprep.subr.mxu0 0.0
        %2663 = vmatpush1.msra.mxu0 0.0
        %2664 = vmatprep.subr.mxu0 0.0
        %2665 = vmatpush1.msra.mxu0 0.0
        %2666 = vmatprep.subr.mxu0 0.0
        %2667 = vmatpush1.msra.mxu0 0.0
        %2668 = vmatprep.subr.mxu0 0.0
        %2669 = vmatpush1.msra.mxu0 0.0
        %2670 = vmatprep.subr.mxu0 0.0
        %2671 = vmatpush1.msra.mxu0 0.0
        %2672 = vmatprep.subr.mxu0 0.0
        %2673 = vmatpush1.msra.mxu0 0.0
        %2674 = vmatprep.subr.mxu0 0.0
        %2675 = vmatpush1.msra.mxu0 0.0
        %2676 = vmatprep.subr.mxu0 0.0
        %2677 = vmatpush1.msra.mxu0 0.0
        %2678 = vmatprep.subr.mxu0 0.0
        %2679 = vmatpush1.msra.mxu0 0.0
        %2680 = vmatprep.subr.mxu0 0.0
        %2681 = vmatpush1.msra.mxu0 0.0
        %2682 = vmatprep.subr.mxu0 0.0
        %2683 = vmatpush1.msra.mxu0 0.0
        %2684 = vmatprep.subr.mxu0 0.0
        %2685 = vmatpush1.msra.mxu0 0.0
        %2686 = vmatprep.subr.mxu0 0.0
        %2687 = vmatpush1.msra.mxu0 0.0
        %2688 = vmatprep.subr.mxu0 0.0
        %2689 = vmatpush1.msra.mxu0 0.0
        %2690 = vmatprep.subr.mxu0 0.0
        %2691 = vmatpush1.msra.mxu0 0.0
        %2692 = vmatprep.subr.mxu0 0.0
        %2693 = vmatpush1.msra.mxu0 0.0
        %2694 = vmatprep.subr.mxu0 0.0
        %2695 = vmatpush1.msra.mxu0 0.0
        %2696 = vmatprep.subr.mxu0 0.0
        %2697 = vmatpush1.msra.mxu0 0.0
        %2698 = vmatprep.subr.mxu0 0.0
        %2699 = vmatpush1.msra.mxu0 0.0
        %2700 = vmatprep.mubr.f32.mxu0 0.0
        %2701 = vmatmul.mubr.f32.gmra.mrb[0].mxu0 %v2613
        %v2702 = vpop.f32.mrb[0].mxu0
        %v2703 = vadd.f32 0.0, %v2702
        %v2704 = vpop.f32.mrb[0].mxu0
        %2705 = vmatprep.mubr.f32.mxu0 0.0
        %2706 = vmatmul.mubr.f32.gmra.mrb[0].mxu0 %v2616
        %v2707 = vpop.f32.mrb[0].mxu0
        %v2708 = vadd.f32 0.0, %v2707
        %v2709 = vpop.f32.mrb[0].mxu0
        %2710 = vmatprep.mubr.f32.mxu0 0.0
        %2711 = vmatmul.mubr.f32.gmra.mrb[0].mxu0 %v2619
        %v2712 = vpop.f32.mrb[0].mxu0
        %v2713 = vadd.f32 0.0, %v2712
        %v2714 = vpop.f32.mrb[0].mxu0
        %2715 = vmatprep.mubr.f32.mxu0 0.0
        %2716 = vmatmul.mubr.f32.gmra.mrb[0].mxu0 %v2622
        %v2717 = vpop.f32.mrb[0].mxu0
        %v2718 = vadd.f32 0.0, %v2717
        %v2719 = vpop.f32.mrb[0].mxu0
        %2720 = vmatprep.mubr.f32.mxu0 0.0
        %2721 = vmatmul.mubr.f32.gmra.mrb[0].mxu0 %v2625
        %v2722 = vpop.f32.mrb[0].mxu0
        %v2723 = vadd.f32 0.0, %v2722
        %v2724 = vpop.f32.mrb[0].mxu0
        %2725 = vmatprep.mubr.f32.mxu0 0.0
        %2726 = vmatmul.mubr.f32.gmra.mrb[0].mxu0 %v2628
        %v2727 = vpop.f32.mrb[0].mxu0
        %v2728 = vadd.f32 0.0, %v2727
        %v2729 = vpop.f32.mrb[0].mxu0
        %2730 = vmatprep.mubr.f32.mxu0 0.0
        %2731 = vmatmul.mubr.f32.gmra.mrb[0].mxu0 %v2631
        %v2732 = vpop.f32.mrb[0].mxu0
        %v2733 = vadd.f32 0.0, %v2732
        %v2734 = vpop.f32.mrb[0].mxu0
        %2735 = vmatprep.mubr.f32.mxu0 0.0
        %2736 = vmatmul.mubr.f32.gmra.mrb[0].mxu0 %v2634
        %v2737 = vpop.f32.mrb[0].mxu0
        %v2738 = vadd.f32 0.0, %v2737
        %v2739 = vpop.f32.mrb[0].mxu0
        %2740 = vdwg.mxu0
        %vm2741 = vcmask 31744
        %v2743 = vsel %vm2741, %v2498, 0
        %v2746 = vsel %vm2741, %v2503, 0
        %v2749 = vsel %vm2741, %v2508, 0
        %v2752 = vsel %vm2741, %v2513, 0
        %v2755 = vsel %vm2741, %v2518, 0
        %v2758 = vsel %vm2741, %v2523, 0
        %v2761 = vsel %vm2741, %v2528, 0
        %v2764 = vsel %vm2741, %v2533, 0
        %vm2766 = vcmask 1043456
        %v2768 = vsel %vm2766, %v2607, 0
        %2770 = vmatprep.subr.mxu0 0.0
        %2771 = vmatpush1.msra.mxu0 %v2768
        %2772 = vmatprep.subr.mxu0 0.0
        %2773 = vmatpush1.msra.mxu0 0.0
        %2774 = vmatprep.subr.mxu0 0.0
        %2775 = vmatpush1.msra.mxu0 0.0
        %2776 = vmatprep.subr.mxu0 0.0
        %2777 = vmatpush1.msra.mxu0 0.0
        %2778 = vmatprep.subr.mxu0 0.0
        %2779 = vmatpush1.msra.mxu0 0.0
        %2780 = vmatprep.subr.mxu0 0.0
        %2781 = vmatpush1.msra.mxu0 0.0
        %2782 = vmatprep.subr.mxu0 0.0
        %2783 = vmatpush1.msra.mxu0 0.0
        %2784 = vmatprep.subr.mxu0 0.0
        %2785 = vmatpush1.msra.mxu0 0.0
        %2786 = vmatprep.subr.mxu0 0.0
        %2787 = vmatpush1.msra.mxu0 0.0
        %2788 = vmatprep.subr.mxu0 0.0
        %2789 = vmatpush1.msra.mxu0 0.0
        %2790 = vmatprep.subr.mxu0 0.0
        %2791 = vmatpush1.msra.mxu0 0.0
        %2792 = vmatprep.subr.mxu0 0.0
        %2793 = vmatpush1.msra.mxu0 0.0
        %2794 = vmatprep.subr.mxu0 0.0
        %2795 = vmatpush1.msra.mxu0 0.0
        %2796 = vmatprep.subr.mxu0 0.0
        %2797 = vmatpush1.msra.mxu0 0.0
        %2798 = vmatprep.subr.mxu0 0.0
        %2799 = vmatpush1.msra.mxu0 0.0
        %2800 = vmatprep.subr.mxu0 0.0
        %2801 = vmatpush1.msra.mxu0 0.0
        %2802 = vmatprep.subr.mxu0 0.0
        %2803 = vmatpush1.msra.mxu0 0.0
        %2804 = vmatprep.subr.mxu0 0.0
        %2805 = vmatpush1.msra.mxu0 0.0
        %2806 = vmatprep.subr.mxu0 0.0
        %2807 = vmatpush1.msra.mxu0 0.0
        %2808 = vmatprep.subr.mxu0 0.0
        %2809 = vmatpush1.msra.mxu0 0.0
        %2810 = vmatprep.subr.mxu0 0.0
        %2811 = vmatpush1.msra.mxu0 0.0
        %2812 = vmatprep.subr.mxu0 0.0
        %2813 = vmatpush1.msra.mxu0 0.0
        %2814 = vmatprep.subr.mxu0 0.0
        %2815 = vmatpush1.msra.mxu0 0.0
        %2816 = vmatprep.subr.mxu0 0.0
        %2817 = vmatpush1.msra.mxu0 0.0
        %2818 = vmatprep.subr.mxu0 0.0
        %2819 = vmatpush1.msra.mxu0 0.0
        %2820 = vmatprep.subr.mxu0 0.0
        %2821 = vmatpush1.msra.mxu0 0.0
        %2822 = vmatprep.subr.mxu0 0.0
        %2823 = vmatpush1.msra.mxu0 0.0
        %2824 = vmatprep.subr.mxu0 0.0
        %2825 = vmatpush1.msra.mxu0 0.0
        %2826 = vmatprep.subr.mxu0 0.0
        %2827 = vmatpush1.msra.mxu0 0.0
        %2828 = vmatprep.subr.mxu0 0.0
        %2829 = vmatpush1.msra.mxu0 0.0
        %2830 = vmatprep.subr.mxu0 0.0
        %2831 = vmatpush1.msra.mxu0 0.0
        %2832 = vmatprep.subr.mxu0 0.0
        %2833 = vmatpush1.msra.mxu0 0.0
        %2834 = vmatprep.mubr.f32.mxu0 0.0
        %2835 = vmatmul.mubr.f32.gmra.mrb[0].mxu0 %v2743
        %v2836 = vpop.f32.mrb[0].mxu0
        %v2837 = vadd.f32 0.0, %v2836
        %v2838 = vpop.f32.mrb[0].mxu0
        %2839 = vmatprep.mubr.f32.mxu0 0.0
        %2840 = vmatmul.mubr.f32.gmra.mrb[0].mxu0 %v2746
        %v2841 = vpop.f32.mrb[0].mxu0
        %v2842 = vadd.f32 0.0, %v2841
        %v2843 = vpop.f32.mrb[0].mxu0
        %2844 = vmatprep.mubr.f32.mxu0 0.0
        %2845 = vmatmul.mubr.f32.gmra.mrb[0].mxu0 %v2749
        %v2846 = vpop.f32.mrb[0].mxu0
        %v2847 = vadd.f32 0.0, %v2846
        %v2848 = vpop.f32.mrb[0].mxu0
        %2849 = vmatprep.mubr.f32.mxu0 0.0
        %2850 = vmatmul.mubr.f32.gmra.mrb[0].mxu0 %v2752
        %v2851 = vpop.f32.mrb[0].mxu0
        %v2852 = vadd.f32 0.0, %v2851
        %v2853 = vpop.f32.mrb[0].mxu0
        %2854 = vmatprep.mubr.f32.mxu0 0.0
        %2855 = vmatmul.mubr.f32.gmra.mrb[0].mxu0 %v2755
        %v2856 = vpop.f32.mrb[0].mxu0
        %v2857 = vadd.f32 0.0, %v2856
        %v2858 = vpop.f32.mrb[0].mxu0
        %2859 = vmatprep.mubr.f32.mxu0 0.0
        %2860 = vmatmul.mubr.f32.gmra.mrb[0].mxu0 %v2758
        %v2861 = vpop.f32.mrb[0].mxu0
        %v2862 = vadd.f32 0.0, %v2861
        %v2863 = vpop.f32.mrb[0].mxu0
        %2864 = vmatprep.mubr.f32.mxu0 0.0
        %2865 = vmatmul.mubr.f32.gmra.mrb[0].mxu0 %v2761
        %v2866 = vpop.f32.mrb[0].mxu0
        %v2867 = vadd.f32 0.0, %v2866
        %v2868 = vpop.f32.mrb[0].mxu0
        %2869 = vmatprep.mubr.f32.mxu0 0.0
        %2870 = vmatmul.mubr.f32.gmra.mrb[0].mxu0 %v2764
        %v2871 = vpop.f32.mrb[0].mxu0
        %v2872 = vadd.f32 0.0, %v2871
        %v2873 = vpop.f32.mrb[0].mxu0
        %2874 = vdwg.mxu0
        %v2875 = vmul.f32 %v2837, 0.5
        %v2876 = vmul.f32 %v2842, 0.5
        %v2877 = vmul.f32 %v2847, 0.5
        %v2878 = vmul.f32 %v2852, 0.5
        %v2879 = vmul.f32 %v2857, 0.5
        %v2880 = vmul.f32 %v2862, 0.5
        %v2881 = vmul.f32 %v2867, 0.5
        %v2882 = vmul.f32 %v2872, 0.5
        %v2883 = vadd.f32 %v2875, %v2139
        %v2884 = vadd.f32 %v2876, %v2140
        %v2885 = vadd.f32 %v2877, %v2141
        %v2886 = vadd.f32 %v2878, %v2142
        %v2887 = vadd.f32 %v2879, %v2143
        %v2888 = vadd.f32 %v2880, %v2144
        %v2889 = vadd.f32 %v2881, %v2145
        %v2890 = vadd.f32 %v2882, %v2146
        %v2891 = vsel %vm920, %v2883, -inf
        %2892 = vmax.xlane.f32.xlu0 %v2891
        %v2893 = vpop.xlane.xlu0 %2892
        %v2894 = vsel %vm920, %v2884, -inf
        %2895 = vmax.xlane.f32.xlu0 %v2894
        %v2896 = vpop.xlane.xlu0 %2895
        %v2897 = vsel %vm920, %v2885, -inf
        %2898 = vmax.xlane.f32.xlu0 %v2897
        %v2899 = vpop.xlane.xlu0 %2898
        %v2900 = vsel %vm920, %v2886, -inf
        %2901 = vmax.xlane.f32.xlu0 %v2900
        %v2902 = vpop.xlane.xlu0 %2901
        %v2903 = vsel %vm920, %v2887, -inf
        %2904 = vmax.xlane.f32.xlu0 %v2903
        %v2905 = vpop.xlane.xlu0 %2904
        %v2906 = vsel %vm920, %v2888, -inf
        %2907 = vmax.xlane.f32.xlu0 %v2906
        %v2908 = vpop.xlane.xlu0 %2907
        %v2909 = vsel %vm920, %v2889, -inf
        %2910 = vmax.xlane.f32.xlu0 %v2909
        %v2911 = vpop.xlane.xlu0 %2910
        %v2912 = vsel %vm920, %v2890, -inf
        %2913 = vmax.xlane.f32.xlu0 %v2912
        %v2914 = vpop.xlane.xlu0 %2913
        %v2915 = vsub.f32 %v2883, %v2893
        %v2916 = vsub.f32 %v2884, %v2896
        %v2917 = vsub.f32 %v2885, %v2899
        %v2918 = vsub.f32 %v2886, %v2902
        %v2919 = vsub.f32 %v2887, %v2905
        %v2920 = vsub.f32 %v2888, %v2908
        %v2921 = vsub.f32 %v2889, %v2911
        %v2922 = vsub.f32 %v2890, %v2914
        %v2923 = vmul.f32 %v2915, 1.442695
        %v2924 = vpow.pop %v2923
        %v2925 = vmul.f32 %v2916, 1.442695
        %v2926 = vpow.pop %v2925
        %v2927 = vmul.f32 %v2917, 1.442695
        %v2928 = vpow.pop %v2927
        %v2929 = vmul.f32 %v2918, 1.442695
        %v2930 = vpow.pop %v2929
        %v2931 = vmul.f32 %v2919, 1.442695
        %v2932 = vpow.pop %v2931
        %v2933 = vmul.f32 %v2920, 1.442695
        %v2934 = vpow.pop %v2933
        %v2935 = vmul.f32 %v2921, 1.442695
        %v2936 = vpow.pop %v2935
        %v2937 = vmul.f32 %v2922, 1.442695
        %v2938 = vpow.pop %v2937
        %v2939 = vsel %vm920, %v2924, 0.0
        %2940 = vadd.xlane.f32.xlu0 %v2939
        %v2941 = vpop.xlane.xlu0 %2940
        %v2942 = vsel %vm920, %v2926, 0.0
        %2943 = vadd.xlane.f32.xlu0 %v2942
        %v2944 = vpop.xlane.xlu0 %2943
        %v2945 = vsel %vm920, %v2928, 0.0
        %2946 = vadd.xlane.f32.xlu0 %v2945
        %v2947 = vpop.xlane.xlu0 %2946
        %v2948 = vsel %vm920, %v2930, 0.0
        %2949 = vadd.xlane.f32.xlu0 %v2948
        %v2950 = vpop.xlane.xlu0 %2949
        %v2951 = vsel %vm920, %v2932, 0.0
        %2952 = vadd.xlane.f32.xlu0 %v2951
        %v2953 = vpop.xlane.xlu0 %2952
        %v2954 = vsel %vm920, %v2934, 0.0
        %2955 = vadd.xlane.f32.xlu0 %v2954
        %v2956 = vpop.xlane.xlu0 %2955
        %v2957 = vsel %vm920, %v2936, 0.0
        %2958 = vadd.xlane.f32.xlu0 %v2957
        %v2959 = vpop.xlane.xlu0 %2958
        %v2960 = vsel %vm920, %v2938, 0.0
        %2961 = vadd.xlane.f32.xlu0 %v2960
        %v2962 = vpop.xlane.xlu0 %2961
        %v2963 = vrcp.pop %v2941
        %v2964 = vmul.f32 %v2924, %v2963
        %v2965 = vrcp.pop %v2944
        %v2966 = vmul.f32 %v2926, %v2965
        %v2967 = vrcp.pop %v2947
        %v2968 = vmul.f32 %v2928, %v2967
        %v2969 = vrcp.pop %v2950
        %v2970 = vmul.f32 %v2930, %v2969
        %v2971 = vrcp.pop %v2953
        %v2972 = vmul.f32 %v2932, %v2971
        %v2973 = vrcp.pop %v2956
        %v2974 = vmul.f32 %v2934, %v2973
        %v2975 = vrcp.pop %v2959
        %v2976 = vmul.f32 %v2936, %v2975
        %v2977 = vrcp.pop %v2962
        %v2978 = vmul.f32 %v2938, %v2977
        %v2980 = vsel %vm920, %v2964, 0
        %v2983 = vsel %vm920, %v2966, 0
        %v2986 = vsel %vm920, %v2968, 0
        %v2989 = vsel %vm920, %v2970, 0
        %v2992 = vsel %vm920, %v2972, 0
        %v2995 = vsel %vm920, %v2974, 0
        %v2998 = vsel %vm920, %v2976, 0
        %v3001 = vsel %vm920, %v2978, 0
        %3003 = vmatprep.subr.mxu0 0.0
        %3004 = vmatpush1.msra.mxu0 %v2703
        %3005 = vmatprep.subr.mxu0 0.0
        %3006 = vmatpush1.msra.mxu0 %v2708
        %3007 = vmatprep.subr.mxu0 0.0
        %3008 = vmatpush1.msra.mxu0 %v2713
        %3009 = vmatprep.subr.mxu0 0.0
        %3010 = vmatpush1.msra.mxu0 %v2718
        %3011 = vmatprep.subr.mxu0 0.0
        %3012 = vmatpush1.msra.mxu0 %v2723
        %3013 = vmatprep.subr.mxu0 0.0
        %3014 = vmatpush1.msra.mxu0 %v2728
        %3015 = vmatprep.subr.mxu0 0.0
        %3016 = vmatpush1.msra.mxu0 %v2733
        %3017 = vmatprep.subr.mxu0 0.0
        %3018 = vmatpush1.msra.mxu0 %v2738
        %3019 = vmatprep.subr.mxu0 0.0
        %3020 = vmatpush1.msra.mxu0 0.0
        %3021 = vmatprep.subr.mxu0 0.0
        %3022 = vmatpush1.msra.mxu0 0.0
        %3023 = vmatprep.subr.mxu0 0.0
        %3024 = vmatpush1.msra.mxu0 0.0
        %3025 = vmatprep.subr.mxu0 0.0
        %3026 = vmatpush1.msra.mxu0 0.0
        %3027 = vmatprep.subr.mxu0 0.0
        %3028 = vmatpush1.msra.mxu0 0.0
        %3029 = vmatprep.subr.mxu0 0.0
        %3030 = vmatpush1.msra.mxu0 0.0
        %3031 = vmatprep.subr.mxu0 0.0
        %3032 = vmatpush1.msra.mxu0 0.0
        %3033 = vmatprep.subr.mxu0 0.0
        %3034 = vmatpush1.msra.mxu0 0.0
        %3035 = vmatprep.subr.mxu0 0.0
        %3036 = vmatpush1.msra.mxu0 0.0
        %3037 = vmatprep.subr.mxu0 0.0
        %3038 = vmatpush1.msra.mxu0 0.0
        %3039 = vmatprep.subr.mxu0 0.0
        %3040 = vmatpush1.msra.mxu0 0.0
        %3041 = vmatprep.subr.mxu0 0.0
        %3042 = vmatpush1.msra.mxu0 0.0
        %3043 = vmatprep.subr.mxu0 0.0
        %3044 = vmatpush1.msra.mxu0 0.0
        %3045 = vmatprep.subr.mxu0 0.0
        %3046 = vmatpush1.msra.mxu0 0.0
        %3047 = vmatprep.subr.mxu0 0.0
        %3048 = vmatpush1.msra.mxu0 0.0
        %3049 = vmatprep.subr.mxu0 0.0
        %3050 = vmatpush1.msra.mxu0 0.0
        %3051 = vmatprep.subr.mxu0 0.0
        %3052 = vmatpush1.msra.mxu0 0.0
        %3053 = vmatprep.subr.mxu0 0.0
        %3054 = vmatpush1.msra.mxu0 0.0
        %3055 = vmatprep.subr.mxu0 0.0
        %3056 = vmatpush1.msra.mxu0 0.0
        %3057 = vmatprep.subr.mxu0 0.0
        %3058 = vmatpush1.msra.mxu0 0.0
        %3059 = vmatprep.subr.mxu0 0.0
        %3060 = vmatpush1.msra.mxu0 0.0
        %3061 = vmatprep.subr.mxu0 0.0
        %3062 = vmatpush1.msra.mxu0 0.0
        %3063 = vmatprep.subr.mxu0 0.0
        %3064 = vmatpush1.msra.mxu0 0.0
        %3065 = vmatprep.subr.mxu0 0.0
        %3066 = vmatpush1.msra.mxu0 0.0
        %3067 = vmatprep.mubr.f32.mxu0 0.0
        %3068 = vmatmul.mubr.f32.gmra.mrb[0].mxu0 %v2980
        %v3069 = vpop.f32.mrb[0].mxu0
        %v3070 = vadd.f32 0.0, %v3069
        %v3071 = vpop.f32.mrb[0].mxu0
        %3072 = vmatprep.mubr.f32.mxu0 0.0
        %3073 = vmatmul.mubr.f32.gmra.mrb[0].mxu0 %v2983
        %v3074 = vpop.f32.mrb[0].mxu0
        %v3075 = vadd.f32 0.0, %v3074
        %v3076 = vpop.f32.mrb[0].mxu0
        %3077 = vmatprep.mubr.f32.mxu0 0.0
        %3078 = vmatmul.mubr.f32.gmra.mrb[0].mxu0 %v2986
        %v3079 = vpop.f32.mrb[0].mxu0
        %v3080 = vadd.f32 0.0, %v3079
        %v3081 = vpop.f32.mrb[0].mxu0
        %3082 = vmatprep.mubr.f32.mxu0 0.0
        %3083 = vmatmul.mubr.f32.gmra.mrb[0].mxu0 %v2989
        %v3084 = vpop.f32.mrb[0].mxu0
        %v3085 = vadd.f32 0.0, %v3084
        %v3086 = vpop.f32.mrb[0].mxu0
        %3087 = vmatprep.mubr.f32.mxu0 0.0
        %3088 = vmatmul.mubr.f32.gmra.mrb[0].mxu0 %v2992
        %v3089 = vpop.f32.mrb[0].mxu0
        %v3090 = vadd.f32 0.0, %v3089
        %v3091 = vpop.f32.mrb[0].mxu0
        %3092 = vmatprep.mubr.f32.mxu0 0.0
        %3093 = vmatmul.mubr.f32.gmra.mrb[0].mxu0 %v2995
        %v3094 = vpop.f32.mrb[0].mxu0
        %v3095 = vadd.f32 0.0, %v3094
        %v3096 = vpop.f32.mrb[0].mxu0
        %3097 = vmatprep.mubr.f32.mxu0 0.0
        %3098 = vmatmul.mubr.f32.gmra.mrb[0].mxu0 %v2998
        %v3099 = vpop.f32.mrb[0].mxu0
        %v3100 = vadd.f32 0.0, %v3099
        %v3101 = vpop.f32.mrb[0].mxu0
        %3102 = vmatprep.mubr.f32.mxu0 0.0
        %3103 = vmatmul.mubr.f32.gmra.mrb[0].mxu0 %v3001
        %v3104 = vpop.f32.mrb[0].mxu0
        %v3105 = vadd.f32 0.0, %v3104
        %v3106 = vpop.f32.mrb[0].mxu0
        %3107 = vdwg.mxu0
        %v3108 = vld [vmem:[%s14] sm:$0xf]
        %s3109 = scalar_lea.vmem %s9, 16
        %v3110 = vld [vmem:[%s3109] sm:$0xff]
        %v3111 = vld [vmem:[%s3109 + $0x8] sm:$0xff]
        %3112 = vmatprep.subr.mxu0 0.0
        %3113 = vmatpush1.msra.mxu0 %v3110
        %3114 = vmatprep.subr.mxu0 0.0
        %3115 = vmatpush1.msra.mxu0 %v3111
        %3116 = vmatprep.subr.mxu0 0.0
        %3117 = vmatpush1.msra.mxu0 0.0
        %3118 = vmatprep.subr.mxu0 0.0
        %3119 = vmatpush1.msra.mxu0 0.0
        %3120 = vmatprep.subr.mxu0 0.0
        %3121 = vmatpush1.msra.mxu0 0.0
        %3122 = vmatprep.subr.mxu0 0.0
        %3123 = vmatpush1.msra.mxu0 0.0
        %3124 = vmatprep.subr.mxu0 0.0
        %3125 = vmatpush1.msra.mxu0 0.0
        %3126 = vmatprep.subr.mxu0 0.0
        %3127 = vmatpush1.msra.mxu0 0.0
        %3128 = vmatprep.subr.mxu0 0.0
        %3129 = vmatpush1.msra.mxu0 0.0
        %3130 = vmatprep.subr.mxu0 0.0
        %3131 = vmatpush1.msra.mxu0 0.0
        %3132 = vmatprep.subr.mxu0 0.0
        %3133 = vmatpush1.msra.mxu0 0.0
        %3134 = vmatprep.subr.mxu0 0.0
        %3135 = vmatpush1.msra.mxu0 0.0
        %3136 = vmatprep.subr.mxu0 0.0
        %3137 = vmatpush1.msra.mxu0 0.0
        %3138 = vmatprep.subr.mxu0 0.0
        %3139 = vmatpush1.msra.mxu0 0.0
        %3140 = vmatprep.subr.mxu0 0.0
        %3141 = vmatpush1.msra.mxu0 0.0
        %3142 = vmatprep.subr.mxu0 0.0
        %3143 = vmatpush1.msra.mxu0 0.0
        %3144 = vmatprep.subr.mxu0 0.0
        %3145 = vmatpush1.msra.mxu0 0.0
        %3146 = vmatprep.subr.mxu0 0.0
        %3147 = vmatpush1.msra.mxu0 0.0
        %3148 = vmatprep.subr.mxu0 0.0
        %3149 = vmatpush1.msra.mxu0 0.0
        %3150 = vmatprep.subr.mxu0 0.0
        %3151 = vmatpush1.msra.mxu0 0.0
        %3152 = vmatprep.subr.mxu0 0.0
        %3153 = vmatpush1.msra.mxu0 0.0
        %3154 = vmatprep.subr.mxu0 0.0
        %3155 = vmatpush1.msra.mxu0 0.0
        %3156 = vmatprep.subr.mxu0 0.0
        %3157 = vmatpush1.msra.mxu0 0.0
        %3158 = vmatprep.subr.mxu0 0.0
        %3159 = vmatpush1.msra.mxu0 0.0
        %3160 = vmatprep.subr.mxu0 0.0
        %3161 = vmatpush1.msra.mxu0 0.0
        %3162 = vmatprep.subr.mxu0 0.0
        %3163 = vmatpush1.msra.mxu0 0.0
        %3164 = vmatprep.subr.mxu0 0.0
        %3165 = vmatpush1.msra.mxu0 0.0
        %3166 = vmatprep.subr.mxu0 0.0
        %3167 = vmatpush1.msra.mxu0 0.0
        %3168 = vmatprep.subr.mxu0 0.0
        %3169 = vmatpush1.msra.mxu0 0.0
        %3170 = vmatprep.subr.mxu0 0.0
        %3171 = vmatpush1.msra.mxu0 0.0
        %3172 = vmatprep.subr.mxu0 0.0
        %3173 = vmatpush1.msra.mxu0 0.0
        %3174 = vmatprep.subr.mxu0 0.0
        %3175 = vmatpush1.msra.mxu0 0.0
        %3176 = vmatprep.mubr.f32.mxu0 0.0
        %3177 = vmatmul.mubr.f32.gmra.mrb[0].mxu0 %v2408
        %v3178 = vpop.f32.mrb[0].mxu0
        %v3179 = vadd.f32 0.0, %v3178
        %v3180 = vpop.f32.mrb[0].mxu0
        %3181 = vmatprep.mubr.f32.mxu0 0.0
        %3182 = vmatmul.mubr.f32.gmra.mrb[0].mxu0 %v2411
        %v3183 = vpop.f32.mrb[0].mxu0
        %v3184 = vadd.f32 0.0, %v3183
        %v3185 = vpop.f32.mrb[0].mxu0
        %3186 = vmatprep.mubr.f32.mxu0 0.0
        %3187 = vmatmul.mubr.f32.gmra.mrb[0].mxu0 %v2414
        %v3188 = vpop.f32.mrb[0].mxu0
        %v3189 = vadd.f32 0.0, %v3188
        %v3190 = vpop.f32.mrb[0].mxu0
        %3191 = vmatprep.mubr.f32.mxu0 0.0
        %3192 = vmatmul.mubr.f32.gmra.mrb[0].mxu0 %v2417
        %v3193 = vpop.f32.mrb[0].mxu0
        %v3194 = vadd.f32 0.0, %v3193
        %v3195 = vpop.f32.mrb[0].mxu0
        %3196 = vmatprep.mubr.f32.mxu0 0.0
        %3197 = vmatmul.mubr.f32.gmra.mrb[0].mxu0 %v2420
        %v3198 = vpop.f32.mrb[0].mxu0
        %v3199 = vadd.f32 0.0, %v3198
        %v3200 = vpop.f32.mrb[0].mxu0
        %3201 = vmatprep.mubr.f32.mxu0 0.0
        %3202 = vmatmul.mubr.f32.gmra.mrb[0].mxu0 %v2423
        %v3203 = vpop.f32.mrb[0].mxu0
        %v3204 = vadd.f32 0.0, %v3203
        %v3205 = vpop.f32.mrb[0].mxu0
        %3206 = vmatprep.mubr.f32.mxu0 0.0
        %3207 = vmatmul.mubr.f32.gmra.mrb[0].mxu0 %v2426
        %v3208 = vpop.f32.mrb[0].mxu0
        %v3209 = vadd.f32 0.0, %v3208
        %v3210 = vpop.f32.mrb[0].mxu0
        %3211 = vmatprep.mubr.f32.mxu0 0.0
        %3212 = vmatmul.mubr.f32.gmra.mrb[0].mxu0 %v2429
        %v3213 = vpop.f32.mrb[0].mxu0
        %v3214 = vadd.f32 0.0, %v3213
        %v3215 = vpop.f32.mrb[0].mxu0
        %3216 = vdwg.mxu0
        %s3217 = scalar_lea.vmem %s10, 4
        %v3218 = vld [vmem:[%s3217] sm:$0xf]
        %v3220 = vsel %vm830, %v3218, 0
        %3222 = vmatprep.subr.mxu0 0.0
        %3223 = vmatpush1.msra.mxu0 %v2260
        %3224 = vmatprep.subr.mxu0 0.0
        %3225 = vmatpush1.msra.mxu0 %v2265
        %3226 = vmatprep.subr.mxu0 0.0
        %3227 = vmatpush1.msra.mxu0 0.0
        %3228 = vmatprep.subr.mxu0 0.0
        %3229 = vmatpush1.msra.mxu0 0.0
        %3230 = vmatprep.subr.mxu0 0.0
        %3231 = vmatpush1.msra.mxu0 0.0
        %3232 = vmatprep.subr.mxu0 0.0
        %3233 = vmatpush1.msra.mxu0 0.0
        %3234 = vmatprep.subr.mxu0 0.0
        %3235 = vmatpush1.msra.mxu0 0.0
        %3236 = vmatprep.subr.mxu0 0.0
        %3237 = vmatpush1.msra.mxu0 0.0
        %3238 = vmatprep.subr.mxu0 0.0
        %3239 = vmatpush1.msra.mxu0 0.0
        %3240 = vmatprep.subr.mxu0 0.0
        %3241 = vmatpush1.msra.mxu0 0.0
        %3242 = vmatprep.subr.mxu0 0.0
        %3243 = vmatpush1.msra.mxu0 0.0
        %3244 = vmatprep.subr.mxu0 0.0
        %3245 = vmatpush1.msra.mxu0 0.0
        %3246 = vmatprep.subr.mxu0 0.0
        %3247 = vmatpush1.msra.mxu0 0.0
        %3248 = vmatprep.subr.mxu0 0.0
        %3249 = vmatpush1.msra.mxu0 0.0
        %3250 = vmatprep.subr.mxu0 0.0
        %3251 = vmatpush1.msra.mxu0 0.0
        %3252 = vmatprep.subr.mxu0 0.0
        %3253 = vmatpush1.msra.mxu0 0.0
        %3254 = vmatprep.subr.mxu0 0.0
        %3255 = vmatpush1.msra.mxu0 0.0
        %3256 = vmatprep.subr.mxu0 0.0
        %3257 = vmatpush1.msra.mxu0 0.0
        %3258 = vmatprep.subr.mxu0 0.0
        %3259 = vmatpush1.msra.mxu0 0.0
        %3260 = vmatprep.subr.mxu0 0.0
        %3261 = vmatpush1.msra.mxu0 0.0
        %3262 = vmatprep.subr.mxu0 0.0
        %3263 = vmatpush1.msra.mxu0 0.0
        %3264 = vmatprep.subr.mxu0 0.0
        %3265 = vmatpush1.msra.mxu0 0.0
        %3266 = vmatprep.subr.mxu0 0.0
        %3267 = vmatpush1.msra.mxu0 0.0
        %3268 = vmatprep.subr.mxu0 0.0
        %3269 = vmatpush1.msra.mxu0 0.0
        %3270 = vmatprep.subr.mxu0 0.0
        %3271 = vmatpush1.msra.mxu0 0.0
        %3272 = vmatprep.subr.mxu0 0.0
        %3273 = vmatpush1.msra.mxu0 0.0
        %3274 = vmatprep.subr.mxu0 0.0
        %3275 = vmatpush1.msra.mxu0 0.0
        %3276 = vmatprep.subr.mxu0 0.0
        %3277 = vmatpush1.msra.mxu0 0.0
        %3278 = vmatprep.subr.mxu0 0.0
        %3279 = vmatpush1.msra.mxu0 0.0
        %3280 = vmatprep.subr.mxu0 0.0
        %3281 = vmatpush1.msra.mxu0 0.0
        %3282 = vmatprep.subr.mxu0 0.0
        %3283 = vmatpush1.msra.mxu0 0.0
        %3284 = vmatprep.subr.mxu0 0.0
        %3285 = vmatpush1.msra.mxu0 0.0
        %3286 = vmatprep.mubr.f32.mxu0 0.0
        %3287 = vmatmul.mubr.f32.gmra.mrb[0].mxu0 %v3220
        %v3288 = vpop.f32.mrb[0].mxu0
        %v3289 = vadd.f32 0.0, %v3288
        %v3290 = vpop.f32.mrb[0].mxu0
        %3291 = vdwg.mxu0
        %s3292 = scalar_lea.vmem %s11, 16
        %v3293 = vld [vmem:[%s3292] sm:$0xff]
        %v3294 = vld [vmem:[%s3292 + $0x8] sm:$0xff]
        %3295 = vmatprep.subr.mxu0 0.0
        %3296 = vmatpush1.msra.mxu0 %v3293
        %3297 = vmatprep.subr.mxu0 0.0
        %3298 = vmatpush1.msra.mxu0 %v3294
        %3299 = vmatprep.subr.mxu0 0.0
        %3300 = vmatpush1.msra.mxu0 0.0
        %3301 = vmatprep.subr.mxu0 0.0
        %3302 = vmatpush1.msra.mxu0 0.0
        %3303 = vmatprep.subr.mxu0 0.0
        %3304 = vmatpush1.msra.mxu0 0.0
        %3305 = vmatprep.subr.mxu0 0.0
        %3306 = vmatpush1.msra.mxu0 0.0
        %3307 = vmatprep.subr.mxu0 0.0
        %3308 = vmatpush1.msra.mxu0 0.0
        %3309 = vmatprep.subr.mxu0 0.0
        %3310 = vmatpush1.msra.mxu0 0.0
        %3311 = vmatprep.subr.mxu0 0.0
        %3312 = vmatpush1.msra.mxu0 0.0
        %3313 = vmatprep.subr.mxu0 0.0
        %3314 = vmatpush1.msra.mxu0 0.0
        %3315 = vmatprep.subr.mxu0 0.0
        %3316 = vmatpush1.msra.mxu0 0.0
        %3317 = vmatprep.subr.mxu0 0.0
        %3318 = vmatpush1.msra.mxu0 0.0
        %3319 = vmatprep.subr.mxu0 0.0
        %3320 = vmatpush1.msra.mxu0 0.0
        %3321 = vmatprep.subr.mxu0 0.0
        %3322 = vmatpush1.msra.mxu0 0.0
        %3323 = vmatprep.subr.mxu0 0.0
        %3324 = vmatpush1.msra.mxu0 0.0
        %3325 = vmatprep.subr.mxu0 0.0
        %3326 = vmatpush1.msra.mxu0 0.0
        %3327 = vmatprep.subr.mxu0 0.0
        %3328 = vmatpush1.msra.mxu0 0.0
        %3329 = vmatprep.subr.mxu0 0.0
        %3330 = vmatpush1.msra.mxu0 0.0
        %3331 = vmatprep.subr.mxu0 0.0
        %3332 = vmatpush1.msra.mxu0 0.0
        %3333 = vmatprep.subr.mxu0 0.0
        %3334 = vmatpush1.msra.mxu0 0.0
        %3335 = vmatprep.subr.mxu0 0.0
        %3336 = vmatpush1.msra.mxu0 0.0
        %3337 = vmatprep.subr.mxu0 0.0
        %3338 = vmatpush1.msra.mxu0 0.0
        %3339 = vmatprep.subr.mxu0 0.0
        %3340 = vmatpush1.msra.mxu0 0.0
        %3341 = vmatprep.subr.mxu0 0.0
        %3342 = vmatpush1.msra.mxu0 0.0
        %3343 = vmatprep.subr.mxu0 0.0
        %3344 = vmatpush1.msra.mxu0 0.0
        %3345 = vmatprep.subr.mxu0 0.0
        %3346 = vmatpush1.msra.mxu0 0.0
        %3347 = vmatprep.subr.mxu0 0.0
        %3348 = vmatpush1.msra.mxu0 0.0
        %3349 = vmatprep.subr.mxu0 0.0
        %3350 = vmatpush1.msra.mxu0 0.0
        %3351 = vmatprep.subr.mxu0 0.0
        %3352 = vmatpush1.msra.mxu0 0.0
        %3353 = vmatprep.subr.mxu0 0.0
        %3354 = vmatpush1.msra.mxu0 0.0
        %3355 = vmatprep.subr.mxu0 0.0
        %3356 = vmatpush1.msra.mxu0 0.0
        %3357 = vmatprep.subr.mxu0 0.0
        %3358 = vmatpush1.msra.mxu0 0.0
        %3359 = vmatprep.mubr.f32.mxu0 0.0
        %3360 = vmatmul.mubr.f32.gmra.mrb[0].mxu0 %v2613
        %v3361 = vpop.f32.mrb[0].mxu0
        %v3362 = vadd.f32 0.0, %v3361
        %v3363 = vpop.f32.mrb[0].mxu0
        %3364 = vmatprep.mubr.f32.mxu0 0.0
        %3365 = vmatmul.mubr.f32.gmra.mrb[0].mxu0 %v2616
        %v3366 = vpop.f32.mrb[0].mxu0
        %v3367 = vadd.f32 0.0, %v3366
        %v3368 = vpop.f32.mrb[0].mxu0
        %3369 = vmatprep.mubr.f32.mxu0 0.0
        %3370 = vmatmul.mubr.f32.gmra.mrb[0].mxu0 %v2619
        %v3371 = vpop.f32.mrb[0].mxu0
        %v3372 = vadd.f32 0.0, %v3371
        %v3373 = vpop.f32.mrb[0].mxu0
        %3374 = vmatprep.mubr.f32.mxu0 0.0
        %3375 = vmatmul.mubr.f32.gmra.mrb[0].mxu0 %v2622
        %v3376 = vpop.f32.mrb[0].mxu0
        %v3377 = vadd.f32 0.0, %v3376
        %v3378 = vpop.f32.mrb[0].mxu0
        %3379 = vmatprep.mubr.f32.mxu0 0.0
        %3380 = vmatmul.mubr.f32.gmra.mrb[0].mxu0 %v2625
        %v3381 = vpop.f32.mrb[0].mxu0
        %v3382 = vadd.f32 0.0, %v3381
        %v3383 = vpop.f32.mrb[0].mxu0
        %3384 = vmatprep.mubr.f32.mxu0 0.0
        %3385 = vmatmul.mubr.f32.gmra.mrb[0].mxu0 %v2628
        %v3386 = vpop.f32.mrb[0].mxu0
        %v3387 = vadd.f32 0.0, %v3386
        %v3388 = vpop.f32.mrb[0].mxu0
        %3389 = vmatprep.mubr.f32.mxu0 0.0
        %3390 = vmatmul.mubr.f32.gmra.mrb[0].mxu0 %v2631
        %v3391 = vpop.f32.mrb[0].mxu0
        %v3392 = vadd.f32 0.0, %v3391
        %v3393 = vpop.f32.mrb[0].mxu0
        %3394 = vmatprep.mubr.f32.mxu0 0.0
        %3395 = vmatmul.mubr.f32.gmra.mrb[0].mxu0 %v2634
        %v3396 = vpop.f32.mrb[0].mxu0
        %v3397 = vadd.f32 0.0, %v3396
        %v3398 = vpop.f32.mrb[0].mxu0
        %3399 = vdwg.mxu0
        %v3401 = vsel %vm2741, %v3179, 0
        %v3404 = vsel %vm2741, %v3184, 0
        %v3407 = vsel %vm2741, %v3189, 0
        %v3410 = vsel %vm2741, %v3194, 0
        %v3413 = vsel %vm2741, %v3199, 0
        %v3416 = vsel %vm2741, %v3204, 0
        %v3419 = vsel %vm2741, %v3209, 0
        %v3422 = vsel %vm2741, %v3214, 0
        %v3425 = vsel %vm2766, %v3289, 0
        %3427 = vmatprep.subr.mxu0 0.0
        %3428 = vmatpush1.msra.mxu0 %v3425
        %3429 = vmatprep.subr.mxu0 0.0
        %3430 = vmatpush1.msra.mxu0 0.0
        %3431 = vmatprep.subr.mxu0 0.0
        %3432 = vmatpush1.msra.mxu0 0.0
        %3433 = vmatprep.subr.mxu0 0.0
        %3434 = vmatpush1.msra.mxu0 0.0
        %3435 = vmatprep.subr.mxu0 0.0
        %3436 = vmatpush1.msra.mxu0 0.0
        %3437 = vmatprep.subr.mxu0 0.0
        %3438 = vmatpush1.msra.mxu0 0.0
        %3439 = vmatprep.subr.mxu0 0.0
        %3440 = vmatpush1.msra.mxu0 0.0
        %3441 = vmatprep.subr.mxu0 0.0
        %3442 = vmatpush1.msra.mxu0 0.0
        %3443 = vmatprep.subr.mxu0 0.0
        %3444 = vmatpush1.msra.mxu0 0.0
        %3445 = vmatprep.subr.mxu0 0.0
        %3446 = vmatpush1.msra.mxu0 0.0
        %3447 = vmatprep.subr.mxu0 0.0
        %3448 = vmatpush1.msra.mxu0 0.0
        %3449 = vmatprep.subr.mxu0 0.0
        %3450 = vmatpush1.msra.mxu0 0.0
        %3451 = vmatprep.subr.mxu0 0.0
        %3452 = vmatpush1.msra.mxu0 0.0
        %3453 = vmatprep.subr.mxu0 0.0
        %3454 = vmatpush1.msra.mxu0 0.0
        %3455 = vmatprep.subr.mxu0 0.0
        %3456 = vmatpush1.msra.mxu0 0.0
        %3457 = vmatprep.subr.mxu0 0.0
        %3458 = vmatpush1.msra.mxu0 0.0
        %3459 = vmatprep.subr.mxu0 0.0
        %3460 = vmatpush1.msra.mxu0 0.0
        %3461 = vmatprep.subr.mxu0 0.0
        %3462 = vmatpush1.msra.mxu0 0.0
        %3463 = vmatprep.subr.mxu0 0.0
        %3464 = vmatpush1.msra.mxu0 0.0
        %3465 = vmatprep.subr.mxu0 0.0
        %3466 = vmatpush1.msra.mxu0 0.0
        %3467 = vmatprep.subr.mxu0 0.0
        %3468 = vmatpush1.msra.mxu0 0.0
        %3469 = vmatprep.subr.mxu0 0.0
        %3470 = vmatpush1.msra.mxu0 0.0
        %3471 = vmatprep.subr.mxu0 0.0
        %3472 = vmatpush1.msra.mxu0 0.0
        %3473 = vmatprep.subr.mxu0 0.0
        %3474 = vmatpush1.msra.mxu0 0.0
        %3475 = vmatprep.subr.mxu0 0.0
        %3476 = vmatpush1.msra.mxu0 0.0
        %3477 = vmatprep.subr.mxu0 0.0
        %3478 = vmatpush1.msra.mxu0 0.0
        %3479 = vmatprep.subr.mxu0 0.0
        %3480 = vmatpush1.msra.mxu0 0.0
        %3481 = vmatprep.subr.mxu0 0.0
        %3482 = vmatpush1.msra.mxu0 0.0
        %3483 = vmatprep.subr.mxu0 0.0
        %3484 = vmatpush1.msra.mxu0 0.0
        %3485 = vmatprep.subr.mxu0 0.0
        %3486 = vmatpush1.msra.mxu0 0.0
        %3487 = vmatprep.subr.mxu0 0.0
        %3488 = vmatpush1.msra.mxu0 0.0
        %3489 = vmatprep.subr.mxu0 0.0
        %3490 = vmatpush1.msra.mxu0 0.0
        %3491 = vmatprep.mubr.f32.mxu0 0.0
        %3492 = vmatmul.mubr.f32.gmra.mrb[0].mxu0 %v3401
        %v3493 = vpop.f32.mrb[0].mxu0
        %v3494 = vadd.f32 0.0, %v3493
        %v3495 = vpop.f32.mrb[0].mxu0
        %3496 = vmatprep.mubr.f32.mxu0 0.0
        %3497 = vmatmul.mubr.f32.gmra.mrb[0].mxu0 %v3404
        %v3498 = vpop.f32.mrb[0].mxu0
        %v3499 = vadd.f32 0.0, %v3498
        %v3500 = vpop.f32.mrb[0].mxu0
        %3501 = vmatprep.mubr.f32.mxu0 0.0
        %3502 = vmatmul.mubr.f32.gmra.mrb[0].mxu0 %v3407
        %v3503 = vpop.f32.mrb[0].mxu0
        %v3504 = vadd.f32 0.0, %v3503
        %v3505 = vpop.f32.mrb[0].mxu0
        %3506 = vmatprep.mubr.f32.mxu0 0.0
        %3507 = vmatmul.mubr.f32.gmra.mrb[0].mxu0 %v3410
        %v3508 = vpop.f32.mrb[0].mxu0
        %v3509 = vadd.f32 0.0, %v3508
        %v3510 = vpop.f32.mrb[0].mxu0
        %3511 = vmatprep.mubr.f32.mxu0 0.0
        %3512 = vmatmul.mubr.f32.gmra.mrb[0].mxu0 %v3413
        %v3513 = vpop.f32.mrb[0].mxu0
        %v3514 = vadd.f32 0.0, %v3513
        %v3515 = vpop.f32.mrb[0].mxu0
        %3516 = vmatprep.mubr.f32.mxu0 0.0
        %3517 = vmatmul.mubr.f32.gmra.mrb[0].mxu0 %v3416
        %v3518 = vpop.f32.mrb[0].mxu0
        %v3519 = vadd.f32 0.0, %v3518
        %v3520 = vpop.f32.mrb[0].mxu0
        %3521 = vmatprep.mubr.f32.mxu0 0.0
        %3522 = vmatmul.mubr.f32.gmra.mrb[0].mxu0 %v3419
        %v3523 = vpop.f32.mrb[0].mxu0
        %v3524 = vadd.f32 0.0, %v3523
        %v3525 = vpop.f32.mrb[0].mxu0
        %3526 = vmatprep.mubr.f32.mxu0 0.0
        %3527 = vmatmul.mubr.f32.gmra.mrb[0].mxu0 %v3422
        %v3528 = vpop.f32.mrb[0].mxu0
        %v3529 = vadd.f32 0.0, %v3528
        %v3530 = vpop.f32.mrb[0].mxu0
        %3531 = vdwg.mxu0
        %v3532 = vmul.f32 %v3494, 0.5
        %v3533 = vmul.f32 %v3499, 0.5
        %v3534 = vmul.f32 %v3504, 0.5
        %v3535 = vmul.f32 %v3509, 0.5
        %v3536 = vmul.f32 %v3514, 0.5
        %v3537 = vmul.f32 %v3519, 0.5
        %v3538 = vmul.f32 %v3524, 0.5
        %v3539 = vmul.f32 %v3529, 0.5
        %v3540 = vadd.f32 %v3532, %v2139
        %v3541 = vadd.f32 %v3533, %v2140
        %v3542 = vadd.f32 %v3534, %v2141
        %v3543 = vadd.f32 %v3535, %v2142
        %v3544 = vadd.f32 %v3536, %v2143
        %v3545 = vadd.f32 %v3537, %v2144
        %v3546 = vadd.f32 %v3538, %v2145
        %v3547 = vadd.f32 %v3539, %v2146
        %v3548 = vsel %vm920, %v3540, -inf
        %3549 = vmax.xlane.f32.xlu0 %v3548
        %v3550 = vpop.xlane.xlu0 %3549
        %v3551 = vsel %vm920, %v3541, -inf
        %3552 = vmax.xlane.f32.xlu0 %v3551
        %v3553 = vpop.xlane.xlu0 %3552
        %v3554 = vsel %vm920, %v3542, -inf
        %3555 = vmax.xlane.f32.xlu0 %v3554
        %v3556 = vpop.xlane.xlu0 %3555
        %v3557 = vsel %vm920, %v3543, -inf
        %3558 = vmax.xlane.f32.xlu0 %v3557
        %v3559 = vpop.xlane.xlu0 %3558
        %v3560 = vsel %vm920, %v3544, -inf
        %3561 = vmax.xlane.f32.xlu0 %v3560
        %v3562 = vpop.xlane.xlu0 %3561
        %v3563 = vsel %vm920, %v3545, -inf
        %3564 = vmax.xlane.f32.xlu0 %v3563
        %v3565 = vpop.xlane.xlu0 %3564
        %v3566 = vsel %vm920, %v3546, -inf
        %3567 = vmax.xlane.f32.xlu0 %v3566
        %v3568 = vpop.xlane.xlu0 %3567
        %v3569 = vsel %vm920, %v3547, -inf
        %3570 = vmax.xlane.f32.xlu0 %v3569
        %v3571 = vpop.xlane.xlu0 %3570
        %v3572 = vsub.f32 %v3540, %v3550
        %v3573 = vsub.f32 %v3541, %v3553
        %v3574 = vsub.f32 %v3542, %v3556
        %v3575 = vsub.f32 %v3543, %v3559
        %v3576 = vsub.f32 %v3544, %v3562
        %v3577 = vsub.f32 %v3545, %v3565
        %v3578 = vsub.f32 %v3546, %v3568
        %v3579 = vsub.f32 %v3547, %v3571
        %v3580 = vmul.f32 %v3572, 1.442695
        %v3581 = vpow.pop %v3580
        %v3582 = vmul.f32 %v3573, 1.442695
        %v3583 = vpow.pop %v3582
        %v3584 = vmul.f32 %v3574, 1.442695
        %v3585 = vpow.pop %v3584
        %v3586 = vmul.f32 %v3575, 1.442695
        %v3587 = vpow.pop %v3586
        %v3588 = vmul.f32 %v3576, 1.442695
        %v3589 = vpow.pop %v3588
        %v3590 = vmul.f32 %v3577, 1.442695
        %v3591 = vpow.pop %v3590
        %v3592 = vmul.f32 %v3578, 1.442695
        %v3593 = vpow.pop %v3592
        %v3594 = vmul.f32 %v3579, 1.442695
        %v3595 = vpow.pop %v3594
        %v3596 = vsel %vm920, %v3581, 0.0
        %3597 = vadd.xlane.f32.xlu0 %v3596
        %v3598 = vpop.xlane.xlu0 %3597
        %v3599 = vsel %vm920, %v3583, 0.0
        %3600 = vadd.xlane.f32.xlu0 %v3599
        %v3601 = vpop.xlane.xlu0 %3600
        %v3602 = vsel %vm920, %v3585, 0.0
        %3603 = vadd.xlane.f32.xlu0 %v3602
        %v3604 = vpop.xlane.xlu0 %3603
        %v3605 = vsel %vm920, %v3587, 0.0
        %3606 = vadd.xlane.f32.xlu0 %v3605
        %v3607 = vpop.xlane.xlu0 %3606
        %v3608 = vsel %vm920, %v3589, 0.0
        %3609 = vadd.xlane.f32.xlu0 %v3608
        %v3610 = vpop.xlane.xlu0 %3609
        %v3611 = vsel %vm920, %v3591, 0.0
        %3612 = vadd.xlane.f32.xlu0 %v3611
        %v3613 = vpop.xlane.xlu0 %3612
        %v3614 = vsel %vm920, %v3593, 0.0
        %3615 = vadd.xlane.f32.xlu0 %v3614
        %v3616 = vpop.xlane.xlu0 %3615
        %v3617 = vsel %vm920, %v3595, 0.0
        %3618 = vadd.xlane.f32.xlu0 %v3617
        %v3619 = vpop.xlane.xlu0 %3618
        %v3620 = vrcp.pop %v3598
        %v3621 = vmul.f32 %v3581, %v3620
        %v3622 = vrcp.pop %v3601
        %v3623 = vmul.f32 %v3583, %v3622
        %v3624 = vrcp.pop %v3604
        %v3625 = vmul.f32 %v3585, %v3624
        %v3626 = vrcp.pop %v3607
        %v3627 = vmul.f32 %v3587, %v3626
        %v3628 = vrcp.pop %v3610
        %v3629 = vmul.f32 %v3589, %v3628
        %v3630 = vrcp.pop %v3613
        %v3631 = vmul.f32 %v3591, %v3630
        %v3632 = vrcp.pop %v3616
        %v3633 = vmul.f32 %v3593, %v3632
        %v3634 = vrcp.pop %v3619
        %v3635 = vmul.f32 %v3595, %v3634
        %v3637 = vsel %vm920, %v3621, 0
        %v3640 = vsel %vm920, %v3623, 0
        %v3643 = vsel %vm920, %v3625, 0
        %v3646 = vsel %vm920, %v3627, 0
        %v3649 = vsel %vm920, %v3629, 0
        %v3652 = vsel %vm920, %v3631, 0
        %v3655 = vsel %vm920, %v3633, 0
        %v3658 = vsel %vm920, %v3635, 0
        %3660 = vmatprep.subr.mxu0 0.0
        %3661 = vmatpush1.msra.mxu0 %v3362
        %3662 = vmatprep.subr.mxu0 0.0
        %3663 = vmatpush1.msra.mxu0 %v3367
        %3664 = vmatprep.subr.mxu0 0.0
        %3665 = vmatpush1.msra.mxu0 %v3372
        %3666 = vmatprep.subr.mxu0 0.0
        %3667 = vmatpush1.msra.mxu0 %v3377
        %3668 = vmatprep.subr.mxu0 0.0
        %3669 = vmatpush1.msra.mxu0 %v3382
        %3670 = vmatprep.subr.mxu0 0.0
        %3671 = vmatpush1.msra.mxu0 %v3387
        %3672 = vmatprep.subr.mxu0 0.0
        %3673 = vmatpush1.msra.mxu0 %v3392
        %3674 = vmatprep.subr.mxu0 0.0
        %3675 = vmatpush1.msra.mxu0 %v3397
        %3676 = vmatprep.subr.mxu0 0.0
        %3677 = vmatpush1.msra.mxu0 0.0
        %3678 = vmatprep.subr.mxu0 0.0
        %3679 = vmatpush1.msra.mxu0 0.0
        %3680 = vmatprep.subr.mxu0 0.0
        %3681 = vmatpush1.msra.mxu0 0.0
        %3682 = vmatprep.subr.mxu0 0.0
        %3683 = vmatpush1.msra.mxu0 0.0
        %3684 = vmatprep.subr.mxu0 0.0
        %3685 = vmatpush1.msra.mxu0 0.0
        %3686 = vmatprep.subr.mxu0 0.0
        %3687 = vmatpush1.msra.mxu0 0.0
        %3688 = vmatprep.subr.mxu0 0.0
        %3689 = vmatpush1.msra.mxu0 0.0
        %3690 = vmatprep.subr.mxu0 0.0
        %3691 = vmatpush1.msra.mxu0 0.0
        %3692 = vmatprep.subr.mxu0 0.0
        %3693 = vmatpush1.msra.mxu0 0.0
        %3694 = vmatprep.subr.mxu0 0.0
        %3695 = vmatpush1.msra.mxu0 0.0
        %3696 = vmatprep.subr.mxu0 0.0
        %3697 = vmatpush1.msra.mxu0 0.0
        %3698 = vmatprep.subr.mxu0 0.0
        %3699 = vmatpush1.msra.mxu0 0.0
        %3700 = vmatprep.subr.mxu0 0.0
        %3701 = vmatpush1.msra.mxu0 0.0
        %3702 = vmatprep.subr.mxu0 0.0
        %3703 = vmatpush1.msra.mxu0 0.0
        %3704 = vmatprep.subr.mxu0 0.0
        %3705 = vmatpush1.msra.mxu0 0.0
        %3706 = vmatprep.subr.mxu0 0.0
        %3707 = vmatpush1.msra.mxu0 0.0
        %3708 = vmatprep.subr.mxu0 0.0
        %3709 = vmatpush1.msra.mxu0 0.0
        %3710 = vmatprep.subr.mxu0 0.0
        %3711 = vmatpush1.msra.mxu0 0.0
        %3712 = vmatprep.subr.mxu0 0.0
        %3713 = vmatpush1.msra.mxu0 0.0
        %3714 = vmatprep.subr.mxu0 0.0
        %3715 = vmatpush1.msra.mxu0 0.0
        %3716 = vmatprep.subr.mxu0 0.0
        %3717 = vmatpush1.msra.mxu0 0.0
        %3718 = vmatprep.subr.mxu0 0.0
        %3719 = vmatpush1.msra.mxu0 0.0
        %3720 = vmatprep.subr.mxu0 0.0
        %3721 = vmatpush1.msra.mxu0 0.0
        %3722 = vmatprep.subr.mxu0 0.0
        %3723 = vmatpush1.msra.mxu0 0.0
        %3724 = vmatprep.mubr.f32.mxu0 0.0
        %3725 = vmatmul.mubr.f32.gmra.mrb[0].mxu0 %v3637
        %v3726 = vpop.f32.mrb[0].mxu0
        %v3727 = vadd.f32 0.0, %v3726
        %v3728 = vpop.f32.mrb[0].mxu0
        %3729 = vmatprep.mubr.f32.mxu0 0.0
        %3730 = vmatmul.mubr.f32.gmra.mrb[0].mxu0 %v3640
        %v3731 = vpop.f32.mrb[0].mxu0
        %v3732 = vadd.f32 0.0, %v3731
        %v3733 = vpop.f32.mrb[0].mxu0
        %3734 = vmatprep.mubr.f32.mxu0 0.0
        %3735 = vmatmul.mubr.f32.gmra.mrb[0].mxu0 %v3643
        %v3736 = vpop.f32.mrb[0].mxu0
        %v3737 = vadd.f32 0.0, %v3736
        %v3738 = vpop.f32.mrb[0].mxu0
        %3739 = vmatprep.mubr.f32.mxu0 0.0
        %3740 = vmatmul.mubr.f32.gmra.mrb[0].mxu0 %v3646
        %v3741 = vpop.f32.mrb[0].mxu0
        %v3742 = vadd.f32 0.0, %v3741
        %v3743 = vpop.f32.mrb[0].mxu0
        %3744 = vmatprep.mubr.f32.mxu0 0.0
        %3745 = vmatmul.mubr.f32.gmra.mrb[0].mxu0 %v3649
        %v3746 = vpop.f32.mrb[0].mxu0
        %v3747 = vadd.f32 0.0, %v3746
        %v3748 = vpop.f32.mrb[0].mxu0
        %3749 = vmatprep.mubr.f32.mxu0 0.0
        %3750 = vmatmul.mubr.f32.gmra.mrb[0].mxu0 %v3652
        %v3751 = vpop.f32.mrb[0].mxu0
        %v3752 = vadd.f32 0.0, %v3751
        %v3753 = vpop.f32.mrb[0].mxu0
        %3754 = vmatprep.mubr.f32.mxu0 0.0
        %3755 = vmatmul.mubr.f32.gmra.mrb[0].mxu0 %v3655
        %v3756 = vpop.f32.mrb[0].mxu0
        %v3757 = vadd.f32 0.0, %v3756
        %v3758 = vpop.f32.mrb[0].mxu0
        %3759 = vmatprep.mubr.f32.mxu0 0.0
        %3760 = vmatmul.mubr.f32.gmra.mrb[0].mxu0 %v3658
        %v3761 = vpop.f32.mrb[0].mxu0
        %v3762 = vadd.f32 0.0, %v3761
        %v3763 = vpop.f32.mrb[0].mxu0
        %3764 = vdwg.mxu0
        %s3765 = scalar_lea.vmem %s14, 4
        %v3766 = vld [vmem:[%s3765] sm:$0xf]
        %v3768 = vsel %vm2741, %v3727, 0
        %v3771 = vsel %vm2741, %v3732, 0
        %v3774 = vsel %vm2741, %v3737, 0
        %v3777 = vsel %vm2741, %v3742, 0
        %v3780 = vsel %vm2741, %v3747, 0
        %v3783 = vsel %vm2741, %v3752, 0
        %v3786 = vsel %vm2741, %v3757, 0
        %v3789 = vsel %vm2741, %v3762, 0
        %v3792 = vsel %vm2766, %v3766, 0
        %3794 = vmatprep.subr.mxu0 0.0
        %3795 = vmatpush1.msra.mxu0 %v3792
        %3796 = vmatprep.subr.mxu0 0.0
        %3797 = vmatpush1.msra.mxu0 0.0
        %3798 = vmatprep.subr.mxu0 0.0
        %3799 = vmatpush1.msra.mxu0 0.0
        %3800 = vmatprep.subr.mxu0 0.0
        %3801 = vmatpush1.msra.mxu0 0.0
        %3802 = vmatprep.subr.mxu0 0.0
        %3803 = vmatpush1.msra.mxu0 0.0
        %3804 = vmatprep.subr.mxu0 0.0
        %3805 = vmatpush1.msra.mxu0 0.0
        %3806 = vmatprep.subr.mxu0 0.0
        %3807 = vmatpush1.msra.mxu0 0.0
        %3808 = vmatprep.subr.mxu0 0.0
        %3809 = vmatpush1.msra.mxu0 0.0
        %3810 = vmatprep.subr.mxu0 0.0
        %3811 = vmatpush1.msra.mxu0 0.0
        %3812 = vmatprep.subr.mxu0 0.0
        %3813 = vmatpush1.msra.mxu0 0.0
        %3814 = vmatprep.subr.mxu0 0.0
        %3815 = vmatpush1.msra.mxu0 0.0
        %3816 = vmatprep.subr.mxu0 0.0
        %3817 = vmatpush1.msra.mxu0 0.0
        %3818 = vmatprep.subr.mxu0 0.0
        %3819 = vmatpush1.msra.mxu0 0.0
        %3820 = vmatprep.subr.mxu0 0.0
        %3821 = vmatpush1.msra.mxu0 0.0
        %3822 = vmatprep.subr.mxu0 0.0
        %3823 = vmatpush1.msra.mxu0 0.0
        %3824 = vmatprep.subr.mxu0 0.0
        %3825 = vmatpush1.msra.mxu0 0.0
        %3826 = vmatprep.subr.mxu0 0.0
        %3827 = vmatpush1.msra.mxu0 0.0
        %3828 = vmatprep.subr.mxu0 0.0
        %3829 = vmatpush1.msra.mxu0 0.0
        %3830 = vmatprep.subr.mxu0 0.0
        %3831 = vmatpush1.msra.mxu0 0.0
        %3832 = vmatprep.subr.mxu0 0.0
        %3833 = vmatpush1.msra.mxu0 0.0
        %3834 = vmatprep.subr.mxu0 0.0
        %3835 = vmatpush1.msra.mxu0 0.0
        %3836 = vmatprep.subr.mxu0 0.0
        %3837 = vmatpush1.msra.mxu0 0.0
        %3838 = vmatprep.subr.mxu0 0.0
        %3839 = vmatpush1.msra.mxu0 0.0
        %3840 = vmatprep.subr.mxu0 0.0
        %3841 = vmatpush1.msra.mxu0 0.0
        %3842 = vmatprep.subr.mxu0 0.0
        %3843 = vmatpush1.msra.mxu0 0.0
        %3844 = vmatprep.subr.mxu0 0.0
        %3845 = vmatpush1.msra.mxu0 0.0
        %3846 = vmatprep.subr.mxu0 0.0
        %3847 = vmatpush1.msra.mxu0 0.0
        %3848 = vmatprep.subr.mxu0 0.0
        %3849 = vmatpush1.msra.mxu0 0.0
        %3850 = vmatprep.subr.mxu0 0.0
        %3851 = vmatpush1.msra.mxu0 0.0
        %3852 = vmatprep.subr.mxu0 0.0
        %3853 = vmatpush1.msra.mxu0 0.0
        %3854 = vmatprep.subr.mxu0 0.0
        %3855 = vmatpush1.msra.mxu0 0.0
        %3856 = vmatprep.subr.mxu0 0.0
        %3857 = vmatpush1.msra.mxu0 0.0
        %3858 = vmatprep.mubr.f32.mxu0 0.0
        %3859 = vmatmul.mubr.f32.gmra.mrb[0].mxu0 %v3768
        %v3860 = vpop.f32.mrb[0].mxu0
        %v3861 = vadd.f32 0.0, %v3860
        %v3862 = vpop.f32.mrb[0].mxu0
        %3863 = vmatprep.mubr.f32.mxu0 0.0
        %3864 = vmatmul.mubr.f32.gmra.mrb[0].mxu0 %v3771
        %v3865 = vpop.f32.mrb[0].mxu0
        %v3866 = vadd.f32 0.0, %v3865
        %v3867 = vpop.f32.mrb[0].mxu0
        %3868 = vmatprep.mubr.f32.mxu0 0.0
        %3869 = vmatmul.mubr.f32.gmra.mrb[0].mxu0 %v3774
        %v3870 = vpop.f32.mrb[0].mxu0
        %v3871 = vadd.f32 0.0, %v3870
        %v3872 = vpop.f32.mrb[0].mxu0
        %3873 = vmatprep.mubr.f32.mxu0 0.0
        %3874 = vmatmul.mubr.f32.gmra.mrb[0].mxu0 %v3777
        %v3875 = vpop.f32.mrb[0].mxu0
        %v3876 = vadd.f32 0.0, %v3875
        %v3877 = vpop.f32.mrb[0].mxu0
        %3878 = vmatprep.mubr.f32.mxu0 0.0
        %3879 = vmatmul.mubr.f32.gmra.mrb[0].mxu0 %v3780
        %v3880 = vpop.f32.mrb[0].mxu0
        %v3881 = vadd.f32 0.0, %v3880
        %v3882 = vpop.f32.mrb[0].mxu0
        %3883 = vmatprep.mubr.f32.mxu0 0.0
        %3884 = vmatmul.mubr.f32.gmra.mrb[0].mxu0 %v3783
        %v3885 = vpop.f32.mrb[0].mxu0
        %v3886 = vadd.f32 0.0, %v3885
        %v3887 = vpop.f32.mrb[0].mxu0
        %3888 = vmatprep.mubr.f32.mxu0 0.0
        %3889 = vmatmul.mubr.f32.gmra.mrb[0].mxu0 %v3786
        %v3890 = vpop.f32.mrb[0].mxu0
        %v3891 = vadd.f32 0.0, %v3890
        %v3892 = vpop.f32.mrb[0].mxu0
        %3893 = vmatprep.mubr.f32.mxu0 0.0
        %3894 = vmatmul.mubr.f32.gmra.mrb[0].mxu0 %v3789
        %v3895 = vpop.f32.mrb[0].mxu0
        %v3896 = vadd.f32 0.0, %v3895
        %v3897 = vpop.f32.mrb[0].mxu0
        %3898 = vdwg.mxu0
        %v3900 = vsel %vm2741, %v3070, 0
        %v3903 = vsel %vm2741, %v3075, 0
        %v3906 = vsel %vm2741, %v3080, 0
        %v3909 = vsel %vm2741, %v3085, 0
        %v3912 = vsel %vm2741, %v3090, 0
        %v3915 = vsel %vm2741, %v3095, 0
        %v3918 = vsel %vm2741, %v3100, 0
        %v3921 = vsel %vm2741, %v3105, 0
        %v3924 = vsel %vm2766, %v3108, 0
        %3926 = vmatprep.subr.mxu0 0.0
        %3927 = vmatpush1.msra.mxu0 %v3924
        %3928 = vmatprep.subr.mxu0 0.0
        %3929 = vmatpush1.msra.mxu0 0.0
        %3930 = vmatprep.subr.mxu0 0.0
        %3931 = vmatpush1.msra.mxu0 0.0
        %3932 = vmatprep.subr.mxu0 0.0
        %3933 = vmatpush1.msra.mxu0 0.0
        %3934 = vmatprep.subr.mxu0 0.0
        %3935 = vmatpush1.msra.mxu0 0.0
        %3936 = vmatprep.subr.mxu0 0.0
        %3937 = vmatpush1.msra.mxu0 0.0
        %3938 = vmatprep.subr.mxu0 0.0
        %3939 = vmatpush1.msra.mxu0 0.0
        %3940 = vmatprep.subr.mxu0 0.0
        %3941 = vmatpush1.msra.mxu0 0.0
        %3942 = vmatprep.subr.mxu0 0.0
        %3943 = vmatpush1.msra.mxu0 0.0
        %3944 = vmatprep.subr.mxu0 0.0
        %3945 = vmatpush1.msra.mxu0 0.0
        %3946 = vmatprep.subr.mxu0 0.0
        %3947 = vmatpush1.msra.mxu0 0.0
        %3948 = vmatprep.subr.mxu0 0.0
        %3949 = vmatpush1.msra.mxu0 0.0
        %3950 = vmatprep.subr.mxu0 0.0
        %3951 = vmatpush1.msra.mxu0 0.0
        %3952 = vmatprep.subr.mxu0 0.0
        %3953 = vmatpush1.msra.mxu0 0.0
        %3954 = vmatprep.subr.mxu0 0.0
        %3955 = vmatpush1.msra.mxu0 0.0
        %3956 = vmatprep.subr.mxu0 0.0
        %3957 = vmatpush1.msra.mxu0 0.0
        %3958 = vmatprep.subr.mxu0 0.0
        %3959 = vmatpush1.msra.mxu0 0.0
        %3960 = vmatprep.subr.mxu0 0.0
        %3961 = vmatpush1.msra.mxu0 0.0
        %3962 = vmatprep.subr.mxu0 0.0
        %3963 = vmatpush1.msra.mxu0 0.0
        %3964 = vmatprep.subr.mxu0 0.0
        %3965 = vmatpush1.msra.mxu0 0.0
        %3966 = vmatprep.subr.mxu0 0.0
        %3967 = vmatpush1.msra.mxu0 0.0
        %3968 = vmatprep.subr.mxu0 0.0
        %3969 = vmatpush1.msra.mxu0 0.0
        %3970 = vmatprep.subr.mxu0 0.0
        %3971 = vmatpush1.msra.mxu0 0.0
        %3972 = vmatprep.subr.mxu0 0.0
        %3973 = vmatpush1.msra.mxu0 0.0
        %3974 = vmatprep.subr.mxu0 0.0
        %3975 = vmatpush1.msra.mxu0 0.0
        %3976 = vmatprep.subr.mxu0 0.0
        %3977 = vmatpush1.msra.mxu0 0.0
        %3978 = vmatprep.subr.mxu0 0.0
        %3979 = vmatpush1.msra.mxu0 0.0
        %3980 = vmatprep.subr.mxu0 0.0
        %3981 = vmatpush1.msra.mxu0 0.0
        %3982 = vmatprep.subr.mxu0 0.0
        %3983 = vmatpush1.msra.mxu0 0.0
        %3984 = vmatprep.subr.mxu0 0.0
        %3985 = vmatpush1.msra.mxu0 0.0
        %3986 = vmatprep.subr.mxu0 0.0
        %3987 = vmatpush1.msra.mxu0 0.0
        %3988 = vmatprep.subr.mxu0 0.0
        %3989 = vmatpush1.msra.mxu0 0.0
        %3990 = vmatprep.mubr.f32.mxu0 0.0
        %3991 = vmatmul.mubr.f32.gmra.mrb[0].mxu0 %v3900
        %v3992 = vpop.f32.mrb[0].mxu0
        %v3993 = vadd.f32 %v3861, %v3992
        %v3994 = vpop.f32.mrb[0].mxu0
        %3995 = vmatprep.mubr.f32.mxu0 0.0
        %3996 = vmatmul.mubr.f32.gmra.mrb[0].mxu0 %v3903
        %v3997 = vpop.f32.mrb[0].mxu0
        %v3998 = vadd.f32 %v3866, %v3997
        %v3999 = vpop.f32.mrb[0].mxu0
        %4000 = vmatprep.mubr.f32.mxu0 0.0
        %4001 = vmatmul.mubr.f32.gmra.mrb[0].mxu0 %v3906
        %v4002 = vpop.f32.mrb[0].mxu0
        %v4003 = vadd.f32 %v3871, %v4002
        %v4004 = vpop.f32.mrb[0].mxu0
        %4005 = vmatprep.mubr.f32.mxu0 0.0
        %4006 = vmatmul.mubr.f32.gmra.mrb[0].mxu0 %v3909
        %v4007 = vpop.f32.mrb[0].mxu0
        %v4008 = vadd.f32 %v3876, %v4007
        %v4009 = vpop.f32.mrb[0].mxu0
        %4010 = vmatprep.mubr.f32.mxu0 0.0
        %4011 = vmatmul.mubr.f32.gmra.mrb[0].mxu0 %v3912
        %v4012 = vpop.f32.mrb[0].mxu0
        %v4013 = vadd.f32 %v3881, %v4012
        %v4014 = vpop.f32.mrb[0].mxu0
        %4015 = vmatprep.mubr.f32.mxu0 0.0
        %4016 = vmatmul.mubr.f32.gmra.mrb[0].mxu0 %v3915
        %v4017 = vpop.f32.mrb[0].mxu0
        %v4018 = vadd.f32 %v3886, %v4017
        %v4019 = vpop.f32.mrb[0].mxu0
        %4020 = vmatprep.mubr.f32.mxu0 0.0
        %4021 = vmatmul.mubr.f32.gmra.mrb[0].mxu0 %v3918
        %v4022 = vpop.f32.mrb[0].mxu0
        %v4023 = vadd.f32 %v3891, %v4022
        %v4024 = vpop.f32.mrb[0].mxu0
        %4025 = vmatprep.mubr.f32.mxu0 0.0
        %4026 = vmatmul.mubr.f32.gmra.mrb[0].mxu0 %v3921
        %v4027 = vpop.f32.mrb[0].mxu0
        %v4028 = vadd.f32 %v3896, %v4027
        %v4029 = vpop.f32.mrb[0].mxu0
        %4030 = vdwg.mxu0
        %s4031 = scalar_lea.vmem %s9, 32
        %v4032 = vld [vmem:[%s4031] sm:$0xff]
        %v4033 = vld [vmem:[%s4031 + $0x8] sm:$0xff]
        %4034 = vmatprep.subr.mxu0 0.0
        %4035 = vmatpush1.msra.mxu0 %v4032
        %4036 = vmatprep.subr.mxu0 0.0
        %4037 = vmatpush1.msra.mxu0 %v4033
        %4038 = vmatprep.subr.mxu0 0.0
        %4039 = vmatpush1.msra.mxu0 0.0
        %4040 = vmatprep.subr.mxu0 0.0
        %4041 = vmatpush1.msra.mxu0 0.0
        %4042 = vmatprep.subr.mxu0 0.0
        %4043 = vmatpush1.msra.mxu0 0.0
        %4044 = vmatprep.subr.mxu0 0.0
        %4045 = vmatpush1.msra.mxu0 0.0
        %4046 = vmatprep.subr.mxu0 0.0
        %4047 = vmatpush1.msra.mxu0 0.0
        %4048 = vmatprep.subr.mxu0 0.0
        %4049 = vmatpush1.msra.mxu0 0.0
        %4050 = vmatprep.subr.mxu0 0.0
        %4051 = vmatpush1.msra.mxu0 0.0
        %4052 = vmatprep.subr.mxu0 0.0
        %4053 = vmatpush1.msra.mxu0 0.0
        %4054 = vmatprep.subr.mxu0 0.0
        %4055 = vmatpush1.msra.mxu0 0.0
        %4056 = vmatprep.subr.mxu0 0.0
        %4057 = vmatpush1.msra.mxu0 0.0
        %4058 = vmatprep.subr.mxu0 0.0
        %4059 = vmatpush1.msra.mxu0 0.0
        %4060 = vmatprep.subr.mxu0 0.0
        %4061 = vmatpush1.msra.mxu0 0.0
        %4062 = vmatprep.subr.mxu0 0.0
        %4063 = vmatpush1.msra.mxu0 0.0
        %4064 = vmatprep.subr.mxu0 0.0
        %4065 = vmatpush1.msra.mxu0 0.0
        %4066 = vmatprep.subr.mxu0 0.0
        %4067 = vmatpush1.msra.mxu0 0.0
        %4068 = vmatprep.subr.mxu0 0.0
        %4069 = vmatpush1.msra.mxu0 0.0
        %4070 = vmatprep.subr.mxu0 0.0
        %4071 = vmatpush1.msra.mxu0 0.0
        %4072 = vmatprep.subr.mxu0 0.0
        %4073 = vmatpush1.msra.mxu0 0.0
        %4074 = vmatprep.subr.mxu0 0.0
        %4075 = vmatpush1.msra.mxu0 0.0
        %4076 = vmatprep.subr.mxu0 0.0
        %4077 = vmatpush1.msra.mxu0 0.0
        %4078 = vmatprep.subr.mxu0 0.0
        %4079 = vmatpush1.msra.mxu0 0.0
        %4080 = vmatprep.subr.mxu0 0.0
        %4081 = vmatpush1.msra.mxu0 0.0
        %4082 = vmatprep.subr.mxu0 0.0
        %4083 = vmatpush1.msra.mxu0 0.0
        %4084 = vmatprep.subr.mxu0 0.0
        %4085 = vmatpush1.msra.mxu0 0.0
        %4086 = vmatprep.subr.mxu0 0.0
        %4087 = vmatpush1.msra.mxu0 0.0
        %4088 = vmatprep.subr.mxu0 0.0
        %4089 = vmatpush1.msra.mxu0 0.0
        %4090 = vmatprep.subr.mxu0 0.0
        %4091 = vmatpush1.msra.mxu0 0.0
        %4092 = vmatprep.subr.mxu0 0.0
        %4093 = vmatpush1.msra.mxu0 0.0
        %4094 = vmatprep.subr.mxu0 0.0
        %4095 = vmatpush1.msra.mxu0 0.0
        %4096 = vmatprep.subr.mxu0 0.0
        %4097 = vmatpush1.msra.mxu0 0.0
        %4098 = vmatprep.mubr.f32.mxu0 0.0
        %4099 = vmatmul.mubr.f32.gmra.mrb[0].mxu0 %v2408
        %v4100 = vpop.f32.mrb[0].mxu0
        %v4101 = vadd.f32 0.0, %v4100
        %v4102 = vpop.f32.mrb[0].mxu0
        %4103 = vmatprep.mubr.f32.mxu0 0.0
        %4104 = vmatmul.mubr.f32.gmra.mrb[0].mxu0 %v2411
        %v4105 = vpop.f32.mrb[0].mxu0
        %v4106 = vadd.f32 0.0, %v4105
        %v4107 = vpop.f32.mrb[0].mxu0
        %4108 = vmatprep.mubr.f32.mxu0 0.0
        %4109 = vmatmul.mubr.f32.gmra.mrb[0].mxu0 %v2414
        %v4110 = vpop.f32.mrb[0].mxu0
        %v4111 = vadd.f32 0.0, %v4110
        %v4112 = vpop.f32.mrb[0].mxu0
        %4113 = vmatprep.mubr.f32.mxu0 0.0
        %4114 = vmatmul.mubr.f32.gmra.mrb[0].mxu0 %v2417
        %v4115 = vpop.f32.mrb[0].mxu0
        %v4116 = vadd.f32 0.0, %v4115
        %v4117 = vpop.f32.mrb[0].mxu0
        %4118 = vmatprep.mubr.f32.mxu0 0.0
        %4119 = vmatmul.mubr.f32.gmra.mrb[0].mxu0 %v2420
        %v4120 = vpop.f32.mrb[0].mxu0
        %v4121 = vadd.f32 0.0, %v4120
        %v4122 = vpop.f32.mrb[0].mxu0
        %4123 = vmatprep.mubr.f32.mxu0 0.0
        %4124 = vmatmul.mubr.f32.gmra.mrb[0].mxu0 %v2423
        %v4125 = vpop.f32.mrb[0].mxu0
        %v4126 = vadd.f32 0.0, %v4125
        %v4127 = vpop.f32.mrb[0].mxu0
        %4128 = vmatprep.mubr.f32.mxu0 0.0
        %4129 = vmatmul.mubr.f32.gmra.mrb[0].mxu0 %v2426
        %v4130 = vpop.f32.mrb[0].mxu0
        %v4131 = vadd.f32 0.0, %v4130
        %v4132 = vpop.f32.mrb[0].mxu0
        %4133 = vmatprep.mubr.f32.mxu0 0.0
        %4134 = vmatmul.mubr.f32.gmra.mrb[0].mxu0 %v2429
        %v4135 = vpop.f32.mrb[0].mxu0
        %v4136 = vadd.f32 0.0, %v4135
        %v4137 = vpop.f32.mrb[0].mxu0
        %4138 = vdwg.mxu0
        %s4139 = scalar_lea.vmem %s10, 8
        %v4140 = vld [vmem:[%s4139] sm:$0xf]
        %v4142 = vsel %vm830, %v4140, 0
        %4144 = vmatprep.subr.mxu0 0.0
        %4145 = vmatpush1.msra.mxu0 %v2260
        %4146 = vmatprep.subr.mxu0 0.0
        %4147 = vmatpush1.msra.mxu0 %v2265
        %4148 = vmatprep.subr.mxu0 0.0
        %4149 = vmatpush1.msra.mxu0 0.0
        %4150 = vmatprep.subr.mxu0 0.0
        %4151 = vmatpush1.msra.mxu0 0.0
        %4152 = vmatprep.subr.mxu0 0.0
        %4153 = vmatpush1.msra.mxu0 0.0
        %4154 = vmatprep.subr.mxu0 0.0
        %4155 = vmatpush1.msra.mxu0 0.0
        %4156 = vmatprep.subr.mxu0 0.0
        %4157 = vmatpush1.msra.mxu0 0.0
        %4158 = vmatprep.subr.mxu0 0.0
        %4159 = vmatpush1.msra.mxu0 0.0
        %4160 = vmatprep.subr.mxu0 0.0
        %4161 = vmatpush1.msra.mxu0 0.0
        %4162 = vmatprep.subr.mxu0 0.0
        %4163 = vmatpush1.msra.mxu0 0.0
        %4164 = vmatprep.subr.mxu0 0.0
        %4165 = vmatpush1.msra.mxu0 0.0
        %4166 = vmatprep.subr.mxu0 0.0
        %4167 = vmatpush1.msra.mxu0 0.0
        %4168 = vmatprep.subr.mxu0 0.0
        %4169 = vmatpush1.msra.mxu0 0.0
        %4170 = vmatprep.subr.mxu0 0.0
        %4171 = vmatpush1.msra.mxu0 0.0
        %4172 = vmatprep.subr.mxu0 0.0
        %4173 = vmatpush1.msra.mxu0 0.0
        %4174 = vmatprep.subr.mxu0 0.0
        %4175 = vmatpush1.msra.mxu0 0.0
        %4176 = vmatprep.subr.mxu0 0.0
        %4177 = vmatpush1.msra.mxu0 0.0
        %4178 = vmatprep.subr.mxu0 0.0
        %4179 = vmatpush1.msra.mxu0 0.0
        %4180 = vmatprep.subr.mxu0 0.0
        %4181 = vmatpush1.msra.mxu0 0.0
        %4182 = vmatprep.subr.mxu0 0.0
        %4183 = vmatpush1.msra.mxu0 0.0
        %4184 = vmatprep.subr.mxu0 0.0
        %4185 = vmatpush1.msra.mxu0 0.0
        %4186 = vmatprep.subr.mxu0 0.0
        %4187 = vmatpush1.msra.mxu0 0.0
        %4188 = vmatprep.subr.mxu0 0.0
        %4189 = vmatpush1.msra.mxu0 0.0
        %4190 = vmatprep.subr.mxu0 0.0
        %4191 = vmatpush1.msra.mxu0 0.0
        %4192 = vmatprep.subr.mxu0 0.0
        %4193 = vmatpush1.msra.mxu0 0.0
        %4194 = vmatprep.subr.mxu0 0.0
        %4195 = vmatpush1.msra.mxu0 0.0
        %4196 = vmatprep.subr.mxu0 0.0
        %4197 = vmatpush1.msra.mxu0 0.0
        %4198 = vmatprep.subr.mxu0 0.0
        %4199 = vmatpush1.msra.mxu0 0.0
        %4200 = vmatprep.subr.mxu0 0.0
        %4201 = vmatpush1.msra.mxu0 0.0
        %4202 = vmatprep.subr.mxu0 0.0
        %4203 = vmatpush1.msra.mxu0 0.0
        %4204 = vmatprep.subr.mxu0 0.0
        %4205 = vmatpush1.msra.mxu0 0.0
        %4206 = vmatprep.subr.mxu0 0.0
        %4207 = vmatpush1.msra.mxu0 0.0
        %4208 = vmatprep.mubr.f32.mxu0 0.0
        %4209 = vmatmul.mubr.f32.gmra.mrb[0].mxu0 %v4142
        %v4210 = vpop.f32.mrb[0].mxu0
        %v4211 = vadd.f32 0.0, %v4210
        %v4212 = vpop.f32.mrb[0].mxu0
        %4213 = vdwg.mxu0
        %s4214 = scalar_lea.vmem %s11, 32
        %v4215 = vld [vmem:[%s4214] sm:$0xff]
        %v4216 = vld [vmem:[%s4214 + $0x8] sm:$0xff]
        %4217 = vmatprep.subr.mxu0 0.0
        %4218 = vmatpush1.msra.mxu0 %v4215
        %4219 = vmatprep.subr.mxu0 0.0
        %4220 = vmatpush1.msra.mxu0 %v4216
        %4221 = vmatprep.subr.mxu0 0.0
        %4222 = vmatpush1.msra.mxu0 0.0
        %4223 = vmatprep.subr.mxu0 0.0
        %4224 = vmatpush1.msra.mxu0 0.0
        %4225 = vmatprep.subr.mxu0 0.0
        %4226 = vmatpush1.msra.mxu0 0.0
        %4227 = vmatprep.subr.mxu0 0.0
        %4228 = vmatpush1.msra.mxu0 0.0
        %4229 = vmatprep.subr.mxu0 0.0
        %4230 = vmatpush1.msra.mxu0 0.0
        %4231 = vmatprep.subr.mxu0 0.0
        %4232 = vmatpush1.msra.mxu0 0.0
        %4233 = vmatprep.subr.mxu0 0.0
        %4234 = vmatpush1.msra.mxu0 0.0
        %4235 = vmatprep.subr.mxu0 0.0
        %4236 = vmatpush1.msra.mxu0 0.0
        %4237 = vmatprep.subr.mxu0 0.0
        %4238 = vmatpush1.msra.mxu0 0.0
        %4239 = vmatprep.subr.mxu0 0.0
        %4240 = vmatpush1.msra.mxu0 0.0
        %4241 = vmatprep.subr.mxu0 0.0
        %4242 = vmatpush1.msra.mxu0 0.0
        %4243 = vmatprep.subr.mxu0 0.0
        %4244 = vmatpush1.msra.mxu0 0.0
        %4245 = vmatprep.subr.mxu0 0.0
        %4246 = vmatpush1.msra.mxu0 0.0
        %4247 = vmatprep.subr.mxu0 0.0
        %4248 = vmatpush1.msra.mxu0 0.0
        %4249 = vmatprep.subr.mxu0 0.0
        %4250 = vmatpush1.msra.mxu0 0.0
        %4251 = vmatprep.subr.mxu0 0.0
        %4252 = vmatpush1.msra.mxu0 0.0
        %4253 = vmatprep.subr.mxu0 0.0
        %4254 = vmatpush1.msra.mxu0 0.0
        %4255 = vmatprep.subr.mxu0 0.0
        %4256 = vmatpush1.msra.mxu0 0.0
        %4257 = vmatprep.subr.mxu0 0.0
        %4258 = vmatpush1.msra.mxu0 0.0
        %4259 = vmatprep.subr.mxu0 0.0
        %4260 = vmatpush1.msra.mxu0 0.0
        %4261 = vmatprep.subr.mxu0 0.0
        %4262 = vmatpush1.msra.mxu0 0.0
        %4263 = vmatprep.subr.mxu0 0.0
        %4264 = vmatpush1.msra.mxu0 0.0
        %4265 = vmatprep.subr.mxu0 0.0
        %4266 = vmatpush1.msra.mxu0 0.0
        %4267 = vmatprep.subr.mxu0 0.0
        %4268 = vmatpush1.msra.mxu0 0.0
        %4269 = vmatprep.subr.mxu0 0.0
        %4270 = vmatpush1.msra.mxu0 0.0
        %4271 = vmatprep.subr.mxu0 0.0
        %4272 = vmatpush1.msra.mxu0 0.0
        %4273 = vmatprep.subr.mxu0 0.0
        %4274 = vmatpush1.msra.mxu0 0.0
        %4275 = vmatprep.subr.mxu0 0.0
        %4276 = vmatpush1.msra.mxu0 0.0
        %4277 = vmatprep.subr.mxu0 0.0
        %4278 = vmatpush1.msra.mxu0 0.0
        %4279 = vmatprep.subr.mxu0 0.0
        %4280 = vmatpush1.msra.mxu0 0.0
        %4281 = vmatprep.mubr.f32.mxu0 0.0
        %4282 = vmatmul.mubr.f32.gmra.mrb[0].mxu0 %v2613
        %v4283 = vpop.f32.mrb[0].mxu0
        %v4284 = vadd.f32 0.0, %v4283
        %v4285 = vpop.f32.mrb[0].mxu0
        %4286 = vmatprep.mubr.f32.mxu0 0.0
        %4287 = vmatmul.mubr.f32.gmra.mrb[0].mxu0 %v2616
        %v4288 = vpop.f32.mrb[0].mxu0
        %v4289 = vadd.f32 0.0, %v4288
        %v4290 = vpop.f32.mrb[0].mxu0
        %4291 = vmatprep.mubr.f32.mxu0 0.0
        %4292 = vmatmul.mubr.f32.gmra.mrb[0].mxu0 %v2619
        %v4293 = vpop.f32.mrb[0].mxu0
        %v4294 = vadd.f32 0.0, %v4293
        %v4295 = vpop.f32.mrb[0].mxu0
        %4296 = vmatprep.mubr.f32.mxu0 0.0
        %4297 = vmatmul.mubr.f32.gmra.mrb[0].mxu0 %v2622
        %v4298 = vpop.f32.mrb[0].mxu0
        %v4299 = vadd.f32 0.0, %v4298
        %v4300 = vpop.f32.mrb[0].mxu0
        %4301 = vmatprep.mubr.f32.mxu0 0.0
        %4302 = vmatmul.mubr.f32.gmra.mrb[0].mxu0 %v2625
        %v4303 = vpop.f32.mrb[0].mxu0
        %v4304 = vadd.f32 0.0, %v4303
        %v4305 = vpop.f32.mrb[0].mxu0
        %4306 = vmatprep.mubr.f32.mxu0 0.0
        %4307 = vmatmul.mubr.f32.gmra.mrb[0].mxu0 %v2628
        %v4308 = vpop.f32.mrb[0].mxu0
        %v4309 = vadd.f32 0.0, %v4308
        %v4310 = vpop.f32.mrb[0].mxu0
        %4311 = vmatprep.mubr.f32.mxu0 0.0
        %4312 = vmatmul.mubr.f32.gmra.mrb[0].mxu0 %v2631
        %v4313 = vpop.f32.mrb[0].mxu0
        %v4314 = vadd.f32 0.0, %v4313
        %v4315 = vpop.f32.mrb[0].mxu0
        %4316 = vmatprep.mubr.f32.mxu0 0.0
        %4317 = vmatmul.mubr.f32.gmra.mrb[0].mxu0 %v2634
        %v4318 = vpop.f32.mrb[0].mxu0
        %v4319 = vadd.f32 0.0, %v4318
        %v4320 = vpop.f32.mrb[0].mxu0
        %4321 = vdwg.mxu0
        %v4323 = vsel %vm2741, %v4101, 0
        %v4326 = vsel %vm2741, %v4106, 0
        %v4329 = vsel %vm2741, %v4111, 0
        %v4332 = vsel %vm2741, %v4116, 0
        %v4335 = vsel %vm2741, %v4121, 0
        %v4338 = vsel %vm2741, %v4126, 0
        %v4341 = vsel %vm2741, %v4131, 0
        %v4344 = vsel %vm2741, %v4136, 0
        %v4347 = vsel %vm2766, %v4211, 0
        %4349 = vmatprep.subr.mxu0 0.0
        %4350 = vmatpush1.msra.mxu0 %v4347
        %4351 = vmatprep.subr.mxu0 0.0
        %4352 = vmatpush1.msra.mxu0 0.0
        %4353 = vmatprep.subr.mxu0 0.0
        %4354 = vmatpush1.msra.mxu0 0.0
        %4355 = vmatprep.subr.mxu0 0.0
        %4356 = vmatpush1.msra.mxu0 0.0
        %4357 = vmatprep.subr.mxu0 0.0
        %4358 = vmatpush1.msra.mxu0 0.0
        %4359 = vmatprep.subr.mxu0 0.0
        %4360 = vmatpush1.msra.mxu0 0.0
        %4361 = vmatprep.subr.mxu0 0.0
        %4362 = vmatpush1.msra.mxu0 0.0
        %4363 = vmatprep.subr.mxu0 0.0
        %4364 = vmatpush1.msra.mxu0 0.0
        %4365 = vmatprep.subr.mxu0 0.0
        %4366 = vmatpush1.msra.mxu0 0.0
        %4367 = vmatprep.subr.mxu0 0.0
        %4368 = vmatpush1.msra.mxu0 0.0
        %4369 = vmatprep.subr.mxu0 0.0
        %4370 = vmatpush1.msra.mxu0 0.0
        %4371 = vmatprep.subr.mxu0 0.0
        %4372 = vmatpush1.msra.mxu0 0.0
        %4373 = vmatprep.subr.mxu0 0.0
        %4374 = vmatpush1.msra.mxu0 0.0
        %4375 = vmatprep.subr.mxu0 0.0
        %4376 = vmatpush1.msra.mxu0 0.0
        %4377 = vmatprep.subr.mxu0 0.0
        %4378 = vmatpush1.msra.mxu0 0.0
        %4379 = vmatprep.subr.mxu0 0.0
        %4380 = vmatpush1.msra.mxu0 0.0
        %4381 = vmatprep.subr.mxu0 0.0
        %4382 = vmatpush1.msra.mxu0 0.0
        %4383 = vmatprep.subr.mxu0 0.0
        %4384 = vmatpush1.msra.mxu0 0.0
        %4385 = vmatprep.subr.mxu0 0.0
        %4386 = vmatpush1.msra.mxu0 0.0
        %4387 = vmatprep.subr.mxu0 0.0
        %4388 = vmatpush1.msra.mxu0 0.0
        %4389 = vmatprep.subr.mxu0 0.0
        %4390 = vmatpush1.msra.mxu0 0.0
        %4391 = vmatprep.subr.mxu0 0.0
        %4392 = vmatpush1.msra.mxu0 0.0
        %4393 = vmatprep.subr.mxu0 0.0
        %4394 = vmatpush1.msra.mxu0 0.0
        %4395 = vmatprep.subr.mxu0 0.0
        %4396 = vmatpush1.msra.mxu0 0.0
        %4397 = vmatprep.subr.mxu0 0.0
        %4398 = vmatpush1.msra.mxu0 0.0
        %4399 = vmatprep.subr.mxu0 0.0
        %4400 = vmatpush1.msra.mxu0 0.0
        %4401 = vmatprep.subr.mxu0 0.0
        %4402 = vmatpush1.msra.mxu0 0.0
        %4403 = vmatprep.subr.mxu0 0.0
        %4404 = vmatpush1.msra.mxu0 0.0
        %4405 = vmatprep.subr.mxu0 0.0
        %4406 = vmatpush1.msra.mxu0 0.0
        %4407 = vmatprep.subr.mxu0 0.0
        %4408 = vmatpush1.msra.mxu0 0.0
        %4409 = vmatprep.subr.mxu0 0.0
        %4410 = vmatpush1.msra.mxu0 0.0
        %4411 = vmatprep.subr.mxu0 0.0
        %4412 = vmatpush1.msra.mxu0 0.0
        %4413 = vmatprep.mubr.f32.mxu0 0.0
        %4414 = vmatmul.mubr.f32.gmra.mrb[0].mxu0 %v4323
        %v4415 = vpop.f32.mrb[0].mxu0
        %v4416 = vadd.f32 0.0, %v4415
        %v4417 = vpop.f32.mrb[0].mxu0
        %4418 = vmatprep.mubr.f32.mxu0 0.0
        %4419 = vmatmul.mubr.f32.gmra.mrb[0].mxu0 %v4326
        %v4420 = vpop.f32.mrb[0].mxu0
        %v4421 = vadd.f32 0.0, %v4420
        %v4422 = vpop.f32.mrb[0].mxu0
        %4423 = vmatprep.mubr.f32.mxu0 0.0
        %4424 = vmatmul.mubr.f32.gmra.mrb[0].mxu0 %v4329
        %v4425 = vpop.f32.mrb[0].mxu0
        %v4426 = vadd.f32 0.0, %v4425
        %v4427 = vpop.f32.mrb[0].mxu0
        %4428 = vmatprep.mubr.f32.mxu0 0.0
        %4429 = vmatmul.mubr.f32.gmra.mrb[0].mxu0 %v4332
        %v4430 = vpop.f32.mrb[0].mxu0
        %v4431 = vadd.f32 0.0, %v4430
        %v4432 = vpop.f32.mrb[0].mxu0
        %4433 = vmatprep.mubr.f32.mxu0 0.0
        %4434 = vmatmul.mubr.f32.gmra.mrb[0].mxu0 %v4335
        %v4435 = vpop.f32.mrb[0].mxu0
        %v4436 = vadd.f32 0.0, %v4435
        %v4437 = vpop.f32.mrb[0].mxu0
        %4438 = vmatprep.mubr.f32.mxu0 0.0
        %4439 = vmatmul.mubr.f32.gmra.mrb[0].mxu0 %v4338
        %v4440 = vpop.f32.mrb[0].mxu0
        %v4441 = vadd.f32 0.0, %v4440
        %v4442 = vpop.f32.mrb[0].mxu0
        %4443 = vmatprep.mubr.f32.mxu0 0.0
        %4444 = vmatmul.mubr.f32.gmra.mrb[0].mxu0 %v4341
        %v4445 = vpop.f32.mrb[0].mxu0
        %v4446 = vadd.f32 0.0, %v4445
        %v4447 = vpop.f32.mrb[0].mxu0
        %4448 = vmatprep.mubr.f32.mxu0 0.0
        %4449 = vmatmul.mubr.f32.gmra.mrb[0].mxu0 %v4344
        %v4450 = vpop.f32.mrb[0].mxu0
        %v4451 = vadd.f32 0.0, %v4450
        %v4452 = vpop.f32.mrb[0].mxu0
        %4453 = vdwg.mxu0
        %v4454 = vmul.f32 %v4416, 0.5
        %v4455 = vmul.f32 %v4421, 0.5
        %v4456 = vmul.f32 %v4426, 0.5
        %v4457 = vmul.f32 %v4431, 0.5
        %v4458 = vmul.f32 %v4436, 0.5
        %v4459 = vmul.f32 %v4441, 0.5
        %v4460 = vmul.f32 %v4446, 0.5
        %v4461 = vmul.f32 %v4451, 0.5
        %v4462 = vadd.f32 %v4454, %v2139
        %v4463 = vadd.f32 %v4455, %v2140
        %v4464 = vadd.f32 %v4456, %v2141
        %v4465 = vadd.f32 %v4457, %v2142
        %v4466 = vadd.f32 %v4458, %v2143
        %v4467 = vadd.f32 %v4459, %v2144
        %v4468 = vadd.f32 %v4460, %v2145
        %v4469 = vadd.f32 %v4461, %v2146
        %v4470 = vsel %vm920, %v4462, -inf
        %4471 = vmax.xlane.f32.xlu0 %v4470
        %v4472 = vpop.xlane.xlu0 %4471
        %v4473 = vsel %vm920, %v4463, -inf
        %4474 = vmax.xlane.f32.xlu0 %v4473
        %v4475 = vpop.xlane.xlu0 %4474
        %v4476 = vsel %vm920, %v4464, -inf
        %4477 = vmax.xlane.f32.xlu0 %v4476
        %v4478 = vpop.xlane.xlu0 %4477
        %v4479 = vsel %vm920, %v4465, -inf
        %4480 = vmax.xlane.f32.xlu0 %v4479
        %v4481 = vpop.xlane.xlu0 %4480
        %v4482 = vsel %vm920, %v4466, -inf
        %4483 = vmax.xlane.f32.xlu0 %v4482
        %v4484 = vpop.xlane.xlu0 %4483
        %v4485 = vsel %vm920, %v4467, -inf
        %4486 = vmax.xlane.f32.xlu0 %v4485
        %v4487 = vpop.xlane.xlu0 %4486
        %v4488 = vsel %vm920, %v4468, -inf
        %4489 = vmax.xlane.f32.xlu0 %v4488
        %v4490 = vpop.xlane.xlu0 %4489
        %v4491 = vsel %vm920, %v4469, -inf
        %4492 = vmax.xlane.f32.xlu0 %v4491
        %v4493 = vpop.xlane.xlu0 %4492
        %v4494 = vsub.f32 %v4462, %v4472
        %v4495 = vsub.f32 %v4463, %v4475
        %v4496 = vsub.f32 %v4464, %v4478
        %v4497 = vsub.f32 %v4465, %v4481
        %v4498 = vsub.f32 %v4466, %v4484
        %v4499 = vsub.f32 %v4467, %v4487
        %v4500 = vsub.f32 %v4468, %v4490
        %v4501 = vsub.f32 %v4469, %v4493
        %v4502 = vmul.f32 %v4494, 1.442695
        %v4503 = vpow.pop %v4502
        %v4504 = vmul.f32 %v4495, 1.442695
        %v4505 = vpow.pop %v4504
        %v4506 = vmul.f32 %v4496, 1.442695
        %v4507 = vpow.pop %v4506
        %v4508 = vmul.f32 %v4497, 1.442695
        %v4509 = vpow.pop %v4508
        %v4510 = vmul.f32 %v4498, 1.442695
        %v4511 = vpow.pop %v4510
        %v4512 = vmul.f32 %v4499, 1.442695
        %v4513 = vpow.pop %v4512
        %v4514 = vmul.f32 %v4500, 1.442695
        %v4515 = vpow.pop %v4514
        %v4516 = vmul.f32 %v4501, 1.442695
        %v4517 = vpow.pop %v4516
        %v4518 = vsel %vm920, %v4503, 0.0
        %4519 = vadd.xlane.f32.xlu0 %v4518
        %v4520 = vpop.xlane.xlu0 %4519
        %v4521 = vsel %vm920, %v4505, 0.0
        %4522 = vadd.xlane.f32.xlu0 %v4521
        %v4523 = vpop.xlane.xlu0 %4522
        %v4524 = vsel %vm920, %v4507, 0.0
        %4525 = vadd.xlane.f32.xlu0 %v4524
        %v4526 = vpop.xlane.xlu0 %4525
        %v4527 = vsel %vm920, %v4509, 0.0
        %4528 = vadd.xlane.f32.xlu0 %v4527
        %v4529 = vpop.xlane.xlu0 %4528
        %v4530 = vsel %vm920, %v4511, 0.0
        %4531 = vadd.xlane.f32.xlu0 %v4530
        %v4532 = vpop.xlane.xlu0 %4531
        %v4533 = vsel %vm920, %v4513, 0.0
        %4534 = vadd.xlane.f32.xlu0 %v4533
        %v4535 = vpop.xlane.xlu0 %4534
        %v4536 = vsel %vm920, %v4515, 0.0
        %4537 = vadd.xlane.f32.xlu0 %v4536
        %v4538 = vpop.xlane.xlu0 %4537
        %v4539 = vsel %vm920, %v4517, 0.0
        %4540 = vadd.xlane.f32.xlu0 %v4539
        %v4541 = vpop.xlane.xlu0 %4540
        %v4542 = vrcp.pop %v4520
        %v4543 = vmul.f32 %v4503, %v4542
        %v4544 = vrcp.pop %v4523
        %v4545 = vmul.f32 %v4505, %v4544
        %v4546 = vrcp.pop %v4526
        %v4547 = vmul.f32 %v4507, %v4546
        %v4548 = vrcp.pop %v4529
        %v4549 = vmul.f32 %v4509, %v4548
        %v4550 = vrcp.pop %v4532
        %v4551 = vmul.f32 %v4511, %v4550
        %v4552 = vrcp.pop %v4535
        %v4553 = vmul.f32 %v4513, %v4552
        %v4554 = vrcp.pop %v4538
        %v4555 = vmul.f32 %v4515, %v4554
        %v4556 = vrcp.pop %v4541
        %v4557 = vmul.f32 %v4517, %v4556
        %v4559 = vsel %vm920, %v4543, 0
        %v4562 = vsel %vm920, %v4545, 0
        %v4565 = vsel %vm920, %v4547, 0
        %v4568 = vsel %vm920, %v4549, 0
        %v4571 = vsel %vm920, %v4551, 0
        %v4574 = vsel %vm920, %v4553, 0
        %v4577 = vsel %vm920, %v4555, 0
        %v4580 = vsel %vm920, %v4557, 0
        %4582 = vmatprep.subr.mxu0 0.0
        %4583 = vmatpush1.msra.mxu0 %v4284
        %4584 = vmatprep.subr.mxu0 0.0
        %4585 = vmatpush1.msra.mxu0 %v4289
        %4586 = vmatprep.subr.mxu0 0.0
        %4587 = vmatpush1.msra.mxu0 %v4294
        %4588 = vmatprep.subr.mxu0 0.0
        %4589 = vmatpush1.msra.mxu0 %v4299
        %4590 = vmatprep.subr.mxu0 0.0
        %4591 = vmatpush1.msra.mxu0 %v4304
        %4592 = vmatprep.subr.mxu0 0.0
        %4593 = vmatpush1.msra.mxu0 %v4309
        %4594 = vmatprep.subr.mxu0 0.0
        %4595 = vmatpush1.msra.mxu0 %v4314
        %4596 = vmatprep.subr.mxu0 0.0
        %4597 = vmatpush1.msra.mxu0 %v4319
        %4598 = vmatprep.subr.mxu0 0.0
        %4599 = vmatpush1.msra.mxu0 0.0
        %4600 = vmatprep.subr.mxu0 0.0
        %4601 = vmatpush1.msra.mxu0 0.0
        %4602 = vmatprep.subr.mxu0 0.0
        %4603 = vmatpush1.msra.mxu0 0.0
        %4604 = vmatprep.subr.mxu0 0.0
        %4605 = vmatpush1.msra.mxu0 0.0
        %4606 = vmatprep.subr.mxu0 0.0
        %4607 = vmatpush1.msra.mxu0 0.0
        %4608 = vmatprep.subr.mxu0 0.0
        %4609 = vmatpush1.msra.mxu0 0.0
        %4610 = vmatprep.subr.mxu0 0.0
        %4611 = vmatpush1.msra.mxu0 0.0
        %4612 = vmatprep.subr.mxu0 0.0
        %4613 = vmatpush1.msra.mxu0 0.0
        %4614 = vmatprep.subr.mxu0 0.0
        %4615 = vmatpush1.msra.mxu0 0.0
        %4616 = vmatprep.subr.mxu0 0.0
        %4617 = vmatpush1.msra.mxu0 0.0
        %4618 = vmatprep.subr.mxu0 0.0
        %4619 = vmatpush1.msra.mxu0 0.0
        %4620 = vmatprep.subr.mxu0 0.0
        %4621 = vmatpush1.msra.mxu0 0.0
        %4622 = vmatprep.subr.mxu0 0.0
        %4623 = vmatpush1.msra.mxu0 0.0
        %4624 = vmatprep.subr.mxu0 0.0
        %4625 = vmatpush1.msra.mxu0 0.0
        %4626 = vmatprep.subr.mxu0 0.0
        %4627 = vmatpush1.msra.mxu0 0.0
        %4628 = vmatprep.subr.mxu0 0.0
        %4629 = vmatpush1.msra.mxu0 0.0
        %4630 = vmatprep.subr.mxu0 0.0
        %4631 = vmatpush1.msra.mxu0 0.0
        %4632 = vmatprep.subr.mxu0 0.0
        %4633 = vmatpush1.msra.mxu0 0.0
        %4634 = vmatprep.subr.mxu0 0.0
        %4635 = vmatpush1.msra.mxu0 0.0
        %4636 = vmatprep.subr.mxu0 0.0
        %4637 = vmatpush1.msra.mxu0 0.0
        %4638 = vmatprep.subr.mxu0 0.0
        %4639 = vmatpush1.msra.mxu0 0.0
        %4640 = vmatprep.subr.mxu0 0.0
        %4641 = vmatpush1.msra.mxu0 0.0
        %4642 = vmatprep.subr.mxu0 0.0
        %4643 = vmatpush1.msra.mxu0 0.0
        %4644 = vmatprep.subr.mxu0 0.0
        %4645 = vmatpush1.msra.mxu0 0.0
        %4646 = vmatprep.mubr.f32.mxu0 0.0
        %4647 = vmatmul.mubr.f32.gmra.mrb[0].mxu0 %v4559
        %v4648 = vpop.f32.mrb[0].mxu0
        %v4649 = vadd.f32 0.0, %v4648
        %v4650 = vpop.f32.mrb[0].mxu0
        %4651 = vmatprep.mubr.f32.mxu0 0.0
        %4652 = vmatmul.mubr.f32.gmra.mrb[0].mxu0 %v4562
        %v4653 = vpop.f32.mrb[0].mxu0
        %v4654 = vadd.f32 0.0, %v4653
        %v4655 = vpop.f32.mrb[0].mxu0
        %4656 = vmatprep.mubr.f32.mxu0 0.0
        %4657 = vmatmul.mubr.f32.gmra.mrb[0].mxu0 %v4565
        %v4658 = vpop.f32.mrb[0].mxu0
        %v4659 = vadd.f32 0.0, %v4658
        %v4660 = vpop.f32.mrb[0].mxu0
        %4661 = vmatprep.mubr.f32.mxu0 0.0
        %4662 = vmatmul.mubr.f32.gmra.mrb[0].mxu0 %v4568
        %v4663 = vpop.f32.mrb[0].mxu0
        %v4664 = vadd.f32 0.0, %v4663
        %v4665 = vpop.f32.mrb[0].mxu0
        %4666 = vmatprep.mubr.f32.mxu0 0.0
        %4667 = vmatmul.mubr.f32.gmra.mrb[0].mxu0 %v4571
        %v4668 = vpop.f32.mrb[0].mxu0
        %v4669 = vadd.f32 0.0, %v4668
        %v4670 = vpop.f32.mrb[0].mxu0
        %4671 = vmatprep.mubr.f32.mxu0 0.0
        %4672 = vmatmul.mubr.f32.gmra.mrb[0].mxu0 %v4574
        %v4673 = vpop.f32.mrb[0].mxu0
        %v4674 = vadd.f32 0.0, %v4673
        %v4675 = vpop.f32.mrb[0].mxu0
        %4676 = vmatprep.mubr.f32.mxu0 0.0
        %4677 = vmatmul.mubr.f32.gmra.mrb[0].mxu0 %v4577
        %v4678 = vpop.f32.mrb[0].mxu0
        %v4679 = vadd.f32 0.0, %v4678
        %v4680 = vpop.f32.mrb[0].mxu0
        %4681 = vmatprep.mubr.f32.mxu0 0.0
        %4682 = vmatmul.mubr.f32.gmra.mrb[0].mxu0 %v4580
        %v4683 = vpop.f32.mrb[0].mxu0
        %v4684 = vadd.f32 0.0, %v4683
        %v4685 = vpop.f32.mrb[0].mxu0
        %4686 = vdwg.mxu0
        %s4687 = scalar_lea.vmem %s14, 8
        %v4688 = vld [vmem:[%s4687] sm:$0xf]
        %v4690 = vsel %vm2741, %v4649, 0
        %v4693 = vsel %vm2741, %v4654, 0
        %v4696 = vsel %vm2741, %v4659, 0
        %v4699 = vsel %vm2741, %v4664, 0
        %v4702 = vsel %vm2741, %v4669, 0
        %v4705 = vsel %vm2741, %v4674, 0
        %v4708 = vsel %vm2741, %v4679, 0
        %v4711 = vsel %vm2741, %v4684, 0
        %v4714 = vsel %vm2766, %v4688, 0
        %4716 = vmatprep.subr.mxu0 0.0
        %4717 = vmatpush1.msra.mxu0 %v4714
        %4718 = vmatprep.subr.mxu0 0.0
        %4719 = vmatpush1.msra.mxu0 0.0
        %4720 = vmatprep.subr.mxu0 0.0
        %4721 = vmatpush1.msra.mxu0 0.0
        %4722 = vmatprep.subr.mxu0 0.0
        %4723 = vmatpush1.msra.mxu0 0.0
        %4724 = vmatprep.subr.mxu0 0.0
        %4725 = vmatpush1.msra.mxu0 0.0
        %4726 = vmatprep.subr.mxu0 0.0
        %4727 = vmatpush1.msra.mxu0 0.0
        %4728 = vmatprep.subr.mxu0 0.0
        %4729 = vmatpush1.msra.mxu0 0.0
        %4730 = vmatprep.subr.mxu0 0.0
        %4731 = vmatpush1.msra.mxu0 0.0
        %4732 = vmatprep.subr.mxu0 0.0
        %4733 = vmatpush1.msra.mxu0 0.0
        %4734 = vmatprep.subr.mxu0 0.0
        %4735 = vmatpush1.msra.mxu0 0.0
        %4736 = vmatprep.subr.mxu0 0.0
        %4737 = vmatpush1.msra.mxu0 0.0
        %4738 = vmatprep.subr.mxu0 0.0
        %4739 = vmatpush1.msra.mxu0 0.0
        %4740 = vmatprep.subr.mxu0 0.0
        %4741 = vmatpush1.msra.mxu0 0.0
        %4742 = vmatprep.subr.mxu0 0.0
        %4743 = vmatpush1.msra.mxu0 0.0
        %4744 = vmatprep.subr.mxu0 0.0
        %4745 = vmatpush1.msra.mxu0 0.0
        %4746 = vmatprep.subr.mxu0 0.0
        %4747 = vmatpush1.msra.mxu0 0.0
        %4748 = vmatprep.subr.mxu0 0.0
        %4749 = vmatpush1.msra.mxu0 0.0
        %4750 = vmatprep.subr.mxu0 0.0
        %4751 = vmatpush1.msra.mxu0 0.0
        %4752 = vmatprep.subr.mxu0 0.0
        %4753 = vmatpush1.msra.mxu0 0.0
        %4754 = vmatprep.subr.mxu0 0.0
        %4755 = vmatpush1.msra.mxu0 0.0
        %4756 = vmatprep.subr.mxu0 0.0
        %4757 = vmatpush1.msra.mxu0 0.0
        %4758 = vmatprep.subr.mxu0 0.0
        %4759 = vmatpush1.msra.mxu0 0.0
        %4760 = vmatprep.subr.mxu0 0.0
        %4761 = vmatpush1.msra.mxu0 0.0
        %4762 = vmatprep.subr.mxu0 0.0
        %4763 = vmatpush1.msra.mxu0 0.0
        %4764 = vmatprep.subr.mxu0 0.0
        %4765 = vmatpush1.msra.mxu0 0.0
        %4766 = vmatprep.subr.mxu0 0.0
        %4767 = vmatpush1.msra.mxu0 0.0
        %4768 = vmatprep.subr.mxu0 0.0
        %4769 = vmatpush1.msra.mxu0 0.0
        %4770 = vmatprep.subr.mxu0 0.0
        %4771 = vmatpush1.msra.mxu0 0.0
        %4772 = vmatprep.subr.mxu0 0.0
        %4773 = vmatpush1.msra.mxu0 0.0
        %4774 = vmatprep.subr.mxu0 0.0
        %4775 = vmatpush1.msra.mxu0 0.0
        %4776 = vmatprep.subr.mxu0 0.0
        %4777 = vmatpush1.msra.mxu0 0.0
        %4778 = vmatprep.subr.mxu0 0.0
        %4779 = vmatpush1.msra.mxu0 0.0
        %4780 = vmatprep.mubr.f32.mxu0 0.0
        %4781 = vmatmul.mubr.f32.gmra.mrb[0].mxu0 %v4690
        %v4782 = vpop.f32.mrb[0].mxu0
        %v4783 = vadd.f32 0.0, %v4782
        %v4784 = vpop.f32.mrb[0].mxu0
        %4785 = vmatprep.mubr.f32.mxu0 0.0
        %4786 = vmatmul.mubr.f32.gmra.mrb[0].mxu0 %v4693
        %v4787 = vpop.f32.mrb[0].mxu0
        %v4788 = vadd.f32 0.0, %v4787
        %v4789 = vpop.f32.mrb[0].mxu0
        %4790 = vmatprep.mubr.f32.mxu0 0.0
        %4791 = vmatmul.mubr.f32.gmra.mrb[0].mxu0 %v4696
        %v4792 = vpop.f32.mrb[0].mxu0
        %v4793 = vadd.f32 0.0, %v4792
        %v4794 = vpop.f32.mrb[0].mxu0
        %4795 = vmatprep.mubr.f32.mxu0 0.0
        %4796 = vmatmul.mubr.f32.gmra.mrb[0].mxu0 %v4699
        %v4797 = vpop.f32.mrb[0].mxu0
        %v4798 = vadd.f32 0.0, %v4797
        %v4799 = vpop.f32.mrb[0].mxu0
        %4800 = vmatprep.mubr.f32.mxu0 0.0
        %4801 = vmatmul.mubr.f32.gmra.mrb[0].mxu0 %v4702
        %v4802 = vpop.f32.mrb[0].mxu0
        %v4803 = vadd.f32 0.0, %v4802
        %v4804 = vpop.f32.mrb[0].mxu0
        %4805 = vmatprep.mubr.f32.mxu0 0.0
        %4806 = vmatmul.mubr.f32.gmra.mrb[0].mxu0 %v4705
        %v4807 = vpop.f32.mrb[0].mxu0
        %v4808 = vadd.f32 0.0, %v4807
        %v4809 = vpop.f32.mrb[0].mxu0
        %4810 = vmatprep.mubr.f32.mxu0 0.0
        %4811 = vmatmul.mubr.f32.gmra.mrb[0].mxu0 %v4708
        %v4812 = vpop.f32.mrb[0].mxu0
        %v4813 = vadd.f32 0.0, %v4812
        %v4814 = vpop.f32.mrb[0].mxu0
        %4815 = vmatprep.mubr.f32.mxu0 0.0
        %4816 = vmatmul.mubr.f32.gmra.mrb[0].mxu0 %v4711
        %v4817 = vpop.f32.mrb[0].mxu0
        %v4818 = vadd.f32 0.0, %v4817
        %v4819 = vpop.f32.mrb[0].mxu0
        %4820 = vdwg.mxu0
        %v4821 = vadd.f32 %v3993, %v4783
        %v4822 = vadd.f32 %v3998, %v4788
        %v4823 = vadd.f32 %v4003, %v4793
        %v4824 = vadd.f32 %v4008, %v4798
        %v4825 = vadd.f32 %v4013, %v4803
        %v4826 = vadd.f32 %v4018, %v4808
        %v4827 = vadd.f32 %v4023, %v4813
        %v4828 = vadd.f32 %v4028, %v4818
        %s4829 = scalar_lea.vmem %s9, 48
        %v4830 = vld [vmem:[%s4829] sm:$0xff]
        %v4831 = vld [vmem:[%s4829 + $0x8] sm:$0xff]
        %4832 = vmatprep.subr.mxu0 0.0
        %4833 = vmatpush1.msra.mxu0 %v4830
        %4834 = vmatprep.subr.mxu0 0.0
        %4835 = vmatpush1.msra.mxu0 %v4831
        %4836 = vmatprep.subr.mxu0 0.0
        %4837 = vmatpush1.msra.mxu0 0.0
        %4838 = vmatprep.subr.mxu0 0.0
        %4839 = vmatpush1.msra.mxu0 0.0
        %4840 = vmatprep.subr.mxu0 0.0
        %4841 = vmatpush1.msra.mxu0 0.0
        %4842 = vmatprep.subr.mxu0 0.0
        %4843 = vmatpush1.msra.mxu0 0.0
        %4844 = vmatprep.subr.mxu0 0.0
        %4845 = vmatpush1.msra.mxu0 0.0
        %4846 = vmatprep.subr.mxu0 0.0
        %4847 = vmatpush1.msra.mxu0 0.0
        %4848 = vmatprep.subr.mxu0 0.0
        %4849 = vmatpush1.msra.mxu0 0.0
        %4850 = vmatprep.subr.mxu0 0.0
        %4851 = vmatpush1.msra.mxu0 0.0
        %4852 = vmatprep.subr.mxu0 0.0
        %4853 = vmatpush1.msra.mxu0 0.0
        %4854 = vmatprep.subr.mxu0 0.0
        %4855 = vmatpush1.msra.mxu0 0.0
        %4856 = vmatprep.subr.mxu0 0.0
        %4857 = vmatpush1.msra.mxu0 0.0
        %4858 = vmatprep.subr.mxu0 0.0
        %4859 = vmatpush1.msra.mxu0 0.0
        %4860 = vmatprep.subr.mxu0 0.0
        %4861 = vmatpush1.msra.mxu0 0.0
        %4862 = vmatprep.subr.mxu0 0.0
        %4863 = vmatpush1.msra.mxu0 0.0
        %4864 = vmatprep.subr.mxu0 0.0
        %4865 = vmatpush1.msra.mxu0 0.0
        %4866 = vmatprep.subr.mxu0 0.0
        %4867 = vmatpush1.msra.mxu0 0.0
        %4868 = vmatprep.subr.mxu0 0.0
        %4869 = vmatpush1.msra.mxu0 0.0
        %4870 = vmatprep.subr.mxu0 0.0
        %4871 = vmatpush1.msra.mxu0 0.0
        %4872 = vmatprep.subr.mxu0 0.0
        %4873 = vmatpush1.msra.mxu0 0.0
        %4874 = vmatprep.subr.mxu0 0.0
        %4875 = vmatpush1.msra.mxu0 0.0
        %4876 = vmatprep.subr.mxu0 0.0
        %4877 = vmatpush1.msra.mxu0 0.0
        %4878 = vmatprep.subr.mxu0 0.0
        %4879 = vmatpush1.msra.mxu0 0.0
        %4880 = vmatprep.subr.mxu0 0.0
        %4881 = vmatpush1.msra.mxu0 0.0
        %4882 = vmatprep.subr.mxu0 0.0
        %4883 = vmatpush1.msra.mxu0 0.0
        %4884 = vmatprep.subr.mxu0 0.0
        %4885 = vmatpush1.msra.mxu0 0.0
        %4886 = vmatprep.subr.mxu0 0.0
        %4887 = vmatpush1.msra.mxu0 0.0
        %4888 = vmatprep.subr.mxu0 0.0
        %4889 = vmatpush1.msra.mxu0 0.0
        %4890 = vmatprep.subr.mxu0 0.0
        %4891 = vmatpush1.msra.mxu0 0.0
        %4892 = vmatprep.subr.mxu0 0.0
        %4893 = vmatpush1.msra.mxu0 0.0
        %4894 = vmatprep.subr.mxu0 0.0
        %4895 = vmatpush1.msra.mxu0 0.0
        %4896 = vmatprep.mubr.f32.mxu0 0.0
        %4897 = vmatmul.mubr.f32.gmra.mrb[0].mxu0 %v2408
        %v4898 = vpop.f32.mrb[0].mxu0
        %v4899 = vadd.f32 0.0, %v4898
        %v4900 = vpop.f32.mrb[0].mxu0
        %4901 = vmatprep.mubr.f32.mxu0 0.0
        %4902 = vmatmul.mubr.f32.gmra.mrb[0].mxu0 %v2411
        %v4903 = vpop.f32.mrb[0].mxu0
        %v4904 = vadd.f32 0.0, %v4903
        %v4905 = vpop.f32.mrb[0].mxu0
        %4906 = vmatprep.mubr.f32.mxu0 0.0
        %4907 = vmatmul.mubr.f32.gmra.mrb[0].mxu0 %v2414
        %v4908 = vpop.f32.mrb[0].mxu0
        %v4909 = vadd.f32 0.0, %v4908
        %v4910 = vpop.f32.mrb[0].mxu0
        %4911 = vmatprep.mubr.f32.mxu0 0.0
        %4912 = vmatmul.mubr.f32.gmra.mrb[0].mxu0 %v2417
        %v4913 = vpop.f32.mrb[0].mxu0
        %v4914 = vadd.f32 0.0, %v4913
        %v4915 = vpop.f32.mrb[0].mxu0
        %4916 = vmatprep.mubr.f32.mxu0 0.0
        %4917 = vmatmul.mubr.f32.gmra.mrb[0].mxu0 %v2420
        %v4918 = vpop.f32.mrb[0].mxu0
        %v4919 = vadd.f32 0.0, %v4918
        %v4920 = vpop.f32.mrb[0].mxu0
        %4921 = vmatprep.mubr.f32.mxu0 0.0
        %4922 = vmatmul.mubr.f32.gmra.mrb[0].mxu0 %v2423
        %v4923 = vpop.f32.mrb[0].mxu0
        %v4924 = vadd.f32 0.0, %v4923
        %v4925 = vpop.f32.mrb[0].mxu0
        %4926 = vmatprep.mubr.f32.mxu0 0.0
        %4927 = vmatmul.mubr.f32.gmra.mrb[0].mxu0 %v2426
        %v4928 = vpop.f32.mrb[0].mxu0
        %v4929 = vadd.f32 0.0, %v4928
        %v4930 = vpop.f32.mrb[0].mxu0
        %4931 = vmatprep.mubr.f32.mxu0 0.0
        %4932 = vmatmul.mubr.f32.gmra.mrb[0].mxu0 %v2429
        %v4933 = vpop.f32.mrb[0].mxu0
        %v4934 = vadd.f32 0.0, %v4933
        %v4935 = vpop.f32.mrb[0].mxu0
        %4936 = vdwg.mxu0
        %s4937 = scalar_lea.vmem %s10, 12
        %v4938 = vld [vmem:[%s4937] sm:$0xf]
        %v4940 = vsel %vm830, %v4938, 0
        %4942 = vmatprep.subr.mxu0 0.0
        %4943 = vmatpush1.msra.mxu0 %v2260
        %4944 = vmatprep.subr.mxu0 0.0
        %4945 = vmatpush1.msra.mxu0 %v2265
        %4946 = vmatprep.subr.mxu0 0.0
        %4947 = vmatpush1.msra.mxu0 0.0
        %4948 = vmatprep.subr.mxu0 0.0
        %4949 = vmatpush1.msra.mxu0 0.0
        %4950 = vmatprep.subr.mxu0 0.0
        %4951 = vmatpush1.msra.mxu0 0.0
        %4952 = vmatprep.subr.mxu0 0.0
        %4953 = vmatpush1.msra.mxu0 0.0
        %4954 = vmatprep.subr.mxu0 0.0
        %4955 = vmatpush1.msra.mxu0 0.0
        %4956 = vmatprep.subr.mxu0 0.0
        %4957 = vmatpush1.msra.mxu0 0.0
        %4958 = vmatprep.subr.mxu0 0.0
        %4959 = vmatpush1.msra.mxu0 0.0
        %4960 = vmatprep.subr.mxu0 0.0
        %4961 = vmatpush1.msra.mxu0 0.0
        %4962 = vmatprep.subr.mxu0 0.0
        %4963 = vmatpush1.msra.mxu0 0.0
        %4964 = vmatprep.subr.mxu0 0.0
        %4965 = vmatpush1.msra.mxu0 0.0
        %4966 = vmatprep.subr.mxu0 0.0
        %4967 = vmatpush1.msra.mxu0 0.0
        %4968 = vmatprep.subr.mxu0 0.0
        %4969 = vmatpush1.msra.mxu0 0.0
        %4970 = vmatprep.subr.mxu0 0.0
        %4971 = vmatpush1.msra.mxu0 0.0
        %4972 = vmatprep.subr.mxu0 0.0
        %4973 = vmatpush1.msra.mxu0 0.0
        %4974 = vmatprep.subr.mxu0 0.0
        %4975 = vmatpush1.msra.mxu0 0.0
        %4976 = vmatprep.subr.mxu0 0.0
        %4977 = vmatpush1.msra.mxu0 0.0
        %4978 = vmatprep.subr.mxu0 0.0
        %4979 = vmatpush1.msra.mxu0 0.0
        %4980 = vmatprep.subr.mxu0 0.0
        %4981 = vmatpush1.msra.mxu0 0.0
        %4982 = vmatprep.subr.mxu0 0.0
        %4983 = vmatpush1.msra.mxu0 0.0
        %4984 = vmatprep.subr.mxu0 0.0
        %4985 = vmatpush1.msra.mxu0 0.0
        %4986 = vmatprep.subr.mxu0 0.0
        %4987 = vmatpush1.msra.mxu0 0.0
        %4988 = vmatprep.subr.mxu0 0.0
        %4989 = vmatpush1.msra.mxu0 0.0
        %4990 = vmatprep.subr.mxu0 0.0
        %4991 = vmatpush1.msra.mxu0 0.0
        %4992 = vmatprep.subr.mxu0 0.0
        %4993 = vmatpush1.msra.mxu0 0.0
        %4994 = vmatprep.subr.mxu0 0.0
        %4995 = vmatpush1.msra.mxu0 0.0
        %4996 = vmatprep.subr.mxu0 0.0
        %4997 = vmatpush1.msra.mxu0 0.0
        %4998 = vmatprep.subr.mxu0 0.0
        %4999 = vmatpush1.msra.mxu0 0.0
        %5000 = vmatprep.subr.mxu0 0.0
        %5001 = vmatpush1.msra.mxu0 0.0
        %5002 = vmatprep.subr.mxu0 0.0
        %5003 = vmatpush1.msra.mxu0 0.0
        %5004 = vmatprep.subr.mxu0 0.0
        %5005 = vmatpush1.msra.mxu0 0.0
        %5006 = vmatprep.mubr.f32.mxu0 0.0
        %5007 = vmatmul.mubr.f32.gmra.mrb[0].mxu0 %v4940
        %v5008 = vpop.f32.mrb[0].mxu0
        %v5009 = vadd.f32 0.0, %v5008
        %v5010 = vpop.f32.mrb[0].mxu0
        %5011 = vdwg.mxu0
        %s5012 = scalar_lea.vmem %s11, 48
        %v5013 = vld [vmem:[%s5012] sm:$0xff]
        %v5014 = vld [vmem:[%s5012 + $0x8] sm:$0xff]
        %5015 = vmatprep.subr.mxu0 0.0
        %5016 = vmatpush1.msra.mxu0 %v5013
        %5017 = vmatprep.subr.mxu0 0.0
        %5018 = vmatpush1.msra.mxu0 %v5014
        %5019 = vmatprep.subr.mxu0 0.0
        %5020 = vmatpush1.msra.mxu0 0.0
        %5021 = vmatprep.subr.mxu0 0.0
        %5022 = vmatpush1.msra.mxu0 0.0
        %5023 = vmatprep.subr.mxu0 0.0
        %5024 = vmatpush1.msra.mxu0 0.0
        %5025 = vmatprep.subr.mxu0 0.0
        %5026 = vmatpush1.msra.mxu0 0.0
        %5027 = vmatprep.subr.mxu0 0.0
        %5028 = vmatpush1.msra.mxu0 0.0
        %5029 = vmatprep.subr.mxu0 0.0
        %5030 = vmatpush1.msra.mxu0 0.0
        %5031 = vmatprep.subr.mxu0 0.0
        %5032 = vmatpush1.msra.mxu0 0.0
        %5033 = vmatprep.subr.mxu0 0.0
        %5034 = vmatpush1.msra.mxu0 0.0
        %5035 = vmatprep.subr.mxu0 0.0
        %5036 = vmatpush1.msra.mxu0 0.0
        %5037 = vmatprep.subr.mxu0 0.0
        %5038 = vmatpush1.msra.mxu0 0.0
        %5039 = vmatprep.subr.mxu0 0.0
        %5040 = vmatpush1.msra.mxu0 0.0
        %5041 = vmatprep.subr.mxu0 0.0
        %5042 = vmatpush1.msra.mxu0 0.0
        %5043 = vmatprep.subr.mxu0 0.0
        %5044 = vmatpush1.msra.mxu0 0.0
        %5045 = vmatprep.subr.mxu0 0.0
        %5046 = vmatpush1.msra.mxu0 0.0
        %5047 = vmatprep.subr.mxu0 0.0
        %5048 = vmatpush1.msra.mxu0 0.0
        %5049 = vmatprep.subr.mxu0 0.0
        %5050 = vmatpush1.msra.mxu0 0.0
        %5051 = vmatprep.subr.mxu0 0.0
        %5052 = vmatpush1.msra.mxu0 0.0
        %5053 = vmatprep.subr.mxu0 0.0
        %5054 = vmatpush1.msra.mxu0 0.0
        %5055 = vmatprep.subr.mxu0 0.0
        %5056 = vmatpush1.msra.mxu0 0.0
        %5057 = vmatprep.subr.mxu0 0.0
        %5058 = vmatpush1.msra.mxu0 0.0
        %5059 = vmatprep.subr.mxu0 0.0
        %5060 = vmatpush1.msra.mxu0 0.0
        %5061 = vmatprep.subr.mxu0 0.0
        %5062 = vmatpush1.msra.mxu0 0.0
        %5063 = vmatprep.subr.mxu0 0.0
        %5064 = vmatpush1.msra.mxu0 0.0
        %5065 = vmatprep.subr.mxu0 0.0
        %5066 = vmatpush1.msra.mxu0 0.0
        %5067 = vmatprep.subr.mxu0 0.0
        %5068 = vmatpush1.msra.mxu0 0.0
        %5069 = vmatprep.subr.mxu0 0.0
        %5070 = vmatpush1.msra.mxu0 0.0
        %5071 = vmatprep.subr.mxu0 0.0
        %5072 = vmatpush1.msra.mxu0 0.0
        %5073 = vmatprep.subr.mxu0 0.0
        %5074 = vmatpush1.msra.mxu0 0.0
        %5075 = vmatprep.subr.mxu0 0.0
        %5076 = vmatpush1.msra.mxu0 0.0
        %5077 = vmatprep.subr.mxu0 0.0
        %5078 = vmatpush1.msra.mxu0 0.0
        %5079 = vmatprep.mubr.f32.mxu0 0.0
        %5080 = vmatmul.mubr.f32.gmra.mrb[0].mxu0 %v2613
        %v5081 = vpop.f32.mrb[0].mxu0
        %v5082 = vadd.f32 0.0, %v5081
        %v5083 = vpop.f32.mrb[0].mxu0
        %5084 = vmatprep.mubr.f32.mxu0 0.0
        %5085 = vmatmul.mubr.f32.gmra.mrb[0].mxu0 %v2616
        %v5086 = vpop.f32.mrb[0].mxu0
        %v5087 = vadd.f32 0.0, %v5086
        %v5088 = vpop.f32.mrb[0].mxu0
        %5089 = vmatprep.mubr.f32.mxu0 0.0
        %5090 = vmatmul.mubr.f32.gmra.mrb[0].mxu0 %v2619
        %v5091 = vpop.f32.mrb[0].mxu0
        %v5092 = vadd.f32 0.0, %v5091
        %v5093 = vpop.f32.mrb[0].mxu0
        %5094 = vmatprep.mubr.f32.mxu0 0.0
        %5095 = vmatmul.mubr.f32.gmra.mrb[0].mxu0 %v2622
        %v5096 = vpop.f32.mrb[0].mxu0
        %v5097 = vadd.f32 0.0, %v5096
        %v5098 = vpop.f32.mrb[0].mxu0
        %5099 = vmatprep.mubr.f32.mxu0 0.0
        %5100 = vmatmul.mubr.f32.gmra.mrb[0].mxu0 %v2625
        %v5101 = vpop.f32.mrb[0].mxu0
        %v5102 = vadd.f32 0.0, %v5101
        %v5103 = vpop.f32.mrb[0].mxu0
        %5104 = vmatprep.mubr.f32.mxu0 0.0
        %5105 = vmatmul.mubr.f32.gmra.mrb[0].mxu0 %v2628
        %v5106 = vpop.f32.mrb[0].mxu0
        %v5107 = vadd.f32 0.0, %v5106
        %v5108 = vpop.f32.mrb[0].mxu0
        %5109 = vmatprep.mubr.f32.mxu0 0.0
        %5110 = vmatmul.mubr.f32.gmra.mrb[0].mxu0 %v2631
        %v5111 = vpop.f32.mrb[0].mxu0
        %v5112 = vadd.f32 0.0, %v5111
        %v5113 = vpop.f32.mrb[0].mxu0
        %5114 = vmatprep.mubr.f32.mxu0 0.0
        %5115 = vmatmul.mubr.f32.gmra.mrb[0].mxu0 %v2634
        %v5116 = vpop.f32.mrb[0].mxu0
        %v5117 = vadd.f32 0.0, %v5116
        %v5118 = vpop.f32.mrb[0].mxu0
        %5119 = vdwg.mxu0
        %v5121 = vsel %vm2741, %v4899, 0
        %v5124 = vsel %vm2741, %v4904, 0
        %v5127 = vsel %vm2741, %v4909, 0
        %v5130 = vsel %vm2741, %v4914, 0
        %v5133 = vsel %vm2741, %v4919, 0
        %v5136 = vsel %vm2741, %v4924, 0
        %v5139 = vsel %vm2741, %v4929, 0
        %v5142 = vsel %vm2741, %v4934, 0
        %v5145 = vsel %vm2766, %v5009, 0
        %5147 = vmatprep.subr.mxu0 0.0
        %5148 = vmatpush1.msra.mxu0 %v5145
        %5149 = vmatprep.subr.mxu0 0.0
        %5150 = vmatpush1.msra.mxu0 0.0
        %5151 = vmatprep.subr.mxu0 0.0
        %5152 = vmatpush1.msra.mxu0 0.0
        %5153 = vmatprep.subr.mxu0 0.0
        %5154 = vmatpush1.msra.mxu0 0.0
        %5155 = vmatprep.subr.mxu0 0.0
        %5156 = vmatpush1.msra.mxu0 0.0
        %5157 = vmatprep.subr.mxu0 0.0
        %5158 = vmatpush1.msra.mxu0 0.0
        %5159 = vmatprep.subr.mxu0 0.0
        %5160 = vmatpush1.msra.mxu0 0.0
        %5161 = vmatprep.subr.mxu0 0.0
        %5162 = vmatpush1.msra.mxu0 0.0
        %5163 = vmatprep.subr.mxu0 0.0
        %5164 = vmatpush1.msra.mxu0 0.0
        %5165 = vmatprep.subr.mxu0 0.0
        %5166 = vmatpush1.msra.mxu0 0.0
        %5167 = vmatprep.subr.mxu0 0.0
        %5168 = vmatpush1.msra.mxu0 0.0
        %5169 = vmatprep.subr.mxu0 0.0
        %5170 = vmatpush1.msra.mxu0 0.0
        %5171 = vmatprep.subr.mxu0 0.0
        %5172 = vmatpush1.msra.mxu0 0.0
        %5173 = vmatprep.subr.mxu0 0.0
        %5174 = vmatpush1.msra.mxu0 0.0
        %5175 = vmatprep.subr.mxu0 0.0
        %5176 = vmatpush1.msra.mxu0 0.0
        %5177 = vmatprep.subr.mxu0 0.0
        %5178 = vmatpush1.msra.mxu0 0.0
        %5179 = vmatprep.subr.mxu0 0.0
        %5180 = vmatpush1.msra.mxu0 0.0
        %5181 = vmatprep.subr.mxu0 0.0
        %5182 = vmatpush1.msra.mxu0 0.0
        %5183 = vmatprep.subr.mxu0 0.0
        %5184 = vmatpush1.msra.mxu0 0.0
        %5185 = vmatprep.subr.mxu0 0.0
        %5186 = vmatpush1.msra.mxu0 0.0
        %5187 = vmatprep.subr.mxu0 0.0
        %5188 = vmatpush1.msra.mxu0 0.0
        %5189 = vmatprep.subr.mxu0 0.0
        %5190 = vmatpush1.msra.mxu0 0.0
        %5191 = vmatprep.subr.mxu0 0.0
        %5192 = vmatpush1.msra.mxu0 0.0
        %5193 = vmatprep.subr.mxu0 0.0
        %5194 = vmatpush1.msra.mxu0 0.0
        %5195 = vmatprep.subr.mxu0 0.0
        %5196 = vmatpush1.msra.mxu0 0.0
        %5197 = vmatprep.subr.mxu0 0.0
        %5198 = vmatpush1.msra.mxu0 0.0
        %5199 = vmatprep.subr.mxu0 0.0
        %5200 = vmatpush1.msra.mxu0 0.0
        %5201 = vmatprep.subr.mxu0 0.0
        %5202 = vmatpush1.msra.mxu0 0.0
        %5203 = vmatprep.subr.mxu0 0.0
        %5204 = vmatpush1.msra.mxu0 0.0
        %5205 = vmatprep.subr.mxu0 0.0
        %5206 = vmatpush1.msra.mxu0 0.0
        %5207 = vmatprep.subr.mxu0 0.0
        %5208 = vmatpush1.msra.mxu0 0.0
        %5209 = vmatprep.subr.mxu0 0.0
        %5210 = vmatpush1.msra.mxu0 0.0
        %5211 = vmatprep.mubr.f32.mxu0 0.0
        %5212 = vmatmul.mubr.f32.gmra.mrb[0].mxu0 %v5121
        %v5213 = vpop.f32.mrb[0].mxu0
        %v5214 = vadd.f32 0.0, %v5213
        %v5215 = vpop.f32.mrb[0].mxu0
        %5216 = vmatprep.mubr.f32.mxu0 0.0
        %5217 = vmatmul.mubr.f32.gmra.mrb[0].mxu0 %v5124
        %v5218 = vpop.f32.mrb[0].mxu0
        %v5219 = vadd.f32 0.0, %v5218
        %v5220 = vpop.f32.mrb[0].mxu0
        %5221 = vmatprep.mubr.f32.mxu0 0.0
        %5222 = vmatmul.mubr.f32.gmra.mrb[0].mxu0 %v5127
        %v5223 = vpop.f32.mrb[0].mxu0
        %v5224 = vadd.f32 0.0, %v5223
        %v5225 = vpop.f32.mrb[0].mxu0
        %5226 = vmatprep.mubr.f32.mxu0 0.0
        %5227 = vmatmul.mubr.f32.gmra.mrb[0].mxu0 %v5130
        %v5228 = vpop.f32.mrb[0].mxu0
        %v5229 = vadd.f32 0.0, %v5228
        %v5230 = vpop.f32.mrb[0].mxu0
        %5231 = vmatprep.mubr.f32.mxu0 0.0
        %5232 = vmatmul.mubr.f32.gmra.mrb[0].mxu0 %v5133
        %v5233 = vpop.f32.mrb[0].mxu0
        %v5234 = vadd.f32 0.0, %v5233
        %v5235 = vpop.f32.mrb[0].mxu0
        %5236 = vmatprep.mubr.f32.mxu0 0.0
        %5237 = vmatmul.mubr.f32.gmra.mrb[0].mxu0 %v5136
        %v5238 = vpop.f32.mrb[0].mxu0
        %v5239 = vadd.f32 0.0, %v5238
        %v5240 = vpop.f32.mrb[0].mxu0
        %5241 = vmatprep.mubr.f32.mxu0 0.0
        %5242 = vmatmul.mubr.f32.gmra.mrb[0].mxu0 %v5139
        %v5243 = vpop.f32.mrb[0].mxu0
        %v5244 = vadd.f32 0.0, %v5243
        %v5245 = vpop.f32.mrb[0].mxu0
        %5246 = vmatprep.mubr.f32.mxu0 0.0
        %5247 = vmatmul.mubr.f32.gmra.mrb[0].mxu0 %v5142
        %v5248 = vpop.f32.mrb[0].mxu0
        %v5249 = vadd.f32 0.0, %v5248
        %v5250 = vpop.f32.mrb[0].mxu0
        %5251 = vdwg.mxu0
        %v5252 = vmul.f32 %v5214, 0.5
        %v5253 = vmul.f32 %v5219, 0.5
        %v5254 = vmul.f32 %v5224, 0.5
        %v5255 = vmul.f32 %v5229, 0.5
        %v5256 = vmul.f32 %v5234, 0.5
        %v5257 = vmul.f32 %v5239, 0.5
        %v5258 = vmul.f32 %v5244, 0.5
        %v5259 = vmul.f32 %v5249, 0.5
        %v5260 = vadd.f32 %v5252, %v2139
        %v5261 = vadd.f32 %v5253, %v2140
        %v5262 = vadd.f32 %v5254, %v2141
        %v5263 = vadd.f32 %v5255, %v2142
        %v5264 = vadd.f32 %v5256, %v2143
        %v5265 = vadd.f32 %v5257, %v2144
        %v5266 = vadd.f32 %v5258, %v2145
        %v5267 = vadd.f32 %v5259, %v2146
        %v5268 = vsel %vm920, %v5260, -inf
        %5269 = vmax.xlane.f32.xlu0 %v5268
        %v5270 = vpop.xlane.xlu0 %5269
        %v5271 = vsel %vm920, %v5261, -inf
        %5272 = vmax.xlane.f32.xlu0 %v5271
        %v5273 = vpop.xlane.xlu0 %5272
        %v5274 = vsel %vm920, %v5262, -inf
        %5275 = vmax.xlane.f32.xlu0 %v5274
        %v5276 = vpop.xlane.xlu0 %5275
        %v5277 = vsel %vm920, %v5263, -inf
        %5278 = vmax.xlane.f32.xlu0 %v5277
        %v5279 = vpop.xlane.xlu0 %5278
        %v5280 = vsel %vm920, %v5264, -inf
        %5281 = vmax.xlane.f32.xlu0 %v5280
        %v5282 = vpop.xlane.xlu0 %5281
        %v5283 = vsel %vm920, %v5265, -inf
        %5284 = vmax.xlane.f32.xlu0 %v5283
        %v5285 = vpop.xlane.xlu0 %5284
        %v5286 = vsel %vm920, %v5266, -inf
        %5287 = vmax.xlane.f32.xlu0 %v5286
        %v5288 = vpop.xlane.xlu0 %5287
        %v5289 = vsel %vm920, %v5267, -inf
        %5290 = vmax.xlane.f32.xlu0 %v5289
        %v5291 = vpop.xlane.xlu0 %5290
        %v5292 = vsub.f32 %v5260, %v5270
        %v5293 = vsub.f32 %v5261, %v5273
        %v5294 = vsub.f32 %v5262, %v5276
        %v5295 = vsub.f32 %v5263, %v5279
        %v5296 = vsub.f32 %v5264, %v5282
        %v5297 = vsub.f32 %v5265, %v5285
        %v5298 = vsub.f32 %v5266, %v5288
        %v5299 = vsub.f32 %v5267, %v5291
        %v5300 = vmul.f32 %v5292, 1.442695
        %v5301 = vpow.pop %v5300
        %v5302 = vmul.f32 %v5293, 1.442695
        %v5303 = vpow.pop %v5302
        %v5304 = vmul.f32 %v5294, 1.442695
        %v5305 = vpow.pop %v5304
        %v5306 = vmul.f32 %v5295, 1.442695
        %v5307 = vpow.pop %v5306
        %v5308 = vmul.f32 %v5296, 1.442695
        %v5309 = vpow.pop %v5308
        %v5310 = vmul.f32 %v5297, 1.442695
        %v5311 = vpow.pop %v5310
        %v5312 = vmul.f32 %v5298, 1.442695
        %v5313 = vpow.pop %v5312
        %v5314 = vmul.f32 %v5299, 1.442695
        %v5315 = vpow.pop %v5314
        %v5316 = vsel %vm920, %v5301, 0.0
        %5317 = vadd.xlane.f32.xlu0 %v5316
        %v5318 = vpop.xlane.xlu0 %5317
        %v5319 = vsel %vm920, %v5303, 0.0
        %5320 = vadd.xlane.f32.xlu0 %v5319
        %v5321 = vpop.xlane.xlu0 %5320
        %v5322 = vsel %vm920, %v5305, 0.0
        %5323 = vadd.xlane.f32.xlu0 %v5322
        %v5324 = vpop.xlane.xlu0 %5323
        %v5325 = vsel %vm920, %v5307, 0.0
        %5326 = vadd.xlane.f32.xlu0 %v5325
        %v5327 = vpop.xlane.xlu0 %5326
        %v5328 = vsel %vm920, %v5309, 0.0
        %5329 = vadd.xlane.f32.xlu0 %v5328
        %v5330 = vpop.xlane.xlu0 %5329
        %v5331 = vsel %vm920, %v5311, 0.0
        %5332 = vadd.xlane.f32.xlu0 %v5331
        %v5333 = vpop.xlane.xlu0 %5332
        %v5334 = vsel %vm920, %v5313, 0.0
        %5335 = vadd.xlane.f32.xlu0 %v5334
        %v5336 = vpop.xlane.xlu0 %5335
        %v5337 = vsel %vm920, %v5315, 0.0
        %5338 = vadd.xlane.f32.xlu0 %v5337
        %v5339 = vpop.xlane.xlu0 %5338
        %v5340 = vrcp.pop %v5318
        %v5341 = vmul.f32 %v5301, %v5340
        %v5342 = vrcp.pop %v5321
        %v5343 = vmul.f32 %v5303, %v5342
        %v5344 = vrcp.pop %v5324
        %v5345 = vmul.f32 %v5305, %v5344
        %v5346 = vrcp.pop %v5327
        %v5347 = vmul.f32 %v5307, %v5346
        %v5348 = vrcp.pop %v5330
        %v5349 = vmul.f32 %v5309, %v5348
        %v5350 = vrcp.pop %v5333
        %v5351 = vmul.f32 %v5311, %v5350
        %v5352 = vrcp.pop %v5336
        %v5353 = vmul.f32 %v5313, %v5352
        %v5354 = vrcp.pop %v5339
        %v5355 = vmul.f32 %v5315, %v5354
        %v5357 = vsel %vm920, %v5341, 0
        %v5360 = vsel %vm920, %v5343, 0
        %v5363 = vsel %vm920, %v5345, 0
        %v5366 = vsel %vm920, %v5347, 0
        %v5369 = vsel %vm920, %v5349, 0
        %v5372 = vsel %vm920, %v5351, 0
        %v5375 = vsel %vm920, %v5353, 0
        %v5378 = vsel %vm920, %v5355, 0
        %5380 = vmatprep.subr.mxu0 0.0
        %5381 = vmatpush1.msra.mxu0 %v5082
        %5382 = vmatprep.subr.mxu0 0.0
        %5383 = vmatpush1.msra.mxu0 %v5087
        %5384 = vmatprep.subr.mxu0 0.0
        %5385 = vmatpush1.msra.mxu0 %v5092
        %5386 = vmatprep.subr.mxu0 0.0
        %5387 = vmatpush1.msra.mxu0 %v5097
        %5388 = vmatprep.subr.mxu0 0.0
        %5389 = vmatpush1.msra.mxu0 %v5102
        %5390 = vmatprep.subr.mxu0 0.0
        %5391 = vmatpush1.msra.mxu0 %v5107
        %5392 = vmatprep.subr.mxu0 0.0
        %5393 = vmatpush1.msra.mxu0 %v5112
        %5394 = vmatprep.subr.mxu0 0.0
        %5395 = vmatpush1.msra.mxu0 %v5117
        %5396 = vmatprep.subr.mxu0 0.0
        %5397 = vmatpush1.msra.mxu0 0.0
        %5398 = vmatprep.subr.mxu0 0.0
        %5399 = vmatpush1.msra.mxu0 0.0
        %5400 = vmatprep.subr.mxu0 0.0
        %5401 = vmatpush1.msra.mxu0 0.0
        %5402 = vmatprep.subr.mxu0 0.0
        %5403 = vmatpush1.msra.mxu0 0.0
        %5404 = vmatprep.subr.mxu0 0.0
        %5405 = vmatpush1.msra.mxu0 0.0
        %5406 = vmatprep.subr.mxu0 0.0
        %5407 = vmatpush1.msra.mxu0 0.0
        %5408 = vmatprep.subr.mxu0 0.0
        %5409 = vmatpush1.msra.mxu0 0.0
        %5410 = vmatprep.subr.mxu0 0.0
        %5411 = vmatpush1.msra.mxu0 0.0
        %5412 = vmatprep.subr.mxu0 0.0
        %5413 = vmatpush1.msra.mxu0 0.0
        %5414 = vmatprep.subr.mxu0 0.0
        %5415 = vmatpush1.msra.mxu0 0.0
        %5416 = vmatprep.subr.mxu0 0.0
        %5417 = vmatpush1.msra.mxu0 0.0
        %5418 = vmatprep.subr.mxu0 0.0
        %5419 = vmatpush1.msra.mxu0 0.0
        %5420 = vmatprep.subr.mxu0 0.0
        %5421 = vmatpush1.msra.mxu0 0.0
        %5422 = vmatprep.subr.mxu0 0.0
        %5423 = vmatpush1.msra.mxu0 0.0
        %5424 = vmatprep.subr.mxu0 0.0
        %5425 = vmatpush1.msra.mxu0 0.0
        %5426 = vmatprep.subr.mxu0 0.0
        %5427 = vmatpush1.msra.mxu0 0.0
        %5428 = vmatprep.subr.mxu0 0.0
        %5429 = vmatpush1.msra.mxu0 0.0
        %5430 = vmatprep.subr.mxu0 0.0
        %5431 = vmatpush1.msra.mxu0 0.0
        %5432 = vmatprep.subr.mxu0 0.0
        %5433 = vmatpush1.msra.mxu0 0.0
        %5434 = vmatprep.subr.mxu0 0.0
        %5435 = vmatpush1.msra.mxu0 0.0
        %5436 = vmatprep.subr.mxu0 0.0
        %5437 = vmatpush1.msra.mxu0 0.0
        %5438 = vmatprep.subr.mxu0 0.0
        %5439 = vmatpush1.msra.mxu0 0.0
        %5440 = vmatprep.subr.mxu0 0.0
        %5441 = vmatpush1.msra.mxu0 0.0
        %5442 = vmatprep.subr.mxu0 0.0
        %5443 = vmatpush1.msra.mxu0 0.0
        %5444 = vmatprep.mubr.f32.mxu0 0.0
        %5445 = vmatmul.mubr.f32.gmra.mrb[0].mxu0 %v5357
        %v5446 = vpop.f32.mrb[0].mxu0
        %v5447 = vadd.f32 0.0, %v5446
        %v5448 = vpop.f32.mrb[0].mxu0
        %5449 = vmatprep.mubr.f32.mxu0 0.0
        %5450 = vmatmul.mubr.f32.gmra.mrb[0].mxu0 %v5360
        %v5451 = vpop.f32.mrb[0].mxu0
        %v5452 = vadd.f32 0.0, %v5451
        %v5453 = vpop.f32.mrb[0].mxu0
        %5454 = vmatprep.mubr.f32.mxu0 0.0
        %5455 = vmatmul.mubr.f32.gmra.mrb[0].mxu0 %v5363
        %v5456 = vpop.f32.mrb[0].mxu0
        %v5457 = vadd.f32 0.0, %v5456
        %v5458 = vpop.f32.mrb[0].mxu0
        %5459 = vmatprep.mubr.f32.mxu0 0.0
        %5460 = vmatmul.mubr.f32.gmra.mrb[0].mxu0 %v5366
        %v5461 = vpop.f32.mrb[0].mxu0
        %v5462 = vadd.f32 0.0, %v5461
        %v5463 = vpop.f32.mrb[0].mxu0
        %5464 = vmatprep.mubr.f32.mxu0 0.0
        %5465 = vmatmul.mubr.f32.gmra.mrb[0].mxu0 %v5369
        %v5466 = vpop.f32.mrb[0].mxu0
        %v5467 = vadd.f32 0.0, %v5466
        %v5468 = vpop.f32.mrb[0].mxu0
        %5469 = vmatprep.mubr.f32.mxu0 0.0
        %5470 = vmatmul.mubr.f32.gmra.mrb[0].mxu0 %v5372
        %v5471 = vpop.f32.mrb[0].mxu0
        %v5472 = vadd.f32 0.0, %v5471
        %v5473 = vpop.f32.mrb[0].mxu0
        %5474 = vmatprep.mubr.f32.mxu0 0.0
        %5475 = vmatmul.mubr.f32.gmra.mrb[0].mxu0 %v5375
        %v5476 = vpop.f32.mrb[0].mxu0
        %v5477 = vadd.f32 0.0, %v5476
        %v5478 = vpop.f32.mrb[0].mxu0
        %5479 = vmatprep.mubr.f32.mxu0 0.0
        %5480 = vmatmul.mubr.f32.gmra.mrb[0].mxu0 %v5378
        %v5481 = vpop.f32.mrb[0].mxu0
        %v5482 = vadd.f32 0.0, %v5481
        %v5483 = vpop.f32.mrb[0].mxu0
        %5484 = vdwg.mxu0
        %s5485 = scalar_lea.vmem %s14, 12
        %v5486 = vld [vmem:[%s5485] sm:$0xf]
        %v5488 = vsel %vm2741, %v5447, 0
        %v5491 = vsel %vm2741, %v5452, 0
        %v5494 = vsel %vm2741, %v5457, 0
        %v5497 = vsel %vm2741, %v5462, 0
        %v5500 = vsel %vm2741, %v5467, 0
        %v5503 = vsel %vm2741, %v5472, 0
        %v5506 = vsel %vm2741, %v5477, 0
        %v5509 = vsel %vm2741, %v5482, 0
        %v5512 = vsel %vm2766, %v5486, 0
        %5514 = vmatprep.subr.mxu0 0.0
        %5515 = vmatpush1.msra.mxu0 %v5512
        %5516 = vmatprep.subr.mxu0 0.0
        %5517 = vmatpush1.msra.mxu0 0.0
        %5518 = vmatprep.subr.mxu0 0.0
        %5519 = vmatpush1.msra.mxu0 0.0
        %5520 = vmatprep.subr.mxu0 0.0
        %5521 = vmatpush1.msra.mxu0 0.0
        %5522 = vmatprep.subr.mxu0 0.0
        %5523 = vmatpush1.msra.mxu0 0.0
        %5524 = vmatprep.subr.mxu0 0.0
        %5525 = vmatpush1.msra.mxu0 0.0
        %5526 = vmatprep.subr.mxu0 0.0
        %5527 = vmatpush1.msra.mxu0 0.0
        %5528 = vmatprep.subr.mxu0 0.0
        %5529 = vmatpush1.msra.mxu0 0.0
        %5530 = vmatprep.subr.mxu0 0.0
        %5531 = vmatpush1.msra.mxu0 0.0
        %5532 = vmatprep.subr.mxu0 0.0
        %5533 = vmatpush1.msra.mxu0 0.0
        %5534 = vmatprep.subr.mxu0 0.0
        %5535 = vmatpush1.msra.mxu0 0.0
        %5536 = vmatprep.subr.mxu0 0.0
        %5537 = vmatpush1.msra.mxu0 0.0
        %5538 = vmatprep.subr.mxu0 0.0
        %5539 = vmatpush1.msra.mxu0 0.0
        %5540 = vmatprep.subr.mxu0 0.0
        %5541 = vmatpush1.msra.mxu0 0.0
        %5542 = vmatprep.subr.mxu0 0.0
        %5543 = vmatpush1.msra.mxu0 0.0
        %5544 = vmatprep.subr.mxu0 0.0
        %5545 = vmatpush1.msra.mxu0 0.0
        %5546 = vmatprep.subr.mxu0 0.0
        %5547 = vmatpush1.msra.mxu0 0.0
        %5548 = vmatprep.subr.mxu0 0.0
        %5549 = vmatpush1.msra.mxu0 0.0
        %5550 = vmatprep.subr.mxu0 0.0
        %5551 = vmatpush1.msra.mxu0 0.0
        %5552 = vmatprep.subr.mxu0 0.0
        %5553 = vmatpush1.msra.mxu0 0.0
        %5554 = vmatprep.subr.mxu0 0.0
        %5555 = vmatpush1.msra.mxu0 0.0
        %5556 = vmatprep.subr.mxu0 0.0
        %5557 = vmatpush1.msra.mxu0 0.0
        %5558 = vmatprep.subr.mxu0 0.0
        %5559 = vmatpush1.msra.mxu0 0.0
        %5560 = vmatprep.subr.mxu0 0.0
        %5561 = vmatpush1.msra.mxu0 0.0
        %5562 = vmatprep.subr.mxu0 0.0
        %5563 = vmatpush1.msra.mxu0 0.0
        %5564 = vmatprep.subr.mxu0 0.0
        %5565 = vmatpush1.msra.mxu0 0.0
        %5566 = vmatprep.subr.mxu0 0.0
        %5567 = vmatpush1.msra.mxu0 0.0
        %5568 = vmatprep.subr.mxu0 0.0
        %5569 = vmatpush1.msra.mxu0 0.0
        %5570 = vmatprep.subr.mxu0 0.0
        %5571 = vmatpush1.msra.mxu0 0.0
        %5572 = vmatprep.subr.mxu0 0.0
        %5573 = vmatpush1.msra.mxu0 0.0
        %5574 = vmatprep.subr.mxu0 0.0
        %5575 = vmatpush1.msra.mxu0 0.0
        %5576 = vmatprep.subr.mxu0 0.0
        %5577 = vmatpush1.msra.mxu0 0.0
        %5578 = vmatprep.mubr.f32.mxu0 0.0
        %5579 = vmatmul.mubr.f32.gmra.mrb[0].mxu0 %v5488
        %v5580 = vpop.f32.mrb[0].mxu0
        %v5581 = vadd.f32 0.0, %v5580
        %v5582 = vpop.f32.mrb[0].mxu0
        %5583 = vmatprep.mubr.f32.mxu0 0.0
        %5584 = vmatmul.mubr.f32.gmra.mrb[0].mxu0 %v5491
        %v5585 = vpop.f32.mrb[0].mxu0
        %v5586 = vadd.f32 0.0, %v5585
        %v5587 = vpop.f32.mrb[0].mxu0
        %5588 = vmatprep.mubr.f32.mxu0 0.0
        %5589 = vmatmul.mubr.f32.gmra.mrb[0].mxu0 %v5494
        %v5590 = vpop.f32.mrb[0].mxu0
        %v5591 = vadd.f32 0.0, %v5590
        %v5592 = vpop.f32.mrb[0].mxu0
        %5593 = vmatprep.mubr.f32.mxu0 0.0
        %5594 = vmatmul.mubr.f32.gmra.mrb[0].mxu0 %v5497
        %v5595 = vpop.f32.mrb[0].mxu0
        %v5596 = vadd.f32 0.0, %v5595
        %v5597 = vpop.f32.mrb[0].mxu0
        %5598 = vmatprep.mubr.f32.mxu0 0.0
        %5599 = vmatmul.mubr.f32.gmra.mrb[0].mxu0 %v5500
        %v5600 = vpop.f32.mrb[0].mxu0
        %v5601 = vadd.f32 0.0, %v5600
        %v5602 = vpop.f32.mrb[0].mxu0
        %5603 = vmatprep.mubr.f32.mxu0 0.0
        %5604 = vmatmul.mubr.f32.gmra.mrb[0].mxu0 %v5503
        %v5605 = vpop.f32.mrb[0].mxu0
        %v5606 = vadd.f32 0.0, %v5605
        %v5607 = vpop.f32.mrb[0].mxu0
        %5608 = vmatprep.mubr.f32.mxu0 0.0
        %5609 = vmatmul.mubr.f32.gmra.mrb[0].mxu0 %v5506
        %v5610 = vpop.f32.mrb[0].mxu0
        %v5611 = vadd.f32 0.0, %v5610
        %v5612 = vpop.f32.mrb[0].mxu0
        %5613 = vmatprep.mubr.f32.mxu0 0.0
        %5614 = vmatmul.mubr.f32.gmra.mrb[0].mxu0 %v5509
        %v5615 = vpop.f32.mrb[0].mxu0
        %v5616 = vadd.f32 0.0, %v5615
        %v5617 = vpop.f32.mrb[0].mxu0
        %5618 = vdwg.mxu0
        %v5619 = vadd.f32 %v4821, %v5581
        %v5620 = vadd.f32 %v4822, %v5586
        %v5621 = vadd.f32 %v4823, %v5591
        %v5622 = vadd.f32 %v4824, %v5596
        %v5623 = vadd.f32 %v4825, %v5601
        %v5624 = vadd.f32 %v4826, %v5606
        %v5625 = vadd.f32 %v4827, %v5611
        %v5626 = vadd.f32 %v4828, %v5616
        %5627 = vxpose.xlu0.b32.start [1/16] %v5619, 128
        %5628 = vxpose.xlu0.b32.cont [2/16] %v5620, 128
        %5629 = vxpose.xlu0.b32.cont [3/16] %v5621, 128
        %5630 = vxpose.xlu0.b32.cont [4/16] %v5622, 128
        %5631 = vxpose.xlu0.b32.cont [5/16] %v5623, 128
        %5632 = vxpose.xlu0.b32.cont [6/16] %v5624, 128
        %5633 = vxpose.xlu0.b32.cont [7/16] %v5625, 128
        %5634 = vxpose.xlu0.b32.cont [8/16] %v5626, 128
        %5635 = vxpose.xlu0.b32.cont [9/16] 0.0, 128
        %5636 = vxpose.xlu0.b32.cont [10/16] 0.0, 128
        %5637 = vxpose.xlu0.b32.cont [11/16] 0.0, 128
        %5638 = vxpose.xlu0.b32.cont [12/16] 0.0, 128
        %5639 = vxpose.xlu0.b32.cont [13/16] 0.0, 128
        %5640 = vxpose.xlu0.b32.cont [14/16] 0.0, 128
        %5641 = vxpose.xlu0.b32.cont [15/16] 0.0, 128
        %5642 = vxpose.xlu0.b32.end [16/16] 0.0, 128
        %v5643 = vpop.trf.xlu0
        %v5644 = vpop.trf.xlu0
        %v5645 = vpop.trf.xlu0
        %v5646 = vpop.trf.xlu0
        %v5647 = vpop.trf.xlu0
        %v5648 = vpop.trf.xlu0
        %v5649 = vpop.trf.xlu0
        %v5650 = vpop.trf.xlu0
        %v5651 = vpop.trf.xlu0
        %v5652 = vpop.trf.xlu0
        %v5653 = vpop.trf.xlu0
        %v5654 = vpop.trf.xlu0
        %v5655 = vpop.trf.xlu0
        %v5656 = vpop.trf.xlu0
        %v5657 = vpop.trf.xlu0
        %v5658 = vpop.trf.xlu0
        %v5659 = vld [vmem:[%s15] sm:$0xff]
        %v5660 = vld [vmem:[%s15 + $0x8] sm:$0xff]
        %5662 = vset.pattern.permute.xlu0 0
        %5663 = vperm.xlu0 %5662, %v5659
        %v5664 = vpop.permute.xlu0 %5663
        %5667 = vset.pattern.permute.xlu0 0
        %5668 = vperm.xlu0 %5667, %v5660
        %v5669 = vpop.permute.xlu0 %5668
        %v5671 = vadd.f32 %v5643, %v5664
        %v5672 = vadd.f32 %v5644, %v5669
        %v5673 = vadd.f32 %v810, %v5671
        %v5674 = vadd.f32 %v811, %v5672
        %v5675 = vld [vmem:[%s17] sm:$0xff]
        %v5676 = vld [vmem:[%s17 + $0x8] sm:$0xff]
        %v5677 = vld [vmem:[%s18] sm:$0xff]
        %v5678 = vld [vmem:[%s18 + $0x8] sm:$0xff]
        %5679 = vmatprep.subr.mxu0 0.0
        %5680 = vmatpush1.msra.mxu0 %v5673
        %5681 = vmatprep.subr.mxu0 0.0
        %5682 = vmatpush1.msra.mxu0 %v5674
        %5683 = vmatprep.subr.mxu0 0.0
        %5684 = vmatpush1.msra.mxu0 0.0
        %5685 = vmatprep.subr.mxu0 0.0
        %5686 = vmatpush1.msra.mxu0 0.0
        %5687 = vmatprep.subr.mxu0 0.0
        %5688 = vmatpush1.msra.mxu0 0.0
        %5689 = vmatprep.subr.mxu0 0.0
        %5690 = vmatpush1.msra.mxu0 0.0
        %5691 = vmatprep.subr.mxu0 0.0
        %5692 = vmatpush1.msra.mxu0 0.0
        %5693 = vmatprep.subr.mxu0 0.0
        %5694 = vmatpush1.msra.mxu0 0.0
        %5695 = vmatprep.subr.mxu0 0.0
        %5696 = vmatpush1.msra.mxu0 0.0
        %5697 = vmatprep.subr.mxu0 0.0
        %5698 = vmatpush1.msra.mxu0 0.0
        %5699 = vmatprep.subr.mxu0 0.0
        %5700 = vmatpush1.msra.mxu0 0.0
        %5701 = vmatprep.subr.mxu0 0.0
        %5702 = vmatpush1.msra.mxu0 0.0
        %5703 = vmatprep.subr.mxu0 0.0
        %5704 = vmatpush1.msra.mxu0 0.0
        %5705 = vmatprep.subr.mxu0 0.0
        %5706 = vmatpush1.msra.mxu0 0.0
        %5707 = vmatprep.subr.mxu0 0.0
        %5708 = vmatpush1.msra.mxu0 0.0
        %5709 = vmatprep.subr.mxu0 0.0
        %5710 = vmatpush1.msra.mxu0 0.0
        %5711 = vmatprep.subr.mxu0 0.0
        %5712 = vmatpush1.msra.mxu0 0.0
        %5713 = vmatprep.subr.mxu0 0.0
        %5714 = vmatpush1.msra.mxu0 0.0
        %5715 = vmatprep.subr.mxu0 0.0
        %5716 = vmatpush1.msra.mxu0 0.0
        %5717 = vmatprep.subr.mxu0 0.0
        %5718 = vmatpush1.msra.mxu0 0.0
        %5719 = vmatprep.subr.mxu0 0.0
        %5720 = vmatpush1.msra.mxu0 0.0
        %5721 = vmatprep.subr.mxu0 0.0
        %5722 = vmatpush1.msra.mxu0 0.0
        %5723 = vmatprep.subr.mxu0 0.0
        %5724 = vmatpush1.msra.mxu0 0.0
        %5725 = vmatprep.subr.mxu0 0.0
        %5726 = vmatpush1.msra.mxu0 0.0
        %5727 = vmatprep.subr.mxu0 0.0
        %5728 = vmatpush1.msra.mxu0 0.0
        %5729 = vmatprep.subr.mxu0 0.0
        %5730 = vmatpush1.msra.mxu0 0.0
        %5731 = vmatprep.subr.mxu0 0.0
        %5732 = vmatpush1.msra.mxu0 0.0
        %5733 = vmatprep.subr.mxu0 0.0
        %5734 = vmatpush1.msra.mxu0 0.0
        %5735 = vmatprep.subr.mxu0 0.0
        %5736 = vmatpush1.msra.mxu0 0.0
        %5737 = vmatprep.subr.mxu0 0.0
        %5738 = vmatpush1.msra.mxu0 0.0
        %5739 = vmatprep.subr.mxu0 0.0
        %5740 = vmatpush1.msra.mxu0 0.0
        %5741 = vmatprep.subr.mxu0 0.0
        %5742 = vmatpush1.msra.mxu0 0.0
        %5743 = vmatprep.mubr.f32.mxu0 0.0
        %5744 = vmatmul.mubr.f32.gmra.mrb[0].mxu0 %v1934
        %v5745 = vpop.f32.mrb[0].mxu0
        %v5746 = vadd.f32 0.0, %v5745
        %v5747 = vpop.f32.mrb[0].mxu0
        %5748 = vmatprep.mubr.f32.mxu0 0.0
        %5749 = vmatmul.mubr.f32.gmra.mrb[0].mxu0 %v1937
        %v5750 = vpop.f32.mrb[0].mxu0
        %v5751 = vadd.f32 0.0, %v5750
        %v5752 = vpop.f32.mrb[0].mxu0
        %5753 = vdwg.mxu0
        %v5754 = vsel %vm920, %v5746, 0.0
        %5755 = vadd.xlane.f32.xlu0 %v5754
        %v5756 = vpop.xlane.xlu0 %5755
        %v5757 = vsel %vm920, %v5751, 0.0
        %5758 = vadd.xlane.f32.xlu0 %v5757
        %v5759 = vpop.xlane.xlu0 %5758
        %v5760 = vmul.f32 %v5673, %v5673
        %v5761 = vmul.f32 %v5674, %v5674
        %5762 = vmatprep.subr.mxu0 0.0
        %5763 = vmatpush1.msra.mxu0 %v5760
        %5764 = vmatprep.subr.mxu0 0.0
        %5765 = vmatpush1.msra.mxu0 %v5761
        %5766 = vmatprep.subr.mxu0 0.0
        %5767 = vmatpush1.msra.mxu0 0.0
        %5768 = vmatprep.subr.mxu0 0.0
        %5769 = vmatpush1.msra.mxu0 0.0
        %5770 = vmatprep.subr.mxu0 0.0
        %5771 = vmatpush1.msra.mxu0 0.0
        %5772 = vmatprep.subr.mxu0 0.0
        %5773 = vmatpush1.msra.mxu0 0.0
        %5774 = vmatprep.subr.mxu0 0.0
        %5775 = vmatpush1.msra.mxu0 0.0
        %5776 = vmatprep.subr.mxu0 0.0
        %5777 = vmatpush1.msra.mxu0 0.0
        %5778 = vmatprep.subr.mxu0 0.0
        %5779 = vmatpush1.msra.mxu0 0.0
        %5780 = vmatprep.subr.mxu0 0.0
        %5781 = vmatpush1.msra.mxu0 0.0
        %5782 = vmatprep.subr.mxu0 0.0
        %5783 = vmatpush1.msra.mxu0 0.0
        %5784 = vmatprep.subr.mxu0 0.0
        %5785 = vmatpush1.msra.mxu0 0.0
        %5786 = vmatprep.subr.mxu0 0.0
        %5787 = vmatpush1.msra.mxu0 0.0
        %5788 = vmatprep.subr.mxu0 0.0
        %5789 = vmatpush1.msra.mxu0 0.0
        %5790 = vmatprep.subr.mxu0 0.0
        %5791 = vmatpush1.msra.mxu0 0.0
        %5792 = vmatprep.subr.mxu0 0.0
        %5793 = vmatpush1.msra.mxu0 0.0
        %5794 = vmatprep.subr.mxu0 0.0
        %5795 = vmatpush1.msra.mxu0 0.0
        %5796 = vmatprep.subr.mxu0 0.0
        %5797 = vmatpush1.msra.mxu0 0.0
        %5798 = vmatprep.subr.mxu0 0.0
        %5799 = vmatpush1.msra.mxu0 0.0
        %5800 = vmatprep.subr.mxu0 0.0
        %5801 = vmatpush1.msra.mxu0 0.0
        %5802 = vmatprep.subr.mxu0 0.0
        %5803 = vmatpush1.msra.mxu0 0.0
        %5804 = vmatprep.subr.mxu0 0.0
        %5805 = vmatpush1.msra.mxu0 0.0
        %5806 = vmatprep.subr.mxu0 0.0
        %5807 = vmatpush1.msra.mxu0 0.0
        %5808 = vmatprep.subr.mxu0 0.0
        %5809 = vmatpush1.msra.mxu0 0.0
        %5810 = vmatprep.subr.mxu0 0.0
        %5811 = vmatpush1.msra.mxu0 0.0
        %5812 = vmatprep.subr.mxu0 0.0
        %5813 = vmatpush1.msra.mxu0 0.0
        %5814 = vmatprep.subr.mxu0 0.0
        %5815 = vmatpush1.msra.mxu0 0.0
        %5816 = vmatprep.subr.mxu0 0.0
        %5817 = vmatpush1.msra.mxu0 0.0
        %5818 = vmatprep.subr.mxu0 0.0
        %5819 = vmatpush1.msra.mxu0 0.0
        %5820 = vmatprep.subr.mxu0 0.0
        %5821 = vmatpush1.msra.mxu0 0.0
        %5822 = vmatprep.subr.mxu0 0.0
        %5823 = vmatpush1.msra.mxu0 0.0
        %5824 = vmatprep.subr.mxu0 0.0
        %5825 = vmatpush1.msra.mxu0 0.0
        %5826 = vmatprep.mubr.f32.mxu0 0.0
        %5827 = vmatmul.mubr.f32.gmra.mrb[0].mxu0 %v1934
        %v5828 = vpop.f32.mrb[0].mxu0
        %v5829 = vadd.f32 0.0, %v5828
        %v5830 = vpop.f32.mrb[0].mxu0
        %5831 = vmatprep.mubr.f32.mxu0 0.0
        %5832 = vmatmul.mubr.f32.gmra.mrb[0].mxu0 %v1937
        %v5833 = vpop.f32.mrb[0].mxu0
        %v5834 = vadd.f32 0.0, %v5833
        %v5835 = vpop.f32.mrb[0].mxu0
        %5836 = vdwg.mxu0
        %v5837 = vsel %vm920, %v5829, 0.0
        %5838 = vadd.xlane.f32.xlu0 %v5837
        %v5839 = vpop.xlane.xlu0 %5838
        %v5840 = vsel %vm920, %v5834, 0.0
        %5841 = vadd.xlane.f32.xlu0 %v5840
        %v5842 = vpop.xlane.xlu0 %5841
        %v5843 = vmul.f32 %v5756, %v5756
        %v5844 = vmul.f32 %v5759, %v5759
        %v5845 = vsub.f32 %v5839, %v5843
        %v5846 = vsub.f32 %v5842, %v5844
        %v5847 = vadd.f32 %v5845, 1e-05
        %v5848 = vadd.f32 %v5846, 1e-05
        %v5849 = vrsqrt.pop %v5847
        %v5850 = vrsqrt.pop %v5848
        %v5851 = vsub.f32 %v5673, %v5756
        %v5852 = vsub.f32 %v5674, %v5759
        %v5853 = vmul.f32 %v5851, %v5849
        %v5854 = vmul.f32 %v5852, %v5850
        %5856 = vset.pattern.permute.xlu0 0
        %5857 = vperm.xlu0 %5856, %v5675
        %v5858 = vpop.permute.xlu0 %5857
        %5861 = vset.pattern.permute.xlu0 0
        %5862 = vperm.xlu0 %5861, %v5676
        %v5863 = vpop.permute.xlu0 %5862
        %v5865 = vmul.f32 %v5853, %v5858
        %v5866 = vmul.f32 %v5854, %v5863
        %5868 = vset.pattern.permute.xlu0 0
        %5869 = vperm.xlu0 %5868, %v5677
        %v5870 = vpop.permute.xlu0 %5869
        %5873 = vset.pattern.permute.xlu0 0
        %5874 = vperm.xlu0 %5873, %v5678
        %v5875 = vpop.permute.xlu0 %5874
        %v5877 = vadd.f32 %v5865, %v5870
        %v5878 = vadd.f32 %v5866, %v5875
        %v5879 = vadd.f32 %v2137, %v5877
        %v5880 = vadd.f32 %v2138, %v5878
        %v5881 = vld [vmem:[%s19] sm:$0xff]
        %v5882 = vld [vmem:[%s19 + $0x8] sm:$0xff]
        %v5883 = vld [vmem:[%s19 + $0x10] sm:$0xff]
        %v5884 = vld [vmem:[%s19 + $0x18] sm:$0xff]
        %v5885 = vld [vmem:[%s20] sm:$0xff]
        %v5886 = vld [vmem:[%s20 + $0x8] sm:$0xff]
        %v5887 = vld [vmem:[%s20 + $0x10] sm:$0xff]
        %v5888 = vld [vmem:[%s20 + $0x18] sm:$0xff]
        %5890 = vset.pattern.permute.xlu0 0
        %5891 = vperm.xlu0 %5890, %v5885
        %v5892 = vpop.permute.xlu0 %5891
        %5895 = vset.pattern.permute.xlu0 0
        %5896 = vperm.xlu0 %5895, %v5886
        %v5897 = vpop.permute.xlu0 %5896
        %5900 = vset.pattern.permute.xlu0 0
        %5901 = vperm.xlu0 %5900, %v5887
        %v5902 = vpop.permute.xlu0 %5901
        %5905 = vset.pattern.permute.xlu0 0
        %5906 = vperm.xlu0 %5905, %v5888
        %v5907 = vpop.permute.xlu0 %5906
        %v5910 = vsel %vm830, %v5881, 0
        %v5913 = vsel %vm830, %v5882, 0
        %v5916 = vsel %vm830, %v5883, 0
        %v5919 = vsel %vm830, %v5884, 0
        %5921 = vmatprep.subr.mxu0 0.0
        %5922 = vmatpush1.msra.mxu0 %v5879
        %5923 = vmatprep.subr.mxu0 0.0
        %5924 = vmatpush1.msra.mxu0 %v5880
        %5925 = vmatprep.subr.mxu0 0.0
        %5926 = vmatpush1.msra.mxu0 0.0
        %5927 = vmatprep.subr.mxu0 0.0
        %5928 = vmatpush1.msra.mxu0 0.0
        %5929 = vmatprep.subr.mxu0 0.0
        %5930 = vmatpush1.msra.mxu0 0.0
        %5931 = vmatprep.subr.mxu0 0.0
        %5932 = vmatpush1.msra.mxu0 0.0
        %5933 = vmatprep.subr.mxu0 0.0
        %5934 = vmatpush1.msra.mxu0 0.0
        %5935 = vmatprep.subr.mxu0 0.0
        %5936 = vmatpush1.msra.mxu0 0.0
        %5937 = vmatprep.subr.mxu0 0.0
        %5938 = vmatpush1.msra.mxu0 0.0
        %5939 = vmatprep.subr.mxu0 0.0
        %5940 = vmatpush1.msra.mxu0 0.0
        %5941 = vmatprep.subr.mxu0 0.0
        %5942 = vmatpush1.msra.mxu0 0.0
        %5943 = vmatprep.subr.mxu0 0.0
        %5944 = vmatpush1.msra.mxu0 0.0
        %5945 = vmatprep.subr.mxu0 0.0
        %5946 = vmatpush1.msra.mxu0 0.0
        %5947 = vmatprep.subr.mxu0 0.0
        %5948 = vmatpush1.msra.mxu0 0.0
        %5949 = vmatprep.subr.mxu0 0.0
        %5950 = vmatpush1.msra.mxu0 0.0
        %5951 = vmatprep.subr.mxu0 0.0
        %5952 = vmatpush1.msra.mxu0 0.0
        %5953 = vmatprep.subr.mxu0 0.0
        %5954 = vmatpush1.msra.mxu0 0.0
        %5955 = vmatprep.subr.mxu0 0.0
        %5956 = vmatpush1.msra.mxu0 0.0
        %5957 = vmatprep.subr.mxu0 0.0
        %5958 = vmatpush1.msra.mxu0 0.0
        %5959 = vmatprep.subr.mxu0 0.0
        %5960 = vmatpush1.msra.mxu0 0.0
        %5961 = vmatprep.subr.mxu0 0.0
        %5962 = vmatpush1.msra.mxu0 0.0
        %5963 = vmatprep.subr.mxu0 0.0
        %5964 = vmatpush1.msra.mxu0 0.0
        %5965 = vmatprep.subr.mxu0 0.0
        %5966 = vmatpush1.msra.mxu0 0.0
        %5967 = vmatprep.subr.mxu0 0.0
        %5968 = vmatpush1.msra.mxu0 0.0
        %5969 = vmatprep.subr.mxu0 0.0
        %5970 = vmatpush1.msra.mxu0 0.0
        %5971 = vmatprep.subr.mxu0 0.0
        %5972 = vmatpush1.msra.mxu0 0.0
        %5973 = vmatprep.subr.mxu0 0.0
        %5974 = vmatpush1.msra.mxu0 0.0
        %5975 = vmatprep.subr.mxu0 0.0
        %5976 = vmatpush1.msra.mxu0 0.0
        %5977 = vmatprep.subr.mxu0 0.0
        %5978 = vmatpush1.msra.mxu0 0.0
        %5979 = vmatprep.subr.mxu0 0.0
        %5980 = vmatpush1.msra.mxu0 0.0
        %5981 = vmatprep.subr.mxu0 0.0
        %5982 = vmatpush1.msra.mxu0 0.0
        %5983 = vmatprep.subr.mxu0 0.0
        %5984 = vmatpush1.msra.mxu0 0.0
        %5985 = vmatprep.mubr.f32.mxu0 0.0
        %5986 = vmatmul.mubr.f32.gmra.mrb[0].mxu0 %v5910
        %v5987 = vpop.f32.mrb[0].mxu0
        %v5988 = vadd.f32 %v5892, %v5987
        %v5989 = vpop.f32.mrb[0].mxu0
        %5990 = vmatprep.mubr.f32.mxu0 0.0
        %5991 = vmatmul.mubr.f32.gmra.mrb[0].mxu0 %v5913
        %v5992 = vpop.f32.mrb[0].mxu0
        %v5993 = vadd.f32 %v5897, %v5992
        %v5994 = vpop.f32.mrb[0].mxu0
        %5995 = vmatprep.mubr.f32.mxu0 0.0
        %5996 = vmatmul.mubr.f32.gmra.mrb[0].mxu0 %v5916
        %v5997 = vpop.f32.mrb[0].mxu0
        %v5998 = vadd.f32 %v5902, %v5997
        %v5999 = vpop.f32.mrb[0].mxu0
        %6000 = vmatprep.mubr.f32.mxu0 0.0
        %6001 = vmatmul.mubr.f32.gmra.mrb[0].mxu0 %v5919
        %v6002 = vpop.f32.mrb[0].mxu0
        %v6003 = vadd.f32 %v5907, %v6002
        %v6004 = vpop.f32.mrb[0].mxu0
        %6005 = vdwg.mxu0
        %v6006 = vmax.f32 %v5988, 0.0
        %v6007 = vmax.f32 %v5993, 0.0
        %v6008 = vmax.f32 %v5998, 0.0
        %v6009 = vmax.f32 %v6003, 0.0
        %v6010 = vld [vmem:[%s21] sm:$0xff]
        %v6011 = vld [vmem:[%s21 + $0x8] sm:$0xff]
        %v6012 = vld [vmem:[%s22] sm:$0xff]
        %v6013 = vld [vmem:[%s22 + $0x8] sm:$0xff]
        %6015 = vset.pattern.permute.xlu0 0
        %6016 = vperm.xlu0 %6015, %v6012
        %v6017 = vpop.permute.xlu0 %6016
        %6020 = vset.pattern.permute.xlu0 0
        %6021 = vperm.xlu0 %6020, %v6013
        %v6022 = vpop.permute.xlu0 %6021
        %vm6024 = vcmask 261120
        %v6026 = vsel %vm6024, %v6010, 0
        %v6029 = vsel %vm6024, %v6011, 0
        %6031 = vmatprep.subr.mxu0 0.0
        %6032 = vmatpush1.msra.mxu0 %v6006
        %6033 = vmatprep.subr.mxu0 0.0
        %6034 = vmatpush1.msra.mxu0 %v6007
        %6035 = vmatprep.subr.mxu0 0.0
        %6036 = vmatpush1.msra.mxu0 %v6008
        %6037 = vmatprep.subr.mxu0 0.0
        %6038 = vmatpush1.msra.mxu0 %v6009
        %6039 = vmatprep.subr.mxu0 0.0
        %6040 = vmatpush1.msra.mxu0 0.0
        %6041 = vmatprep.subr.mxu0 0.0
        %6042 = vmatpush1.msra.mxu0 0.0
        %6043 = vmatprep.subr.mxu0 0.0
        %6044 = vmatpush1.msra.mxu0 0.0
        %6045 = vmatprep.subr.mxu0 0.0
        %6046 = vmatpush1.msra.mxu0 0.0
        %6047 = vmatprep.subr.mxu0 0.0
        %6048 = vmatpush1.msra.mxu0 0.0
        %6049 = vmatprep.subr.mxu0 0.0
        %6050 = vmatpush1.msra.mxu0 0.0
        %6051 = vmatprep.subr.mxu0 0.0
        %6052 = vmatpush1.msra.mxu0 0.0
        %6053 = vmatprep.subr.mxu0 0.0
        %6054 = vmatpush1.msra.mxu0 0.0
        %6055 = vmatprep.subr.mxu0 0.0
        %6056 = vmatpush1.msra.mxu0 0.0
        %6057 = vmatprep.subr.mxu0 0.0
        %6058 = vmatpush1.msra.mxu0 0.0
        %6059 = vmatprep.subr.mxu0 0.0
        %6060 = vmatpush1.msra.mxu0 0.0
        %6061 = vmatprep.subr.mxu0 0.0
        %6062 = vmatpush1.msra.mxu0 0.0
        %6063 = vmatprep.subr.mxu0 0.0
        %6064 = vmatpush1.msra.mxu0 0.0
        %6065 = vmatprep.subr.mxu0 0.0
        %6066 = vmatpush1.msra.mxu0 0.0
        %6067 = vmatprep.subr.mxu0 0.0
        %6068 = vmatpush1.msra.mxu0 0.0
        %6069 = vmatprep.subr.mxu0 0.0
        %6070 = vmatpush1.msra.mxu0 0.0
        %6071 = vmatprep.subr.mxu0 0.0
        %6072 = vmatpush1.msra.mxu0 0.0
        %6073 = vmatprep.subr.mxu0 0.0
        %6074 = vmatpush1.msra.mxu0 0.0
        %6075 = vmatprep.subr.mxu0 0.0
        %6076 = vmatpush1.msra.mxu0 0.0
        %6077 = vmatprep.subr.mxu0 0.0
        %6078 = vmatpush1.msra.mxu0 0.0
        %6079 = vmatprep.subr.mxu0 0.0
        %6080 = vmatpush1.msra.mxu0 0.0
        %6081 = vmatprep.subr.mxu0 0.0
        %6082 = vmatpush1.msra.mxu0 0.0
        %6083 = vmatprep.subr.mxu0 0.0
        %6084 = vmatpush1.msra.mxu0 0.0
        %6085 = vmatprep.subr.mxu0 0.0
        %6086 = vmatpush1.msra.mxu0 0.0
        %6087 = vmatprep.subr.mxu0 0.0
        %6088 = vmatpush1.msra.mxu0 0.0
        %6089 = vmatprep.subr.mxu0 0.0
        %6090 = vmatpush1.msra.mxu0 0.0
        %6091 = vmatprep.subr.mxu0 0.0
        %6092 = vmatpush1.msra.mxu0 0.0
        %6093 = vmatprep.subr.mxu0 0.0
        %6094 = vmatpush1.msra.mxu0 0.0
        %6095 = vmatprep.mubr.f32.mxu0 0.0
        %6096 = vmatmul.mubr.f32.gmra.mrb[0].mxu0 %v6026
        %v6097 = vpop.f32.mrb[0].mxu0
        %v6098 = vadd.f32 %v6017, %v6097
        %v6099 = vpop.f32.mrb[0].mxu0
        %6100 = vmatprep.mubr.f32.mxu0 0.0
        %6101 = vmatmul.mubr.f32.gmra.mrb[0].mxu0 %v6029
        %v6102 = vpop.f32.mrb[0].mxu0
        %v6103 = vadd.f32 %v6022, %v6102
        %v6104 = vpop.f32.mrb[0].mxu0
        %6105 = vdwg.mxu0
        %v6106 = vadd.f32 %v6098, %v5879
        %v6107 = vadd.f32 %v6103, %v5880
        %v6108 = vld [vmem:[%s23] sm:$0xff]
        %v6109 = vld [vmem:[%s23 + $0x8] sm:$0xff]
        %v6110 = vld [vmem:[%s24] sm:$0xff]
        %v6111 = vld [vmem:[%s24 + $0x8] sm:$0xff]
        %6112 = vmatprep.subr.mxu0 0.0
        %6113 = vmatpush1.msra.mxu0 %v6106
        %6114 = vmatprep.subr.mxu0 0.0
        %6115 = vmatpush1.msra.mxu0 %v6107
        %6116 = vmatprep.subr.mxu0 0.0
        %6117 = vmatpush1.msra.mxu0 0.0
        %6118 = vmatprep.subr.mxu0 0.0
        %6119 = vmatpush1.msra.mxu0 0.0
        %6120 = vmatprep.subr.mxu0 0.0
        %6121 = vmatpush1.msra.mxu0 0.0
        %6122 = vmatprep.subr.mxu0 0.0
        %6123 = vmatpush1.msra.mxu0 0.0
        %6124 = vmatprep.subr.mxu0 0.0
        %6125 = vmatpush1.msra.mxu0 0.0
        %6126 = vmatprep.subr.mxu0 0.0
        %6127 = vmatpush1.msra.mxu0 0.0
        %6128 = vmatprep.subr.mxu0 0.0
        %6129 = vmatpush1.msra.mxu0 0.0
        %6130 = vmatprep.subr.mxu0 0.0
        %6131 = vmatpush1.msra.mxu0 0.0
        %6132 = vmatprep.subr.mxu0 0.0
        %6133 = vmatpush1.msra.mxu0 0.0
        %6134 = vmatprep.subr.mxu0 0.0
        %6135 = vmatpush1.msra.mxu0 0.0
        %6136 = vmatprep.subr.mxu0 0.0
        %6137 = vmatpush1.msra.mxu0 0.0
        %6138 = vmatprep.subr.mxu0 0.0
        %6139 = vmatpush1.msra.mxu0 0.0
        %6140 = vmatprep.subr.mxu0 0.0
        %6141 = vmatpush1.msra.mxu0 0.0
        %6142 = vmatprep.subr.mxu0 0.0
        %6143 = vmatpush1.msra.mxu0 0.0
        %6144 = vmatprep.subr.mxu0 0.0
        %6145 = vmatpush1.msra.mxu0 0.0
        %6146 = vmatprep.subr.mxu0 0.0
        %6147 = vmatpush1.msra.mxu0 0.0
        %6148 = vmatprep.subr.mxu0 0.0
        %6149 = vmatpush1.msra.mxu0 0.0
        %6150 = vmatprep.subr.mxu0 0.0
        %6151 = vmatpush1.msra.mxu0 0.0
        %6152 = vmatprep.subr.mxu0 0.0
        %6153 = vmatpush1.msra.mxu0 0.0
        %6154 = vmatprep.subr.mxu0 0.0
        %6155 = vmatpush1.msra.mxu0 0.0
        %6156 = vmatprep.subr.mxu0 0.0
        %6157 = vmatpush1.msra.mxu0 0.0
        %6158 = vmatprep.subr.mxu0 0.0
        %6159 = vmatpush1.msra.mxu0 0.0
        %6160 = vmatprep.subr.mxu0 0.0
        %6161 = vmatpush1.msra.mxu0 0.0
        %6162 = vmatprep.subr.mxu0 0.0
        %6163 = vmatpush1.msra.mxu0 0.0
        %6164 = vmatprep.subr.mxu0 0.0
        %6165 = vmatpush1.msra.mxu0 0.0
        %6166 = vmatprep.subr.mxu0 0.0
        %6167 = vmatpush1.msra.mxu0 0.0
        %6168 = vmatprep.subr.mxu0 0.0
        %6169 = vmatpush1.msra.mxu0 0.0
        %6170 = vmatprep.subr.mxu0 0.0
        %6171 = vmatpush1.msra.mxu0 0.0
        %6172 = vmatprep.subr.mxu0 0.0
        %6173 = vmatpush1.msra.mxu0 0.0
        %6174 = vmatprep.subr.mxu0 0.0
        %6175 = vmatpush1.msra.mxu0 0.0
        %6176 = vmatprep.mubr.f32.mxu0 0.0
        %6177 = vmatmul.mubr.f32.gmra.mrb[0].mxu0 %v1934
        %v6178 = vpop.f32.mrb[0].mxu0
        %v6179 = vadd.f32 0.0, %v6178
        %v6180 = vpop.f32.mrb[0].mxu0
        %6181 = vmatprep.mubr.f32.mxu0 0.0
        %6182 = vmatmul.mubr.f32.gmra.mrb[0].mxu0 %v1937
        %v6183 = vpop.f32.mrb[0].mxu0
        %v6184 = vadd.f32 0.0, %v6183
        %v6185 = vpop.f32.mrb[0].mxu0
        %6186 = vdwg.mxu0
        %v6187 = vsel %vm920, %v6179, 0.0
        %6188 = vadd.xlane.f32.xlu0 %v6187
        %v6189 = vpop.xlane.xlu0 %6188
        %v6190 = vsel %vm920, %v6184, 0.0
        %6191 = vadd.xlane.f32.xlu0 %v6190
        %v6192 = vpop.xlane.xlu0 %6191
        %v6193 = vmul.f32 %v6106, %v6106
        %v6194 = vmul.f32 %v6107, %v6107
        %6195 = vmatprep.subr.mxu0 0.0
        %6196 = vmatpush1.msra.mxu0 %v6193
        %6197 = vmatprep.subr.mxu0 0.0
        %6198 = vmatpush1.msra.mxu0 %v6194
        %6199 = vmatprep.subr.mxu0 0.0
        %6200 = vmatpush1.msra.mxu0 0.0
        %6201 = vmatprep.subr.mxu0 0.0
        %6202 = vmatpush1.msra.mxu0 0.0
        %6203 = vmatprep.subr.mxu0 0.0
        %6204 = vmatpush1.msra.mxu0 0.0
        %6205 = vmatprep.subr.mxu0 0.0
        %6206 = vmatpush1.msra.mxu0 0.0
        %6207 = vmatprep.subr.mxu0 0.0
        %6208 = vmatpush1.msra.mxu0 0.0
        %6209 = vmatprep.subr.mxu0 0.0
        %6210 = vmatpush1.msra.mxu0 0.0
        %6211 = vmatprep.subr.mxu0 0.0
        %6212 = vmatpush1.msra.mxu0 0.0
        %6213 = vmatprep.subr.mxu0 0.0
        %6214 = vmatpush1.msra.mxu0 0.0
        %6215 = vmatprep.subr.mxu0 0.0
        %6216 = vmatpush1.msra.mxu0 0.0
        %6217 = vmatprep.subr.mxu0 0.0
        %6218 = vmatpush1.msra.mxu0 0.0
        %6219 = vmatprep.subr.mxu0 0.0
        %6220 = vmatpush1.msra.mxu0 0.0
        %6221 = vmatprep.subr.mxu0 0.0
        %6222 = vmatpush1.msra.mxu0 0.0
        %6223 = vmatprep.subr.mxu0 0.0
        %6224 = vmatpush1.msra.mxu0 0.0
        %6225 = vmatprep.subr.mxu0 0.0
        %6226 = vmatpush1.msra.mxu0 0.0
        %6227 = vmatprep.subr.mxu0 0.0
        %6228 = vmatpush1.msra.mxu0 0.0
        %6229 = vmatprep.subr.mxu0 0.0
        %6230 = vmatpush1.msra.mxu0 0.0
        %6231 = vmatprep.subr.mxu0 0.0
        %6232 = vmatpush1.msra.mxu0 0.0
        %6233 = vmatprep.subr.mxu0 0.0
        %6234 = vmatpush1.msra.mxu0 0.0
        %6235 = vmatprep.subr.mxu0 0.0
        %6236 = vmatpush1.msra.mxu0 0.0
        %6237 = vmatprep.subr.mxu0 0.0
        %6238 = vmatpush1.msra.mxu0 0.0
        %6239 = vmatprep.subr.mxu0 0.0
        %6240 = vmatpush1.msra.mxu0 0.0
        %6241 = vmatprep.subr.mxu0 0.0
        %6242 = vmatpush1.msra.mxu0 0.0
        %6243 = vmatprep.subr.mxu0 0.0
        %6244 = vmatpush1.msra.mxu0 0.0
        %6245 = vmatprep.subr.mxu0 0.0
        %6246 = vmatpush1.msra.mxu0 0.0
        %6247 = vmatprep.subr.mxu0 0.0
        %6248 = vmatpush1.msra.mxu0 0.0
        %6249 = vmatprep.subr.mxu0 0.0
        %6250 = vmatpush1.msra.mxu0 0.0
        %6251 = vmatprep.subr.mxu0 0.0
        %6252 = vmatpush1.msra.mxu0 0.0
        %6253 = vmatprep.subr.mxu0 0.0
        %6254 = vmatpush1.msra.mxu0 0.0
        %6255 = vmatprep.subr.mxu0 0.0
        %6256 = vmatpush1.msra.mxu0 0.0
        %6257 = vmatprep.subr.mxu0 0.0
        %6258 = vmatpush1.msra.mxu0 0.0
        %6259 = vmatprep.mubr.f32.mxu0 0.0
        %6260 = vmatmul.mubr.f32.gmra.mrb[0].mxu0 %v1934
        %v6261 = vpop.f32.mrb[0].mxu0
        %v6262 = vadd.f32 0.0, %v6261
        %v6263 = vpop.f32.mrb[0].mxu0
        %6264 = vmatprep.mubr.f32.mxu0 0.0
        %6265 = vmatmul.mubr.f32.gmra.mrb[0].mxu0 %v1937
        %v6266 = vpop.f32.mrb[0].mxu0
        %v6267 = vadd.f32 0.0, %v6266
        %v6268 = vpop.f32.mrb[0].mxu0
        %6269 = vdwg.mxu0
        %v6270 = vsel %vm920, %v6262, 0.0
        %6271 = vadd.xlane.f32.xlu0 %v6270
        %v6272 = vpop.xlane.xlu0 %6271
        %v6273 = vsel %vm920, %v6267, 0.0
        %6274 = vadd.xlane.f32.xlu0 %v6273
        %v6275 = vpop.xlane.xlu0 %6274
        %v6276 = vmul.f32 %v6189, %v6189
        %v6277 = vmul.f32 %v6192, %v6192
        %v6278 = vsub.f32 %v6272, %v6276
        %v6279 = vsub.f32 %v6275, %v6277
        %v6280 = vadd.f32 %v6278, 1e-05
        %v6281 = vadd.f32 %v6279, 1e-05
        %v6282 = vrsqrt.pop %v6280
        %v6283 = vrsqrt.pop %v6281
        %v6284 = vsub.f32 %v6106, %v6189
        %v6285 = vsub.f32 %v6107, %v6192
        %v6286 = vmul.f32 %v6284, %v6282
        %v6287 = vmul.f32 %v6285, %v6283
        %6289 = vset.pattern.permute.xlu0 0
        %6290 = vperm.xlu0 %6289, %v6108
        %v6291 = vpop.permute.xlu0 %6290
        %6294 = vset.pattern.permute.xlu0 0
        %6295 = vperm.xlu0 %6294, %v6109
        %v6296 = vpop.permute.xlu0 %6295
        %v6298 = vmul.f32 %v6286, %v6291
        %v6299 = vmul.f32 %v6287, %v6296
        %6301 = vset.pattern.permute.xlu0 0
        %6302 = vperm.xlu0 %6301, %v6110
        %v6303 = vpop.permute.xlu0 %6302
        %6306 = vset.pattern.permute.xlu0 0
        %6307 = vperm.xlu0 %6306, %v6111
        %v6308 = vpop.permute.xlu0 %6307
        %v6310 = vadd.f32 %v6298, %v6303
        %v6311 = vadd.f32 %v6299, %v6308
        %6312 = vst.msk [vmem:[%s799] sm:$0xff] %vm920, %v6310
        %6313 = vst.msk [vmem:[%s799 + $0x8] sm:$0xff] %vm920, %v6311
        %s6314 = sand.u32 %s604, 1
        %s6315 = scalar_lea.sflag [#allocation3], %s6314
        %s6316 = sand.u32 %s604, 1
        %s6317 = smul.addr %s6316, 16
        %s6318 = scalar_lea.vmem [#allocation2], %s6317
        // Predicated region
        $region125: #{_lambda_.1} parent=123 // pred_check
          %p6319 = pneg %p614
        $region126: #{_lambda_.1} parent=123 // pred_check_branch
          %6321 = sbr.rel (%p6319) target = $region128
        $region127: #{_lambda_.1} parent=123 // pred_region
          %s6323 = ssub.s32 256, 256
          %6324 = vsyncadd %s6315, %s6323
          %s6325 = smul.addr %s40, 2
          %s6326 = smul.addr %s6325, 128
          %s6327 = scalar_lea.hbm %s26, %s6326
          %s6328 = sshll.u32 %s6318, 4
          %s6329 = int_to_ptr.vmem [resolvable:$true] %s6328
          %6334 = dma.vmem_to_hbm [thread:$0]  %s6329, 256, %s6327, %s6315, 128, 128, 8
        $region128: #{_lambda_.1} parent=123 // pred_fallthru
          _
      $region124: #{_lambda_.1} parent=5 // pred_fallthru
        _
      %p6335 = scmp.le.s32.totalorder 2, %s35
      // Predicated region
      $region129: #{_lambda_.1} parent=5 // pred_check
        %p6336 = pneg %p6335
      $region130: #{_lambda_.1} parent=5 // pred_check_branch
        %6338 = sbr.rel (%p6336) target = $region132
      $region131: #{_lambda_.1} parent=5 // pred_region
        %s6339 = ssub.s32 %s35, 2
        // Predicated region
        $region133: #{_lambda_.1} parent=131 // pred_check
          %p6340 = pneg %p620
        $region134: #{_lambda_.1} parent=131 // pred_check_branch
          %6342 = sbr.rel (%p6340) target = $region136
        $region135: #{_lambda_.1} parent=131 // pred_region
          %s6343 = sand.u32 %s605, 1
          %s6344 = scalar_lea.sflag [#allocation3], %s6343
          %s6345 = sand.u32 %s605, 1
          %s6346 = smul.addr %s6345, 16
          %s6347 = scalar_lea.vmem [#allocation2], %s6346
          %6348 = dma.done %s6344, 256
        $region136: #{_lambda_.1} parent=131 // pred_fallthru
          _
      $region132: #{_lambda_.1} parent=5 // pred_fallthru
        _
    $region6: #{_lambda_.1} parent=1 // loop_footer
      %s39 = sadd.s32 1, %s35
    $region7: #{_lambda_.1} parent=1 // loop_footer_branch
      %34 = sbr.rel target = $region3
    $region8: #{_lambda_.1} parent=1 // loop_exit
      _
    %6349 = vsyncpa [#allocation3], 1
    %s6350 = scalar_lea.sflag [#allocation3], 1
    %6351 = vsyncpa %s6350, 1

</llo_original>
